<compile_context>
chip_gen: v5e
topology: v5e:2x2
jax: 0.10.0
libtpu: 0.0.40
codegen_flags: <defaults>
</compile_context>

<pallas_src>
import jax
import jax.numpy as jnp
from jax.experimental import pallas as pl
from jax.experimental.pallas import tpu as pltpu

_VMEM = pl.BlockSpec(memory_space=pltpu.MemorySpace.VMEM)
_ANY = pl.BlockSpec(memory_space=pl.ANY)


# ---------------------------------------------------------------------------
# Fused Pallas kernel (all GATv2 layers + mean readout)
# ---------------------------------------------------------------------------
def _make_fused_gnn_kernel(num_layers):
    """Kernel ref layout:
       inputs : [x, ea, src_oh, dst_oh, dstT_oh]              (VMEM)
                + [w_lr_i per layer]                          (HBM, manual DMA)
                + [b_lr_i, w_e_i, att_i, bias_i per layer]    (VMEM, tiny)
       output : graph embedding [1, C_out]                    (VMEM)
       scratch: [w_lr VMEM buffer per layer] + DMA sem array (num_layers,)
    """

    def kernel(*refs):
        f32, bf16 = jnp.float32, jnp.bfloat16
        n_in = 5 + 5 * num_layers
        x_ref, ea_ref, src_oh_ref, dst_oh_ref, dstT_oh_ref = refs[:5]
        wlr_hbm = refs[5:5 + num_layers]
        small = refs[5 + num_layers:n_in]
        o_ref = refs[n_in]
        wlr_vmem = refs[n_in + 1:n_in + 1 + num_layers]
        dma_sem = refs[n_in + 1 + num_layers]

        # Issue every layer's weight DMA up front; each layer waits just before
        # it needs its weights, so HBM->VMEM weight traffic of later layers is
        # hidden behind earlier layers' compute.
        copies = []
        for i in range(num_layers):
            cp = pltpu.make_async_copy(wlr_hbm[i], wlr_vmem[i], dma_sem.at[i])
            cp.start()
            copies.append(cp)

        src_oh = src_oh_ref[...]        # [E, N] bf16 one-hot(src)
        dst_oh = dst_oh_ref[...]        # [E, N] bf16 one-hot(dst)
        dstT_oh = dstT_oh_ref[...]      # [N, E] bf16 one-hot(dst)^T
        incident = dstT_oh > 0          # exact: 0/1 representable in bf16
        ea = ea_ref[...]                # [E, De] bf16
        neg = f32(-1e30)

        h = x_ref[...]                  # [N, Din] f32 node features

        for i in range(num_layers):
            b_lr_ref, w_e_ref, att_ref, bias_ref = small[4 * i:4 * i + 4]
            c = att_ref.shape[-1]                   # layer width C
            c_pad = wlr_vmem[i].shape[-1] // 2      # 128-aligned split point

            copies[i].wait()
            w_lr = wlr_vmem[i][...]                 # [Din_i, 2*c_pad] bf16

            # Fused lin_l | lin_r projection: one bf16 MXU matmul, f32 accum.
            xlr = jnp.dot(h.astype(bf16), w_lr,
                          preferred_element_type=f32) + b_lr_ref[...]
            x_l = xlr[:, :c]                        # [N, C]  (lane-aligned)
            x_r = xlr[:, c_pad:c_pad + c]           # [N, C]  (lane-aligned)
            e_p = jnp.dot(ea, w_e_ref[...], preferred_element_type=f32)  # [E, C]

            # Gather-by-one-hot on the MXU: per-edge source / target features.
            xs = jnp.dot(src_oh, x_l.astype(bf16), preferred_element_type=f32)
            xd = jnp.dot(dst_oh, x_r.astype(bf16), preferred_element_type=f32)

            # GATv2 attention logits: LeakyReLU(0.2) on VPU (f32), then an MXU
            # contraction against the attention vector (trans-B dot_general).
            z = xs + xd + e_p
            z = jnp.where(z > 0, z, f32(0.2) * z)
            logit_row = jax.lax.dot_general(
                att_ref[...], z, (((1,), (1,)), ((), ())),
                preferred_element_type=f32)          # [1, E]

            # Segment softmax over edges sharing a destination, node-major so
            # the scatter below is a plain [N,E]@[E,C] matmul.  Self-loops
            # guarantee every row has an incident edge (denom > 0).
            masked = jnp.where(incident, logit_row, neg)      # [N, E]
            m = jnp.max(masked, axis=1, keepdims=True)        # [N, 1]
            p = jnp.where(incident, jnp.exp(masked - m), f32(0.0))
            denom = jnp.sum(p, axis=1, keepdims=True)         # [N, 1]
            alpha = p * pl.reciprocal(denom, approx=True)     # EUP reciprocal

            # Scatter-add of alpha-weighted messages (message = x_l[src]).
            h = jnp.dot(alpha, xs, preferred_element_type=f32) + bias_ref[...]

        # Final graph readout fused into the same kernel: mean over nodes.
        o_ref[...] = jnp.mean(h, axis=0, keepdims=True)

    return kernel


# ---------------------------------------------------------------------------
# JAX glue: self-loop augmentation (fill_value='mean'), params, wrapper
# ---------------------------------------------------------------------------
def add_self_loops_mean(edge_index, edge_attr, num_nodes):
    """PyG add_self_loops(..., fill_value='mean'): loop attr = mean of the
    attrs of edges incoming to that node (0 if it has none)."""
    src, dst = edge_index[0], edge_index[1]
    sums = jax.ops.segment_sum(edge_attr, dst, num_segments=num_nodes)
    cnt = jax.ops.segment_sum(jnp.ones((edge_attr.shape[0],), jnp.float32),
                              dst, num_segments=num_nodes)
    loop_attr = sums / jnp.maximum(cnt, 1.0)[:, None]
    loop_idx = jnp.arange(num_nodes, dtype=edge_index.dtype)
    src_aug = jnp.concatenate([src, loop_idx])
    dst_aug = jnp.concatenate([dst, loop_idx])
    ea_aug = jnp.concatenate([edge_attr, loop_attr], axis=0)
    return src_aug, dst_aug, ea_aug


def init_gatv2_params(key, in_dim, out_dim, edge_dim):
    ks = jax.random.split(key, 4)

    def glorot(k, shape):
        s = jnp.sqrt(6.0 / (shape[0] + shape[1]))
        return jax.random.uniform(k, shape, jnp.float32, -s, s)

    # lin_l | lin_r packed into one weight; split point padded to a 128-lane
    # boundary so in-kernel slices never need a lane rotate.
    c_pad = max(out_dim, 128)
    w_lr = jnp.zeros((in_dim, 2 * c_pad), jnp.float32)
    w_lr = w_lr.at[:, :out_dim].set(glorot(ks[0], (in_dim, out_dim)))
    w_lr = w_lr.at[:, c_pad:c_pad + out_dim].set(glorot(ks[1], (in_dim, out_dim)))
    return dict(
        w_lr=w_lr,                                   # [Din, 2*c_pad]
        b_lr=jnp.zeros((1, 2 * c_pad), jnp.float32),
        w_e=glorot(ks[2], (edge_dim, out_dim)),       # lin_edge (no bias)
        att=glorot(ks[3], (1, out_dim)),
        bias=jnp.zeros((1, out_dim), jnp.float32),
    )


def gnn_forward(x, edge_index, edge_attr, layer_params):
    n = x.shape[0]
    num_layers = len(layer_params)
    out_dim = layer_params[-1]["att"].shape[-1]
    bf16 = jnp.bfloat16

    # Self loops + one-hot incidence matrices (bf16 is exact for 0/1); built
    # once with XLA outside the kernel.
    src_aug, dst_aug, ea_aug = add_self_loops_mean(edge_index, edge_attr, n)
    src_oh = jax.nn.one_hot(src_aug, n, dtype=bf16)      # [E, N]
    dst_oh = jax.nn.one_hot(dst_aug, n, dtype=bf16)      # [E, N]
    dstT_oh = dst_oh.T                                   # [N, E]
    ea_bf = ea_aug.astype(bf16)

    wlr_list = [p["w_lr"].astype(bf16) for p in layer_params]   # HBM, streamed
    small_list = []
    for p in layer_params:
        small_list += [p["b_lr"], p["w_e"].astype(bf16), p["att"], p["bias"]]

    in_specs = [_VMEM] * 5 + [_ANY] * num_layers + [_VMEM] * (4 * num_layers)
    scratch_shapes = ([pltpu.VMEM(tuple(w.shape), bf16) for w in wlr_list]
                      + [pltpu.SemaphoreType.DMA((num_layers,))])

    out = pl.pallas_call(
        _make_fused_gnn_kernel(num_layers),
        out_shape=jax.ShapeDtypeStruct((1, out_dim), jnp.float32),
        in_specs=in_specs,
        out_specs=_VMEM,
        scratch_shapes=scratch_shapes,
    )(x, ea_bf, src_oh, dst_oh, dstT_oh, *wlr_list, *small_list)
    return out[0]                                        # [out_dim]


# ---------------------------------------------------------------------------
if __name__ == "__main__":
    key = jax.random.PRNGKey(0)
    node_dim, edge_dim, out_dim = 8, 4, 32
    num_nodes, num_edges = 16, 32

    k_x, k_e, k_src, k_dst, k_p = jax.random.split(key, 5)
    x = jax.random.normal(k_x, (num_nodes, node_dim), jnp.float32)
    edge_attr = jax.random.normal(k_e, (num_edges, edge_dim), jnp.float32)
    src = jax.random.randint(k_src, (num_edges,), 0, num_nodes)
    dst = jax.random.randint(k_dst, (num_edges,), 0, num_nodes)
    edge_index = jnp.stack([src, dst])

    # GNN layer widths from the module: node_dim -> 512 -> 512 -> 256 -> out_dim
    dims = [(node_dim, 512), (512, 512), (512, 256), (256, out_dim)]
    pkeys = jax.random.split(k_p, len(dims))
    layer_params = [init_gatv2_params(pk, din, dout, edge_dim)
                    for pk, (din, dout) in zip(pkeys, dims)]

    out = jax.jit(gnn_forward)(x, edge_index, edge_attr, layer_params)
    out = jax.block_until_ready(out)
    assert out.shape == (out_dim,)
    assert bool(jnp.all(jnp.isfinite(out)))
    print("KERNEL_OK")
</pallas_src>

<mosaic_0001>
module attributes {stable_mosaic.version = 11 : i64} {
  func.func @kernel(%arg0: memref<16x8xf32, #tpu.memory_space<vmem>>, %arg1: memref<48x4xbf16, #tpu.memory_space<vmem>>, %arg2: memref<48x16xbf16, #tpu.memory_space<vmem>>, %arg3: memref<48x16xbf16, #tpu.memory_space<vmem>>, %arg4: memref<16x48xbf16, #tpu.memory_space<vmem>>, %arg5: memref<8x1024xbf16, #tpu.memory_space<any>>, %arg6: memref<512x1024xbf16, #tpu.memory_space<any>>, %arg7: memref<512x512xbf16, #tpu.memory_space<any>>, %arg8: memref<256x256xbf16, #tpu.memory_space<any>>, %arg9: memref<1x1024xf32, #tpu.memory_space<vmem>>, %arg10: memref<4x512xbf16, #tpu.memory_space<vmem>>, %arg11: memref<1x512xf32, #tpu.memory_space<vmem>>, %arg12: memref<1x512xf32, #tpu.memory_space<vmem>>, %arg13: memref<1x1024xf32, #tpu.memory_space<vmem>>, %arg14: memref<4x512xbf16, #tpu.memory_space<vmem>>, %arg15: memref<1x512xf32, #tpu.memory_space<vmem>>, %arg16: memref<1x512xf32, #tpu.memory_space<vmem>>, %arg17: memref<1x512xf32, #tpu.memory_space<vmem>>, %arg18: memref<4x256xbf16, #tpu.memory_space<vmem>>, %arg19: memref<1x256xf32, #tpu.memory_space<vmem>>, %arg20: memref<1x256xf32, #tpu.memory_space<vmem>>, %arg21: memref<1x256xf32, #tpu.memory_space<vmem>>, %arg22: memref<4x32xbf16, #tpu.memory_space<vmem>>, %arg23: memref<1x32xf32, #tpu.memory_space<vmem>>, %arg24: memref<1x32xf32, #tpu.memory_space<vmem>>, %arg25: memref<1x32xf32, #tpu.memory_space<vmem>>, %arg26: memref<8x1024xbf16, #tpu.memory_space<vmem>>, %arg27: memref<512x1024xbf16, #tpu.memory_space<vmem>>, %arg28: memref<512x512xbf16, #tpu.memory_space<vmem>>, %arg29: memref<256x256xbf16, #tpu.memory_space<vmem>>, %arg30: memref<4x!tpu.dma_semaphore, #tpu.memory_space<semaphore_mem>>) attributes {dimension_semantics = [], scalar_prefetch = 0 : i64, scratch_operands = 5 : i64, tpu.core_type = #tpu.core_type<tc>} {
    %c0_i32 = arith.constant 0 : i32
    %0 = tpu.memref_slice %arg30[%c0_i32] : memref<4x!tpu.dma_semaphore, #tpu.memory_space<semaphore_mem>> -> memref<1x!tpu.dma_semaphore, #tpu.memory_space<semaphore_mem>>
    %1 = tpu.memref_squeeze %0 : memref<1x!tpu.dma_semaphore, #tpu.memory_space<semaphore_mem>> -> memref<!tpu.dma_semaphore, #tpu.memory_space<semaphore_mem>>
    tpu.enqueue_dma source(%arg5 : memref<8x1024xbf16, #tpu.memory_space<any>>) target(%arg26 : memref<8x1024xbf16, #tpu.memory_space<vmem>>) target_semaphore(%1 : memref<!tpu.dma_semaphore, #tpu.memory_space<semaphore_mem>>)
    %c1_i32 = arith.constant 1 : i32
    %2 = tpu.memref_slice %arg30[%c1_i32] : memref<4x!tpu.dma_semaphore, #tpu.memory_space<semaphore_mem>> -> memref<1x!tpu.dma_semaphore, #tpu.memory_space<semaphore_mem>>
    %3 = tpu.memref_squeeze %2 : memref<1x!tpu.dma_semaphore, #tpu.memory_space<semaphore_mem>> -> memref<!tpu.dma_semaphore, #tpu.memory_space<semaphore_mem>>
    tpu.enqueue_dma source(%arg6 : memref<512x1024xbf16, #tpu.memory_space<any>>) target(%arg27 : memref<512x1024xbf16, #tpu.memory_space<vmem>>) target_semaphore(%3 : memref<!tpu.dma_semaphore, #tpu.memory_space<semaphore_mem>>)
    %c2_i32 = arith.constant 2 : i32
    %4 = tpu.memref_slice %arg30[%c2_i32] : memref<4x!tpu.dma_semaphore, #tpu.memory_space<semaphore_mem>> -> memref<1x!tpu.dma_semaphore, #tpu.memory_space<semaphore_mem>>
    %5 = tpu.memref_squeeze %4 : memref<1x!tpu.dma_semaphore, #tpu.memory_space<semaphore_mem>> -> memref<!tpu.dma_semaphore, #tpu.memory_space<semaphore_mem>>
    tpu.enqueue_dma source(%arg7 : memref<512x512xbf16, #tpu.memory_space<any>>) target(%arg28 : memref<512x512xbf16, #tpu.memory_space<vmem>>) target_semaphore(%5 : memref<!tpu.dma_semaphore, #tpu.memory_space<semaphore_mem>>)
    %c3_i32 = arith.constant 3 : i32
    %6 = tpu.memref_slice %arg30[%c3_i32] : memref<4x!tpu.dma_semaphore, #tpu.memory_space<semaphore_mem>> -> memref<1x!tpu.dma_semaphore, #tpu.memory_space<semaphore_mem>>
    %7 = tpu.memref_squeeze %6 : memref<1x!tpu.dma_semaphore, #tpu.memory_space<semaphore_mem>> -> memref<!tpu.dma_semaphore, #tpu.memory_space<semaphore_mem>>
    tpu.enqueue_dma source(%arg8 : memref<256x256xbf16, #tpu.memory_space<any>>) target(%arg29 : memref<256x256xbf16, #tpu.memory_space<vmem>>) target_semaphore(%7 : memref<!tpu.dma_semaphore, #tpu.memory_space<semaphore_mem>>)
    %c0 = arith.constant 0 : index
    %c0_0 = arith.constant 0 : index
    %8 = vector.load %arg2[%c0, %c0_0] : memref<48x16xbf16, #tpu.memory_space<vmem>>, vector<48x16xbf16>
    %c0_1 = arith.constant 0 : index
    %c0_2 = arith.constant 0 : index
    %9 = vector.load %arg3[%c0_1, %c0_2] : memref<48x16xbf16, #tpu.memory_space<vmem>>, vector<48x16xbf16>
    %c0_3 = arith.constant 0 : index
    %c0_4 = arith.constant 0 : index
    %10 = vector.load %arg4[%c0_3, %c0_4] : memref<16x48xbf16, #tpu.memory_space<vmem>>, vector<16x48xbf16>
    %cst = arith.constant 0.000000e+00 : bf16
    %11 = vector.broadcast %cst : bf16 to vector<16x48xbf16>
    %12 = arith.cmpf ogt, %10, %11 : vector<16x48xbf16>
    %c0_5 = arith.constant 0 : index
    %c0_6 = arith.constant 0 : index
    %13 = vector.load %arg1[%c0_5, %c0_6] : memref<48x4xbf16, #tpu.memory_space<vmem>>, vector<48x4xbf16>
    %c0_7 = arith.constant 0 : index
    %c0_8 = arith.constant 0 : index
    %14 = vector.load %arg0[%c0_7, %c0_8] : memref<16x8xf32, #tpu.memory_space<vmem>>, vector<16x8xf32>
    %c0_i32_9 = arith.constant 0 : i32
    %15 = tpu.memref_slice %arg30[%c0_i32_9] : memref<4x!tpu.dma_semaphore, #tpu.memory_space<semaphore_mem>> -> memref<1x!tpu.dma_semaphore, #tpu.memory_space<semaphore_mem>>
    %16 = tpu.memref_squeeze %15 : memref<1x!tpu.dma_semaphore, #tpu.memory_space<semaphore_mem>> -> memref<!tpu.dma_semaphore, #tpu.memory_space<semaphore_mem>>
    tpu.wait_dma2 semaphore(%16 : memref<!tpu.dma_semaphore, #tpu.memory_space<semaphore_mem>>) src(%arg5 : memref<8x1024xbf16, #tpu.memory_space<any>>) dst(%arg26 : memref<8x1024xbf16, #tpu.memory_space<vmem>>)
    %c0_10 = arith.constant 0 : index
    %c0_11 = arith.constant 0 : index
    %17 = vector.load %arg26[%c0_10, %c0_11] : memref<8x1024xbf16, #tpu.memory_space<vmem>>, vector<8x1024xbf16>
    %18 = arith.truncf %14 : vector<16x8xf32> to vector<16x8xbf16>
    %cst_12 = arith.constant dense<0.000000e+00> : vector<16x1024xf32>
    %19 = tpu.matmul %18, %17, %cst_12 {dimension_numbers = #tpu.dot_dimension_numbers<[1], [0], [0], [1], [0, 0, 1, 1], [], []>} : vector<16x8xbf16>, vector<8x1024xbf16>, vector<16x1024xf32> -> vector<16x1024xf32>
    %c0_13 = arith.constant 0 : index
    %c0_14 = arith.constant 0 : index
    %20 = vector.load %arg9[%c0_13, %c0_14] : memref<1x1024xf32, #tpu.memory_space<vmem>>, vector<1x1024xf32>
    %21 = vector.broadcast %20 : vector<1x1024xf32> to vector<16x1024xf32>
    %22 = arith.addf %19, %21 : vector<16x1024xf32>
    %23 = vector.extract_strided_slice %22 {offsets = [0, 0], sizes = [16, 512], strides = [1, 1]} : vector<16x1024xf32> to vector<16x512xf32>
    %24 = vector.extract_strided_slice %22 {offsets = [0, 512], sizes = [16, 512], strides = [1, 1]} : vector<16x1024xf32> to vector<16x512xf32>
    %c0_15 = arith.constant 0 : index
    %c0_16 = arith.constant 0 : index
    %25 = vector.load %arg10[%c0_15, %c0_16] : memref<4x512xbf16, #tpu.memory_space<vmem>>, vector<4x512xbf16>
    %cst_17 = arith.constant dense<0.000000e+00> : vector<48x512xf32>
    %26 = tpu.matmul %13, %25, %cst_17 {dimension_numbers = #tpu.dot_dimension_numbers<[1], [0], [0], [1], [0, 0, 1, 1], [], []>} : vector<48x4xbf16>, vector<4x512xbf16>, vector<48x512xf32> -> vector<48x512xf32>
    %27 = arith.truncf %23 : vector<16x512xf32> to vector<16x512xbf16>
    %cst_18 = arith.constant dense<0.000000e+00> : vector<48x512xf32>
    %28 = tpu.matmul %8, %27, %cst_18 {dimension_numbers = #tpu.dot_dimension_numbers<[1], [0], [0], [1], [0, 0, 1, 1], [], []>} : vector<48x16xbf16>, vector<16x512xbf16>, vector<48x512xf32> -> vector<48x512xf32>
    %29 = arith.truncf %24 : vector<16x512xf32> to vector<16x512xbf16>
    %cst_19 = arith.constant dense<0.000000e+00> : vector<48x512xf32>
    %30 = tpu.matmul %9, %29, %cst_19 {dimension_numbers = #tpu.dot_dimension_numbers<[1], [0], [0], [1], [0, 0, 1, 1], [], []>} : vector<48x16xbf16>, vector<16x512xbf16>, vector<48x512xf32> -> vector<48x512xf32>
    %31 = arith.addf %28, %30 : vector<48x512xf32>
    %32 = arith.addf %31, %26 : vector<48x512xf32>
    %cst_20 = arith.constant 0.000000e+00 : f32
    %33 = vector.broadcast %cst_20 : f32 to vector<48x512xf32>
    %34 = arith.cmpf ogt, %32, %33 : vector<48x512xf32>
    %cst_21 = arith.constant 2.000000e-01 : f32
    %35 = vector.broadcast %cst_21 : f32 to vector<48x512xf32>
    %36 = arith.mulf %35, %32 : vector<48x512xf32>
    %37 = arith.select %34, %32, %36 : vector<48x512xi1>, vector<48x512xf32>
    %c0_22 = arith.constant 0 : index
    %c0_23 = arith.constant 0 : index
    %38 = vector.load %arg11[%c0_22, %c0_23] : memref<1x512xf32, #tpu.memory_space<vmem>>, vector<1x512xf32>
    %cst_24 = arith.constant dense<0.000000e+00> : vector<1x48xf32>
    %39 = tpu.matmul %38, %37, %cst_24 {dimension_numbers = #tpu.dot_dimension_numbers<[1], [1], [0], [0], [0, 0, 1, 0], [], []>} : vector<1x512xf32>, vector<48x512xf32>, vector<1x48xf32> -> vector<1x48xf32>
    %cst_25 = arith.constant -1.000000e+30 : f32
    %40 = vector.shape_cast %39 : vector<1x48xf32> to vector<1x48xf32>
    %41 = vector.broadcast %40 : vector<1x48xf32> to vector<16x48xf32>
    %42 = vector.broadcast %cst_25 : f32 to vector<16x48xf32>
    %43 = arith.select %12, %41, %42 : vector<16x48xi1>, vector<16x48xf32>
    %cst_26 = arith.constant dense<0xFF800000> : vector<16xf32>
    %44 = vector.multi_reduction <maximumf>, %43, %cst_26 [1] : vector<16x48xf32> to vector<16xf32>
    %45 = vector.shape_cast %44 : vector<16xf32> to vector<16x1xf32>
    %46 = vector.broadcast %45 : vector<16x1xf32> to vector<16x48xf32>
    %47 = arith.subf %43, %46 : vector<16x48xf32>
    %48 = math.exp %47 : vector<16x48xf32>
    %cst_27 = arith.constant 0.000000e+00 : f32
    %49 = vector.broadcast %cst_27 : f32 to vector<16x48xf32>
    %50 = arith.select %12, %48, %49 : vector<16x48xi1>, vector<16x48xf32>
    %cst_28 = arith.constant dense<0.000000e+00> : vector<16xf32>
    %51 = vector.multi_reduction <add>, %50, %cst_28 [1] : vector<16x48xf32> to vector<16xf32>
    %52 = vector.shape_cast %51 : vector<16xf32> to vector<16x1xf32>
    %53 = tpu.reciprocal %52 {approx = true} : vector<16x1xf32> -> vector<16x1xf32>
    %54 = vector.broadcast %53 : vector<16x1xf32> to vector<16x48xf32>
    %55 = arith.mulf %50, %54 : vector<16x48xf32>
    %cst_29 = arith.constant dense<0.000000e+00> : vector<16x512xf32>
    %56 = tpu.matmul %55, %28, %cst_29 {dimension_numbers = #tpu.dot_dimension_numbers<[1], [0], [0], [1], [0, 0, 1, 1], [], []>} : vector<16x48xf32>, vector<48x512xf32>, vector<16x512xf32> -> vector<16x512xf32>
    %c0_30 = arith.constant 0 : index
    %c0_31 = arith.constant 0 : index
    %57 = vector.load %arg12[%c0_30, %c0_31] : memref<1x512xf32, #tpu.memory_space<vmem>>, vector<1x512xf32>
    %58 = vector.broadcast %57 : vector<1x512xf32> to vector<16x512xf32>
    %59 = arith.addf %56, %58 : vector<16x512xf32>
    %c1_i32_32 = arith.constant 1 : i32
    %60 = tpu.memref_slice %arg30[%c1_i32_32] : memref<4x!tpu.dma_semaphore, #tpu.memory_space<semaphore_mem>> -> memref<1x!tpu.dma_semaphore, #tpu.memory_space<semaphore_mem>>
    %61 = tpu.memref_squeeze %60 : memref<1x!tpu.dma_semaphore, #tpu.memory_space<semaphore_mem>> -> memref<!tpu.dma_semaphore, #tpu.memory_space<semaphore_mem>>
    tpu.wait_dma2 semaphore(%61 : memref<!tpu.dma_semaphore, #tpu.memory_space<semaphore_mem>>) src(%arg6 : memref<512x1024xbf16, #tpu.memory_space<any>>) dst(%arg27 : memref<512x1024xbf16, #tpu.memory_space<vmem>>)
    %c0_33 = arith.constant 0 : index
    %c0_34 = arith.constant 0 : index
    %62 = vector.load %arg27[%c0_33, %c0_34] : memref<512x1024xbf16, #tpu.memory_space<vmem>>, vector<512x1024xbf16>
    %63 = arith.truncf %59 : vector<16x512xf32> to vector<16x512xbf16>
    %cst_35 = arith.constant dense<0.000000e+00> : vector<16x1024xf32>
    %64 = tpu.matmul %63, %62, %cst_35 {dimension_numbers = #tpu.dot_dimension_numbers<[1], [0], [0], [1], [0, 0, 1, 1], [], []>} : vector<16x512xbf16>, vector<512x1024xbf16>, vector<16x1024xf32> -> vector<16x1024xf32>
    %c0_36 = arith.constant 0 : index
    %c0_37 = arith.constant 0 : index
    %65 = vector.load %arg13[%c0_36, %c0_37] : memref<1x1024xf32, #tpu.memory_space<vmem>>, vector<1x1024xf32>
    %66 = vector.broadcast %65 : vector<1x1024xf32> to vector<16x1024xf32>
    %67 = arith.addf %64, %66 : vector<16x1024xf32>
    %68 = vector.extract_strided_slice %67 {offsets = [0, 0], sizes = [16, 512], strides = [1, 1]} : vector<16x1024xf32> to vector<16x512xf32>
    %69 = vector.extract_strided_slice %67 {offsets = [0, 512], sizes = [16, 512], strides = [1, 1]} : vector<16x1024xf32> to vector<16x512xf32>
    %c0_38 = arith.constant 0 : index
    %c0_39 = arith.constant 0 : index
    %70 = vector.load %arg14[%c0_38, %c0_39] : memref<4x512xbf16, #tpu.memory_space<vmem>>, vector<4x512xbf16>
    %cst_40 = arith.constant dense<0.000000e+00> : vector<48x512xf32>
    %71 = tpu.matmul %13, %70, %cst_40 {dimension_numbers = #tpu.dot_dimension_numbers<[1], [0], [0], [1], [0, 0, 1, 1], [], []>} : vector<48x4xbf16>, vector<4x512xbf16>, vector<48x512xf32> -> vector<48x512xf32>
    %72 = arith.truncf %68 : vector<16x512xf32> to vector<16x512xbf16>
    %cst_41 = arith.constant dense<0.000000e+00> : vector<48x512xf32>
    %73 = tpu.matmul %8, %72, %cst_41 {dimension_numbers = #tpu.dot_dimension_numbers<[1], [0], [0], [1], [0, 0, 1, 1], [], []>} : vector<48x16xbf16>, vector<16x512xbf16>, vector<48x512xf32> -> vector<48x512xf32>
    %74 = arith.truncf %69 : vector<16x512xf32> to vector<16x512xbf16>
    %cst_42 = arith.constant dense<0.000000e+00> : vector<48x512xf32>
    %75 = tpu.matmul %9, %74, %cst_42 {dimension_numbers = #tpu.dot_dimension_numbers<[1], [0], [0], [1], [0, 0, 1, 1], [], []>} : vector<48x16xbf16>, vector<16x512xbf16>, vector<48x512xf32> -> vector<48x512xf32>
    %76 = arith.addf %73, %75 : vector<48x512xf32>
    %77 = arith.addf %76, %71 : vector<48x512xf32>
    %cst_43 = arith.constant 0.000000e+00 : f32
    %78 = vector.broadcast %cst_43 : f32 to vector<48x512xf32>
    %79 = arith.cmpf ogt, %77, %78 : vector<48x512xf32>
    %cst_44 = arith.constant 2.000000e-01 : f32
    %80 = vector.broadcast %cst_44 : f32 to vector<48x512xf32>
    %81 = arith.mulf %80, %77 : vector<48x512xf32>
    %82 = arith.select %79, %77, %81 : vector<48x512xi1>, vector<48x512xf32>
    %c0_45 = arith.constant 0 : index
    %c0_46 = arith.constant 0 : index
    %83 = vector.load %arg15[%c0_45, %c0_46] : memref<1x512xf32, #tpu.memory_space<vmem>>, vector<1x512xf32>
    %cst_47 = arith.constant dense<0.000000e+00> : vector<1x48xf32>
    %84 = tpu.matmul %83, %82, %cst_47 {dimension_numbers = #tpu.dot_dimension_numbers<[1], [1], [0], [0], [0, 0, 1, 0], [], []>} : vector<1x512xf32>, vector<48x512xf32>, vector<1x48xf32> -> vector<1x48xf32>
    %cst_48 = arith.constant -1.000000e+30 : f32
    %85 = vector.shape_cast %84 : vector<1x48xf32> to vector<1x48xf32>
    %86 = vector.broadcast %85 : vector<1x48xf32> to vector<16x48xf32>
    %87 = vector.broadcast %cst_48 : f32 to vector<16x48xf32>
    %88 = arith.select %12, %86, %87 : vector<16x48xi1>, vector<16x48xf32>
    %cst_49 = arith.constant dense<0xFF800000> : vector<16xf32>
    %89 = vector.multi_reduction <maximumf>, %88, %cst_49 [1] : vector<16x48xf32> to vector<16xf32>
    %90 = vector.shape_cast %89 : vector<16xf32> to vector<16x1xf32>
    %91 = vector.broadcast %90 : vector<16x1xf32> to vector<16x48xf32>
    %92 = arith.subf %88, %91 : vector<16x48xf32>
    %93 = math.exp %92 : vector<16x48xf32>
    %cst_50 = arith.constant 0.000000e+00 : f32
    %94 = vector.broadcast %cst_50 : f32 to vector<16x48xf32>
    %95 = arith.select %12, %93, %94 : vector<16x48xi1>, vector<16x48xf32>
    %cst_51 = arith.constant dense<0.000000e+00> : vector<16xf32>
    %96 = vector.multi_reduction <add>, %95, %cst_51 [1] : vector<16x48xf32> to vector<16xf32>
    %97 = vector.shape_cast %96 : vector<16xf32> to vector<16x1xf32>
    %98 = tpu.reciprocal %97 {approx = true} : vector<16x1xf32> -> vector<16x1xf32>
    %99 = vector.broadcast %98 : vector<16x1xf32> to vector<16x48xf32>
    %100 = arith.mulf %95, %99 : vector<16x48xf32>
    %cst_52 = arith.constant dense<0.000000e+00> : vector<16x512xf32>
    %101 = tpu.matmul %100, %73, %cst_52 {dimension_numbers = #tpu.dot_dimension_numbers<[1], [0], [0], [1], [0, 0, 1, 1], [], []>} : vector<16x48xf32>, vector<48x512xf32>, vector<16x512xf32> -> vector<16x512xf32>
    %c0_53 = arith.constant 0 : index
    %c0_54 = arith.constant 0 : index
    %102 = vector.load %arg16[%c0_53, %c0_54] : memref<1x512xf32, #tpu.memory_space<vmem>>, vector<1x512xf32>
    %103 = vector.broadcast %102 : vector<1x512xf32> to vector<16x512xf32>
    %104 = arith.addf %101, %103 : vector<16x512xf32>
    %c2_i32_55 = arith.constant 2 : i32
    %105 = tpu.memref_slice %arg30[%c2_i32_55] : memref<4x!tpu.dma_semaphore, #tpu.memory_space<semaphore_mem>> -> memref<1x!tpu.dma_semaphore, #tpu.memory_space<semaphore_mem>>
    %106 = tpu.memref_squeeze %105 : memref<1x!tpu.dma_semaphore, #tpu.memory_space<semaphore_mem>> -> memref<!tpu.dma_semaphore, #tpu.memory_space<semaphore_mem>>
    tpu.wait_dma2 semaphore(%106 : memref<!tpu.dma_semaphore, #tpu.memory_space<semaphore_mem>>) src(%arg7 : memref<512x512xbf16, #tpu.memory_space<any>>) dst(%arg28 : memref<512x512xbf16, #tpu.memory_space<vmem>>)
    %c0_56 = arith.constant 0 : index
    %c0_57 = arith.constant 0 : index
    %107 = vector.load %arg28[%c0_56, %c0_57] : memref<512x512xbf16, #tpu.memory_space<vmem>>, vector<512x512xbf16>
    %108 = arith.truncf %104 : vector<16x512xf32> to vector<16x512xbf16>
    %cst_58 = arith.constant dense<0.000000e+00> : vector<16x512xf32>
    %109 = tpu.matmul %108, %107, %cst_58 {dimension_numbers = #tpu.dot_dimension_numbers<[1], [0], [0], [1], [0, 0, 1, 1], [], []>} : vector<16x512xbf16>, vector<512x512xbf16>, vector<16x512xf32> -> vector<16x512xf32>
    %c0_59 = arith.constant 0 : index
    %c0_60 = arith.constant 0 : index
    %110 = vector.load %arg17[%c0_59, %c0_60] : memref<1x512xf32, #tpu.memory_space<vmem>>, vector<1x512xf32>
    %111 = vector.broadcast %110 : vector<1x512xf32> to vector<16x512xf32>
    %112 = arith.addf %109, %111 : vector<16x512xf32>
    %113 = vector.extract_strided_slice %112 {offsets = [0, 0], sizes = [16, 256], strides = [1, 1]} : vector<16x512xf32> to vector<16x256xf32>
    %114 = vector.extract_strided_slice %112 {offsets = [0, 256], sizes = [16, 256], strides = [1, 1]} : vector<16x512xf32> to vector<16x256xf32>
    %c0_61 = arith.constant 0 : index
    %c0_62 = arith.constant 0 : index
    %115 = vector.load %arg18[%c0_61, %c0_62] : memref<4x256xbf16, #tpu.memory_space<vmem>>, vector<4x256xbf16>
    %cst_63 = arith.constant dense<0.000000e+00> : vector<48x256xf32>
    %116 = tpu.matmul %13, %115, %cst_63 {dimension_numbers = #tpu.dot_dimension_numbers<[1], [0], [0], [1], [0, 0, 1, 1], [], []>} : vector<48x4xbf16>, vector<4x256xbf16>, vector<48x256xf32> -> vector<48x256xf32>
    %117 = arith.truncf %113 : vector<16x256xf32> to vector<16x256xbf16>
    %cst_64 = arith.constant dense<0.000000e+00> : vector<48x256xf32>
    %118 = tpu.matmul %8, %117, %cst_64 {dimension_numbers = #tpu.dot_dimension_numbers<[1], [0], [0], [1], [0, 0, 1, 1], [], []>} : vector<48x16xbf16>, vector<16x256xbf16>, vector<48x256xf32> -> vector<48x256xf32>
    %119 = arith.truncf %114 : vector<16x256xf32> to vector<16x256xbf16>
    %cst_65 = arith.constant dense<0.000000e+00> : vector<48x256xf32>
    %120 = tpu.matmul %9, %119, %cst_65 {dimension_numbers = #tpu.dot_dimension_numbers<[1], [0], [0], [1], [0, 0, 1, 1], [], []>} : vector<48x16xbf16>, vector<16x256xbf16>, vector<48x256xf32> -> vector<48x256xf32>
    %121 = arith.addf %118, %120 : vector<48x256xf32>
    %122 = arith.addf %121, %116 : vector<48x256xf32>
    %cst_66 = arith.constant 0.000000e+00 : f32
    %123 = vector.broadcast %cst_66 : f32 to vector<48x256xf32>
    %124 = arith.cmpf ogt, %122, %123 : vector<48x256xf32>
    %cst_67 = arith.constant 2.000000e-01 : f32
    %125 = vector.broadcast %cst_67 : f32 to vector<48x256xf32>
    %126 = arith.mulf %125, %122 : vector<48x256xf32>
    %127 = arith.select %124, %122, %126 : vector<48x256xi1>, vector<48x256xf32>
    %c0_68 = arith.constant 0 : index
    %c0_69 = arith.constant 0 : index
    %128 = vector.load %arg19[%c0_68, %c0_69] : memref<1x256xf32, #tpu.memory_space<vmem>>, vector<1x256xf32>
    %cst_70 = arith.constant dense<0.000000e+00> : vector<1x48xf32>
    %129 = tpu.matmul %128, %127, %cst_70 {dimension_numbers = #tpu.dot_dimension_numbers<[1], [1], [0], [0], [0, 0, 1, 0], [], []>} : vector<1x256xf32>, vector<48x256xf32>, vector<1x48xf32> -> vector<1x48xf32>
    %cst_71 = arith.constant -1.000000e+30 : f32
    %130 = vector.shape_cast %129 : vector<1x48xf32> to vector<1x48xf32>
    %131 = vector.broadcast %130 : vector<1x48xf32> to vector<16x48xf32>
    %132 = vector.broadcast %cst_71 : f32 to vector<16x48xf32>
    %133 = arith.select %12, %131, %132 : vector<16x48xi1>, vector<16x48xf32>
    %cst_72 = arith.constant dense<0xFF800000> : vector<16xf32>
    %134 = vector.multi_reduction <maximumf>, %133, %cst_72 [1] : vector<16x48xf32> to vector<16xf32>
    %135 = vector.shape_cast %134 : vector<16xf32> to vector<16x1xf32>
    %136 = vector.broadcast %135 : vector<16x1xf32> to vector<16x48xf32>
    %137 = arith.subf %133, %136 : vector<16x48xf32>
    %138 = math.exp %137 : vector<16x48xf32>
    %cst_73 = arith.constant 0.000000e+00 : f32
    %139 = vector.broadcast %cst_73 : f32 to vector<16x48xf32>
    %140 = arith.select %12, %138, %139 : vector<16x48xi1>, vector<16x48xf32>
    %cst_74 = arith.constant dense<0.000000e+00> : vector<16xf32>
    %141 = vector.multi_reduction <add>, %140, %cst_74 [1] : vector<16x48xf32> to vector<16xf32>
    %142 = vector.shape_cast %141 : vector<16xf32> to vector<16x1xf32>
    %143 = tpu.reciprocal %142 {approx = true} : vector<16x1xf32> -> vector<16x1xf32>
    %144 = vector.broadcast %143 : vector<16x1xf32> to vector<16x48xf32>
    %145 = arith.mulf %140, %144 : vector<16x48xf32>
    %cst_75 = arith.constant dense<0.000000e+00> : vector<16x256xf32>
    %146 = tpu.matmul %145, %118, %cst_75 {dimension_numbers = #tpu.dot_dimension_numbers<[1], [0], [0], [1], [0, 0, 1, 1], [], []>} : vector<16x48xf32>, vector<48x256xf32>, vector<16x256xf32> -> vector<16x256xf32>
    %c0_76 = arith.constant 0 : index
    %c0_77 = arith.constant 0 : index
    %147 = vector.load %arg20[%c0_76, %c0_77] : memref<1x256xf32, #tpu.memory_space<vmem>>, vector<1x256xf32>
    %148 = vector.broadcast %147 : vector<1x256xf32> to vector<16x256xf32>
    %149 = arith.addf %146, %148 : vector<16x256xf32>
    %c3_i32_78 = arith.constant 3 : i32
    %150 = tpu.memref_slice %arg30[%c3_i32_78] : memref<4x!tpu.dma_semaphore, #tpu.memory_space<semaphore_mem>> -> memref<1x!tpu.dma_semaphore, #tpu.memory_space<semaphore_mem>>
    %151 = tpu.memref_squeeze %150 : memref<1x!tpu.dma_semaphore, #tpu.memory_space<semaphore_mem>> -> memref<!tpu.dma_semaphore, #tpu.memory_space<semaphore_mem>>
    tpu.wait_dma2 semaphore(%151 : memref<!tpu.dma_semaphore, #tpu.memory_space<semaphore_mem>>) src(%arg8 : memref<256x256xbf16, #tpu.memory_space<any>>) dst(%arg29 : memref<256x256xbf16, #tpu.memory_space<vmem>>)
    %c0_79 = arith.constant 0 : index
    %c0_80 = arith.constant 0 : index
    %152 = vector.load %arg29[%c0_79, %c0_80] : memref<256x256xbf16, #tpu.memory_space<vmem>>, vector<256x256xbf16>
    %153 = arith.truncf %149 : vector<16x256xf32> to vector<16x256xbf16>
    %cst_81 = arith.constant dense<0.000000e+00> : vector<16x256xf32>
    %154 = tpu.matmul %153, %152, %cst_81 {dimension_numbers = #tpu.dot_dimension_numbers<[1], [0], [0], [1], [0, 0, 1, 1], [], []>} : vector<16x256xbf16>, vector<256x256xbf16>, vector<16x256xf32> -> vector<16x256xf32>
    %c0_82 = arith.constant 0 : index
    %c0_83 = arith.constant 0 : index
    %155 = vector.load %arg21[%c0_82, %c0_83] : memref<1x256xf32, #tpu.memory_space<vmem>>, vector<1x256xf32>
    %156 = vector.broadcast %155 : vector<1x256xf32> to vector<16x256xf32>
    %157 = arith.addf %154, %156 : vector<16x256xf32>
    %158 = vector.extract_strided_slice %157 {offsets = [0, 0], sizes = [16, 32], strides = [1, 1]} : vector<16x256xf32> to vector<16x32xf32>
    %159 = vector.extract_strided_slice %157 {offsets = [0, 128], sizes = [16, 32], strides = [1, 1]} : vector<16x256xf32> to vector<16x32xf32>
    %c0_84 = arith.constant 0 : index
    %c0_85 = arith.constant 0 : index
    %160 = vector.load %arg22[%c0_84, %c0_85] : memref<4x32xbf16, #tpu.memory_space<vmem>>, vector<4x32xbf16>
    %cst_86 = arith.constant dense<0.000000e+00> : vector<48x32xf32>
    %161 = tpu.matmul %13, %160, %cst_86 {dimension_numbers = #tpu.dot_dimension_numbers<[1], [0], [0], [1], [0, 0, 1, 1], [], []>} : vector<48x4xbf16>, vector<4x32xbf16>, vector<48x32xf32> -> vector<48x32xf32>
    %162 = arith.truncf %158 : vector<16x32xf32> to vector<16x32xbf16>
    %cst_87 = arith.constant dense<0.000000e+00> : vector<48x32xf32>
    %163 = tpu.matmul %8, %162, %cst_87 {dimension_numbers = #tpu.dot_dimension_numbers<[1], [0], [0], [1], [0, 0, 1, 1], [], []>} : vector<48x16xbf16>, vector<16x32xbf16>, vector<48x32xf32> -> vector<48x32xf32>
    %164 = arith.truncf %159 : vector<16x32xf32> to vector<16x32xbf16>
    %cst_88 = arith.constant dense<0.000000e+00> : vector<48x32xf32>
    %165 = tpu.matmul %9, %164, %cst_88 {dimension_numbers = #tpu.dot_dimension_numbers<[1], [0], [0], [1], [0, 0, 1, 1], [], []>} : vector<48x16xbf16>, vector<16x32xbf16>, vector<48x32xf32> -> vector<48x32xf32>
    %166 = arith.addf %163, %165 : vector<48x32xf32>
    %167 = arith.addf %166, %161 : vector<48x32xf32>
    %cst_89 = arith.constant 0.000000e+00 : f32
    %168 = vector.broadcast %cst_89 : f32 to vector<48x32xf32>
    %169 = arith.cmpf ogt, %167, %168 : vector<48x32xf32>
    %cst_90 = arith.constant 2.000000e-01 : f32
    %170 = vector.broadcast %cst_90 : f32 to vector<48x32xf32>
    %171 = arith.mulf %170, %167 : vector<48x32xf32>
    %172 = arith.select %169, %167, %171 : vector<48x32xi1>, vector<48x32xf32>
    %c0_91 = arith.constant 0 : index
    %c0_92 = arith.constant 0 : index
    %173 = vector.load %arg23[%c0_91, %c0_92] : memref<1x32xf32, #tpu.memory_space<vmem>>, vector<1x32xf32>
    %cst_93 = arith.constant dense<0.000000e+00> : vector<1x48xf32>
    %174 = tpu.matmul %173, %172, %cst_93 {dimension_numbers = #tpu.dot_dimension_numbers<[1], [1], [0], [0], [0, 0, 1, 0], [], []>} : vector<1x32xf32>, vector<48x32xf32>, vector<1x48xf32> -> vector<1x48xf32>
    %cst_94 = arith.constant -1.000000e+30 : f32
    %175 = vector.shape_cast %174 : vector<1x48xf32> to vector<1x48xf32>
    %176 = vector.broadcast %175 : vector<1x48xf32> to vector<16x48xf32>
    %177 = vector.broadcast %cst_94 : f32 to vector<16x48xf32>
    %178 = arith.select %12, %176, %177 : vector<16x48xi1>, vector<16x48xf32>
    %cst_95 = arith.constant dense<0xFF800000> : vector<16xf32>
    %179 = vector.multi_reduction <maximumf>, %178, %cst_95 [1] : vector<16x48xf32> to vector<16xf32>
    %180 = vector.shape_cast %179 : vector<16xf32> to vector<16x1xf32>
    %181 = vector.broadcast %180 : vector<16x1xf32> to vector<16x48xf32>
    %182 = arith.subf %178, %181 : vector<16x48xf32>
    %183 = math.exp %182 : vector<16x48xf32>
    %cst_96 = arith.constant 0.000000e+00 : f32
    %184 = vector.broadcast %cst_96 : f32 to vector<16x48xf32>
    %185 = arith.select %12, %183, %184 : vector<16x48xi1>, vector<16x48xf32>
    %cst_97 = arith.constant dense<0.000000e+00> : vector<16xf32>
    %186 = vector.multi_reduction <add>, %185, %cst_97 [1] : vector<16x48xf32> to vector<16xf32>
    %187 = vector.shape_cast %186 : vector<16xf32> to vector<16x1xf32>
    %188 = tpu.reciprocal %187 {approx = true} : vector<16x1xf32> -> vector<16x1xf32>
    %189 = vector.broadcast %188 : vector<16x1xf32> to vector<16x48xf32>
    %190 = arith.mulf %185, %189 : vector<16x48xf32>
    %cst_98 = arith.constant dense<0.000000e+00> : vector<16x32xf32>
    %191 = tpu.matmul %190, %163, %cst_98 {dimension_numbers = #tpu.dot_dimension_numbers<[1], [0], [0], [1], [0, 0, 1, 1], [], []>} : vector<16x48xf32>, vector<48x32xf32>, vector<16x32xf32> -> vector<16x32xf32>
    %c0_99 = arith.constant 0 : index
    %c0_100 = arith.constant 0 : index
    %192 = vector.load %arg24[%c0_99, %c0_100] : memref<1x32xf32, #tpu.memory_space<vmem>>, vector<1x32xf32>
    %193 = vector.broadcast %192 : vector<1x32xf32> to vector<16x32xf32>
    %194 = arith.addf %191, %193 : vector<16x32xf32>
    %cst_101 = arith.constant dense<0.000000e+00> : vector<32xf32>
    %195 = vector.multi_reduction <add>, %194, %cst_101 [0] : vector<16x32xf32> to vector<32xf32>
    %196 = vector.shape_cast %195 : vector<32xf32> to vector<1x32xf32>
    %cst_102 = arith.constant 1.600000e+01 : f32
    %197 = vector.broadcast %cst_102 : f32 to vector<1x32xf32>
    %198 = arith.divf %196, %197 : vector<1x32xf32>
    %c0_103 = arith.constant 0 : index
    %c0_104 = arith.constant 0 : index
    %199 = vector.load %arg25[%c0_103, %c0_104] : memref<1x32xf32, #tpu.memory_space<vmem>>, vector<1x32xf32>
    tpu.vector_store %arg25[%c0_103, %c0_104], %198 {strides = array<i32>} : memref<1x32xf32, #tpu.memory_space<vmem>>, vector<1x32xf32>,
    return
  }
}

</mosaic_0001>

<llo_original>
// kernel: gnn_forward.1
$region0: #{gnn_forward.1}
  #allocation0 [shape = 'u32[]', space=smem, size = 0x4, offset = 0x4, fixed_abs, tag = 'smem constant byte address 0x4 - core index']
  #allocation1 [shape = 'u32[72,128]{1,0:T(1,128)}', space=vmem, size = 0x9000, scoped, tag = 'internal scratch']
  #allocation2 [shape = 'bf16[8,1024]{1,0:T(8,128)(2,1)}', space=vmem, size = 0x4000, scoped, tag = 'scratch operand']
  #allocation3 [shape = 'bf16[512,1024]{1,0:T(8,128)(2,1)}', space=vmem, size = 0x100000, scoped, tag = 'scratch operand']
  #allocation4 [shape = 'bf16[512,512]{1,0:T(8,128)(2,1)}', space=vmem, size = 0x80000, scoped, tag = 'scratch operand']
  #allocation5 [shape = 'bf16[256,256]{1,0:T(8,128)(2,1)}', space=vmem, size = 0x20000, scoped, tag = 'scratch operand']
  #allocation6 [shape = 's32[4]{0}', space=sflag, size = 0x10, scoped, tag = 'scratch operand']
  #allocation9 [shape = 's32[]', space=sflag, size = 0x4, offset = 0, fixed_abs, tag = 'sflag constant byte address 0x0 - dummy sync flag']
  #allocation10 [shape = 's32[]', space=sflag, size = 0x4, offset = 0, fixed_abs, tag = 'sflag constant byte address 0x0 - dummy sync flag']
  #allocation11 [shape = 's32[]', space=sflag, size = 0x4, offset = 0, fixed_abs, tag = 'sflag constant byte address 0x0 - dummy sync flag']
  #allocation12 [shape = 's32[]', space=sflag, size = 0x4, offset = 0, fixed_abs, tag = 'sflag constant byte address 0x0 - dummy sync flag']
  %s0 = inlined_call_operand.vmem [shape: f32[16,8], index: 0, kind: input, shape index: {}]
  %s1 = inlined_call_operand.vmem [shape: bf16[48,4], index: 1, kind: input, shape index: {}]
  %s2 = inlined_call_operand.vmem [shape: bf16[48,16], index: 2, kind: input, shape index: {}]
  %s3 = inlined_call_operand.vmem [shape: bf16[48,16], index: 3, kind: input, shape index: {}]
  %s4 = inlined_call_operand.vmem [shape: bf16[16,48], index: 4, kind: input, shape index: {}]
  %s5 = inlined_call_operand.vmem [shape: bf16[8,1024], index: 5, kind: input, shape index: {}]
  %s6 = inlined_call_operand.vmem [shape: bf16[512,1024], index: 6, kind: input, shape index: {}]
  %s7 = inlined_call_operand.vmem [shape: bf16[512,512], index: 7, kind: input, shape index: {}]
  %s8 = inlined_call_operand.vmem [shape: bf16[256,256], index: 8, kind: input, shape index: {}]
  %s9 = inlined_call_operand.vmem [shape: f32[1,1024], index: 9, kind: input, shape index: {}]
  %s10 = inlined_call_operand.vmem [shape: bf16[4,512], index: 10, kind: input, shape index: {}]
  %s11 = inlined_call_operand.vmem [shape: f32[1,512], index: 11, kind: input, shape index: {}]
  %s12 = inlined_call_operand.vmem [shape: f32[1,512], index: 12, kind: input, shape index: {}]
  %s13 = inlined_call_operand.vmem [shape: f32[1,1024], index: 13, kind: input, shape index: {}]
  %s14 = inlined_call_operand.vmem [shape: bf16[4,512], index: 14, kind: input, shape index: {}]
  %s15 = inlined_call_operand.vmem [shape: f32[1,512], index: 15, kind: input, shape index: {}]
  %s16 = inlined_call_operand.vmem [shape: f32[1,512], index: 16, kind: input, shape index: {}]
  %s17 = inlined_call_operand.vmem [shape: f32[1,512], index: 17, kind: input, shape index: {}]
  %s18 = inlined_call_operand.vmem [shape: bf16[4,256], index: 18, kind: input, shape index: {}]
  %s19 = inlined_call_operand.vmem [shape: f32[1,256], index: 19, kind: input, shape index: {}]
  %s20 = inlined_call_operand.vmem [shape: f32[1,256], index: 20, kind: input, shape index: {}]
  %s21 = inlined_call_operand.vmem [shape: f32[1,256], index: 21, kind: input, shape index: {}]
  %s22 = inlined_call_operand.vmem [shape: bf16[4,32], index: 22, kind: input, shape index: {}]
  %s23 = inlined_call_operand.vmem [shape: f32[1,32], index: 23, kind: input, shape index: {}]
  %s24 = inlined_call_operand.vmem [shape: f32[1,32], index: 24, kind: input, shape index: {}]
  %s25 = inlined_call_operand.hbm [shape: f32[1,32], index: 25, kind: output, shape index: {}]
  %s26 = sld [smem:[#allocation0]]
  $region170: #{gnn_forward.1} parent=0
    _
  %s28 = ssub.s32 1, %s26
  %s29 = scalar_select 0, %s28, %s26
  $region1: #{gnn_forward.1} parent=0
    #allocation7 [shape = 'u8[512]{0}', space=vmem, size = 0x400, scoped, tag = 'output window, operand 0, single buffered']
    #allocation8 [shape = 's32[1]{0}', space=sflag, size = 0x4, scoped, tag = 'scoped memory for gnn_forward.1']
    %30 = vsyncpa [#allocation8], 0
    // Predicated region
    $region2: #{gnn_forward.1} parent=1 // pred_check
      _
    $region3: #{gnn_forward.1} parent=1 // pred_check_branch
      %32 = sbr.rel (0) target = $region5
    $region4: #{gnn_forward.1} parent=1 // pred_region
      _
    $region5: #{gnn_forward.1} parent=1 // pred_fallthru
      _
    // Predicated region
    $region6: #{gnn_forward.1} parent=1 // pred_check
      _
    $region7: #{gnn_forward.1} parent=1 // pred_check_branch
      %34 = sbr.rel (0) target = $region9
    $region8: #{gnn_forward.1} parent=1 // pred_region
      _
    $region9: #{gnn_forward.1} parent=1 // pred_fallthru
      _
    // Predicated region
    $region10: #{gnn_forward.1} parent=1 // pred_check
      _
    $region11: #{gnn_forward.1} parent=1 // pred_check_branch
      %36 = sbr.rel (0) target = $region13
    $region12: #{gnn_forward.1} parent=1 // pred_region
      _
    $region13: #{gnn_forward.1} parent=1 // pred_fallthru
      _
    // Predicated region
    $region14: #{gnn_forward.1} parent=1 // pred_check
      _
    $region15: #{gnn_forward.1} parent=1 // pred_check_branch
      %38 = sbr.rel (0) target = $region17
    $region16: #{gnn_forward.1} parent=1 // pred_region
      _
    $region17: #{gnn_forward.1} parent=1 // pred_fallthru
      _
    // Predicated region
    $region18: #{gnn_forward.1} parent=1 // pred_check
      _
    $region19: #{gnn_forward.1} parent=1 // pred_check_branch
      %40 = sbr.rel (0) target = $region21
    $region20: #{gnn_forward.1} parent=1 // pred_region
      _
    $region21: #{gnn_forward.1} parent=1 // pred_fallthru
      _
    // Predicated region
    $region22: #{gnn_forward.1} parent=1 // pred_check
      _
    $region23: #{gnn_forward.1} parent=1 // pred_check_branch
      %42 = sbr.rel (0) target = $region25
    $region24: #{gnn_forward.1} parent=1 // pred_region
      _
    $region25: #{gnn_forward.1} parent=1 // pred_fallthru
      _
    // Predicated region
    $region26: #{gnn_forward.1} parent=1 // pred_check
      _
    $region27: #{gnn_forward.1} parent=1 // pred_check_branch
      %44 = sbr.rel (0) target = $region29
    $region28: #{gnn_forward.1} parent=1 // pred_region
      _
    $region29: #{gnn_forward.1} parent=1 // pred_fallthru
      _
    // Predicated region
    $region30: #{gnn_forward.1} parent=1 // pred_check
      _
    $region31: #{gnn_forward.1} parent=1 // pred_check_branch
      %46 = sbr.rel (0) target = $region33
    $region32: #{gnn_forward.1} parent=1 // pred_region
      _
    $region33: #{gnn_forward.1} parent=1 // pred_fallthru
      _
    // Predicated region
    $region34: #{gnn_forward.1} parent=1 // pred_check
      _
    $region35: #{gnn_forward.1} parent=1 // pred_check_branch
      %48 = sbr.rel (0) target = $region37
    $region36: #{gnn_forward.1} parent=1 // pred_region
      _
    $region37: #{gnn_forward.1} parent=1 // pred_fallthru
      _
    // Predicated region
    $region38: #{gnn_forward.1} parent=1 // pred_check
      _
    $region39: #{gnn_forward.1} parent=1 // pred_check_branch
      %50 = sbr.rel (0) target = $region41
    $region40: #{gnn_forward.1} parent=1 // pred_region
      _
    $region41: #{gnn_forward.1} parent=1 // pred_fallthru
      _
    // Predicated region
    $region42: #{gnn_forward.1} parent=1 // pred_check
      _
    $region43: #{gnn_forward.1} parent=1 // pred_check_branch
      %52 = sbr.rel (0) target = $region45
    $region44: #{gnn_forward.1} parent=1 // pred_region
      _
    $region45: #{gnn_forward.1} parent=1 // pred_fallthru
      _
    // Predicated region
    $region46: #{gnn_forward.1} parent=1 // pred_check
      _
    $region47: #{gnn_forward.1} parent=1 // pred_check_branch
      %54 = sbr.rel (0) target = $region49
    $region48: #{gnn_forward.1} parent=1 // pred_region
      _
    $region49: #{gnn_forward.1} parent=1 // pred_fallthru
      _
    // Predicated region
    $region50: #{gnn_forward.1} parent=1 // pred_check
      _
    $region51: #{gnn_forward.1} parent=1 // pred_check_branch
      %56 = sbr.rel (0) target = $region53
    $region52: #{gnn_forward.1} parent=1 // pred_region
      _
    $region53: #{gnn_forward.1} parent=1 // pred_fallthru
      _
    // Predicated region
    $region54: #{gnn_forward.1} parent=1 // pred_check
      _
    $region55: #{gnn_forward.1} parent=1 // pred_check_branch
      %58 = sbr.rel (0) target = $region57
    $region56: #{gnn_forward.1} parent=1 // pred_region
      _
    $region57: #{gnn_forward.1} parent=1 // pred_fallthru
      _
    // Predicated region
    $region58: #{gnn_forward.1} parent=1 // pred_check
      _
    $region59: #{gnn_forward.1} parent=1 // pred_check_branch
      %60 = sbr.rel (0) target = $region61
    $region60: #{gnn_forward.1} parent=1 // pred_region
      _
    $region61: #{gnn_forward.1} parent=1 // pred_fallthru
      _
    // Predicated region
    $region62: #{gnn_forward.1} parent=1 // pred_check
      _
    $region63: #{gnn_forward.1} parent=1 // pred_check_branch
      %62 = sbr.rel (0) target = $region65
    $region64: #{gnn_forward.1} parent=1 // pred_region
      _
    $region65: #{gnn_forward.1} parent=1 // pred_fallthru
      _
    // Predicated region
    $region66: #{gnn_forward.1} parent=1 // pred_check
      _
    $region67: #{gnn_forward.1} parent=1 // pred_check_branch
      %64 = sbr.rel (0) target = $region69
    $region68: #{gnn_forward.1} parent=1 // pred_region
      _
    $region69: #{gnn_forward.1} parent=1 // pred_fallthru
      _
    // Predicated region
    $region70: #{gnn_forward.1} parent=1 // pred_check
      _
    $region71: #{gnn_forward.1} parent=1 // pred_check_branch
      %66 = sbr.rel (0) target = $region73
    $region72: #{gnn_forward.1} parent=1 // pred_region
      _
    $region73: #{gnn_forward.1} parent=1 // pred_fallthru
      _
    // Predicated region
    $region74: #{gnn_forward.1} parent=1 // pred_check
      _
    $region75: #{gnn_forward.1} parent=1 // pred_check_branch
      %68 = sbr.rel (0) target = $region77
    $region76: #{gnn_forward.1} parent=1 // pred_region
      _
    $region77: #{gnn_forward.1} parent=1 // pred_fallthru
      _
    // Predicated region
    $region78: #{gnn_forward.1} parent=1 // pred_check
      _
    $region79: #{gnn_forward.1} parent=1 // pred_check_branch
      %70 = sbr.rel (0) target = $region81
    $region80: #{gnn_forward.1} parent=1 // pred_region
      _
    $region81: #{gnn_forward.1} parent=1 // pred_fallthru
      _
    // Predicated region
    $region82: #{gnn_forward.1} parent=1 // pred_check
      _
    $region83: #{gnn_forward.1} parent=1 // pred_check_branch
      %72 = sbr.rel (0) target = $region85
    $region84: #{gnn_forward.1} parent=1 // pred_region
      _
    $region85: #{gnn_forward.1} parent=1 // pred_fallthru
      _
    // Predicated region
    $region86: #{gnn_forward.1} parent=1 // pred_check
      _
    $region87: #{gnn_forward.1} parent=1 // pred_check_branch
      %75 = sbr.rel (0) target = $region89
    $region88: #{gnn_forward.1} parent=1 // pred_region
      loop: start=0, step=1, limit=1
      $region90: #{gnn_forward.1} parent=88 // loop_pre_header
        _
      $region91: #{gnn_forward.1} parent=88 // loop_header
        %s77 = sphi 0, %s81
        %p78 = scmp.ge.s32.totalorder %s77, 1
        %s82 = sphi %s5, %s5
        %s83 = sphi [#allocation2], [#allocation2]
      $region92: #{gnn_forward.1} parent=88 // loop_header_branch
        %80 = sbr.rel (%p78) target = $region96
      $region93: #{gnn_forward.1} parent=88 // loop_body
        %v84 = vld [vmem:[%s82] sm:$0xff]
        %85 = vst [vmem:[%s83] sm:$0xff] %v84
        %v86 = vld [vmem:[%s82 + $0x8] sm:$0xff]
        %87 = vst [vmem:[%s83 + $0x8] sm:$0xff] %v86
        %v88 = vld [vmem:[%s82 + $0x10] sm:$0xff]
        %89 = vst [vmem:[%s83 + $0x10] sm:$0xff] %v88
        %v90 = vld [vmem:[%s82 + $0x18] sm:$0xff]
        %91 = vst [vmem:[%s83 + $0x18] sm:$0xff] %v90
      $region94: #{gnn_forward.1} parent=88 // loop_footer
        %s81 = sadd.s32 1, %s77
      $region95: #{gnn_forward.1} parent=88 // loop_footer_branch
        %76 = sbr.rel target = $region91
      $region96: #{gnn_forward.1} parent=88 // loop_exit
        _
    $region89: #{gnn_forward.1} parent=1 // pred_fallthru
      _
    // Predicated region
    $region97: #{gnn_forward.1} parent=1 // pred_check
      _
    $region98: #{gnn_forward.1} parent=1 // pred_check_branch
      %93 = sbr.rel target = $region100
    $region99: #{gnn_forward.1} parent=1 // pred_region
      _
    $region100: #{gnn_forward.1} parent=1 // pred_fallthru
      _
    // Predicated region
    $region101: #{gnn_forward.1} parent=1 // pred_check
      _
    $region102: #{gnn_forward.1} parent=1 // pred_check_branch
      %96 = sbr.rel (0) target = $region104
    $region103: #{gnn_forward.1} parent=1 // pred_region
      %97 = vsyncadd [#allocation6], 512
    $region104: #{gnn_forward.1} parent=1 // pred_fallthru
      _
    %s98 = scalar_lea.sflag [#allocation6], 1
    // Predicated region
    $region105: #{gnn_forward.1} parent=1 // pred_check
      _
    $region106: #{gnn_forward.1} parent=1 // pred_check_branch
      %100 = sbr.rel (0) target = $region108
    $region107: #{gnn_forward.1} parent=1 // pred_region
      loop: start=0, step=1, limit=1
      $region109: #{gnn_forward.1} parent=107 // loop_pre_header
        _
      $region110: #{gnn_forward.1} parent=107 // loop_header
        %s102 = sphi 0, %s106
        %p103 = scmp.ge.s32.totalorder %s102, 1
        %s107 = sphi %s6, %s6
        %s108 = sphi [#allocation3], [#allocation3]
      $region111: #{gnn_forward.1} parent=107 // loop_header_branch
        %105 = sbr.rel (%p103) target = $region115
      $region112: #{gnn_forward.1} parent=107 // loop_body
        %v109 = vld [vmem:[%s107] sm:$0xff]
        %110 = vst [vmem:[%s108] sm:$0xff] %v109
        %v111 = vld [vmem:[%s107 + $0x8] sm:$0xff]
        %112 = vst [vmem:[%s108 + $0x8] sm:$0xff] %v111
        %v113 = vld [vmem:[%s107 + $0x10] sm:$0xff]
        %114 = vst [vmem:[%s108 + $0x10] sm:$0xff] %v113
        %v115 = vld [vmem:[%s107 + $0x18] sm:$0xff]
        %116 = vst [vmem:[%s108 + $0x18] sm:$0xff] %v115
        %v117 = vld [vmem:[%s107 + $0x20] sm:$0xff]
        %118 = vst [vmem:[%s108 + $0x20] sm:$0xff] %v117
        %v119 = vld [vmem:[%s107 + $0x28] sm:$0xff]
        %120 = vst [vmem:[%s108 + $0x28] sm:$0xff] %v119
        %v121 = vld [vmem:[%s107 + $0x30] sm:$0xff]
        %122 = vst [vmem:[%s108 + $0x30] sm:$0xff] %v121
        %v123 = vld [vmem:[%s107 + $0x38] sm:$0xff]
        %124 = vst [vmem:[%s108 + $0x38] sm:$0xff] %v123
        %v125 = vld [vmem:[%s107 + $0x40] sm:$0xff]
        %126 = vst [vmem:[%s108 + $0x40] sm:$0xff] %v125
        %v127 = vld [vmem:[%s107 + $0x48] sm:$0xff]
        %128 = vst [vmem:[%s108 + $0x48] sm:$0xff] %v127
        %v129 = vld [vmem:[%s107 + $0x50] sm:$0xff]
        %130 = vst [vmem:[%s108 + $0x50] sm:$0xff] %v129
        %v131 = vld [vmem:[%s107 + $0x58] sm:$0xff]
        %132 = vst [vmem:[%s108 + $0x58] sm:$0xff] %v131
        %v133 = vld [vmem:[%s107 + $0x60] sm:$0xff]
        %134 = vst [vmem:[%s108 + $0x60] sm:$0xff] %v133
        %v135 = vld [vmem:[%s107 + $0x68] sm:$0xff]
        %136 = vst [vmem:[%s108 + $0x68] sm:$0xff] %v135
        %v137 = vld [vmem:[%s107 + $0x70] sm:$0xff]
        %138 = vst [vmem:[%s108 + $0x70] sm:$0xff] %v137
        %v139 = vld [vmem:[%s107 + $0x78] sm:$0xff]
        %140 = vst [vmem:[%s108 + $0x78] sm:$0xff] %v139
        %v141 = vld [vmem:[%s107 + $0x80] sm:$0xff]
        %142 = vst [vmem:[%s108 + $0x80] sm:$0xff] %v141
        %v143 = vld [vmem:[%s107 + $0x88] sm:$0xff]
        %144 = vst [vmem:[%s108 + $0x88] sm:$0xff] %v143
        %v145 = vld [vmem:[%s107 + $0x90] sm:$0xff]
        %146 = vst [vmem:[%s108 + $0x90] sm:$0xff] %v145
        %v147 = vld [vmem:[%s107 + $0x98] sm:$0xff]
        %148 = vst [vmem:[%s108 + $0x98] sm:$0xff] %v147
        %v149 = vld [vmem:[%s107 + $0xa0] sm:$0xff]
        %150 = vst [vmem:[%s108 + $0xa0] sm:$0xff] %v149
        %v151 = vld [vmem:[%s107 + $0xa8] sm:$0xff]
        %152 = vst [vmem:[%s108 + $0xa8] sm:$0xff] %v151
        %v153 = vld [vmem:[%s107 + $0xb0] sm:$0xff]
        %154 = vst [vmem:[%s108 + $0xb0] sm:$0xff] %v153
        %v155 = vld [vmem:[%s107 + $0xb8] sm:$0xff]
        %156 = vst [vmem:[%s108 + $0xb8] sm:$0xff] %v155
        %v157 = vld [vmem:[%s107 + $0xc0] sm:$0xff]
        %158 = vst [vmem:[%s108 + $0xc0] sm:$0xff] %v157
        %v159 = vld [vmem:[%s107 + $0xc8] sm:$0xff]
        %160 = vst [vmem:[%s108 + $0xc8] sm:$0xff] %v159
        %v161 = vld [vmem:[%s107 + $0xd0] sm:$0xff]
        %162 = vst [vmem:[%s108 + $0xd0] sm:$0xff] %v161
        %v163 = vld [vmem:[%s107 + $0xd8] sm:$0xff]
        %164 = vst [vmem:[%s108 + $0xd8] sm:$0xff] %v163
        %v165 = vld [vmem:[%s107 + $0xe0] sm:$0xff]
        %166 = vst [vmem:[%s108 + $0xe0] sm:$0xff] %v165
        %v167 = vld [vmem:[%s107 + $0xe8] sm:$0xff]
        %168 = vst [vmem:[%s108 + $0xe8] sm:$0xff] %v167
        %v169 = vld [vmem:[%s107 + $0xf0] sm:$0xff]
        %170 = vst [vmem:[%s108 + $0xf0] sm:$0xff] %v169
        %v171 = vld [vmem:[%s107 + $0xf8] sm:$0xff]
        %172 = vst [vmem:[%s108 + $0xf8] sm:$0xff] %v171
        %v173 = vld [vmem:[%s107 + $0x100] sm:$0xff]
        %174 = vst [vmem:[%s108 + $0x100] sm:$0xff] %v173
        %v175 = vld [vmem:[%s107 + $0x108] sm:$0xff]
        %176 = vst [vmem:[%s108 + $0x108] sm:$0xff] %v175
        %v177 = vld [vmem:[%s107 + $0x110] sm:$0xff]
        %178 = vst [vmem:[%s108 + $0x110] sm:$0xff] %v177
        %v179 = vld [vmem:[%s107 + $0x118] sm:$0xff]
        %180 = vst [vmem:[%s108 + $0x118] sm:$0xff] %v179
        %v181 = vld [vmem:[%s107 + $0x120] sm:$0xff]
        %182 = vst [vmem:[%s108 + $0x120] sm:$0xff] %v181
        %v183 = vld [vmem:[%s107 + $0x128] sm:$0xff]
        %184 = vst [vmem:[%s108 + $0x128] sm:$0xff] %v183
        %v185 = vld [vmem:[%s107 + $0x130] sm:$0xff]
        %186 = vst [vmem:[%s108 + $0x130] sm:$0xff] %v185
        %v187 = vld [vmem:[%s107 + $0x138] sm:$0xff]
        %188 = vst [vmem:[%s108 + $0x138] sm:$0xff] %v187
        %v189 = vld [vmem:[%s107 + $0x140] sm:$0xff]
        %190 = vst [vmem:[%s108 + $0x140] sm:$0xff] %v189
        %v191 = vld [vmem:[%s107 + $0x148] sm:$0xff]
        %192 = vst [vmem:[%s108 + $0x148] sm:$0xff] %v191
        %v193 = vld [vmem:[%s107 + $0x150] sm:$0xff]
        %194 = vst [vmem:[%s108 + $0x150] sm:$0xff] %v193
        %v195 = vld [vmem:[%s107 + $0x158] sm:$0xff]
        %196 = vst [vmem:[%s108 + $0x158] sm:$0xff] %v195
        %v197 = vld [vmem:[%s107 + $0x160] sm:$0xff]
        %198 = vst [vmem:[%s108 + $0x160] sm:$0xff] %v197
        %v199 = vld [vmem:[%s107 + $0x168] sm:$0xff]
        %200 = vst [vmem:[%s108 + $0x168] sm:$0xff] %v199
        %v201 = vld [vmem:[%s107 + $0x170] sm:$0xff]
        %202 = vst [vmem:[%s108 + $0x170] sm:$0xff] %v201
        %v203 = vld [vmem:[%s107 + $0x178] sm:$0xff]
        %204 = vst [vmem:[%s108 + $0x178] sm:$0xff] %v203
        %v205 = vld [vmem:[%s107 + $0x180] sm:$0xff]
        %206 = vst [vmem:[%s108 + $0x180] sm:$0xff] %v205
        %v207 = vld [vmem:[%s107 + $0x188] sm:$0xff]
        %208 = vst [vmem:[%s108 + $0x188] sm:$0xff] %v207
        %v209 = vld [vmem:[%s107 + $0x190] sm:$0xff]
        %210 = vst [vmem:[%s108 + $0x190] sm:$0xff] %v209
        %v211 = vld [vmem:[%s107 + $0x198] sm:$0xff]
        %212 = vst [vmem:[%s108 + $0x198] sm:$0xff] %v211
        %v213 = vld [vmem:[%s107 + $0x1a0] sm:$0xff]
        %214 = vst [vmem:[%s108 + $0x1a0] sm:$0xff] %v213
        %v215 = vld [vmem:[%s107 + $0x1a8] sm:$0xff]
        %216 = vst [vmem:[%s108 + $0x1a8] sm:$0xff] %v215
        %v217 = vld [vmem:[%s107 + $0x1b0] sm:$0xff]
        %218 = vst [vmem:[%s108 + $0x1b0] sm:$0xff] %v217
        %v219 = vld [vmem:[%s107 + $0x1b8] sm:$0xff]
        %220 = vst [vmem:[%s108 + $0x1b8] sm:$0xff] %v219
        %v221 = vld [vmem:[%s107 + $0x1c0] sm:$0xff]
        %222 = vst [vmem:[%s108 + $0x1c0] sm:$0xff] %v221
        %v223 = vld [vmem:[%s107 + $0x1c8] sm:$0xff]
        %224 = vst [vmem:[%s108 + $0x1c8] sm:$0xff] %v223
        %v225 = vld [vmem:[%s107 + $0x1d0] sm:$0xff]
        %226 = vst [vmem:[%s108 + $0x1d0] sm:$0xff] %v225
        %v227 = vld [vmem:[%s107 + $0x1d8] sm:$0xff]
        %228 = vst [vmem:[%s108 + $0x1d8] sm:$0xff] %v227
        %v229 = vld [vmem:[%s107 + $0x1e0] sm:$0xff]
        %230 = vst [vmem:[%s108 + $0x1e0] sm:$0xff] %v229
        %v231 = vld [vmem:[%s107 + $0x1e8] sm:$0xff]
        %232 = vst [vmem:[%s108 + $0x1e8] sm:$0xff] %v231
        %v233 = vld [vmem:[%s107 + $0x1f0] sm:$0xff]
        %234 = vst [vmem:[%s108 + $0x1f0] sm:$0xff] %v233
        %v235 = vld [vmem:[%s107 + $0x1f8] sm:$0xff]
        %236 = vst [vmem:[%s108 + $0x1f8] sm:$0xff] %v235
        %v237 = vld [vmem:[%s107 + $0x200] sm:$0xff]
        %238 = vst [vmem:[%s108 + $0x200] sm:$0xff] %v237
        %v239 = vld [vmem:[%s107 + $0x208] sm:$0xff]
        %240 = vst [vmem:[%s108 + $0x208] sm:$0xff] %v239
        %v241 = vld [vmem:[%s107 + $0x210] sm:$0xff]
        %242 = vst [vmem:[%s108 + $0x210] sm:$0xff] %v241
        %v243 = vld [vmem:[%s107 + $0x218] sm:$0xff]
        %244 = vst [vmem:[%s108 + $0x218] sm:$0xff] %v243
        %v245 = vld [vmem:[%s107 + $0x220] sm:$0xff]
        %246 = vst [vmem:[%s108 + $0x220] sm:$0xff] %v245
        %v247 = vld [vmem:[%s107 + $0x228] sm:$0xff]
        %248 = vst [vmem:[%s108 + $0x228] sm:$0xff] %v247
        %v249 = vld [vmem:[%s107 + $0x230] sm:$0xff]
        %250 = vst [vmem:[%s108 + $0x230] sm:$0xff] %v249
        %v251 = vld [vmem:[%s107 + $0x238] sm:$0xff]
        %252 = vst [vmem:[%s108 + $0x238] sm:$0xff] %v251
        %v253 = vld [vmem:[%s107 + $0x240] sm:$0xff]
        %254 = vst [vmem:[%s108 + $0x240] sm:$0xff] %v253
        %v255 = vld [vmem:[%s107 + $0x248] sm:$0xff]
        %256 = vst [vmem:[%s108 + $0x248] sm:$0xff] %v255
        %v257 = vld [vmem:[%s107 + $0x250] sm:$0xff]
        %258 = vst [vmem:[%s108 + $0x250] sm:$0xff] %v257
        %v259 = vld [vmem:[%s107 + $0x258] sm:$0xff]
        %260 = vst [vmem:[%s108 + $0x258] sm:$0xff] %v259
        %v261 = vld [vmem:[%s107 + $0x260] sm:$0xff]
        %262 = vst [vmem:[%s108 + $0x260] sm:$0xff] %v261
        %v263 = vld [vmem:[%s107 + $0x268] sm:$0xff]
        %264 = vst [vmem:[%s108 + $0x268] sm:$0xff] %v263
        %v265 = vld [vmem:[%s107 + $0x270] sm:$0xff]
        %266 = vst [vmem:[%s108 + $0x270] sm:$0xff] %v265
        %v267 = vld [vmem:[%s107 + $0x278] sm:$0xff]
        %268 = vst [vmem:[%s108 + $0x278] sm:$0xff] %v267
        %v269 = vld [vmem:[%s107 + $0x280] sm:$0xff]
        %270 = vst [vmem:[%s108 + $0x280] sm:$0xff] %v269
        %v271 = vld [vmem:[%s107 + $0x288] sm:$0xff]
        %272 = vst [vmem:[%s108 + $0x288] sm:$0xff] %v271
        %v273 = vld [vmem:[%s107 + $0x290] sm:$0xff]
        %274 = vst [vmem:[%s108 + $0x290] sm:$0xff] %v273
        %v275 = vld [vmem:[%s107 + $0x298] sm:$0xff]
        %276 = vst [vmem:[%s108 + $0x298] sm:$0xff] %v275
        %v277 = vld [vmem:[%s107 + $0x2a0] sm:$0xff]
        %278 = vst [vmem:[%s108 + $0x2a0] sm:$0xff] %v277
        %v279 = vld [vmem:[%s107 + $0x2a8] sm:$0xff]
        %280 = vst [vmem:[%s108 + $0x2a8] sm:$0xff] %v279
        %v281 = vld [vmem:[%s107 + $0x2b0] sm:$0xff]
        %282 = vst [vmem:[%s108 + $0x2b0] sm:$0xff] %v281
        %v283 = vld [vmem:[%s107 + $0x2b8] sm:$0xff]
        %284 = vst [vmem:[%s108 + $0x2b8] sm:$0xff] %v283
        %v285 = vld [vmem:[%s107 + $0x2c0] sm:$0xff]
        %286 = vst [vmem:[%s108 + $0x2c0] sm:$0xff] %v285
        %v287 = vld [vmem:[%s107 + $0x2c8] sm:$0xff]
        %288 = vst [vmem:[%s108 + $0x2c8] sm:$0xff] %v287
        %v289 = vld [vmem:[%s107 + $0x2d0] sm:$0xff]
        %290 = vst [vmem:[%s108 + $0x2d0] sm:$0xff] %v289
        %v291 = vld [vmem:[%s107 + $0x2d8] sm:$0xff]
        %292 = vst [vmem:[%s108 + $0x2d8] sm:$0xff] %v291
        %v293 = vld [vmem:[%s107 + $0x2e0] sm:$0xff]
        %294 = vst [vmem:[%s108 + $0x2e0] sm:$0xff] %v293
        %v295 = vld [vmem:[%s107 + $0x2e8] sm:$0xff]
        %296 = vst [vmem:[%s108 + $0x2e8] sm:$0xff] %v295
        %v297 = vld [vmem:[%s107 + $0x2f0] sm:$0xff]
        %298 = vst [vmem:[%s108 + $0x2f0] sm:$0xff] %v297
        %v299 = vld [vmem:[%s107 + $0x2f8] sm:$0xff]
        %300 = vst [vmem:[%s108 + $0x2f8] sm:$0xff] %v299
        %v301 = vld [vmem:[%s107 + $0x300] sm:$0xff]
        %302 = vst [vmem:[%s108 + $0x300] sm:$0xff] %v301
        %v303 = vld [vmem:[%s107 + $0x308] sm:$0xff]
        %304 = vst [vmem:[%s108 + $0x308] sm:$0xff] %v303
        %v305 = vld [vmem:[%s107 + $0x310] sm:$0xff]
        %306 = vst [vmem:[%s108 + $0x310] sm:$0xff] %v305
        %v307 = vld [vmem:[%s107 + $0x318] sm:$0xff]
        %308 = vst [vmem:[%s108 + $0x318] sm:$0xff] %v307
        %v309 = vld [vmem:[%s107 + $0x320] sm:$0xff]
        %310 = vst [vmem:[%s108 + $0x320] sm:$0xff] %v309
        %v311 = vld [vmem:[%s107 + $0x328] sm:$0xff]
        %312 = vst [vmem:[%s108 + $0x328] sm:$0xff] %v311
        %v313 = vld [vmem:[%s107 + $0x330] sm:$0xff]
        %314 = vst [vmem:[%s108 + $0x330] sm:$0xff] %v313
        %v315 = vld [vmem:[%s107 + $0x338] sm:$0xff]
        %316 = vst [vmem:[%s108 + $0x338] sm:$0xff] %v315
        %v317 = vld [vmem:[%s107 + $0x340] sm:$0xff]
        %318 = vst [vmem:[%s108 + $0x340] sm:$0xff] %v317
        %v319 = vld [vmem:[%s107 + $0x348] sm:$0xff]
        %320 = vst [vmem:[%s108 + $0x348] sm:$0xff] %v319
        %v321 = vld [vmem:[%s107 + $0x350] sm:$0xff]
        %322 = vst [vmem:[%s108 + $0x350] sm:$0xff] %v321
        %v323 = vld [vmem:[%s107 + $0x358] sm:$0xff]
        %324 = vst [vmem:[%s108 + $0x358] sm:$0xff] %v323
        %v325 = vld [vmem:[%s107 + $0x360] sm:$0xff]
        %326 = vst [vmem:[%s108 + $0x360] sm:$0xff] %v325
        %v327 = vld [vmem:[%s107 + $0x368] sm:$0xff]
        %328 = vst [vmem:[%s108 + $0x368] sm:$0xff] %v327
        %v329 = vld [vmem:[%s107 + $0x370] sm:$0xff]
        %330 = vst [vmem:[%s108 + $0x370] sm:$0xff] %v329
        %v331 = vld [vmem:[%s107 + $0x378] sm:$0xff]
        %332 = vst [vmem:[%s108 + $0x378] sm:$0xff] %v331
        %v333 = vld [vmem:[%s107 + $0x380] sm:$0xff]
        %334 = vst [vmem:[%s108 + $0x380] sm:$0xff] %v333
        %v335 = vld [vmem:[%s107 + $0x388] sm:$0xff]
        %336 = vst [vmem:[%s108 + $0x388] sm:$0xff] %v335
        %v337 = vld [vmem:[%s107 + $0x390] sm:$0xff]
        %338 = vst [vmem:[%s108 + $0x390] sm:$0xff] %v337
        %v339 = vld [vmem:[%s107 + $0x398] sm:$0xff]
        %340 = vst [vmem:[%s108 + $0x398] sm:$0xff] %v339
        %v341 = vld [vmem:[%s107 + $0x3a0] sm:$0xff]
        %342 = vst [vmem:[%s108 + $0x3a0] sm:$0xff] %v341
        %v343 = vld [vmem:[%s107 + $0x3a8] sm:$0xff]
        %344 = vst [vmem:[%s108 + $0x3a8] sm:$0xff] %v343
        %v345 = vld [vmem:[%s107 + $0x3b0] sm:$0xff]
        %346 = vst [vmem:[%s108 + $0x3b0] sm:$0xff] %v345
        %v347 = vld [vmem:[%s107 + $0x3b8] sm:$0xff]
        %348 = vst [vmem:[%s108 + $0x3b8] sm:$0xff] %v347
        %v349 = vld [vmem:[%s107 + $0x3c0] sm:$0xff]
        %350 = vst [vmem:[%s108 + $0x3c0] sm:$0xff] %v349
        %v351 = vld [vmem:[%s107 + $0x3c8] sm:$0xff]
        %352 = vst [vmem:[%s108 + $0x3c8] sm:$0xff] %v351
        %v353 = vld [vmem:[%s107 + $0x3d0] sm:$0xff]
        %354 = vst [vmem:[%s108 + $0x3d0] sm:$0xff] %v353
        %v355 = vld [vmem:[%s107 + $0x3d8] sm:$0xff]
        %356 = vst [vmem:[%s108 + $0x3d8] sm:$0xff] %v355
        %v357 = vld [vmem:[%s107 + $0x3e0] sm:$0xff]
        %358 = vst [vmem:[%s108 + $0x3e0] sm:$0xff] %v357
        %v359 = vld [vmem:[%s107 + $0x3e8] sm:$0xff]
        %360 = vst [vmem:[%s108 + $0x3e8] sm:$0xff] %v359
        %v361 = vld [vmem:[%s107 + $0x3f0] sm:$0xff]
        %362 = vst [vmem:[%s108 + $0x3f0] sm:$0xff] %v361
        %v363 = vld [vmem:[%s107 + $0x3f8] sm:$0xff]
        %364 = vst [vmem:[%s108 + $0x3f8] sm:$0xff] %v363
        %v365 = vld [vmem:[%s107 + $0x400] sm:$0xff]
        %366 = vst [vmem:[%s108 + $0x400] sm:$0xff] %v365
        %v367 = vld [vmem:[%s107 + $0x408] sm:$0xff]
        %368 = vst [vmem:[%s108 + $0x408] sm:$0xff] %v367
        %v369 = vld [vmem:[%s107 + $0x410] sm:$0xff]
        %370 = vst [vmem:[%s108 + $0x410] sm:$0xff] %v369
        %v371 = vld [vmem:[%s107 + $0x418] sm:$0xff]
        %372 = vst [vmem:[%s108 + $0x418] sm:$0xff] %v371
        %v373 = vld [vmem:[%s107 + $0x420] sm:$0xff]
        %374 = vst [vmem:[%s108 + $0x420] sm:$0xff] %v373
        %v375 = vld [vmem:[%s107 + $0x428] sm:$0xff]
        %376 = vst [vmem:[%s108 + $0x428] sm:$0xff] %v375
        %v377 = vld [vmem:[%s107 + $0x430] sm:$0xff]
        %378 = vst [vmem:[%s108 + $0x430] sm:$0xff] %v377
        %v379 = vld [vmem:[%s107 + $0x438] sm:$0xff]
        %380 = vst [vmem:[%s108 + $0x438] sm:$0xff] %v379
        %v381 = vld [vmem:[%s107 + $0x440] sm:$0xff]
        %382 = vst [vmem:[%s108 + $0x440] sm:$0xff] %v381
        %v383 = vld [vmem:[%s107 + $0x448] sm:$0xff]
        %384 = vst [vmem:[%s108 + $0x448] sm:$0xff] %v383
        %v385 = vld [vmem:[%s107 + $0x450] sm:$0xff]
        %386 = vst [vmem:[%s108 + $0x450] sm:$0xff] %v385
        %v387 = vld [vmem:[%s107 + $0x458] sm:$0xff]
        %388 = vst [vmem:[%s108 + $0x458] sm:$0xff] %v387
        %v389 = vld [vmem:[%s107 + $0x460] sm:$0xff]
        %390 = vst [vmem:[%s108 + $0x460] sm:$0xff] %v389
        %v391 = vld [vmem:[%s107 + $0x468] sm:$0xff]
        %392 = vst [vmem:[%s108 + $0x468] sm:$0xff] %v391
        %v393 = vld [vmem:[%s107 + $0x470] sm:$0xff]
        %394 = vst [vmem:[%s108 + $0x470] sm:$0xff] %v393
        %v395 = vld [vmem:[%s107 + $0x478] sm:$0xff]
        %396 = vst [vmem:[%s108 + $0x478] sm:$0xff] %v395
        %v397 = vld [vmem:[%s107 + $0x480] sm:$0xff]
        %398 = vst [vmem:[%s108 + $0x480] sm:$0xff] %v397
        %v399 = vld [vmem:[%s107 + $0x488] sm:$0xff]
        %400 = vst [vmem:[%s108 + $0x488] sm:$0xff] %v399
        %v401 = vld [vmem:[%s107 + $0x490] sm:$0xff]
        %402 = vst [vmem:[%s108 + $0x490] sm:$0xff] %v401
        %v403 = vld [vmem:[%s107 + $0x498] sm:$0xff]
        %404 = vst [vmem:[%s108 + $0x498] sm:$0xff] %v403
        %v405 = vld [vmem:[%s107 + $0x4a0] sm:$0xff]
        %406 = vst [vmem:[%s108 + $0x4a0] sm:$0xff] %v405
        %v407 = vld [vmem:[%s107 + $0x4a8] sm:$0xff]
        %408 = vst [vmem:[%s108 + $0x4a8] sm:$0xff] %v407
        %v409 = vld [vmem:[%s107 + $0x4b0] sm:$0xff]
        %410 = vst [vmem:[%s108 + $0x4b0] sm:$0xff] %v409
        %v411 = vld [vmem:[%s107 + $0x4b8] sm:$0xff]
        %412 = vst [vmem:[%s108 + $0x4b8] sm:$0xff] %v411
        %v413 = vld [vmem:[%s107 + $0x4c0] sm:$0xff]
        %414 = vst [vmem:[%s108 + $0x4c0] sm:$0xff] %v413
        %v415 = vld [vmem:[%s107 + $0x4c8] sm:$0xff]
        %416 = vst [vmem:[%s108 + $0x4c8] sm:$0xff] %v415
        %v417 = vld [vmem:[%s107 + $0x4d0] sm:$0xff]
        %418 = vst [vmem:[%s108 + $0x4d0] sm:$0xff] %v417
        %v419 = vld [vmem:[%s107 + $0x4d8] sm:$0xff]
        %420 = vst [vmem:[%s108 + $0x4d8] sm:$0xff] %v419
        %v421 = vld [vmem:[%s107 + $0x4e0] sm:$0xff]
        %422 = vst [vmem:[%s108 + $0x4e0] sm:$0xff] %v421
        %v423 = vld [vmem:[%s107 + $0x4e8] sm:$0xff]
        %424 = vst [vmem:[%s108 + $0x4e8] sm:$0xff] %v423
        %v425 = vld [vmem:[%s107 + $0x4f0] sm:$0xff]
        %426 = vst [vmem:[%s108 + $0x4f0] sm:$0xff] %v425
        %v427 = vld [vmem:[%s107 + $0x4f8] sm:$0xff]
        %428 = vst [vmem:[%s108 + $0x4f8] sm:$0xff] %v427
        %v429 = vld [vmem:[%s107 + $0x500] sm:$0xff]
        %430 = vst [vmem:[%s108 + $0x500] sm:$0xff] %v429
        %v431 = vld [vmem:[%s107 + $0x508] sm:$0xff]
        %432 = vst [vmem:[%s108 + $0x508] sm:$0xff] %v431
        %v433 = vld [vmem:[%s107 + $0x510] sm:$0xff]
        %434 = vst [vmem:[%s108 + $0x510] sm:$0xff] %v433
        %v435 = vld [vmem:[%s107 + $0x518] sm:$0xff]
        %436 = vst [vmem:[%s108 + $0x518] sm:$0xff] %v435
        %v437 = vld [vmem:[%s107 + $0x520] sm:$0xff]
        %438 = vst [vmem:[%s108 + $0x520] sm:$0xff] %v437
        %v439 = vld [vmem:[%s107 + $0x528] sm:$0xff]
        %440 = vst [vmem:[%s108 + $0x528] sm:$0xff] %v439
        %v441 = vld [vmem:[%s107 + $0x530] sm:$0xff]
        %442 = vst [vmem:[%s108 + $0x530] sm:$0xff] %v441
        %v443 = vld [vmem:[%s107 + $0x538] sm:$0xff]
        %444 = vst [vmem:[%s108 + $0x538] sm:$0xff] %v443
        %v445 = vld [vmem:[%s107 + $0x540] sm:$0xff]
        %446 = vst [vmem:[%s108 + $0x540] sm:$0xff] %v445
        %v447 = vld [vmem:[%s107 + $0x548] sm:$0xff]
        %448 = vst [vmem:[%s108 + $0x548] sm:$0xff] %v447
        %v449 = vld [vmem:[%s107 + $0x550] sm:$0xff]
        %450 = vst [vmem:[%s108 + $0x550] sm:$0xff] %v449
        %v451 = vld [vmem:[%s107 + $0x558] sm:$0xff]
        %452 = vst [vmem:[%s108 + $0x558] sm:$0xff] %v451
        %v453 = vld [vmem:[%s107 + $0x560] sm:$0xff]
        %454 = vst [vmem:[%s108 + $0x560] sm:$0xff] %v453
        %v455 = vld [vmem:[%s107 + $0x568] sm:$0xff]
        %456 = vst [vmem:[%s108 + $0x568] sm:$0xff] %v455
        %v457 = vld [vmem:[%s107 + $0x570] sm:$0xff]
        %458 = vst [vmem:[%s108 + $0x570] sm:$0xff] %v457
        %v459 = vld [vmem:[%s107 + $0x578] sm:$0xff]
        %460 = vst [vmem:[%s108 + $0x578] sm:$0xff] %v459
        %v461 = vld [vmem:[%s107 + $0x580] sm:$0xff]
        %462 = vst [vmem:[%s108 + $0x580] sm:$0xff] %v461
        %v463 = vld [vmem:[%s107 + $0x588] sm:$0xff]
        %464 = vst [vmem:[%s108 + $0x588] sm:$0xff] %v463
        %v465 = vld [vmem:[%s107 + $0x590] sm:$0xff]
        %466 = vst [vmem:[%s108 + $0x590] sm:$0xff] %v465
        %v467 = vld [vmem:[%s107 + $0x598] sm:$0xff]
        %468 = vst [vmem:[%s108 + $0x598] sm:$0xff] %v467
        %v469 = vld [vmem:[%s107 + $0x5a0] sm:$0xff]
        %470 = vst [vmem:[%s108 + $0x5a0] sm:$0xff] %v469
        %v471 = vld [vmem:[%s107 + $0x5a8] sm:$0xff]
        %472 = vst [vmem:[%s108 + $0x5a8] sm:$0xff] %v471
        %v473 = vld [vmem:[%s107 + $0x5b0] sm:$0xff]
        %474 = vst [vmem:[%s108 + $0x5b0] sm:$0xff] %v473
        %v475 = vld [vmem:[%s107 + $0x5b8] sm:$0xff]
        %476 = vst [vmem:[%s108 + $0x5b8] sm:$0xff] %v475
        %v477 = vld [vmem:[%s107 + $0x5c0] sm:$0xff]
        %478 = vst [vmem:[%s108 + $0x5c0] sm:$0xff] %v477
        %v479 = vld [vmem:[%s107 + $0x5c8] sm:$0xff]
        %480 = vst [vmem:[%s108 + $0x5c8] sm:$0xff] %v479
        %v481 = vld [vmem:[%s107 + $0x5d0] sm:$0xff]
        %482 = vst [vmem:[%s108 + $0x5d0] sm:$0xff] %v481
        %v483 = vld [vmem:[%s107 + $0x5d8] sm:$0xff]
        %484 = vst [vmem:[%s108 + $0x5d8] sm:$0xff] %v483
        %v485 = vld [vmem:[%s107 + $0x5e0] sm:$0xff]
        %486 = vst [vmem:[%s108 + $0x5e0] sm:$0xff] %v485
        %v487 = vld [vmem:[%s107 + $0x5e8] sm:$0xff]
        %488 = vst [vmem:[%s108 + $0x5e8] sm:$0xff] %v487
        %v489 = vld [vmem:[%s107 + $0x5f0] sm:$0xff]
        %490 = vst [vmem:[%s108 + $0x5f0] sm:$0xff] %v489
        %v491 = vld [vmem:[%s107 + $0x5f8] sm:$0xff]
        %492 = vst [vmem:[%s108 + $0x5f8] sm:$0xff] %v491
        %v493 = vld [vmem:[%s107 + $0x600] sm:$0xff]
        %494 = vst [vmem:[%s108 + $0x600] sm:$0xff] %v493
        %v495 = vld [vmem:[%s107 + $0x608] sm:$0xff]
        %496 = vst [vmem:[%s108 + $0x608] sm:$0xff] %v495
        %v497 = vld [vmem:[%s107 + $0x610] sm:$0xff]
        %498 = vst [vmem:[%s108 + $0x610] sm:$0xff] %v497
        %v499 = vld [vmem:[%s107 + $0x618] sm:$0xff]
        %500 = vst [vmem:[%s108 + $0x618] sm:$0xff] %v499
        %v501 = vld [vmem:[%s107 + $0x620] sm:$0xff]
        %502 = vst [vmem:[%s108 + $0x620] sm:$0xff] %v501
        %v503 = vld [vmem:[%s107 + $0x628] sm:$0xff]
        %504 = vst [vmem:[%s108 + $0x628] sm:$0xff] %v503
        %v505 = vld [vmem:[%s107 + $0x630] sm:$0xff]
        %506 = vst [vmem:[%s108 + $0x630] sm:$0xff] %v505
        %v507 = vld [vmem:[%s107 + $0x638] sm:$0xff]
        %508 = vst [vmem:[%s108 + $0x638] sm:$0xff] %v507
        %v509 = vld [vmem:[%s107 + $0x640] sm:$0xff]
        %510 = vst [vmem:[%s108 + $0x640] sm:$0xff] %v509
        %v511 = vld [vmem:[%s107 + $0x648] sm:$0xff]
        %512 = vst [vmem:[%s108 + $0x648] sm:$0xff] %v511
        %v513 = vld [vmem:[%s107 + $0x650] sm:$0xff]
        %514 = vst [vmem:[%s108 + $0x650] sm:$0xff] %v513
        %v515 = vld [vmem:[%s107 + $0x658] sm:$0xff]
        %516 = vst [vmem:[%s108 + $0x658] sm:$0xff] %v515
        %v517 = vld [vmem:[%s107 + $0x660] sm:$0xff]
        %518 = vst [vmem:[%s108 + $0x660] sm:$0xff] %v517
        %v519 = vld [vmem:[%s107 + $0x668] sm:$0xff]
        %520 = vst [vmem:[%s108 + $0x668] sm:$0xff] %v519
        %v521 = vld [vmem:[%s107 + $0x670] sm:$0xff]
        %522 = vst [vmem:[%s108 + $0x670] sm:$0xff] %v521
        %v523 = vld [vmem:[%s107 + $0x678] sm:$0xff]
        %524 = vst [vmem:[%s108 + $0x678] sm:$0xff] %v523
        %v525 = vld [vmem:[%s107 + $0x680] sm:$0xff]
        %526 = vst [vmem:[%s108 + $0x680] sm:$0xff] %v525
        %v527 = vld [vmem:[%s107 + $0x688] sm:$0xff]
        %528 = vst [vmem:[%s108 + $0x688] sm:$0xff] %v527
        %v529 = vld [vmem:[%s107 + $0x690] sm:$0xff]
        %530 = vst [vmem:[%s108 + $0x690] sm:$0xff] %v529
        %v531 = vld [vmem:[%s107 + $0x698] sm:$0xff]
        %532 = vst [vmem:[%s108 + $0x698] sm:$0xff] %v531
        %v533 = vld [vmem:[%s107 + $0x6a0] sm:$0xff]
        %534 = vst [vmem:[%s108 + $0x6a0] sm:$0xff] %v533
        %v535 = vld [vmem:[%s107 + $0x6a8] sm:$0xff]
        %536 = vst [vmem:[%s108 + $0x6a8] sm:$0xff] %v535
        %v537 = vld [vmem:[%s107 + $0x6b0] sm:$0xff]
        %538 = vst [vmem:[%s108 + $0x6b0] sm:$0xff] %v537
        %v539 = vld [vmem:[%s107 + $0x6b8] sm:$0xff]
        %540 = vst [vmem:[%s108 + $0x6b8] sm:$0xff] %v539
        %v541 = vld [vmem:[%s107 + $0x6c0] sm:$0xff]
        %542 = vst [vmem:[%s108 + $0x6c0] sm:$0xff] %v541
        %v543 = vld [vmem:[%s107 + $0x6c8] sm:$0xff]
        %544 = vst [vmem:[%s108 + $0x6c8] sm:$0xff] %v543
        %v545 = vld [vmem:[%s107 + $0x6d0] sm:$0xff]
        %546 = vst [vmem:[%s108 + $0x6d0] sm:$0xff] %v545
        %v547 = vld [vmem:[%s107 + $0x6d8] sm:$0xff]
        %548 = vst [vmem:[%s108 + $0x6d8] sm:$0xff] %v547
        %v549 = vld [vmem:[%s107 + $0x6e0] sm:$0xff]
        %550 = vst [vmem:[%s108 + $0x6e0] sm:$0xff] %v549
        %v551 = vld [vmem:[%s107 + $0x6e8] sm:$0xff]
        %552 = vst [vmem:[%s108 + $0x6e8] sm:$0xff] %v551
        %v553 = vld [vmem:[%s107 + $0x6f0] sm:$0xff]
        %554 = vst [vmem:[%s108 + $0x6f0] sm:$0xff] %v553
        %v555 = vld [vmem:[%s107 + $0x6f8] sm:$0xff]
        %556 = vst [vmem:[%s108 + $0x6f8] sm:$0xff] %v555
        %v557 = vld [vmem:[%s107 + $0x700] sm:$0xff]
        %558 = vst [vmem:[%s108 + $0x700] sm:$0xff] %v557
        %v559 = vld [vmem:[%s107 + $0x708] sm:$0xff]
        %560 = vst [vmem:[%s108 + $0x708] sm:$0xff] %v559
        %v561 = vld [vmem:[%s107 + $0x710] sm:$0xff]
        %562 = vst [vmem:[%s108 + $0x710] sm:$0xff] %v561
        %v563 = vld [vmem:[%s107 + $0x718] sm:$0xff]
        %564 = vst [vmem:[%s108 + $0x718] sm:$0xff] %v563
        %v565 = vld [vmem:[%s107 + $0x720] sm:$0xff]
        %566 = vst [vmem:[%s108 + $0x720] sm:$0xff] %v565
        %v567 = vld [vmem:[%s107 + $0x728] sm:$0xff]
        %568 = vst [vmem:[%s108 + $0x728] sm:$0xff] %v567
        %v569 = vld [vmem:[%s107 + $0x730] sm:$0xff]
        %570 = vst [vmem:[%s108 + $0x730] sm:$0xff] %v569
        %v571 = vld [vmem:[%s107 + $0x738] sm:$0xff]
        %572 = vst [vmem:[%s108 + $0x738] sm:$0xff] %v571
        %v573 = vld [vmem:[%s107 + $0x740] sm:$0xff]
        %574 = vst [vmem:[%s108 + $0x740] sm:$0xff] %v573
        %v575 = vld [vmem:[%s107 + $0x748] sm:$0xff]
        %576 = vst [vmem:[%s108 + $0x748] sm:$0xff] %v575
        %v577 = vld [vmem:[%s107 + $0x750] sm:$0xff]
        %578 = vst [vmem:[%s108 + $0x750] sm:$0xff] %v577
        %v579 = vld [vmem:[%s107 + $0x758] sm:$0xff]
        %580 = vst [vmem:[%s108 + $0x758] sm:$0xff] %v579
        %v581 = vld [vmem:[%s107 + $0x760] sm:$0xff]
        %582 = vst [vmem:[%s108 + $0x760] sm:$0xff] %v581
        %v583 = vld [vmem:[%s107 + $0x768] sm:$0xff]
        %584 = vst [vmem:[%s108 + $0x768] sm:$0xff] %v583
        %v585 = vld [vmem:[%s107 + $0x770] sm:$0xff]
        %586 = vst [vmem:[%s108 + $0x770] sm:$0xff] %v585
        %v587 = vld [vmem:[%s107 + $0x778] sm:$0xff]
        %588 = vst [vmem:[%s108 + $0x778] sm:$0xff] %v587
        %v589 = vld [vmem:[%s107 + $0x780] sm:$0xff]
        %590 = vst [vmem:[%s108 + $0x780] sm:$0xff] %v589
        %v591 = vld [vmem:[%s107 + $0x788] sm:$0xff]
        %592 = vst [vmem:[%s108 + $0x788] sm:$0xff] %v591
        %v593 = vld [vmem:[%s107 + $0x790] sm:$0xff]
        %594 = vst [vmem:[%s108 + $0x790] sm:$0xff] %v593
        %v595 = vld [vmem:[%s107 + $0x798] sm:$0xff]
        %596 = vst [vmem:[%s108 + $0x798] sm:$0xff] %v595
        %v597 = vld [vmem:[%s107 + $0x7a0] sm:$0xff]
        %598 = vst [vmem:[%s108 + $0x7a0] sm:$0xff] %v597
        %v599 = vld [vmem:[%s107 + $0x7a8] sm:$0xff]
        %600 = vst [vmem:[%s108 + $0x7a8] sm:$0xff] %v599
        %v601 = vld [vmem:[%s107 + $0x7b0] sm:$0xff]
        %602 = vst [vmem:[%s108 + $0x7b0] sm:$0xff] %v601
        %v603 = vld [vmem:[%s107 + $0x7b8] sm:$0xff]
        %604 = vst [vmem:[%s108 + $0x7b8] sm:$0xff] %v603
        %v605 = vld [vmem:[%s107 + $0x7c0] sm:$0xff]
        %606 = vst [vmem:[%s108 + $0x7c0] sm:$0xff] %v605
        %v607 = vld [vmem:[%s107 + $0x7c8] sm:$0xff]
        %608 = vst [vmem:[%s108 + $0x7c8] sm:$0xff] %v607
        %v609 = vld [vmem:[%s107 + $0x7d0] sm:$0xff]
        %610 = vst [vmem:[%s108 + $0x7d0] sm:$0xff] %v609
        %v611 = vld [vmem:[%s107 + $0x7d8] sm:$0xff]
        %612 = vst [vmem:[%s108 + $0x7d8] sm:$0xff] %v611
        %v613 = vld [vmem:[%s107 + $0x7e0] sm:$0xff]
        %614 = vst [vmem:[%s108 + $0x7e0] sm:$0xff] %v613
        %v615 = vld [vmem:[%s107 + $0x7e8] sm:$0xff]
        %616 = vst [vmem:[%s108 + $0x7e8] sm:$0xff] %v615
        %v617 = vld [vmem:[%s107 + $0x7f0] sm:$0xff]
        %618 = vst [vmem:[%s108 + $0x7f0] sm:$0xff] %v617
        %v619 = vld [vmem:[%s107 + $0x7f8] sm:$0xff]
        %620 = vst [vmem:[%s108 + $0x7f8] sm:$0xff] %v619
      $region113: #{gnn_forward.1} parent=107 // loop_footer
        %s106 = sadd.s32 1, %s102
      $region114: #{gnn_forward.1} parent=107 // loop_footer_branch
        %101 = sbr.rel target = $region110
      $region115: #{gnn_forward.1} parent=107 // loop_exit
        _
    $region108: #{gnn_forward.1} parent=1 // pred_fallthru
      _
    // Predicated region
    $region116: #{gnn_forward.1} parent=1 // pred_check
      _
    $region117: #{gnn_forward.1} parent=1 // pred_check_branch
      %622 = sbr.rel target = $region119
    $region118: #{gnn_forward.1} parent=1 // pred_region
      _
    $region119: #{gnn_forward.1} parent=1 // pred_fallthru
      _
    // Predicated region
    $region120: #{gnn_forward.1} parent=1 // pred_check
      _
    $region121: #{gnn_forward.1} parent=1 // pred_check_branch
      %625 = sbr.rel (0) target = $region123
    $region122: #{gnn_forward.1} parent=1 // pred_region
      %626 = vsyncadd %s98, 32768
    $region123: #{gnn_forward.1} parent=1 // pred_fallthru
      _
    %s627 = scalar_lea.sflag [#allocation6], 2
    // Predicated region
    $region124: #{gnn_forward.1} parent=1 // pred_check
      _
    $region125: #{gnn_forward.1} parent=1 // pred_check_branch
      %629 = sbr.rel (0) target = $region127
    $region126: #{gnn_forward.1} parent=1 // pred_region
      loop: start=0, step=1, limit=1
      $region128: #{gnn_forward.1} parent=126 // loop_pre_header
        _
      $region129: #{gnn_forward.1} parent=126 // loop_header
        %s631 = sphi 0, %s635
        %p632 = scmp.ge.s32.totalorder %s631, 1
        %s636 = sphi %s7, %s7
        %s637 = sphi [#allocation4], [#allocation4]
      $region130: #{gnn_forward.1} parent=126 // loop_header_branch
        %634 = sbr.rel (%p632) target = $region134
      $region131: #{gnn_forward.1} parent=126 // loop_body
        %v638 = vld [vmem:[%s636] sm:$0xff]
        %639 = vst [vmem:[%s637] sm:$0xff] %v638
        %v640 = vld [vmem:[%s636 + $0x8] sm:$0xff]
        %641 = vst [vmem:[%s637 + $0x8] sm:$0xff] %v640
        %v642 = vld [vmem:[%s636 + $0x10] sm:$0xff]
        %643 = vst [vmem:[%s637 + $0x10] sm:$0xff] %v642
        %v644 = vld [vmem:[%s636 + $0x18] sm:$0xff]
        %645 = vst [vmem:[%s637 + $0x18] sm:$0xff] %v644
        %v646 = vld [vmem:[%s636 + $0x20] sm:$0xff]
        %647 = vst [vmem:[%s637 + $0x20] sm:$0xff] %v646
        %v648 = vld [vmem:[%s636 + $0x28] sm:$0xff]
        %649 = vst [vmem:[%s637 + $0x28] sm:$0xff] %v648
        %v650 = vld [vmem:[%s636 + $0x30] sm:$0xff]
        %651 = vst [vmem:[%s637 + $0x30] sm:$0xff] %v650
        %v652 = vld [vmem:[%s636 + $0x38] sm:$0xff]
        %653 = vst [vmem:[%s637 + $0x38] sm:$0xff] %v652
        %v654 = vld [vmem:[%s636 + $0x40] sm:$0xff]
        %655 = vst [vmem:[%s637 + $0x40] sm:$0xff] %v654
        %v656 = vld [vmem:[%s636 + $0x48] sm:$0xff]
        %657 = vst [vmem:[%s637 + $0x48] sm:$0xff] %v656
        %v658 = vld [vmem:[%s636 + $0x50] sm:$0xff]
        %659 = vst [vmem:[%s637 + $0x50] sm:$0xff] %v658
        %v660 = vld [vmem:[%s636 + $0x58] sm:$0xff]
        %661 = vst [vmem:[%s637 + $0x58] sm:$0xff] %v660
        %v662 = vld [vmem:[%s636 + $0x60] sm:$0xff]
        %663 = vst [vmem:[%s637 + $0x60] sm:$0xff] %v662
        %v664 = vld [vmem:[%s636 + $0x68] sm:$0xff]
        %665 = vst [vmem:[%s637 + $0x68] sm:$0xff] %v664
        %v666 = vld [vmem:[%s636 + $0x70] sm:$0xff]
        %667 = vst [vmem:[%s637 + $0x70] sm:$0xff] %v666
        %v668 = vld [vmem:[%s636 + $0x78] sm:$0xff]
        %669 = vst [vmem:[%s637 + $0x78] sm:$0xff] %v668
        %v670 = vld [vmem:[%s636 + $0x80] sm:$0xff]
        %671 = vst [vmem:[%s637 + $0x80] sm:$0xff] %v670
        %v672 = vld [vmem:[%s636 + $0x88] sm:$0xff]
        %673 = vst [vmem:[%s637 + $0x88] sm:$0xff] %v672
        %v674 = vld [vmem:[%s636 + $0x90] sm:$0xff]
        %675 = vst [vmem:[%s637 + $0x90] sm:$0xff] %v674
        %v676 = vld [vmem:[%s636 + $0x98] sm:$0xff]
        %677 = vst [vmem:[%s637 + $0x98] sm:$0xff] %v676
        %v678 = vld [vmem:[%s636 + $0xa0] sm:$0xff]
        %679 = vst [vmem:[%s637 + $0xa0] sm:$0xff] %v678
        %v680 = vld [vmem:[%s636 + $0xa8] sm:$0xff]
        %681 = vst [vmem:[%s637 + $0xa8] sm:$0xff] %v680
        %v682 = vld [vmem:[%s636 + $0xb0] sm:$0xff]
        %683 = vst [vmem:[%s637 + $0xb0] sm:$0xff] %v682
        %v684 = vld [vmem:[%s636 + $0xb8] sm:$0xff]
        %685 = vst [vmem:[%s637 + $0xb8] sm:$0xff] %v684
        %v686 = vld [vmem:[%s636 + $0xc0] sm:$0xff]
        %687 = vst [vmem:[%s637 + $0xc0] sm:$0xff] %v686
        %v688 = vld [vmem:[%s636 + $0xc8] sm:$0xff]
        %689 = vst [vmem:[%s637 + $0xc8] sm:$0xff] %v688
        %v690 = vld [vmem:[%s636 + $0xd0] sm:$0xff]
        %691 = vst [vmem:[%s637 + $0xd0] sm:$0xff] %v690
        %v692 = vld [vmem:[%s636 + $0xd8] sm:$0xff]
        %693 = vst [vmem:[%s637 + $0xd8] sm:$0xff] %v692
        %v694 = vld [vmem:[%s636 + $0xe0] sm:$0xff]
        %695 = vst [vmem:[%s637 + $0xe0] sm:$0xff] %v694
        %v696 = vld [vmem:[%s636 + $0xe8] sm:$0xff]
        %697 = vst [vmem:[%s637 + $0xe8] sm:$0xff] %v696
        %v698 = vld [vmem:[%s636 + $0xf0] sm:$0xff]
        %699 = vst [vmem:[%s637 + $0xf0] sm:$0xff] %v698
        %v700 = vld [vmem:[%s636 + $0xf8] sm:$0xff]
        %701 = vst [vmem:[%s637 + $0xf8] sm:$0xff] %v700
        %v702 = vld [vmem:[%s636 + $0x100] sm:$0xff]
        %703 = vst [vmem:[%s637 + $0x100] sm:$0xff] %v702
        %v704 = vld [vmem:[%s636 + $0x108] sm:$0xff]
        %705 = vst [vmem:[%s637 + $0x108] sm:$0xff] %v704
        %v706 = vld [vmem:[%s636 + $0x110] sm:$0xff]
        %707 = vst [vmem:[%s637 + $0x110] sm:$0xff] %v706
        %v708 = vld [vmem:[%s636 + $0x118] sm:$0xff]
        %709 = vst [vmem:[%s637 + $0x118] sm:$0xff] %v708
        %v710 = vld [vmem:[%s636 + $0x120] sm:$0xff]
        %711 = vst [vmem:[%s637 + $0x120] sm:$0xff] %v710
        %v712 = vld [vmem:[%s636 + $0x128] sm:$0xff]
        %713 = vst [vmem:[%s637 + $0x128] sm:$0xff] %v712
        %v714 = vld [vmem:[%s636 + $0x130] sm:$0xff]
        %715 = vst [vmem:[%s637 + $0x130] sm:$0xff] %v714
        %v716 = vld [vmem:[%s636 + $0x138] sm:$0xff]
        %717 = vst [vmem:[%s637 + $0x138] sm:$0xff] %v716
        %v718 = vld [vmem:[%s636 + $0x140] sm:$0xff]
        %719 = vst [vmem:[%s637 + $0x140] sm:$0xff] %v718
        %v720 = vld [vmem:[%s636 + $0x148] sm:$0xff]
        %721 = vst [vmem:[%s637 + $0x148] sm:$0xff] %v720
        %v722 = vld [vmem:[%s636 + $0x150] sm:$0xff]
        %723 = vst [vmem:[%s637 + $0x150] sm:$0xff] %v722
        %v724 = vld [vmem:[%s636 + $0x158] sm:$0xff]
        %725 = vst [vmem:[%s637 + $0x158] sm:$0xff] %v724
        %v726 = vld [vmem:[%s636 + $0x160] sm:$0xff]
        %727 = vst [vmem:[%s637 + $0x160] sm:$0xff] %v726
        %v728 = vld [vmem:[%s636 + $0x168] sm:$0xff]
        %729 = vst [vmem:[%s637 + $0x168] sm:$0xff] %v728
        %v730 = vld [vmem:[%s636 + $0x170] sm:$0xff]
        %731 = vst [vmem:[%s637 + $0x170] sm:$0xff] %v730
        %v732 = vld [vmem:[%s636 + $0x178] sm:$0xff]
        %733 = vst [vmem:[%s637 + $0x178] sm:$0xff] %v732
        %v734 = vld [vmem:[%s636 + $0x180] sm:$0xff]
        %735 = vst [vmem:[%s637 + $0x180] sm:$0xff] %v734
        %v736 = vld [vmem:[%s636 + $0x188] sm:$0xff]
        %737 = vst [vmem:[%s637 + $0x188] sm:$0xff] %v736
        %v738 = vld [vmem:[%s636 + $0x190] sm:$0xff]
        %739 = vst [vmem:[%s637 + $0x190] sm:$0xff] %v738
        %v740 = vld [vmem:[%s636 + $0x198] sm:$0xff]
        %741 = vst [vmem:[%s637 + $0x198] sm:$0xff] %v740
        %v742 = vld [vmem:[%s636 + $0x1a0] sm:$0xff]
        %743 = vst [vmem:[%s637 + $0x1a0] sm:$0xff] %v742
        %v744 = vld [vmem:[%s636 + $0x1a8] sm:$0xff]
        %745 = vst [vmem:[%s637 + $0x1a8] sm:$0xff] %v744
        %v746 = vld [vmem:[%s636 + $0x1b0] sm:$0xff]
        %747 = vst [vmem:[%s637 + $0x1b0] sm:$0xff] %v746
        %v748 = vld [vmem:[%s636 + $0x1b8] sm:$0xff]
        %749 = vst [vmem:[%s637 + $0x1b8] sm:$0xff] %v748
        %v750 = vld [vmem:[%s636 + $0x1c0] sm:$0xff]
        %751 = vst [vmem:[%s637 + $0x1c0] sm:$0xff] %v750
        %v752 = vld [vmem:[%s636 + $0x1c8] sm:$0xff]
        %753 = vst [vmem:[%s637 + $0x1c8] sm:$0xff] %v752
        %v754 = vld [vmem:[%s636 + $0x1d0] sm:$0xff]
        %755 = vst [vmem:[%s637 + $0x1d0] sm:$0xff] %v754
        %v756 = vld [vmem:[%s636 + $0x1d8] sm:$0xff]
        %757 = vst [vmem:[%s637 + $0x1d8] sm:$0xff] %v756
        %v758 = vld [vmem:[%s636 + $0x1e0] sm:$0xff]
        %759 = vst [vmem:[%s637 + $0x1e0] sm:$0xff] %v758
        %v760 = vld [vmem:[%s636 + $0x1e8] sm:$0xff]
        %761 = vst [vmem:[%s637 + $0x1e8] sm:$0xff] %v760
        %v762 = vld [vmem:[%s636 + $0x1f0] sm:$0xff]
        %763 = vst [vmem:[%s637 + $0x1f0] sm:$0xff] %v762
        %v764 = vld [vmem:[%s636 + $0x1f8] sm:$0xff]
        %765 = vst [vmem:[%s637 + $0x1f8] sm:$0xff] %v764
        %v766 = vld [vmem:[%s636 + $0x200] sm:$0xff]
        %767 = vst [vmem:[%s637 + $0x200] sm:$0xff] %v766
        %v768 = vld [vmem:[%s636 + $0x208] sm:$0xff]
        %769 = vst [vmem:[%s637 + $0x208] sm:$0xff] %v768
        %v770 = vld [vmem:[%s636 + $0x210] sm:$0xff]
        %771 = vst [vmem:[%s637 + $0x210] sm:$0xff] %v770
        %v772 = vld [vmem:[%s636 + $0x218] sm:$0xff]
        %773 = vst [vmem:[%s637 + $0x218] sm:$0xff] %v772
        %v774 = vld [vmem:[%s636 + $0x220] sm:$0xff]
        %775 = vst [vmem:[%s637 + $0x220] sm:$0xff] %v774
        %v776 = vld [vmem:[%s636 + $0x228] sm:$0xff]
        %777 = vst [vmem:[%s637 + $0x228] sm:$0xff] %v776
        %v778 = vld [vmem:[%s636 + $0x230] sm:$0xff]
        %779 = vst [vmem:[%s637 + $0x230] sm:$0xff] %v778
        %v780 = vld [vmem:[%s636 + $0x238] sm:$0xff]
        %781 = vst [vmem:[%s637 + $0x238] sm:$0xff] %v780
        %v782 = vld [vmem:[%s636 + $0x240] sm:$0xff]
        %783 = vst [vmem:[%s637 + $0x240] sm:$0xff] %v782
        %v784 = vld [vmem:[%s636 + $0x248] sm:$0xff]
        %785 = vst [vmem:[%s637 + $0x248] sm:$0xff] %v784
        %v786 = vld [vmem:[%s636 + $0x250] sm:$0xff]
        %787 = vst [vmem:[%s637 + $0x250] sm:$0xff] %v786
        %v788 = vld [vmem:[%s636 + $0x258] sm:$0xff]
        %789 = vst [vmem:[%s637 + $0x258] sm:$0xff] %v788
        %v790 = vld [vmem:[%s636 + $0x260] sm:$0xff]
        %791 = vst [vmem:[%s637 + $0x260] sm:$0xff] %v790
        %v792 = vld [vmem:[%s636 + $0x268] sm:$0xff]
        %793 = vst [vmem:[%s637 + $0x268] sm:$0xff] %v792
        %v794 = vld [vmem:[%s636 + $0x270] sm:$0xff]
        %795 = vst [vmem:[%s637 + $0x270] sm:$0xff] %v794
        %v796 = vld [vmem:[%s636 + $0x278] sm:$0xff]
        %797 = vst [vmem:[%s637 + $0x278] sm:$0xff] %v796
        %v798 = vld [vmem:[%s636 + $0x280] sm:$0xff]
        %799 = vst [vmem:[%s637 + $0x280] sm:$0xff] %v798
        %v800 = vld [vmem:[%s636 + $0x288] sm:$0xff]
        %801 = vst [vmem:[%s637 + $0x288] sm:$0xff] %v800
        %v802 = vld [vmem:[%s636 + $0x290] sm:$0xff]
        %803 = vst [vmem:[%s637 + $0x290] sm:$0xff] %v802
        %v804 = vld [vmem:[%s636 + $0x298] sm:$0xff]
        %805 = vst [vmem:[%s637 + $0x298] sm:$0xff] %v804
        %v806 = vld [vmem:[%s636 + $0x2a0] sm:$0xff]
        %807 = vst [vmem:[%s637 + $0x2a0] sm:$0xff] %v806
        %v808 = vld [vmem:[%s636 + $0x2a8] sm:$0xff]
        %809 = vst [vmem:[%s637 + $0x2a8] sm:$0xff] %v808
        %v810 = vld [vmem:[%s636 + $0x2b0] sm:$0xff]
        %811 = vst [vmem:[%s637 + $0x2b0] sm:$0xff] %v810
        %v812 = vld [vmem:[%s636 + $0x2b8] sm:$0xff]
        %813 = vst [vmem:[%s637 + $0x2b8] sm:$0xff] %v812
        %v814 = vld [vmem:[%s636 + $0x2c0] sm:$0xff]
        %815 = vst [vmem:[%s637 + $0x2c0] sm:$0xff] %v814
        %v816 = vld [vmem:[%s636 + $0x2c8] sm:$0xff]
        %817 = vst [vmem:[%s637 + $0x2c8] sm:$0xff] %v816
        %v818 = vld [vmem:[%s636 + $0x2d0] sm:$0xff]
        %819 = vst [vmem:[%s637 + $0x2d0] sm:$0xff] %v818
        %v820 = vld [vmem:[%s636 + $0x2d8] sm:$0xff]
        %821 = vst [vmem:[%s637 + $0x2d8] sm:$0xff] %v820
        %v822 = vld [vmem:[%s636 + $0x2e0] sm:$0xff]
        %823 = vst [vmem:[%s637 + $0x2e0] sm:$0xff] %v822
        %v824 = vld [vmem:[%s636 + $0x2e8] sm:$0xff]
        %825 = vst [vmem:[%s637 + $0x2e8] sm:$0xff] %v824
        %v826 = vld [vmem:[%s636 + $0x2f0] sm:$0xff]
        %827 = vst [vmem:[%s637 + $0x2f0] sm:$0xff] %v826
        %v828 = vld [vmem:[%s636 + $0x2f8] sm:$0xff]
        %829 = vst [vmem:[%s637 + $0x2f8] sm:$0xff] %v828
        %v830 = vld [vmem:[%s636 + $0x300] sm:$0xff]
        %831 = vst [vmem:[%s637 + $0x300] sm:$0xff] %v830
        %v832 = vld [vmem:[%s636 + $0x308] sm:$0xff]
        %833 = vst [vmem:[%s637 + $0x308] sm:$0xff] %v832
        %v834 = vld [vmem:[%s636 + $0x310] sm:$0xff]
        %835 = vst [vmem:[%s637 + $0x310] sm:$0xff] %v834
        %v836 = vld [vmem:[%s636 + $0x318] sm:$0xff]
        %837 = vst [vmem:[%s637 + $0x318] sm:$0xff] %v836
        %v838 = vld [vmem:[%s636 + $0x320] sm:$0xff]
        %839 = vst [vmem:[%s637 + $0x320] sm:$0xff] %v838
        %v840 = vld [vmem:[%s636 + $0x328] sm:$0xff]
        %841 = vst [vmem:[%s637 + $0x328] sm:$0xff] %v840
        %v842 = vld [vmem:[%s636 + $0x330] sm:$0xff]
        %843 = vst [vmem:[%s637 + $0x330] sm:$0xff] %v842
        %v844 = vld [vmem:[%s636 + $0x338] sm:$0xff]
        %845 = vst [vmem:[%s637 + $0x338] sm:$0xff] %v844
        %v846 = vld [vmem:[%s636 + $0x340] sm:$0xff]
        %847 = vst [vmem:[%s637 + $0x340] sm:$0xff] %v846
        %v848 = vld [vmem:[%s636 + $0x348] sm:$0xff]
        %849 = vst [vmem:[%s637 + $0x348] sm:$0xff] %v848
        %v850 = vld [vmem:[%s636 + $0x350] sm:$0xff]
        %851 = vst [vmem:[%s637 + $0x350] sm:$0xff] %v850
        %v852 = vld [vmem:[%s636 + $0x358] sm:$0xff]
        %853 = vst [vmem:[%s637 + $0x358] sm:$0xff] %v852
        %v854 = vld [vmem:[%s636 + $0x360] sm:$0xff]
        %855 = vst [vmem:[%s637 + $0x360] sm:$0xff] %v854
        %v856 = vld [vmem:[%s636 + $0x368] sm:$0xff]
        %857 = vst [vmem:[%s637 + $0x368] sm:$0xff] %v856
        %v858 = vld [vmem:[%s636 + $0x370] sm:$0xff]
        %859 = vst [vmem:[%s637 + $0x370] sm:$0xff] %v858
        %v860 = vld [vmem:[%s636 + $0x378] sm:$0xff]
        %861 = vst [vmem:[%s637 + $0x378] sm:$0xff] %v860
        %v862 = vld [vmem:[%s636 + $0x380] sm:$0xff]
        %863 = vst [vmem:[%s637 + $0x380] sm:$0xff] %v862
        %v864 = vld [vmem:[%s636 + $0x388] sm:$0xff]
        %865 = vst [vmem:[%s637 + $0x388] sm:$0xff] %v864
        %v866 = vld [vmem:[%s636 + $0x390] sm:$0xff]
        %867 = vst [vmem:[%s637 + $0x390] sm:$0xff] %v866
        %v868 = vld [vmem:[%s636 + $0x398] sm:$0xff]
        %869 = vst [vmem:[%s637 + $0x398] sm:$0xff] %v868
        %v870 = vld [vmem:[%s636 + $0x3a0] sm:$0xff]
        %871 = vst [vmem:[%s637 + $0x3a0] sm:$0xff] %v870
        %v872 = vld [vmem:[%s636 + $0x3a8] sm:$0xff]
        %873 = vst [vmem:[%s637 + $0x3a8] sm:$0xff] %v872
        %v874 = vld [vmem:[%s636 + $0x3b0] sm:$0xff]
        %875 = vst [vmem:[%s637 + $0x3b0] sm:$0xff] %v874
        %v876 = vld [vmem:[%s636 + $0x3b8] sm:$0xff]
        %877 = vst [vmem:[%s637 + $0x3b8] sm:$0xff] %v876
        %v878 = vld [vmem:[%s636 + $0x3c0] sm:$0xff]
        %879 = vst [vmem:[%s637 + $0x3c0] sm:$0xff] %v878
        %v880 = vld [vmem:[%s636 + $0x3c8] sm:$0xff]
        %881 = vst [vmem:[%s637 + $0x3c8] sm:$0xff] %v880
        %v882 = vld [vmem:[%s636 + $0x3d0] sm:$0xff]
        %883 = vst [vmem:[%s637 + $0x3d0] sm:$0xff] %v882
        %v884 = vld [vmem:[%s636 + $0x3d8] sm:$0xff]
        %885 = vst [vmem:[%s637 + $0x3d8] sm:$0xff] %v884
        %v886 = vld [vmem:[%s636 + $0x3e0] sm:$0xff]
        %887 = vst [vmem:[%s637 + $0x3e0] sm:$0xff] %v886
        %v888 = vld [vmem:[%s636 + $0x3e8] sm:$0xff]
        %889 = vst [vmem:[%s637 + $0x3e8] sm:$0xff] %v888
        %v890 = vld [vmem:[%s636 + $0x3f0] sm:$0xff]
        %891 = vst [vmem:[%s637 + $0x3f0] sm:$0xff] %v890
        %v892 = vld [vmem:[%s636 + $0x3f8] sm:$0xff]
        %893 = vst [vmem:[%s637 + $0x3f8] sm:$0xff] %v892
      $region132: #{gnn_forward.1} parent=126 // loop_footer
        %s635 = sadd.s32 1, %s631
      $region133: #{gnn_forward.1} parent=126 // loop_footer_branch
        %630 = sbr.rel target = $region129
      $region134: #{gnn_forward.1} parent=126 // loop_exit
        _
    $region127: #{gnn_forward.1} parent=1 // pred_fallthru
      _
    // Predicated region
    $region135: #{gnn_forward.1} parent=1 // pred_check
      _
    $region136: #{gnn_forward.1} parent=1 // pred_check_branch
      %895 = sbr.rel target = $region138
    $region137: #{gnn_forward.1} parent=1 // pred_region
      _
    $region138: #{gnn_forward.1} parent=1 // pred_fallthru
      _
    // Predicated region
    $region139: #{gnn_forward.1} parent=1 // pred_check
      _
    $region140: #{gnn_forward.1} parent=1 // pred_check_branch
      %898 = sbr.rel (0) target = $region142
    $region141: #{gnn_forward.1} parent=1 // pred_region
      %899 = vsyncadd %s627, 16384
    $region142: #{gnn_forward.1} parent=1 // pred_fallthru
      _
    %s900 = scalar_lea.sflag [#allocation6], 3
    // Predicated region
    $region143: #{gnn_forward.1} parent=1 // pred_check
      _
    $region144: #{gnn_forward.1} parent=1 // pred_check_branch
      %902 = sbr.rel (0) target = $region146
    $region145: #{gnn_forward.1} parent=1 // pred_region
      loop: start=0, step=1, limit=1
      $region147: #{gnn_forward.1} parent=145 // loop_pre_header
        _
      $region148: #{gnn_forward.1} parent=145 // loop_header
        %s904 = sphi 0, %s908
        %p905 = scmp.ge.s32.totalorder %s904, 1
        %s909 = sphi %s8, %s8
        %s910 = sphi [#allocation5], [#allocation5]
      $region149: #{gnn_forward.1} parent=145 // loop_header_branch
        %907 = sbr.rel (%p905) target = $region153
      $region150: #{gnn_forward.1} parent=145 // loop_body
        %v911 = vld [vmem:[%s909] sm:$0xff]
        %912 = vst [vmem:[%s910] sm:$0xff] %v911
        %v913 = vld [vmem:[%s909 + $0x8] sm:$0xff]
        %914 = vst [vmem:[%s910 + $0x8] sm:$0xff] %v913
        %v915 = vld [vmem:[%s909 + $0x10] sm:$0xff]
        %916 = vst [vmem:[%s910 + $0x10] sm:$0xff] %v915
        %v917 = vld [vmem:[%s909 + $0x18] sm:$0xff]
        %918 = vst [vmem:[%s910 + $0x18] sm:$0xff] %v917
        %v919 = vld [vmem:[%s909 + $0x20] sm:$0xff]
        %920 = vst [vmem:[%s910 + $0x20] sm:$0xff] %v919
        %v921 = vld [vmem:[%s909 + $0x28] sm:$0xff]
        %922 = vst [vmem:[%s910 + $0x28] sm:$0xff] %v921
        %v923 = vld [vmem:[%s909 + $0x30] sm:$0xff]
        %924 = vst [vmem:[%s910 + $0x30] sm:$0xff] %v923
        %v925 = vld [vmem:[%s909 + $0x38] sm:$0xff]
        %926 = vst [vmem:[%s910 + $0x38] sm:$0xff] %v925
        %v927 = vld [vmem:[%s909 + $0x40] sm:$0xff]
        %928 = vst [vmem:[%s910 + $0x40] sm:$0xff] %v927
        %v929 = vld [vmem:[%s909 + $0x48] sm:$0xff]
        %930 = vst [vmem:[%s910 + $0x48] sm:$0xff] %v929
        %v931 = vld [vmem:[%s909 + $0x50] sm:$0xff]
        %932 = vst [vmem:[%s910 + $0x50] sm:$0xff] %v931
        %v933 = vld [vmem:[%s909 + $0x58] sm:$0xff]
        %934 = vst [vmem:[%s910 + $0x58] sm:$0xff] %v933
        %v935 = vld [vmem:[%s909 + $0x60] sm:$0xff]
        %936 = vst [vmem:[%s910 + $0x60] sm:$0xff] %v935
        %v937 = vld [vmem:[%s909 + $0x68] sm:$0xff]
        %938 = vst [vmem:[%s910 + $0x68] sm:$0xff] %v937
        %v939 = vld [vmem:[%s909 + $0x70] sm:$0xff]
        %940 = vst [vmem:[%s910 + $0x70] sm:$0xff] %v939
        %v941 = vld [vmem:[%s909 + $0x78] sm:$0xff]
        %942 = vst [vmem:[%s910 + $0x78] sm:$0xff] %v941
        %v943 = vld [vmem:[%s909 + $0x80] sm:$0xff]
        %944 = vst [vmem:[%s910 + $0x80] sm:$0xff] %v943
        %v945 = vld [vmem:[%s909 + $0x88] sm:$0xff]
        %946 = vst [vmem:[%s910 + $0x88] sm:$0xff] %v945
        %v947 = vld [vmem:[%s909 + $0x90] sm:$0xff]
        %948 = vst [vmem:[%s910 + $0x90] sm:$0xff] %v947
        %v949 = vld [vmem:[%s909 + $0x98] sm:$0xff]
        %950 = vst [vmem:[%s910 + $0x98] sm:$0xff] %v949
        %v951 = vld [vmem:[%s909 + $0xa0] sm:$0xff]
        %952 = vst [vmem:[%s910 + $0xa0] sm:$0xff] %v951
        %v953 = vld [vmem:[%s909 + $0xa8] sm:$0xff]
        %954 = vst [vmem:[%s910 + $0xa8] sm:$0xff] %v953
        %v955 = vld [vmem:[%s909 + $0xb0] sm:$0xff]
        %956 = vst [vmem:[%s910 + $0xb0] sm:$0xff] %v955
        %v957 = vld [vmem:[%s909 + $0xb8] sm:$0xff]
        %958 = vst [vmem:[%s910 + $0xb8] sm:$0xff] %v957
        %v959 = vld [vmem:[%s909 + $0xc0] sm:$0xff]
        %960 = vst [vmem:[%s910 + $0xc0] sm:$0xff] %v959
        %v961 = vld [vmem:[%s909 + $0xc8] sm:$0xff]
        %962 = vst [vmem:[%s910 + $0xc8] sm:$0xff] %v961
        %v963 = vld [vmem:[%s909 + $0xd0] sm:$0xff]
        %964 = vst [vmem:[%s910 + $0xd0] sm:$0xff] %v963
        %v965 = vld [vmem:[%s909 + $0xd8] sm:$0xff]
        %966 = vst [vmem:[%s910 + $0xd8] sm:$0xff] %v965
        %v967 = vld [vmem:[%s909 + $0xe0] sm:$0xff]
        %968 = vst [vmem:[%s910 + $0xe0] sm:$0xff] %v967
        %v969 = vld [vmem:[%s909 + $0xe8] sm:$0xff]
        %970 = vst [vmem:[%s910 + $0xe8] sm:$0xff] %v969
        %v971 = vld [vmem:[%s909 + $0xf0] sm:$0xff]
        %972 = vst [vmem:[%s910 + $0xf0] sm:$0xff] %v971
        %v973 = vld [vmem:[%s909 + $0xf8] sm:$0xff]
        %974 = vst [vmem:[%s910 + $0xf8] sm:$0xff] %v973
      $region151: #{gnn_forward.1} parent=145 // loop_footer
        %s908 = sadd.s32 1, %s904
      $region152: #{gnn_forward.1} parent=145 // loop_footer_branch
        %903 = sbr.rel target = $region148
      $region153: #{gnn_forward.1} parent=145 // loop_exit
        _
    $region146: #{gnn_forward.1} parent=1 // pred_fallthru
      _
    // Predicated region
    $region154: #{gnn_forward.1} parent=1 // pred_check
      _
    $region155: #{gnn_forward.1} parent=1 // pred_check_branch
      %976 = sbr.rel target = $region157
    $region156: #{gnn_forward.1} parent=1 // pred_region
      _
    $region157: #{gnn_forward.1} parent=1 // pred_fallthru
      _
    // Predicated region
    $region158: #{gnn_forward.1} parent=1 // pred_check
      _
    $region159: #{gnn_forward.1} parent=1 // pred_check_branch
      %979 = sbr.rel (0) target = $region161
    $region160: #{gnn_forward.1} parent=1 // pred_region
      %980 = vsyncadd %s900, 4096
    $region161: #{gnn_forward.1} parent=1 // pred_fallthru
      _
    %v981 = vld [vmem:[%s2] sm:$0xf]
    %v982 = vld [vmem:[%s2 + $0x4] sm:$0xf]
    %v983 = vld [vmem:[%s2 + $0x8] sm:$0xf]
    %v984 = vld [vmem:[%s2 + $0xc] sm:$0xf]
    %v985 = vld [vmem:[%s2 + $0x10] sm:$0xf]
    %v986 = vld [vmem:[%s2 + $0x14] sm:$0xf]
    %v987 = vld [vmem:[%s3] sm:$0xf]
    %v988 = vld [vmem:[%s3 + $0x4] sm:$0xf]
    %v989 = vld [vmem:[%s3 + $0x8] sm:$0xf]
    %v990 = vld [vmem:[%s3 + $0xc] sm:$0xf]
    %v991 = vld [vmem:[%s3 + $0x10] sm:$0xf]
    %v992 = vld [vmem:[%s3 + $0x14] sm:$0xf]
    %v993 = vld [vmem:[%s4] sm:$0xf]
    %v994 = vld [vmem:[%s4 + $0x4] sm:$0xf]
    %v995 = vunpack.c.l.bf16 %v993
    %v996 = vunpack.c.l.bf16 %v994
    %vm997 = vcmp.gt.f32.partialorder %v995, 0.0
    %vm998 = vcmp.gt.f32.partialorder %v996, 0.0
    %v999 = vld [vmem:[%s1] sm:$0xf]
    %v1000 = vld [vmem:[%s1 + $0x4] sm:$0xf]
    %v1001 = vld [vmem:[%s1 + $0x8] sm:$0xf]
    %v1002 = vld [vmem:[%s1 + $0xc] sm:$0xf]
    %v1003 = vld [vmem:[%s1 + $0x10] sm:$0xf]
    %v1004 = vld [vmem:[%s1 + $0x14] sm:$0xf]
    %v1005 = vld [vmem:[%s0] sm:$0xff]
    %v1006 = vld [vmem:[%s0 + $0x8] sm:$0xff]
    %s1007 = smul.u32 4, 1
    %s1008 = smul.u32 %s1007, 8
    %s1009 = sshll.u32 %s1008, 4
    %1010 = dma.done [#allocation6], %s1009
    %v1011 = vld [vmem:[#allocation2] sm:$0xff]
    %v1012 = vld [vmem:[#allocation2 + $0x8] sm:$0xff]
    %v1013 = vld [vmem:[#allocation2 + $0x10] sm:$0xff]
    %v1014 = vld [vmem:[#allocation2 + $0x18] sm:$0xff]
    %v1015 = vpack.c.bf16 %v1006, %v1005
    %v1016 = vld [vmem:[%s9] sm:$0xff]
    %v1018 = vperm.slane %v1016, 0
    %v1019 = vperm.slane %v1016, 1
    %v1020 = vperm.slane %v1016, 2
    %v1021 = vperm.slane %v1016, 3
    %v1022 = vperm.slane %v1016, 4
    %v1023 = vperm.slane %v1016, 5
    %v1024 = vperm.slane %v1016, 6
    %v1025 = vperm.slane %v1016, 7
    %v1038 = vunpack.c.l.b16 %v1011
    %v1039 = vunpack.c.h.b16 %v1011
    %v1040 = vunpack.c.l.b16 %v1012
    %v1041 = vunpack.c.h.b16 %v1012
    %v1042 = vunpack.c.l.b16 %v1013
    %v1043 = vunpack.c.h.b16 %v1013
    %v1044 = vunpack.c.l.b16 %v1014
    %v1045 = vunpack.c.h.b16 %v1014
    %v1046 = vpack.c.b16 %v1038, %v1038
    %v1047 = vpack.c.b16 %v1039, %v1039
    %v1048 = vpack.c.b16 %v1040, %v1040
    %v1049 = vpack.c.b16 %v1041, %v1041
    %v1050 = vpack.c.b16 %v1042, %v1042
    %v1051 = vpack.c.b16 %v1043, %v1043
    %v1052 = vpack.c.b16 %v1044, %v1044
    %v1053 = vpack.c.b16 %v1045, %v1045
    %vm1054 = vcmask 64512
    %v1056 = vsel %vm1054, %v1015, 0
    %vm1058 = vcmask 1043456
    %v1060 = vsel %vm1058, %v1046, 0
    %v1063 = vsel %vm1058, %v1047, 0
    %v1066 = vsel %vm1058, %v1048, 0
    %v1069 = vsel %vm1058, %v1049, 0
    %v1072 = vsel %vm1058, %v1050, 0
    %v1075 = vsel %vm1058, %v1051, 0
    %v1078 = vsel %vm1058, %v1052, 0
    %v1081 = vsel %vm1058, %v1053, 0
    %1083 = vmatpush.bf16.msra.mxu0 0
    %1084 = vmatpush.bf16.msra.mxu0 0
    %1085 = vmatpush.bf16.msra.mxu0 0
    %1086 = vmatpush.bf16.msra.mxu0 0
    %1087 = vmatpush.bf16.msra.mxu0 0
    %1088 = vmatpush.bf16.msra.mxu0 0
    %1089 = vmatpush.bf16.msra.mxu0 0
    %1090 = vmatpush.bf16.msra.mxu0 %v1060
    %1091 = vmatmul.bf16.gmra.mxu0 %v1056
    %v1092 = vpop.f32.mrf.mxu0
    %v1093 = vadd.f32 %v1018, %v1092
    %v1094 = vpop.f32.mrf.mxu0
    %v1095 = vadd.f32 %v1018, %v1094
    %1096 = vdwg.mxu0
    %1097 = vmatpush.bf16.msra.mxu0 0
    %1098 = vmatpush.bf16.msra.mxu0 0
    %1099 = vmatpush.bf16.msra.mxu0 0
    %1100 = vmatpush.bf16.msra.mxu0 0
    %1101 = vmatpush.bf16.msra.mxu0 0
    %1102 = vmatpush.bf16.msra.mxu0 0
    %1103 = vmatpush.bf16.msra.mxu0 0
    %1104 = vmatpush.bf16.msra.mxu0 %v1063
    %1105 = vmatmul.bf16.gmra.mxu0 %v1056
    %v1106 = vpop.f32.mrf.mxu0
    %v1107 = vadd.f32 %v1019, %v1106
    %v1108 = vpop.f32.mrf.mxu0
    %v1109 = vadd.f32 %v1019, %v1108
    %1110 = vdwg.mxu0
    %1111 = vmatpush.bf16.msra.mxu0 0
    %1112 = vmatpush.bf16.msra.mxu0 0
    %1113 = vmatpush.bf16.msra.mxu0 0
    %1114 = vmatpush.bf16.msra.mxu0 0
    %1115 = vmatpush.bf16.msra.mxu0 0
    %1116 = vmatpush.bf16.msra.mxu0 0
    %1117 = vmatpush.bf16.msra.mxu0 0
    %1118 = vmatpush.bf16.msra.mxu0 %v1066
    %1119 = vmatmul.bf16.gmra.mxu0 %v1056
    %v1120 = vpop.f32.mrf.mxu0
    %v1121 = vadd.f32 %v1020, %v1120
    %v1122 = vpop.f32.mrf.mxu0
    %v1123 = vadd.f32 %v1020, %v1122
    %1124 = vdwg.mxu0
    %1125 = vmatpush.bf16.msra.mxu0 0
    %1126 = vmatpush.bf16.msra.mxu0 0
    %1127 = vmatpush.bf16.msra.mxu0 0
    %1128 = vmatpush.bf16.msra.mxu0 0
    %1129 = vmatpush.bf16.msra.mxu0 0
    %1130 = vmatpush.bf16.msra.mxu0 0
    %1131 = vmatpush.bf16.msra.mxu0 0
    %1132 = vmatpush.bf16.msra.mxu0 %v1069
    %1133 = vmatmul.bf16.gmra.mxu0 %v1056
    %v1134 = vpop.f32.mrf.mxu0
    %v1135 = vadd.f32 %v1021, %v1134
    %v1136 = vpop.f32.mrf.mxu0
    %v1137 = vadd.f32 %v1021, %v1136
    %1138 = vdwg.mxu0
    %1139 = vmatpush.bf16.msra.mxu0 0
    %1140 = vmatpush.bf16.msra.mxu0 0
    %1141 = vmatpush.bf16.msra.mxu0 0
    %1142 = vmatpush.bf16.msra.mxu0 0
    %1143 = vmatpush.bf16.msra.mxu0 0
    %1144 = vmatpush.bf16.msra.mxu0 0
    %1145 = vmatpush.bf16.msra.mxu0 0
    %1146 = vmatpush.bf16.msra.mxu0 %v1072
    %1147 = vmatmul.bf16.gmra.mxu0 %v1056
    %v1148 = vpop.f32.mrf.mxu0
    %v1149 = vadd.f32 %v1022, %v1148
    %v1150 = vpop.f32.mrf.mxu0
    %v1151 = vadd.f32 %v1022, %v1150
    %1152 = vdwg.mxu0
    %1153 = vmatpush.bf16.msra.mxu0 0
    %1154 = vmatpush.bf16.msra.mxu0 0
    %1155 = vmatpush.bf16.msra.mxu0 0
    %1156 = vmatpush.bf16.msra.mxu0 0
    %1157 = vmatpush.bf16.msra.mxu0 0
    %1158 = vmatpush.bf16.msra.mxu0 0
    %1159 = vmatpush.bf16.msra.mxu0 0
    %1160 = vmatpush.bf16.msra.mxu0 %v1075
    %1161 = vmatmul.bf16.gmra.mxu0 %v1056
    %v1162 = vpop.f32.mrf.mxu0
    %v1163 = vadd.f32 %v1023, %v1162
    %v1164 = vpop.f32.mrf.mxu0
    %v1165 = vadd.f32 %v1023, %v1164
    %1166 = vdwg.mxu0
    %1167 = vmatpush.bf16.msra.mxu0 0
    %1168 = vmatpush.bf16.msra.mxu0 0
    %1169 = vmatpush.bf16.msra.mxu0 0
    %1170 = vmatpush.bf16.msra.mxu0 0
    %1171 = vmatpush.bf16.msra.mxu0 0
    %1172 = vmatpush.bf16.msra.mxu0 0
    %1173 = vmatpush.bf16.msra.mxu0 0
    %1174 = vmatpush.bf16.msra.mxu0 %v1078
    %1175 = vmatmul.bf16.gmra.mxu0 %v1056
    %v1176 = vpop.f32.mrf.mxu0
    %v1177 = vadd.f32 %v1024, %v1176
    %v1178 = vpop.f32.mrf.mxu0
    %v1179 = vadd.f32 %v1024, %v1178
    %1180 = vdwg.mxu0
    %1181 = vmatpush.bf16.msra.mxu0 0
    %1182 = vmatpush.bf16.msra.mxu0 0
    %1183 = vmatpush.bf16.msra.mxu0 0
    %1184 = vmatpush.bf16.msra.mxu0 0
    %1185 = vmatpush.bf16.msra.mxu0 0
    %1186 = vmatpush.bf16.msra.mxu0 0
    %1187 = vmatpush.bf16.msra.mxu0 0
    %1188 = vmatpush.bf16.msra.mxu0 %v1081
    %1189 = vmatmul.bf16.gmra.mxu0 %v1056
    %v1190 = vpop.f32.mrf.mxu0
    %v1191 = vadd.f32 %v1025, %v1190
    %v1192 = vpop.f32.mrf.mxu0
    %v1193 = vadd.f32 %v1025, %v1192
    %1194 = vdwg.mxu0
    %v1195 = vld [vmem:[%s10] sm:$0xff]
    %v1202 = vunpack.c.l.b16 %v999
    %v1203 = vunpack.c.l.b16 %v1000
    %v1204 = vunpack.c.l.b16 %v1001
    %v1205 = vunpack.c.l.b16 %v1002
    %v1206 = vunpack.c.l.b16 %v1003
    %v1207 = vunpack.c.l.b16 %v1004
    %v1208 = vpack.c.b16 %v1203, %v1202
    %v1209 = vpack.c.b16 %v1205, %v1204
    %v1210 = vpack.c.b16 %v1207, %v1206
    %1212 = vst [vmem:[#allocation1] ss:$4 sm:$0xff] %v1195
    %v1213 = vld.sshfl [vmem:[#allocation1] sm:$0xff pattern:$0x73625140]
    %v1214 = vld.sshfl [vmem:[#allocation1 + $0x8] sm:$0xff pattern:$0x73625140]
    %v1215 = vld.sshfl [vmem:[#allocation1 + $0x10] sm:$0xff pattern:$0x73625140]
    %v1216 = vld.sshfl [vmem:[#allocation1 + $0x18] sm:$0xff pattern:$0x73625140]
    %vm1217 = vcmask 31744
    %v1219 = vsel %vm1217, %v1208, 0
    %v1222 = vsel %vm1217, %v1209, 0
    %v1225 = vsel %vm1217, %v1210, 0
    %vm1227 = vcmask 1041408
    %v1228 = vsel %vm1227, %v1213, 0
    %v1230 = vsel %vm1227, %v1214, 0
    %v1232 = vsel %vm1227, %v1215, 0
    %v1234 = vsel %vm1227, %v1216, 0
    %1236 = vmatpush.bf16.msra.mxu0 0
    %1237 = vmatpush.bf16.msra.mxu0 0
    %1238 = vmatpush.bf16.msra.mxu0 0
    %1239 = vmatpush.bf16.msra.mxu0 0
    %1240 = vmatpush.bf16.msra.mxu0 0
    %1241 = vmatpush.bf16.msra.mxu0 0
    %1242 = vmatpush.bf16.msra.mxu0 0
    %1243 = vmatpush.bf16.msra.mxu0 %v1228
    %1244 = vmatmul.bf16.gmra.mxu0 %v1219
    %v1245 = vpop.f32.mrf.mxu0
    %v1246 = vadd.f32 0.0, %v1245
    %v1247 = vpop.f32.mrf.mxu0
    %v1248 = vadd.f32 0.0, %v1247
    %1249 = vmatmul.bf16.gmra.mxu0 %v1222
    %v1250 = vpop.f32.mrf.mxu0
    %v1251 = vadd.f32 0.0, %v1250
    %v1252 = vpop.f32.mrf.mxu0
    %v1253 = vadd.f32 0.0, %v1252
    %1254 = vmatmul.bf16.gmra.mxu0 %v1225
    %v1255 = vpop.f32.mrf.mxu0
    %v1256 = vadd.f32 0.0, %v1255
    %v1257 = vpop.f32.mrf.mxu0
    %v1258 = vadd.f32 0.0, %v1257
    %1259 = vdwg.mxu0
    %1260 = vmatpush.bf16.msra.mxu0 0
    %1261 = vmatpush.bf16.msra.mxu0 0
    %1262 = vmatpush.bf16.msra.mxu0 0
    %1263 = vmatpush.bf16.msra.mxu0 0
    %1264 = vmatpush.bf16.msra.mxu0 0
    %1265 = vmatpush.bf16.msra.mxu0 0
    %1266 = vmatpush.bf16.msra.mxu0 0
    %1267 = vmatpush.bf16.msra.mxu0 %v1230
    %1268 = vmatmul.bf16.gmra.mxu0 %v1219
    %v1269 = vpop.f32.mrf.mxu0
    %v1270 = vadd.f32 0.0, %v1269
    %v1271 = vpop.f32.mrf.mxu0
    %v1272 = vadd.f32 0.0, %v1271
    %1273 = vmatmul.bf16.gmra.mxu0 %v1222
    %v1274 = vpop.f32.mrf.mxu0
    %v1275 = vadd.f32 0.0, %v1274
    %v1276 = vpop.f32.mrf.mxu0
    %v1277 = vadd.f32 0.0, %v1276
    %1278 = vmatmul.bf16.gmra.mxu0 %v1225
    %v1279 = vpop.f32.mrf.mxu0
    %v1280 = vadd.f32 0.0, %v1279
    %v1281 = vpop.f32.mrf.mxu0
    %v1282 = vadd.f32 0.0, %v1281
    %1283 = vdwg.mxu0
    %1284 = vmatpush.bf16.msra.mxu0 0
    %1285 = vmatpush.bf16.msra.mxu0 0
    %1286 = vmatpush.bf16.msra.mxu0 0
    %1287 = vmatpush.bf16.msra.mxu0 0
    %1288 = vmatpush.bf16.msra.mxu0 0
    %1289 = vmatpush.bf16.msra.mxu0 0
    %1290 = vmatpush.bf16.msra.mxu0 0
    %1291 = vmatpush.bf16.msra.mxu0 %v1232
    %1292 = vmatmul.bf16.gmra.mxu0 %v1219
    %v1293 = vpop.f32.mrf.mxu0
    %v1294 = vadd.f32 0.0, %v1293
    %v1295 = vpop.f32.mrf.mxu0
    %v1296 = vadd.f32 0.0, %v1295
    %1297 = vmatmul.bf16.gmra.mxu0 %v1222
    %v1298 = vpop.f32.mrf.mxu0
    %v1299 = vadd.f32 0.0, %v1298
    %v1300 = vpop.f32.mrf.mxu0
    %v1301 = vadd.f32 0.0, %v1300
    %1302 = vmatmul.bf16.gmra.mxu0 %v1225
    %v1303 = vpop.f32.mrf.mxu0
    %v1304 = vadd.f32 0.0, %v1303
    %v1305 = vpop.f32.mrf.mxu0
    %v1306 = vadd.f32 0.0, %v1305
    %1307 = vdwg.mxu0
    %1308 = vmatpush.bf16.msra.mxu0 0
    %1309 = vmatpush.bf16.msra.mxu0 0
    %1310 = vmatpush.bf16.msra.mxu0 0
    %1311 = vmatpush.bf16.msra.mxu0 0
    %1312 = vmatpush.bf16.msra.mxu0 0
    %1313 = vmatpush.bf16.msra.mxu0 0
    %1314 = vmatpush.bf16.msra.mxu0 0
    %1315 = vmatpush.bf16.msra.mxu0 %v1234
    %1316 = vmatmul.bf16.gmra.mxu0 %v1219
    %v1317 = vpop.f32.mrf.mxu0
    %v1318 = vadd.f32 0.0, %v1317
    %v1319 = vpop.f32.mrf.mxu0
    %v1320 = vadd.f32 0.0, %v1319
    %1321 = vmatmul.bf16.gmra.mxu0 %v1222
    %v1322 = vpop.f32.mrf.mxu0
    %v1323 = vadd.f32 0.0, %v1322
    %v1324 = vpop.f32.mrf.mxu0
    %v1325 = vadd.f32 0.0, %v1324
    %1326 = vmatmul.bf16.gmra.mxu0 %v1225
    %v1327 = vpop.f32.mrf.mxu0
    %v1328 = vadd.f32 0.0, %v1327
    %v1329 = vpop.f32.mrf.mxu0
    %v1330 = vadd.f32 0.0, %v1329
    %1331 = vdwg.mxu0
    %v1332 = vpack.c.bf16 %v1095, %v1093
    %v1333 = vpack.c.bf16 %v1109, %v1107
    %v1334 = vpack.c.bf16 %v1123, %v1121
    %v1335 = vpack.c.bf16 %v1137, %v1135
    %v1342 = vunpack.c.l.b16 %v981
    %v1343 = vunpack.c.l.b16 %v982
    %v1344 = vunpack.c.l.b16 %v983
    %v1345 = vunpack.c.l.b16 %v984
    %v1346 = vunpack.c.l.b16 %v985
    %v1347 = vunpack.c.l.b16 %v986
    %v1348 = vpack.c.b16 %v1343, %v1342
    %v1349 = vpack.c.b16 %v1345, %v1344
    %v1350 = vpack.c.b16 %v1347, %v1346
    %vm1351 = vcmask 130048
    %v1353 = vsel %vm1351, %v1348, 0
    %v1356 = vsel %vm1351, %v1349, 0
    %v1359 = vsel %vm1351, %v1350, 0
    %1361 = vmatpush.bf16.msra.mxu0 0
    %1362 = vmatpush.bf16.msra.mxu0 0
    %1363 = vmatpush.bf16.msra.mxu0 0
    %1364 = vmatpush.bf16.msra.mxu0 0
    %1365 = vmatpush.bf16.msra.mxu0 0
    %1366 = vmatpush.bf16.msra.mxu0 0
    %1367 = vmatpush.bf16.msra.mxu0 0
    %1368 = vmatpush.bf16.msra.mxu0 %v1332
    %1369 = vmatmul.bf16.gmra.mxu0 %v1353
    %v1370 = vpop.f32.mrf.mxu0
    %v1371 = vadd.f32 0.0, %v1370
    %v1372 = vpop.f32.mrf.mxu0
    %v1373 = vadd.f32 0.0, %v1372
    %1374 = vmatmul.bf16.gmra.mxu0 %v1356
    %v1375 = vpop.f32.mrf.mxu0
    %v1376 = vadd.f32 0.0, %v1375
    %v1377 = vpop.f32.mrf.mxu0
    %v1378 = vadd.f32 0.0, %v1377
    %1379 = vmatmul.bf16.gmra.mxu0 %v1359
    %v1380 = vpop.f32.mrf.mxu0
    %v1381 = vadd.f32 0.0, %v1380
    %v1382 = vpop.f32.mrf.mxu0
    %v1383 = vadd.f32 0.0, %v1382
    %1384 = vdwg.mxu0
    %1385 = vmatpush.bf16.msra.mxu0 0
    %1386 = vmatpush.bf16.msra.mxu0 0
    %1387 = vmatpush.bf16.msra.mxu0 0
    %1388 = vmatpush.bf16.msra.mxu0 0
    %1389 = vmatpush.bf16.msra.mxu0 0
    %1390 = vmatpush.bf16.msra.mxu0 0
    %1391 = vmatpush.bf16.msra.mxu0 0
    %1392 = vmatpush.bf16.msra.mxu0 %v1333
    %1393 = vmatmul.bf16.gmra.mxu0 %v1353
    %v1394 = vpop.f32.mrf.mxu0
    %v1395 = vadd.f32 0.0, %v1394
    %v1396 = vpop.f32.mrf.mxu0
    %v1397 = vadd.f32 0.0, %v1396
    %1398 = vmatmul.bf16.gmra.mxu0 %v1356
    %v1399 = vpop.f32.mrf.mxu0
    %v1400 = vadd.f32 0.0, %v1399
    %v1401 = vpop.f32.mrf.mxu0
    %v1402 = vadd.f32 0.0, %v1401
    %1403 = vmatmul.bf16.gmra.mxu0 %v1359
    %v1404 = vpop.f32.mrf.mxu0
    %v1405 = vadd.f32 0.0, %v1404
    %v1406 = vpop.f32.mrf.mxu0
    %v1407 = vadd.f32 0.0, %v1406
    %1408 = vdwg.mxu0
    %1409 = vmatpush.bf16.msra.mxu0 0
    %1410 = vmatpush.bf16.msra.mxu0 0
    %1411 = vmatpush.bf16.msra.mxu0 0
    %1412 = vmatpush.bf16.msra.mxu0 0
    %1413 = vmatpush.bf16.msra.mxu0 0
    %1414 = vmatpush.bf16.msra.mxu0 0
    %1415 = vmatpush.bf16.msra.mxu0 0
    %1416 = vmatpush.bf16.msra.mxu0 %v1334
    %1417 = vmatmul.bf16.gmra.mxu0 %v1353
    %v1418 = vpop.f32.mrf.mxu0
    %v1419 = vadd.f32 0.0, %v1418
    %v1420 = vpop.f32.mrf.mxu0
    %v1421 = vadd.f32 0.0, %v1420
    %1422 = vmatmul.bf16.gmra.mxu0 %v1356
    %v1423 = vpop.f32.mrf.mxu0
    %v1424 = vadd.f32 0.0, %v1423
    %v1425 = vpop.f32.mrf.mxu0
    %v1426 = vadd.f32 0.0, %v1425
    %1427 = vmatmul.bf16.gmra.mxu0 %v1359
    %v1428 = vpop.f32.mrf.mxu0
    %v1429 = vadd.f32 0.0, %v1428
    %v1430 = vpop.f32.mrf.mxu0
    %v1431 = vadd.f32 0.0, %v1430
    %1432 = vdwg.mxu0
    %1433 = vmatpush.bf16.msra.mxu0 0
    %1434 = vmatpush.bf16.msra.mxu0 0
    %1435 = vmatpush.bf16.msra.mxu0 0
    %1436 = vmatpush.bf16.msra.mxu0 0
    %1437 = vmatpush.bf16.msra.mxu0 0
    %1438 = vmatpush.bf16.msra.mxu0 0
    %1439 = vmatpush.bf16.msra.mxu0 0
    %1440 = vmatpush.bf16.msra.mxu0 %v1335
    %1441 = vmatmul.bf16.gmra.mxu0 %v1353
    %v1442 = vpop.f32.mrf.mxu0
    %v1443 = vadd.f32 0.0, %v1442
    %v1444 = vpop.f32.mrf.mxu0
    %v1445 = vadd.f32 0.0, %v1444
    %1446 = vmatmul.bf16.gmra.mxu0 %v1356
    %v1447 = vpop.f32.mrf.mxu0
    %v1448 = vadd.f32 0.0, %v1447
    %v1449 = vpop.f32.mrf.mxu0
    %v1450 = vadd.f32 0.0, %v1449
    %1451 = vmatmul.bf16.gmra.mxu0 %v1359
    %v1452 = vpop.f32.mrf.mxu0
    %v1453 = vadd.f32 0.0, %v1452
    %v1454 = vpop.f32.mrf.mxu0
    %v1455 = vadd.f32 0.0, %v1454
    %1456 = vdwg.mxu0
    %v1457 = vpack.c.bf16 %v1151, %v1149
    %v1458 = vpack.c.bf16 %v1165, %v1163
    %v1459 = vpack.c.bf16 %v1179, %v1177
    %v1460 = vpack.c.bf16 %v1193, %v1191
    %v1467 = vunpack.c.l.b16 %v987
    %v1468 = vunpack.c.l.b16 %v988
    %v1469 = vunpack.c.l.b16 %v989
    %v1470 = vunpack.c.l.b16 %v990
    %v1471 = vunpack.c.l.b16 %v991
    %v1472 = vunpack.c.l.b16 %v992
    %v1473 = vpack.c.b16 %v1468, %v1467
    %v1474 = vpack.c.b16 %v1470, %v1469
    %v1475 = vpack.c.b16 %v1472, %v1471
    %v1477 = vsel %vm1351, %v1473, 0
    %v1480 = vsel %vm1351, %v1474, 0
    %v1483 = vsel %vm1351, %v1475, 0
    %1485 = vmatpush.bf16.msra.mxu0 0
    %1486 = vmatpush.bf16.msra.mxu0 0
    %1487 = vmatpush.bf16.msra.mxu0 0
    %1488 = vmatpush.bf16.msra.mxu0 0
    %1489 = vmatpush.bf16.msra.mxu0 0
    %1490 = vmatpush.bf16.msra.mxu0 0
    %1491 = vmatpush.bf16.msra.mxu0 0
    %1492 = vmatpush.bf16.msra.mxu0 %v1457
    %1493 = vmatmul.bf16.gmra.mxu0 %v1477
    %v1494 = vpop.f32.mrf.mxu0
    %v1495 = vadd.f32 0.0, %v1494
    %v1496 = vpop.f32.mrf.mxu0
    %v1497 = vadd.f32 0.0, %v1496
    %1498 = vmatmul.bf16.gmra.mxu0 %v1480
    %v1499 = vpop.f32.mrf.mxu0
    %v1500 = vadd.f32 0.0, %v1499
    %v1501 = vpop.f32.mrf.mxu0
    %v1502 = vadd.f32 0.0, %v1501
    %1503 = vmatmul.bf16.gmra.mxu0 %v1483
    %v1504 = vpop.f32.mrf.mxu0
    %v1505 = vadd.f32 0.0, %v1504
    %v1506 = vpop.f32.mrf.mxu0
    %v1507 = vadd.f32 0.0, %v1506
    %1508 = vdwg.mxu0
    %1509 = vmatpush.bf16.msra.mxu0 0
    %1510 = vmatpush.bf16.msra.mxu0 0
    %1511 = vmatpush.bf16.msra.mxu0 0
    %1512 = vmatpush.bf16.msra.mxu0 0
    %1513 = vmatpush.bf16.msra.mxu0 0
    %1514 = vmatpush.bf16.msra.mxu0 0
    %1515 = vmatpush.bf16.msra.mxu0 0
    %1516 = vmatpush.bf16.msra.mxu0 %v1458
    %1517 = vmatmul.bf16.gmra.mxu0 %v1477
    %v1518 = vpop.f32.mrf.mxu0
    %v1519 = vadd.f32 0.0, %v1518
    %v1520 = vpop.f32.mrf.mxu0
    %v1521 = vadd.f32 0.0, %v1520
    %1522 = vmatmul.bf16.gmra.mxu0 %v1480
    %v1523 = vpop.f32.mrf.mxu0
    %v1524 = vadd.f32 0.0, %v1523
    %v1525 = vpop.f32.mrf.mxu0
    %v1526 = vadd.f32 0.0, %v1525
    %1527 = vmatmul.bf16.gmra.mxu0 %v1483
    %v1528 = vpop.f32.mrf.mxu0
    %v1529 = vadd.f32 0.0, %v1528
    %v1530 = vpop.f32.mrf.mxu0
    %v1531 = vadd.f32 0.0, %v1530
    %1532 = vdwg.mxu0
    %1533 = vmatpush.bf16.msra.mxu0 0
    %1534 = vmatpush.bf16.msra.mxu0 0
    %1535 = vmatpush.bf16.msra.mxu0 0
    %1536 = vmatpush.bf16.msra.mxu0 0
    %1537 = vmatpush.bf16.msra.mxu0 0
    %1538 = vmatpush.bf16.msra.mxu0 0
    %1539 = vmatpush.bf16.msra.mxu0 0
    %1540 = vmatpush.bf16.msra.mxu0 %v1459
    %1541 = vmatmul.bf16.gmra.mxu0 %v1477
    %v1542 = vpop.f32.mrf.mxu0
    %v1543 = vadd.f32 0.0, %v1542
    %v1544 = vpop.f32.mrf.mxu0
    %v1545 = vadd.f32 0.0, %v1544
    %1546 = vmatmul.bf16.gmra.mxu0 %v1480
    %v1547 = vpop.f32.mrf.mxu0
    %v1548 = vadd.f32 0.0, %v1547
    %v1549 = vpop.f32.mrf.mxu0
    %v1550 = vadd.f32 0.0, %v1549
    %1551 = vmatmul.bf16.gmra.mxu0 %v1483
    %v1552 = vpop.f32.mrf.mxu0
    %v1553 = vadd.f32 0.0, %v1552
    %v1554 = vpop.f32.mrf.mxu0
    %v1555 = vadd.f32 0.0, %v1554
    %1556 = vdwg.mxu0
    %1557 = vmatpush.bf16.msra.mxu0 0
    %1558 = vmatpush.bf16.msra.mxu0 0
    %1559 = vmatpush.bf16.msra.mxu0 0
    %1560 = vmatpush.bf16.msra.mxu0 0
    %1561 = vmatpush.bf16.msra.mxu0 0
    %1562 = vmatpush.bf16.msra.mxu0 0
    %1563 = vmatpush.bf16.msra.mxu0 0
    %1564 = vmatpush.bf16.msra.mxu0 %v1460
    %1565 = vmatmul.bf16.gmra.mxu0 %v1477
    %v1566 = vpop.f32.mrf.mxu0
    %v1567 = vadd.f32 0.0, %v1566
    %v1568 = vpop.f32.mrf.mxu0
    %v1569 = vadd.f32 0.0, %v1568
    %1570 = vmatmul.bf16.gmra.mxu0 %v1480
    %v1571 = vpop.f32.mrf.mxu0
    %v1572 = vadd.f32 0.0, %v1571
    %v1573 = vpop.f32.mrf.mxu0
    %v1574 = vadd.f32 0.0, %v1573
    %1575 = vmatmul.bf16.gmra.mxu0 %v1483
    %v1576 = vpop.f32.mrf.mxu0
    %v1577 = vadd.f32 0.0, %v1576
    %v1578 = vpop.f32.mrf.mxu0
    %v1579 = vadd.f32 0.0, %v1578
    %1580 = vdwg.mxu0
    %v1581 = vadd.f32 %v1371, %v1495
    %v1582 = vadd.f32 %v1395, %v1519
    %v1583 = vadd.f32 %v1419, %v1543
    %v1584 = vadd.f32 %v1443, %v1567
    %v1585 = vadd.f32 %v1373, %v1497
    %v1586 = vadd.f32 %v1397, %v1521
    %v1587 = vadd.f32 %v1421, %v1545
    %v1588 = vadd.f32 %v1445, %v1569
    %v1589 = vadd.f32 %v1376, %v1500
    %v1590 = vadd.f32 %v1400, %v1524
    %v1591 = vadd.f32 %v1424, %v1548
    %v1592 = vadd.f32 %v1448, %v1572
    %v1593 = vadd.f32 %v1378, %v1502
    %v1594 = vadd.f32 %v1402, %v1526
    %v1595 = vadd.f32 %v1426, %v1550
    %v1596 = vadd.f32 %v1450, %v1574
    %v1597 = vadd.f32 %v1381, %v1505
    %v1598 = vadd.f32 %v1405, %v1529
    %v1599 = vadd.f32 %v1429, %v1553
    %v1600 = vadd.f32 %v1453, %v1577
    %v1601 = vadd.f32 %v1383, %v1507
    %v1602 = vadd.f32 %v1407, %v1531
    %v1603 = vadd.f32 %v1431, %v1555
    %v1604 = vadd.f32 %v1455, %v1579
    %v1605 = vadd.f32 %v1581, %v1246
    %v1606 = vadd.f32 %v1582, %v1270
    %v1607 = vadd.f32 %v1583, %v1294
    %v1608 = vadd.f32 %v1584, %v1318
    %v1609 = vadd.f32 %v1585, %v1248
    %v1610 = vadd.f32 %v1586, %v1272
    %v1611 = vadd.f32 %v1587, %v1296
    %v1612 = vadd.f32 %v1588, %v1320
    %v1613 = vadd.f32 %v1589, %v1251
    %v1614 = vadd.f32 %v1590, %v1275
    %v1615 = vadd.f32 %v1591, %v1299
    %v1616 = vadd.f32 %v1592, %v1323
    %v1617 = vadd.f32 %v1593, %v1253
    %v1618 = vadd.f32 %v1594, %v1277
    %v1619 = vadd.f32 %v1595, %v1301
    %v1620 = vadd.f32 %v1596, %v1325
    %v1621 = vadd.f32 %v1597, %v1256
    %v1622 = vadd.f32 %v1598, %v1280
    %v1623 = vadd.f32 %v1599, %v1304
    %v1624 = vadd.f32 %v1600, %v1328
    %v1625 = vadd.f32 %v1601, %v1258
    %v1626 = vadd.f32 %v1602, %v1282
    %v1627 = vadd.f32 %v1603, %v1306
    %v1628 = vadd.f32 %v1604, %v1330
    %vm1629 = vcmp.gt.f32.partialorder %v1605, 0.0
    %vm1630 = vcmp.gt.f32.partialorder %v1606, 0.0
    %vm1631 = vcmp.gt.f32.partialorder %v1607, 0.0
    %vm1632 = vcmp.gt.f32.partialorder %v1608, 0.0
    %vm1633 = vcmp.gt.f32.partialorder %v1609, 0.0
    %vm1634 = vcmp.gt.f32.partialorder %v1610, 0.0
    %vm1635 = vcmp.gt.f32.partialorder %v1611, 0.0
    %vm1636 = vcmp.gt.f32.partialorder %v1612, 0.0
    %vm1637 = vcmp.gt.f32.partialorder %v1613, 0.0
    %vm1638 = vcmp.gt.f32.partialorder %v1614, 0.0
    %vm1639 = vcmp.gt.f32.partialorder %v1615, 0.0
    %vm1640 = vcmp.gt.f32.partialorder %v1616, 0.0
    %vm1641 = vcmp.gt.f32.partialorder %v1617, 0.0
    %vm1642 = vcmp.gt.f32.partialorder %v1618, 0.0
    %vm1643 = vcmp.gt.f32.partialorder %v1619, 0.0
    %vm1644 = vcmp.gt.f32.partialorder %v1620, 0.0
    %vm1645 = vcmp.gt.f32.partialorder %v1621, 0.0
    %vm1646 = vcmp.gt.f32.partialorder %v1622, 0.0
    %vm1647 = vcmp.gt.f32.partialorder %v1623, 0.0
    %vm1648 = vcmp.gt.f32.partialorder %v1624, 0.0
    %vm1649 = vcmp.gt.f32.partialorder %v1625, 0.0
    %vm1650 = vcmp.gt.f32.partialorder %v1626, 0.0
    %vm1651 = vcmp.gt.f32.partialorder %v1627, 0.0
    %vm1652 = vcmp.gt.f32.partialorder %v1628, 0.0
    %v1653 = vmul.f32 %v1605, 0.2
    %v1654 = vmul.f32 %v1606, 0.2
    %v1655 = vmul.f32 %v1607, 0.2
    %v1656 = vmul.f32 %v1608, 0.2
    %v1657 = vmul.f32 %v1609, 0.2
    %v1658 = vmul.f32 %v1610, 0.2
    %v1659 = vmul.f32 %v1611, 0.2
    %v1660 = vmul.f32 %v1612, 0.2
    %v1661 = vmul.f32 %v1613, 0.2
    %v1662 = vmul.f32 %v1614, 0.2
    %v1663 = vmul.f32 %v1615, 0.2
    %v1664 = vmul.f32 %v1616, 0.2
    %v1665 = vmul.f32 %v1617, 0.2
    %v1666 = vmul.f32 %v1618, 0.2
    %v1667 = vmul.f32 %v1619, 0.2
    %v1668 = vmul.f32 %v1620, 0.2
    %v1669 = vmul.f32 %v1621, 0.2
    %v1670 = vmul.f32 %v1622, 0.2
    %v1671 = vmul.f32 %v1623, 0.2
    %v1672 = vmul.f32 %v1624, 0.2
    %v1673 = vmul.f32 %v1625, 0.2
    %v1674 = vmul.f32 %v1626, 0.2
    %v1675 = vmul.f32 %v1627, 0.2
    %v1676 = vmul.f32 %v1628, 0.2
    %v1677 = vsel %vm1629, %v1605, %v1653
    %v1678 = vsel %vm1630, %v1606, %v1654
    %v1679 = vsel %vm1631, %v1607, %v1655
    %v1680 = vsel %vm1632, %v1608, %v1656
    %v1681 = vsel %vm1633, %v1609, %v1657
    %v1682 = vsel %vm1634, %v1610, %v1658
    %v1683 = vsel %vm1635, %v1611, %v1659
    %v1684 = vsel %vm1636, %v1612, %v1660
    %v1685 = vsel %vm1637, %v1613, %v1661
    %v1686 = vsel %vm1638, %v1614, %v1662
    %v1687 = vsel %vm1639, %v1615, %v1663
    %v1688 = vsel %vm1640, %v1616, %v1664
    %v1689 = vsel %vm1641, %v1617, %v1665
    %v1690 = vsel %vm1642, %v1618, %v1666
    %v1691 = vsel %vm1643, %v1619, %v1667
    %v1692 = vsel %vm1644, %v1620, %v1668
    %v1693 = vsel %vm1645, %v1621, %v1669
    %v1694 = vsel %vm1646, %v1622, %v1670
    %v1695 = vsel %vm1647, %v1623, %v1671
    %v1696 = vsel %vm1648, %v1624, %v1672
    %v1697 = vsel %vm1649, %v1625, %v1673
    %v1698 = vsel %vm1650, %v1626, %v1674
    %v1699 = vsel %vm1651, %v1627, %v1675
    %v1700 = vsel %vm1652, %v1628, %v1676
    %v1701 = vld [vmem:[%s11] sm:$0xf]
    %v1703 = vperm.slane %v1701, 0
    %v1704 = vperm.slane %v1701, 1
    %v1705 = vperm.slane %v1701, 2
    %v1706 = vperm.slane %v1701, 3
    %1711 = vmatpush.xpose.msra.mxu0 0.0
    %1712 = vmatpush.xpose.msra.mxu0 0.0
    %1713 = vmatpush.xpose.msra.mxu0 0.0
    %1714 = vmatpush.xpose.msra.mxu0 0.0
    %1715 = vmatpush.xpose.msra.mxu0 0.0
    %1716 = vmatpush.xpose.msra.mxu0 0.0
    %1717 = vmatpush.xpose.msra.mxu0 0.0
    %1718 = vmatpush.xpose.msra.mxu0 0.0
    %1719 = vmatpush.xpose.msra.mxu0 0.0
    %1720 = vmatpush.xpose.msra.mxu0 0.0
    %1721 = vmatpush.xpose.msra.mxu0 %v1697
    %1722 = vmatpush.xpose.msra.mxu0 %v1693
    %1723 = vmatpush.xpose.msra.mxu0 %v1689
    %1724 = vmatpush.xpose.msra.mxu0 %v1685
    %1725 = vmatpush.xpose.msra.mxu0 %v1681
    %1726 = vmatpush.xpose.msra.mxu0 %v1677
    %1727 = vmatmul.f32.gmra.mxu0 %v1703
    %v1728 = vpop.f32.mrf.mxu0
    %v1729 = vadd.f32 0.0, %v1728
    %1730 = vdwg.mxu0
    %1731 = vmatpush.xpose.msra.mxu0 0.0
    %1732 = vmatpush.xpose.msra.mxu0 0.0
    %1733 = vmatpush.xpose.msra.mxu0 0.0
    %1734 = vmatpush.xpose.msra.mxu0 0.0
    %1735 = vmatpush.xpose.msra.mxu0 0.0
    %1736 = vmatpush.xpose.msra.mxu0 0.0
    %1737 = vmatpush.xpose.msra.mxu0 0.0
    %1738 = vmatpush.xpose.msra.mxu0 0.0
    %1739 = vmatpush.xpose.msra.mxu0 0.0
    %1740 = vmatpush.xpose.msra.mxu0 0.0
    %1741 = vmatpush.xpose.msra.mxu0 %v1698
    %1742 = vmatpush.xpose.msra.mxu0 %v1694
    %1743 = vmatpush.xpose.msra.mxu0 %v1690
    %1744 = vmatpush.xpose.msra.mxu0 %v1686
    %1745 = vmatpush.xpose.msra.mxu0 %v1682
    %1746 = vmatpush.xpose.msra.mxu0 %v1678
    %1747 = vmatmul.f32.gmra.mxu0 %v1704
    %v1748 = vpop.f32.mrf.mxu0
    %v1749 = vadd.f32 %v1729, %v1748
    %1750 = vdwg.mxu0
    %1751 = vmatpush.xpose.msra.mxu0 0.0
    %1752 = vmatpush.xpose.msra.mxu0 0.0
    %1753 = vmatpush.xpose.msra.mxu0 0.0
    %1754 = vmatpush.xpose.msra.mxu0 0.0
    %1755 = vmatpush.xpose.msra.mxu0 0.0
    %1756 = vmatpush.xpose.msra.mxu0 0.0
    %1757 = vmatpush.xpose.msra.mxu0 0.0
    %1758 = vmatpush.xpose.msra.mxu0 0.0
    %1759 = vmatpush.xpose.msra.mxu0 0.0
    %1760 = vmatpush.xpose.msra.mxu0 0.0
    %1761 = vmatpush.xpose.msra.mxu0 %v1699
    %1762 = vmatpush.xpose.msra.mxu0 %v1695
    %1763 = vmatpush.xpose.msra.mxu0 %v1691
    %1764 = vmatpush.xpose.msra.mxu0 %v1687
    %1765 = vmatpush.xpose.msra.mxu0 %v1683
    %1766 = vmatpush.xpose.msra.mxu0 %v1679
    %1767 = vmatmul.f32.gmra.mxu0 %v1705
    %v1768 = vpop.f32.mrf.mxu0
    %v1769 = vadd.f32 %v1749, %v1768
    %1770 = vdwg.mxu0
    %1771 = vmatpush.xpose.msra.mxu0 0.0
    %1772 = vmatpush.xpose.msra.mxu0 0.0
    %1773 = vmatpush.xpose.msra.mxu0 0.0
    %1774 = vmatpush.xpose.msra.mxu0 0.0
    %1775 = vmatpush.xpose.msra.mxu0 0.0
    %1776 = vmatpush.xpose.msra.mxu0 0.0
    %1777 = vmatpush.xpose.msra.mxu0 0.0
    %1778 = vmatpush.xpose.msra.mxu0 0.0
    %1779 = vmatpush.xpose.msra.mxu0 0.0
    %1780 = vmatpush.xpose.msra.mxu0 0.0
    %1781 = vmatpush.xpose.msra.mxu0 %v1700
    %1782 = vmatpush.xpose.msra.mxu0 %v1696
    %1783 = vmatpush.xpose.msra.mxu0 %v1692
    %1784 = vmatpush.xpose.msra.mxu0 %v1688
    %1785 = vmatpush.xpose.msra.mxu0 %v1684
    %1786 = vmatpush.xpose.msra.mxu0 %v1680
    %1787 = vmatmul.f32.gmra.mxu0 %v1706
    %v1788 = vpop.f32.mrf.mxu0
    %v1789 = vadd.f32 %v1769, %v1788
    %1790 = vdwg.mxu0
    %v1791 = vperm.slane %v1789, 0
    %v1792 = vsel %vm997, %v1791, -1e+30
    %v1793 = vsel %vm998, %v1791, -1e+30
    %vm1794 = vcmask 392192
    %v1795 = vsel %vm1794, %v1792, -inf
    %1796 = vmax.xlane.f32.xlu0 %v1795
    %v1797 = vpop.xlane.xlu0 %1796
    %v1798 = vsel %vm1794, %v1793, -inf
    %1799 = vmax.xlane.f32.xlu0 %v1798
    %v1800 = vpop.xlane.xlu0 %1799
    %v1801 = vsub.f32 %v1792, %v1797
    %v1802 = vsub.f32 %v1793, %v1800
    %v1803 = vmul.f32 %v1801, 1.442695
    %v1804 = vpow.pop %v1803
    %v1805 = vmul.f32 %v1802, 1.442695
    %v1806 = vpow.pop %v1805
    %v1807 = vsel %vm997, %v1804, 0.0
    %v1808 = vsel %vm998, %v1806, 0.0
    %v1809 = vsel %vm1794, %v1807, 0.0
    %1810 = vadd.xlane.f32.xlu0 %v1809
    %v1811 = vpop.xlane.xlu0 %1810
    %v1812 = vsel %vm1794, %v1808, 0.0
    %1813 = vadd.xlane.f32.xlu0 %v1812
    %v1814 = vpop.xlane.xlu0 %1813
    %v1815 = vrcp.pop %v1811
    %v1816 = vrcp.pop %v1814
    %v1817 = vmul.f32 %v1807, %v1815
    %v1818 = vmul.f32 %v1808, %v1816
    %v1819 = vld [vmem:[%s12] sm:$0xf]
    %v1821 = vperm.slane %v1819, 0
    %v1822 = vperm.slane %v1819, 1
    %v1823 = vperm.slane %v1819, 2
    %v1824 = vperm.slane %v1819, 3
    %v1830 = vsel %vm1794, %v1817, 0
    %v1833 = vsel %vm1794, %v1818, 0
    %1835 = vmatpush.msra.mxu0 0.0
    %1836 = vmatpush.msra.mxu0 0.0
    %1837 = vmatpush.msra.mxu0 0.0
    %1838 = vmatpush.msra.mxu0 0.0
    %1839 = vmatpush.msra.mxu0 0.0
    %1840 = vmatpush.msra.mxu0 0.0
    %1841 = vmatpush.msra.mxu0 0.0
    %1842 = vmatpush.msra.mxu0 0.0
    %1843 = vmatpush.msra.mxu0 0.0
    %1844 = vmatpush.msra.mxu0 0.0
    %1845 = vmatpush.msra.mxu0 %v1383
    %1846 = vmatpush.msra.mxu0 %v1381
    %1847 = vmatpush.msra.mxu0 %v1378
    %1848 = vmatpush.msra.mxu0 %v1376
    %1849 = vmatpush.msra.mxu0 %v1373
    %1850 = vmatpush.msra.mxu0 %v1371
    %1851 = vmatmul.f32.gmra.mxu0 %v1830
    %v1852 = vpop.f32.mrf.mxu0
    %v1853 = vadd.f32 %v1821, %v1852
    %1854 = vmatmul.f32.gmra.mxu0 %v1833
    %v1855 = vpop.f32.mrf.mxu0
    %v1856 = vadd.f32 %v1821, %v1855
    %1857 = vdwg.mxu0
    %1858 = vmatpush.msra.mxu0 0.0
    %1859 = vmatpush.msra.mxu0 0.0
    %1860 = vmatpush.msra.mxu0 0.0
    %1861 = vmatpush.msra.mxu0 0.0
    %1862 = vmatpush.msra.mxu0 0.0
    %1863 = vmatpush.msra.mxu0 0.0
    %1864 = vmatpush.msra.mxu0 0.0
    %1865 = vmatpush.msra.mxu0 0.0
    %1866 = vmatpush.msra.mxu0 0.0
    %1867 = vmatpush.msra.mxu0 0.0
    %1868 = vmatpush.msra.mxu0 %v1407
    %1869 = vmatpush.msra.mxu0 %v1405
    %1870 = vmatpush.msra.mxu0 %v1402
    %1871 = vmatpush.msra.mxu0 %v1400
    %1872 = vmatpush.msra.mxu0 %v1397
    %1873 = vmatpush.msra.mxu0 %v1395
    %1874 = vmatmul.f32.gmra.mxu0 %v1830
    %v1875 = vpop.f32.mrf.mxu0
    %v1876 = vadd.f32 %v1822, %v1875
    %1877 = vmatmul.f32.gmra.mxu0 %v1833
    %v1878 = vpop.f32.mrf.mxu0
    %v1879 = vadd.f32 %v1822, %v1878
    %1880 = vdwg.mxu0
    %1881 = vmatpush.msra.mxu0 0.0
    %1882 = vmatpush.msra.mxu0 0.0
    %1883 = vmatpush.msra.mxu0 0.0
    %1884 = vmatpush.msra.mxu0 0.0
    %1885 = vmatpush.msra.mxu0 0.0
    %1886 = vmatpush.msra.mxu0 0.0
    %1887 = vmatpush.msra.mxu0 0.0
    %1888 = vmatpush.msra.mxu0 0.0
    %1889 = vmatpush.msra.mxu0 0.0
    %1890 = vmatpush.msra.mxu0 0.0
    %1891 = vmatpush.msra.mxu0 %v1431
    %1892 = vmatpush.msra.mxu0 %v1429
    %1893 = vmatpush.msra.mxu0 %v1426
    %1894 = vmatpush.msra.mxu0 %v1424
    %1895 = vmatpush.msra.mxu0 %v1421
    %1896 = vmatpush.msra.mxu0 %v1419
    %1897 = vmatmul.f32.gmra.mxu0 %v1830
    %v1898 = vpop.f32.mrf.mxu0
    %v1899 = vadd.f32 %v1823, %v1898
    %1900 = vmatmul.f32.gmra.mxu0 %v1833
    %v1901 = vpop.f32.mrf.mxu0
    %v1902 = vadd.f32 %v1823, %v1901
    %1903 = vdwg.mxu0
    %1904 = vmatpush.msra.mxu0 0.0
    %1905 = vmatpush.msra.mxu0 0.0
    %1906 = vmatpush.msra.mxu0 0.0
    %1907 = vmatpush.msra.mxu0 0.0
    %1908 = vmatpush.msra.mxu0 0.0
    %1909 = vmatpush.msra.mxu0 0.0
    %1910 = vmatpush.msra.mxu0 0.0
    %1911 = vmatpush.msra.mxu0 0.0
    %1912 = vmatpush.msra.mxu0 0.0
    %1913 = vmatpush.msra.mxu0 0.0
    %1914 = vmatpush.msra.mxu0 %v1455
    %1915 = vmatpush.msra.mxu0 %v1453
    %1916 = vmatpush.msra.mxu0 %v1450
    %1917 = vmatpush.msra.mxu0 %v1448
    %1918 = vmatpush.msra.mxu0 %v1445
    %1919 = vmatpush.msra.mxu0 %v1443
    %1920 = vmatmul.f32.gmra.mxu0 %v1830
    %v1921 = vpop.f32.mrf.mxu0
    %v1922 = vadd.f32 %v1824, %v1921
    %1923 = vmatmul.f32.gmra.mxu0 %v1833
    %v1924 = vpop.f32.mrf.mxu0
    %v1925 = vadd.f32 %v1824, %v1924
    %1926 = vdwg.mxu0
    %s1927 = smul.u32 4, 64
    %s1928 = smul.u32 %s1927, 8
    %s1929 = sshll.u32 %s1928, 4
    %1930 = dma.done %s98, %s1929
    %v1931 = vld [vmem:[#allocation3] sm:$0xff]
    %v1932 = vld [vmem:[#allocation3 + $0x8] sm:$0xff]
    %v1933 = vld [vmem:[#allocation3 + $0x10] sm:$0xff]
    %v1934 = vld [vmem:[#allocation3 + $0x18] sm:$0xff]
    %v1935 = vld [vmem:[#allocation3 + $0x20] sm:$0xff]
    %v1936 = vld [vmem:[#allocation3 + $0x28] sm:$0xff]
    %v1937 = vld [vmem:[#allocation3 + $0x30] sm:$0xff]
    %v1938 = vld [vmem:[#allocation3 + $0x38] sm:$0xff]
    %v1939 = vld [vmem:[#allocation3 + $0x40] sm:$0xff]
    %v1940 = vld [vmem:[#allocation3 + $0x48] sm:$0xff]
    %v1941 = vld [vmem:[#allocation3 + $0x50] sm:$0xff]
    %v1942 = vld [vmem:[#allocation3 + $0x58] sm:$0xff]
    %v1943 = vld [vmem:[#allocation3 + $0x60] sm:$0xff]
    %v1944 = vld [vmem:[#allocation3 + $0x68] sm:$0xff]
    %v1945 = vld [vmem:[#allocation3 + $0x70] sm:$0xff]
    %v1946 = vld [vmem:[#allocation3 + $0x78] sm:$0xff]
    %v1947 = vld [vmem:[#allocation3 + $0x80] sm:$0xff]
    %v1948 = vld [vmem:[#allocation3 + $0x88] sm:$0xff]
    %v1949 = vld [vmem:[#allocation3 + $0x90] sm:$0xff]
    %v1950 = vld [vmem:[#allocation3 + $0x98] sm:$0xff]
    %v1951 = vld [vmem:[#allocation3 + $0xa0] sm:$0xff]
    %v1952 = vld [vmem:[#allocation3 + $0xa8] sm:$0xff]
    %v1953 = vld [vmem:[#allocation3 + $0xb0] sm:$0xff]
    %v1954 = vld [vmem:[#allocation3 + $0xb8] sm:$0xff]
    %v1955 = vld [vmem:[#allocation3 + $0xc0] sm:$0xff]
    %v1956 = vld [vmem:[#allocation3 + $0xc8] sm:$0xff]
    %v1957 = vld [vmem:[#allocation3 + $0xd0] sm:$0xff]
    %v1958 = vld [vmem:[#allocation3 + $0xd8] sm:$0xff]
    %v1959 = vld [vmem:[#allocation3 + $0xe0] sm:$0xff]
    %v1960 = vld [vmem:[#allocation3 + $0xe8] sm:$0xff]
    %v1961 = vld [vmem:[#allocation3 + $0xf0] sm:$0xff]
    %v1962 = vld [vmem:[#allocation3 + $0xf8] sm:$0xff]
    %v1963 = vld [vmem:[#allocation3 + $0x100] sm:$0xff]
    %v1964 = vld [vmem:[#allocation3 + $0x108] sm:$0xff]
    %v1965 = vld [vmem:[#allocation3 + $0x110] sm:$0xff]
    %v1966 = vld [vmem:[#allocation3 + $0x118] sm:$0xff]
    %v1967 = vld [vmem:[#allocation3 + $0x120] sm:$0xff]
    %v1968 = vld [vmem:[#allocation3 + $0x128] sm:$0xff]
    %v1969 = vld [vmem:[#allocation3 + $0x130] sm:$0xff]
    %v1970 = vld [vmem:[#allocation3 + $0x138] sm:$0xff]
    %v1971 = vld [vmem:[#allocation3 + $0x140] sm:$0xff]
    %v1972 = vld [vmem:[#allocation3 + $0x148] sm:$0xff]
    %v1973 = vld [vmem:[#allocation3 + $0x150] sm:$0xff]
    %v1974 = vld [vmem:[#allocation3 + $0x158] sm:$0xff]
    %v1975 = vld [vmem:[#allocation3 + $0x160] sm:$0xff]
    %v1976 = vld [vmem:[#allocation3 + $0x168] sm:$0xff]
    %v1977 = vld [vmem:[#allocation3 + $0x170] sm:$0xff]
    %v1978 = vld [vmem:[#allocation3 + $0x178] sm:$0xff]
    %v1979 = vld [vmem:[#allocation3 + $0x180] sm:$0xff]
    %v1980 = vld [vmem:[#allocation3 + $0x188] sm:$0xff]
    %v1981 = vld [vmem:[#allocation3 + $0x190] sm:$0xff]
    %v1982 = vld [vmem:[#allocation3 + $0x198] sm:$0xff]
    %v1983 = vld [vmem:[#allocation3 + $0x1a0] sm:$0xff]
    %v1984 = vld [vmem:[#allocation3 + $0x1a8] sm:$0xff]
    %v1985 = vld [vmem:[#allocation3 + $0x1b0] sm:$0xff]
    %v1986 = vld [vmem:[#allocation3 + $0x1b8] sm:$0xff]
    %v1987 = vld [vmem:[#allocation3 + $0x1c0] sm:$0xff]
    %v1988 = vld [vmem:[#allocation3 + $0x1c8] sm:$0xff]
    %v1989 = vld [vmem:[#allocation3 + $0x1d0] sm:$0xff]
    %v1990 = vld [vmem:[#allocation3 + $0x1d8] sm:$0xff]
    %v1991 = vld [vmem:[#allocation3 + $0x1e0] sm:$0xff]
    %v1992 = vld [vmem:[#allocation3 + $0x1e8] sm:$0xff]
    %v1993 = vld [vmem:[#allocation3 + $0x1f0] sm:$0xff]
    %v1994 = vld [vmem:[#allocation3 + $0x1f8] sm:$0xff]
    %v1995 = vld [vmem:[#allocation3 + $0x200] sm:$0xff]
    %v1996 = vld [vmem:[#allocation3 + $0x208] sm:$0xff]
    %v1997 = vld [vmem:[#allocation3 + $0x210] sm:$0xff]
    %v1998 = vld [vmem:[#allocation3 + $0x218] sm:$0xff]
    %v1999 = vld [vmem:[#allocation3 + $0x220] sm:$0xff]
    %v2000 = vld [vmem:[#allocation3 + $0x228] sm:$0xff]
    %v2001 = vld [vmem:[#allocation3 + $0x230] sm:$0xff]
    %v2002 = vld [vmem:[#allocation3 + $0x238] sm:$0xff]
    %v2003 = vld [vmem:[#allocation3 + $0x240] sm:$0xff]
    %v2004 = vld [vmem:[#allocation3 + $0x248] sm:$0xff]
    %v2005 = vld [vmem:[#allocation3 + $0x250] sm:$0xff]
    %v2006 = vld [vmem:[#allocation3 + $0x258] sm:$0xff]
    %v2007 = vld [vmem:[#allocation3 + $0x260] sm:$0xff]
    %v2008 = vld [vmem:[#allocation3 + $0x268] sm:$0xff]
    %v2009 = vld [vmem:[#allocation3 + $0x270] sm:$0xff]
    %v2010 = vld [vmem:[#allocation3 + $0x278] sm:$0xff]
    %v2011 = vld [vmem:[#allocation3 + $0x280] sm:$0xff]
    %v2012 = vld [vmem:[#allocation3 + $0x288] sm:$0xff]
    %v2013 = vld [vmem:[#allocation3 + $0x290] sm:$0xff]
    %v2014 = vld [vmem:[#allocation3 + $0x298] sm:$0xff]
    %v2015 = vld [vmem:[#allocation3 + $0x2a0] sm:$0xff]
    %v2016 = vld [vmem:[#allocation3 + $0x2a8] sm:$0xff]
    %v2017 = vld [vmem:[#allocation3 + $0x2b0] sm:$0xff]
    %v2018 = vld [vmem:[#allocation3 + $0x2b8] sm:$0xff]
    %v2019 = vld [vmem:[#allocation3 + $0x2c0] sm:$0xff]
    %v2020 = vld [vmem:[#allocation3 + $0x2c8] sm:$0xff]
    %v2021 = vld [vmem:[#allocation3 + $0x2d0] sm:$0xff]
    %v2022 = vld [vmem:[#allocation3 + $0x2d8] sm:$0xff]
    %v2023 = vld [vmem:[#allocation3 + $0x2e0] sm:$0xff]
    %v2024 = vld [vmem:[#allocation3 + $0x2e8] sm:$0xff]
    %v2025 = vld [vmem:[#allocation3 + $0x2f0] sm:$0xff]
    %v2026 = vld [vmem:[#allocation3 + $0x2f8] sm:$0xff]
    %v2027 = vld [vmem:[#allocation3 + $0x300] sm:$0xff]
    %v2028 = vld [vmem:[#allocation3 + $0x308] sm:$0xff]
    %v2029 = vld [vmem:[#allocation3 + $0x310] sm:$0xff]
    %v2030 = vld [vmem:[#allocation3 + $0x318] sm:$0xff]
    %v2031 = vld [vmem:[#allocation3 + $0x320] sm:$0xff]
    %v2032 = vld [vmem:[#allocation3 + $0x328] sm:$0xff]
    %v2033 = vld [vmem:[#allocation3 + $0x330] sm:$0xff]
    %v2034 = vld [vmem:[#allocation3 + $0x338] sm:$0xff]
    %v2035 = vld [vmem:[#allocation3 + $0x340] sm:$0xff]
    %v2036 = vld [vmem:[#allocation3 + $0x348] sm:$0xff]
    %v2037 = vld [vmem:[#allocation3 + $0x350] sm:$0xff]
    %v2038 = vld [vmem:[#allocation3 + $0x358] sm:$0xff]
    %v2039 = vld [vmem:[#allocation3 + $0x360] sm:$0xff]
    %v2040 = vld [vmem:[#allocation3 + $0x368] sm:$0xff]
    %v2041 = vld [vmem:[#allocation3 + $0x370] sm:$0xff]
    %v2042 = vld [vmem:[#allocation3 + $0x378] sm:$0xff]
    %v2043 = vld [vmem:[#allocation3 + $0x380] sm:$0xff]
    %v2044 = vld [vmem:[#allocation3 + $0x388] sm:$0xff]
    %v2045 = vld [vmem:[#allocation3 + $0x390] sm:$0xff]
    %v2046 = vld [vmem:[#allocation3 + $0x398] sm:$0xff]
    %v2047 = vld [vmem:[#allocation3 + $0x3a0] sm:$0xff]
    %v2048 = vld [vmem:[#allocation3 + $0x3a8] sm:$0xff]
    %v2049 = vld [vmem:[#allocation3 + $0x3b0] sm:$0xff]
    %v2050 = vld [vmem:[#allocation3 + $0x3b8] sm:$0xff]
    %v2051 = vld [vmem:[#allocation3 + $0x3c0] sm:$0xff]
    %v2052 = vld [vmem:[#allocation3 + $0x3c8] sm:$0xff]
    %v2053 = vld [vmem:[#allocation3 + $0x3d0] sm:$0xff]
    %v2054 = vld [vmem:[#allocation3 + $0x3d8] sm:$0xff]
    %v2055 = vld [vmem:[#allocation3 + $0x3e0] sm:$0xff]
    %v2056 = vld [vmem:[#allocation3 + $0x3e8] sm:$0xff]
    %v2057 = vld [vmem:[#allocation3 + $0x3f0] sm:$0xff]
    %v2058 = vld [vmem:[#allocation3 + $0x3f8] sm:$0xff]
    %v2059 = vld [vmem:[#allocation3 + $0x400] sm:$0xff]
    %v2060 = vld [vmem:[#allocation3 + $0x408] sm:$0xff]
    %v2061 = vld [vmem:[#allocation3 + $0x410] sm:$0xff]
    %v2062 = vld [vmem:[#allocation3 + $0x418] sm:$0xff]
    %v2063 = vld [vmem:[#allocation3 + $0x420] sm:$0xff]
    %v2064 = vld [vmem:[#allocation3 + $0x428] sm:$0xff]
    %v2065 = vld [vmem:[#allocation3 + $0x430] sm:$0xff]
    %v2066 = vld [vmem:[#allocation3 + $0x438] sm:$0xff]
    %v2067 = vld [vmem:[#allocation3 + $0x440] sm:$0xff]
    %v2068 = vld [vmem:[#allocation3 + $0x448] sm:$0xff]
    %v2069 = vld [vmem:[#allocation3 + $0x450] sm:$0xff]
    %v2070 = vld [vmem:[#allocation3 + $0x458] sm:$0xff]
    %v2071 = vld [vmem:[#allocation3 + $0x460] sm:$0xff]
    %v2072 = vld [vmem:[#allocation3 + $0x468] sm:$0xff]
    %v2073 = vld [vmem:[#allocation3 + $0x470] sm:$0xff]
    %v2074 = vld [vmem:[#allocation3 + $0x478] sm:$0xff]
    %v2075 = vld [vmem:[#allocation3 + $0x480] sm:$0xff]
    %v2076 = vld [vmem:[#allocation3 + $0x488] sm:$0xff]
    %v2077 = vld [vmem:[#allocation3 + $0x490] sm:$0xff]
    %v2078 = vld [vmem:[#allocation3 + $0x498] sm:$0xff]
    %v2079 = vld [vmem:[#allocation3 + $0x4a0] sm:$0xff]
    %v2080 = vld [vmem:[#allocation3 + $0x4a8] sm:$0xff]
    %v2081 = vld [vmem:[#allocation3 + $0x4b0] sm:$0xff]
    %v2082 = vld [vmem:[#allocation3 + $0x4b8] sm:$0xff]
    %v2083 = vld [vmem:[#allocation3 + $0x4c0] sm:$0xff]
    %v2084 = vld [vmem:[#allocation3 + $0x4c8] sm:$0xff]
    %v2085 = vld [vmem:[#allocation3 + $0x4d0] sm:$0xff]
    %v2086 = vld [vmem:[#allocation3 + $0x4d8] sm:$0xff]
    %v2087 = vld [vmem:[#allocation3 + $0x4e0] sm:$0xff]
    %v2088 = vld [vmem:[#allocation3 + $0x4e8] sm:$0xff]
    %v2089 = vld [vmem:[#allocation3 + $0x4f0] sm:$0xff]
    %v2090 = vld [vmem:[#allocation3 + $0x4f8] sm:$0xff]
    %v2091 = vld [vmem:[#allocation3 + $0x500] sm:$0xff]
    %v2092 = vld [vmem:[#allocation3 + $0x508] sm:$0xff]
    %v2093 = vld [vmem:[#allocation3 + $0x510] sm:$0xff]
    %v2094 = vld [vmem:[#allocation3 + $0x518] sm:$0xff]
    %v2095 = vld [vmem:[#allocation3 + $0x520] sm:$0xff]
    %v2096 = vld [vmem:[#allocation3 + $0x528] sm:$0xff]
    %v2097 = vld [vmem:[#allocation3 + $0x530] sm:$0xff]
    %v2098 = vld [vmem:[#allocation3 + $0x538] sm:$0xff]
    %v2099 = vld [vmem:[#allocation3 + $0x540] sm:$0xff]
    %v2100 = vld [vmem:[#allocation3 + $0x548] sm:$0xff]
    %v2101 = vld [vmem:[#allocation3 + $0x550] sm:$0xff]
    %v2102 = vld [vmem:[#allocation3 + $0x558] sm:$0xff]
    %v2103 = vld [vmem:[#allocation3 + $0x560] sm:$0xff]
    %v2104 = vld [vmem:[#allocation3 + $0x568] sm:$0xff]
    %v2105 = vld [vmem:[#allocation3 + $0x570] sm:$0xff]
    %v2106 = vld [vmem:[#allocation3 + $0x578] sm:$0xff]
    %v2107 = vld [vmem:[#allocation3 + $0x580] sm:$0xff]
    %v2108 = vld [vmem:[#allocation3 + $0x588] sm:$0xff]
    %v2109 = vld [vmem:[#allocation3 + $0x590] sm:$0xff]
    %v2110 = vld [vmem:[#allocation3 + $0x598] sm:$0xff]
    %v2111 = vld [vmem:[#allocation3 + $0x5a0] sm:$0xff]
    %v2112 = vld [vmem:[#allocation3 + $0x5a8] sm:$0xff]
    %v2113 = vld [vmem:[#allocation3 + $0x5b0] sm:$0xff]
    %v2114 = vld [vmem:[#allocation3 + $0x5b8] sm:$0xff]
    %v2115 = vld [vmem:[#allocation3 + $0x5c0] sm:$0xff]
    %v2116 = vld [vmem:[#allocation3 + $0x5c8] sm:$0xff]
    %v2117 = vld [vmem:[#allocation3 + $0x5d0] sm:$0xff]
    %v2118 = vld [vmem:[#allocation3 + $0x5d8] sm:$0xff]
    %v2119 = vld [vmem:[#allocation3 + $0x5e0] sm:$0xff]
    %v2120 = vld [vmem:[#allocation3 + $0x5e8] sm:$0xff]
    %v2121 = vld [vmem:[#allocation3 + $0x5f0] sm:$0xff]
    %v2122 = vld [vmem:[#allocation3 + $0x5f8] sm:$0xff]
    %v2123 = vld [vmem:[#allocation3 + $0x600] sm:$0xff]
    %v2124 = vld [vmem:[#allocation3 + $0x608] sm:$0xff]
    %v2125 = vld [vmem:[#allocation3 + $0x610] sm:$0xff]
    %v2126 = vld [vmem:[#allocation3 + $0x618] sm:$0xff]
    %v2127 = vld [vmem:[#allocation3 + $0x620] sm:$0xff]
    %v2128 = vld [vmem:[#allocation3 + $0x628] sm:$0xff]
    %v2129 = vld [vmem:[#allocation3 + $0x630] sm:$0xff]
    %v2130 = vld [vmem:[#allocation3 + $0x638] sm:$0xff]
    %v2131 = vld [vmem:[#allocation3 + $0x640] sm:$0xff]
    %v2132 = vld [vmem:[#allocation3 + $0x648] sm:$0xff]
    %v2133 = vld [vmem:[#allocation3 + $0x650] sm:$0xff]
    %v2134 = vld [vmem:[#allocation3 + $0x658] sm:$0xff]
    %v2135 = vld [vmem:[#allocation3 + $0x660] sm:$0xff]
    %v2136 = vld [vmem:[#allocation3 + $0x668] sm:$0xff]
    %v2137 = vld [vmem:[#allocation3 + $0x670] sm:$0xff]
    %v2138 = vld [vmem:[#allocation3 + $0x678] sm:$0xff]
    %v2139 = vld [vmem:[#allocation3 + $0x680] sm:$0xff]
    %v2140 = vld [vmem:[#allocation3 + $0x688] sm:$0xff]
    %v2141 = vld [vmem:[#allocation3 + $0x690] sm:$0xff]
    %v2142 = vld [vmem:[#allocation3 + $0x698] sm:$0xff]
    %v2143 = vld [vmem:[#allocation3 + $0x6a0] sm:$0xff]
    %v2144 = vld [vmem:[#allocation3 + $0x6a8] sm:$0xff]
    %v2145 = vld [vmem:[#allocation3 + $0x6b0] sm:$0xff]
    %v2146 = vld [vmem:[#allocation3 + $0x6b8] sm:$0xff]
    %v2147 = vld [vmem:[#allocation3 + $0x6c0] sm:$0xff]
    %v2148 = vld [vmem:[#allocation3 + $0x6c8] sm:$0xff]
    %v2149 = vld [vmem:[#allocation3 + $0x6d0] sm:$0xff]
    %v2150 = vld [vmem:[#allocation3 + $0x6d8] sm:$0xff]
    %v2151 = vld [vmem:[#allocation3 + $0x6e0] sm:$0xff]
    %v2152 = vld [vmem:[#allocation3 + $0x6e8] sm:$0xff]
    %v2153 = vld [vmem:[#allocation3 + $0x6f0] sm:$0xff]
    %v2154 = vld [vmem:[#allocation3 + $0x6f8] sm:$0xff]
    %v2155 = vld [vmem:[#allocation3 + $0x700] sm:$0xff]
    %v2156 = vld [vmem:[#allocation3 + $0x708] sm:$0xff]
    %v2157 = vld [vmem:[#allocation3 + $0x710] sm:$0xff]
    %v2158 = vld [vmem:[#allocation3 + $0x718] sm:$0xff]
    %v2159 = vld [vmem:[#allocation3 + $0x720] sm:$0xff]
    %v2160 = vld [vmem:[#allocation3 + $0x728] sm:$0xff]
    %v2161 = vld [vmem:[#allocation3 + $0x730] sm:$0xff]
    %v2162 = vld [vmem:[#allocation3 + $0x738] sm:$0xff]
    %v2163 = vld [vmem:[#allocation3 + $0x740] sm:$0xff]
    %v2164 = vld [vmem:[#allocation3 + $0x748] sm:$0xff]
    %v2165 = vld [vmem:[#allocation3 + $0x750] sm:$0xff]
    %v2166 = vld [vmem:[#allocation3 + $0x758] sm:$0xff]
    %v2167 = vld [vmem:[#allocation3 + $0x760] sm:$0xff]
    %v2168 = vld [vmem:[#allocation3 + $0x768] sm:$0xff]
    %v2169 = vld [vmem:[#allocation3 + $0x770] sm:$0xff]
    %v2170 = vld [vmem:[#allocation3 + $0x778] sm:$0xff]
    %v2171 = vld [vmem:[#allocation3 + $0x780] sm:$0xff]
    %v2172 = vld [vmem:[#allocation3 + $0x788] sm:$0xff]
    %v2173 = vld [vmem:[#allocation3 + $0x790] sm:$0xff]
    %v2174 = vld [vmem:[#allocation3 + $0x798] sm:$0xff]
    %v2175 = vld [vmem:[#allocation3 + $0x7a0] sm:$0xff]
    %v2176 = vld [vmem:[#allocation3 + $0x7a8] sm:$0xff]
    %v2177 = vld [vmem:[#allocation3 + $0x7b0] sm:$0xff]
    %v2178 = vld [vmem:[#allocation3 + $0x7b8] sm:$0xff]
    %v2179 = vld [vmem:[#allocation3 + $0x7c0] sm:$0xff]
    %v2180 = vld [vmem:[#allocation3 + $0x7c8] sm:$0xff]
    %v2181 = vld [vmem:[#allocation3 + $0x7d0] sm:$0xff]
    %v2182 = vld [vmem:[#allocation3 + $0x7d8] sm:$0xff]
    %v2183 = vld [vmem:[#allocation3 + $0x7e0] sm:$0xff]
    %v2184 = vld [vmem:[#allocation3 + $0x7e8] sm:$0xff]
    %v2185 = vld [vmem:[#allocation3 + $0x7f0] sm:$0xff]
    %v2186 = vld [vmem:[#allocation3 + $0x7f8] sm:$0xff]
    %v2187 = vpack.c.bf16 %v1856, %v1853
    %v2188 = vpack.c.bf16 %v1879, %v1876
    %v2189 = vpack.c.bf16 %v1902, %v1899
    %v2190 = vpack.c.bf16 %v1925, %v1922
    %v2191 = vld [vmem:[%s13] sm:$0xff]
    %v2193 = vperm.slane %v2191, 0
    %v2194 = vperm.slane %v2191, 1
    %v2195 = vperm.slane %v2191, 2
    %v2196 = vperm.slane %v2191, 3
    %v2197 = vperm.slane %v2191, 4
    %v2198 = vperm.slane %v2191, 5
    %v2199 = vperm.slane %v2191, 6
    %v2200 = vperm.slane %v2191, 7
    %v2465 = vunpack.c.l.b16 %v1931
    %v2466 = vunpack.c.h.b16 %v1931
    %v2467 = vunpack.c.l.b16 %v1932
    %v2468 = vunpack.c.h.b16 %v1932
    %v2469 = vunpack.c.l.b16 %v1933
    %v2470 = vunpack.c.h.b16 %v1933
    %v2471 = vunpack.c.l.b16 %v1934
    %v2472 = vunpack.c.h.b16 %v1934
    %v2473 = vunpack.c.l.b16 %v1935
    %v2474 = vunpack.c.h.b16 %v1935
    %v2475 = vunpack.c.l.b16 %v1936
    %v2476 = vunpack.c.h.b16 %v1936
    %v2477 = vunpack.c.l.b16 %v1937
    %v2478 = vunpack.c.h.b16 %v1937
    %v2479 = vunpack.c.l.b16 %v1938
    %v2480 = vunpack.c.h.b16 %v1938
    %v2481 = vunpack.c.l.b16 %v1939
    %v2482 = vunpack.c.h.b16 %v1939
    %v2483 = vunpack.c.l.b16 %v1940
    %v2484 = vunpack.c.h.b16 %v1940
    %v2485 = vunpack.c.l.b16 %v1941
    %v2486 = vunpack.c.h.b16 %v1941
    %v2487 = vunpack.c.l.b16 %v1942
    %v2488 = vunpack.c.h.b16 %v1942
    %v2489 = vunpack.c.l.b16 %v1943
    %v2490 = vunpack.c.h.b16 %v1943
    %v2491 = vunpack.c.l.b16 %v1944
    %v2492 = vunpack.c.h.b16 %v1944
    %v2493 = vunpack.c.l.b16 %v1945
    %v2494 = vunpack.c.h.b16 %v1945
    %v2495 = vunpack.c.l.b16 %v1946
    %v2496 = vunpack.c.h.b16 %v1946
    %v2497 = vunpack.c.l.b16 %v1947
    %v2498 = vunpack.c.h.b16 %v1947
    %v2499 = vunpack.c.l.b16 %v1948
    %v2500 = vunpack.c.h.b16 %v1948
    %v2501 = vunpack.c.l.b16 %v1949
    %v2502 = vunpack.c.h.b16 %v1949
    %v2503 = vunpack.c.l.b16 %v1950
    %v2504 = vunpack.c.h.b16 %v1950
    %v2505 = vunpack.c.l.b16 %v1951
    %v2506 = vunpack.c.h.b16 %v1951
    %v2507 = vunpack.c.l.b16 %v1952
    %v2508 = vunpack.c.h.b16 %v1952
    %v2509 = vunpack.c.l.b16 %v1953
    %v2510 = vunpack.c.h.b16 %v1953
    %v2511 = vunpack.c.l.b16 %v1954
    %v2512 = vunpack.c.h.b16 %v1954
    %v2513 = vunpack.c.l.b16 %v1955
    %v2514 = vunpack.c.h.b16 %v1955
    %v2515 = vunpack.c.l.b16 %v1956
    %v2516 = vunpack.c.h.b16 %v1956
    %v2517 = vunpack.c.l.b16 %v1957
    %v2518 = vunpack.c.h.b16 %v1957
    %v2519 = vunpack.c.l.b16 %v1958
    %v2520 = vunpack.c.h.b16 %v1958
    %v2521 = vunpack.c.l.b16 %v1959
    %v2522 = vunpack.c.h.b16 %v1959
    %v2523 = vunpack.c.l.b16 %v1960
    %v2524 = vunpack.c.h.b16 %v1960
    %v2525 = vunpack.c.l.b16 %v1961
    %v2526 = vunpack.c.h.b16 %v1961
    %v2527 = vunpack.c.l.b16 %v1962
    %v2528 = vunpack.c.h.b16 %v1962
    %v2529 = vunpack.c.l.b16 %v1963
    %v2530 = vunpack.c.h.b16 %v1963
    %v2531 = vunpack.c.l.b16 %v1964
    %v2532 = vunpack.c.h.b16 %v1964
    %v2533 = vunpack.c.l.b16 %v1965
    %v2534 = vunpack.c.h.b16 %v1965
    %v2535 = vunpack.c.l.b16 %v1966
    %v2536 = vunpack.c.h.b16 %v1966
    %v2537 = vunpack.c.l.b16 %v1967
    %v2538 = vunpack.c.h.b16 %v1967
    %v2539 = vunpack.c.l.b16 %v1968
    %v2540 = vunpack.c.h.b16 %v1968
    %v2541 = vunpack.c.l.b16 %v1969
    %v2542 = vunpack.c.h.b16 %v1969
    %v2543 = vunpack.c.l.b16 %v1970
    %v2544 = vunpack.c.h.b16 %v1970
    %v2545 = vunpack.c.l.b16 %v1971
    %v2546 = vunpack.c.h.b16 %v1971
    %v2547 = vunpack.c.l.b16 %v1972
    %v2548 = vunpack.c.h.b16 %v1972
    %v2549 = vunpack.c.l.b16 %v1973
    %v2550 = vunpack.c.h.b16 %v1973
    %v2551 = vunpack.c.l.b16 %v1974
    %v2552 = vunpack.c.h.b16 %v1974
    %v2553 = vunpack.c.l.b16 %v1975
    %v2554 = vunpack.c.h.b16 %v1975
    %v2555 = vunpack.c.l.b16 %v1976
    %v2556 = vunpack.c.h.b16 %v1976
    %v2557 = vunpack.c.l.b16 %v1977
    %v2558 = vunpack.c.h.b16 %v1977
    %v2559 = vunpack.c.l.b16 %v1978
    %v2560 = vunpack.c.h.b16 %v1978
    %v2561 = vunpack.c.l.b16 %v1979
    %v2562 = vunpack.c.h.b16 %v1979
    %v2563 = vunpack.c.l.b16 %v1980
    %v2564 = vunpack.c.h.b16 %v1980
    %v2565 = vunpack.c.l.b16 %v1981
    %v2566 = vunpack.c.h.b16 %v1981
    %v2567 = vunpack.c.l.b16 %v1982
    %v2568 = vunpack.c.h.b16 %v1982
    %v2569 = vunpack.c.l.b16 %v1983
    %v2570 = vunpack.c.h.b16 %v1983
    %v2571 = vunpack.c.l.b16 %v1984
    %v2572 = vunpack.c.h.b16 %v1984
    %v2573 = vunpack.c.l.b16 %v1985
    %v2574 = vunpack.c.h.b16 %v1985
    %v2575 = vunpack.c.l.b16 %v1986
    %v2576 = vunpack.c.h.b16 %v1986
    %v2577 = vunpack.c.l.b16 %v1987
    %v2578 = vunpack.c.h.b16 %v1987
    %v2579 = vunpack.c.l.b16 %v1988
    %v2580 = vunpack.c.h.b16 %v1988
    %v2581 = vunpack.c.l.b16 %v1989
    %v2582 = vunpack.c.h.b16 %v1989
    %v2583 = vunpack.c.l.b16 %v1990
    %v2584 = vunpack.c.h.b16 %v1990
    %v2585 = vunpack.c.l.b16 %v1991
    %v2586 = vunpack.c.h.b16 %v1991
    %v2587 = vunpack.c.l.b16 %v1992
    %v2588 = vunpack.c.h.b16 %v1992
    %v2589 = vunpack.c.l.b16 %v1993
    %v2590 = vunpack.c.h.b16 %v1993
    %v2591 = vunpack.c.l.b16 %v1994
    %v2592 = vunpack.c.h.b16 %v1994
    %v2593 = vunpack.c.l.b16 %v1995
    %v2594 = vunpack.c.h.b16 %v1995
    %v2595 = vunpack.c.l.b16 %v1996
    %v2596 = vunpack.c.h.b16 %v1996
    %v2597 = vunpack.c.l.b16 %v1997
    %v2598 = vunpack.c.h.b16 %v1997
    %v2599 = vunpack.c.l.b16 %v1998
    %v2600 = vunpack.c.h.b16 %v1998
    %v2601 = vunpack.c.l.b16 %v1999
    %v2602 = vunpack.c.h.b16 %v1999
    %v2603 = vunpack.c.l.b16 %v2000
    %v2604 = vunpack.c.h.b16 %v2000
    %v2605 = vunpack.c.l.b16 %v2001
    %v2606 = vunpack.c.h.b16 %v2001
    %v2607 = vunpack.c.l.b16 %v2002
    %v2608 = vunpack.c.h.b16 %v2002
    %v2609 = vunpack.c.l.b16 %v2003
    %v2610 = vunpack.c.h.b16 %v2003
    %v2611 = vunpack.c.l.b16 %v2004
    %v2612 = vunpack.c.h.b16 %v2004
    %v2613 = vunpack.c.l.b16 %v2005
    %v2614 = vunpack.c.h.b16 %v2005
    %v2615 = vunpack.c.l.b16 %v2006
    %v2616 = vunpack.c.h.b16 %v2006
    %v2617 = vunpack.c.l.b16 %v2007
    %v2618 = vunpack.c.h.b16 %v2007
    %v2619 = vunpack.c.l.b16 %v2008
    %v2620 = vunpack.c.h.b16 %v2008
    %v2621 = vunpack.c.l.b16 %v2009
    %v2622 = vunpack.c.h.b16 %v2009
    %v2623 = vunpack.c.l.b16 %v2010
    %v2624 = vunpack.c.h.b16 %v2010
    %v2625 = vunpack.c.l.b16 %v2011
    %v2626 = vunpack.c.h.b16 %v2011
    %v2627 = vunpack.c.l.b16 %v2012
    %v2628 = vunpack.c.h.b16 %v2012
    %v2629 = vunpack.c.l.b16 %v2013
    %v2630 = vunpack.c.h.b16 %v2013
    %v2631 = vunpack.c.l.b16 %v2014
    %v2632 = vunpack.c.h.b16 %v2014
    %v2633 = vunpack.c.l.b16 %v2015
    %v2634 = vunpack.c.h.b16 %v2015
    %v2635 = vunpack.c.l.b16 %v2016
    %v2636 = vunpack.c.h.b16 %v2016
    %v2637 = vunpack.c.l.b16 %v2017
    %v2638 = vunpack.c.h.b16 %v2017
    %v2639 = vunpack.c.l.b16 %v2018
    %v2640 = vunpack.c.h.b16 %v2018
    %v2641 = vunpack.c.l.b16 %v2019
    %v2642 = vunpack.c.h.b16 %v2019
    %v2643 = vunpack.c.l.b16 %v2020
    %v2644 = vunpack.c.h.b16 %v2020
    %v2645 = vunpack.c.l.b16 %v2021
    %v2646 = vunpack.c.h.b16 %v2021
    %v2647 = vunpack.c.l.b16 %v2022
    %v2648 = vunpack.c.h.b16 %v2022
    %v2649 = vunpack.c.l.b16 %v2023
    %v2650 = vunpack.c.h.b16 %v2023
    %v2651 = vunpack.c.l.b16 %v2024
    %v2652 = vunpack.c.h.b16 %v2024
    %v2653 = vunpack.c.l.b16 %v2025
    %v2654 = vunpack.c.h.b16 %v2025
    %v2655 = vunpack.c.l.b16 %v2026
    %v2656 = vunpack.c.h.b16 %v2026
    %v2657 = vunpack.c.l.b16 %v2027
    %v2658 = vunpack.c.h.b16 %v2027
    %v2659 = vunpack.c.l.b16 %v2028
    %v2660 = vunpack.c.h.b16 %v2028
    %v2661 = vunpack.c.l.b16 %v2029
    %v2662 = vunpack.c.h.b16 %v2029
    %v2663 = vunpack.c.l.b16 %v2030
    %v2664 = vunpack.c.h.b16 %v2030
    %v2665 = vunpack.c.l.b16 %v2031
    %v2666 = vunpack.c.h.b16 %v2031
    %v2667 = vunpack.c.l.b16 %v2032
    %v2668 = vunpack.c.h.b16 %v2032
    %v2669 = vunpack.c.l.b16 %v2033
    %v2670 = vunpack.c.h.b16 %v2033
    %v2671 = vunpack.c.l.b16 %v2034
    %v2672 = vunpack.c.h.b16 %v2034
    %v2673 = vunpack.c.l.b16 %v2035
    %v2674 = vunpack.c.h.b16 %v2035
    %v2675 = vunpack.c.l.b16 %v2036
    %v2676 = vunpack.c.h.b16 %v2036
    %v2677 = vunpack.c.l.b16 %v2037
    %v2678 = vunpack.c.h.b16 %v2037
    %v2679 = vunpack.c.l.b16 %v2038
    %v2680 = vunpack.c.h.b16 %v2038
    %v2681 = vunpack.c.l.b16 %v2039
    %v2682 = vunpack.c.h.b16 %v2039
    %v2683 = vunpack.c.l.b16 %v2040
    %v2684 = vunpack.c.h.b16 %v2040
    %v2685 = vunpack.c.l.b16 %v2041
    %v2686 = vunpack.c.h.b16 %v2041
    %v2687 = vunpack.c.l.b16 %v2042
    %v2688 = vunpack.c.h.b16 %v2042
    %v2689 = vunpack.c.l.b16 %v2043
    %v2690 = vunpack.c.h.b16 %v2043
    %v2691 = vunpack.c.l.b16 %v2044
    %v2692 = vunpack.c.h.b16 %v2044
    %v2693 = vunpack.c.l.b16 %v2045
    %v2694 = vunpack.c.h.b16 %v2045
    %v2695 = vunpack.c.l.b16 %v2046
    %v2696 = vunpack.c.h.b16 %v2046
    %v2697 = vunpack.c.l.b16 %v2047
    %v2698 = vunpack.c.h.b16 %v2047
    %v2699 = vunpack.c.l.b16 %v2048
    %v2700 = vunpack.c.h.b16 %v2048
    %v2701 = vunpack.c.l.b16 %v2049
    %v2702 = vunpack.c.h.b16 %v2049
    %v2703 = vunpack.c.l.b16 %v2050
    %v2704 = vunpack.c.h.b16 %v2050
    %v2705 = vunpack.c.l.b16 %v2051
    %v2706 = vunpack.c.h.b16 %v2051
    %v2707 = vunpack.c.l.b16 %v2052
    %v2708 = vunpack.c.h.b16 %v2052
    %v2709 = vunpack.c.l.b16 %v2053
    %v2710 = vunpack.c.h.b16 %v2053
    %v2711 = vunpack.c.l.b16 %v2054
    %v2712 = vunpack.c.h.b16 %v2054
    %v2713 = vunpack.c.l.b16 %v2055
    %v2714 = vunpack.c.h.b16 %v2055
    %v2715 = vunpack.c.l.b16 %v2056
    %v2716 = vunpack.c.h.b16 %v2056
    %v2717 = vunpack.c.l.b16 %v2057
    %v2718 = vunpack.c.h.b16 %v2057
    %v2719 = vunpack.c.l.b16 %v2058
    %v2720 = vunpack.c.h.b16 %v2058
    %v2721 = vunpack.c.l.b16 %v2059
    %v2722 = vunpack.c.h.b16 %v2059
    %v2723 = vunpack.c.l.b16 %v2060
    %v2724 = vunpack.c.h.b16 %v2060
    %v2725 = vunpack.c.l.b16 %v2061
    %v2726 = vunpack.c.h.b16 %v2061
    %v2727 = vunpack.c.l.b16 %v2062
    %v2728 = vunpack.c.h.b16 %v2062
    %v2729 = vunpack.c.l.b16 %v2063
    %v2730 = vunpack.c.h.b16 %v2063
    %v2731 = vunpack.c.l.b16 %v2064
    %v2732 = vunpack.c.h.b16 %v2064
    %v2733 = vunpack.c.l.b16 %v2065
    %v2734 = vunpack.c.h.b16 %v2065
    %v2735 = vunpack.c.l.b16 %v2066
    %v2736 = vunpack.c.h.b16 %v2066
    %v2737 = vunpack.c.l.b16 %v2067
    %v2738 = vunpack.c.h.b16 %v2067
    %v2739 = vunpack.c.l.b16 %v2068
    %v2740 = vunpack.c.h.b16 %v2068
    %v2741 = vunpack.c.l.b16 %v2069
    %v2742 = vunpack.c.h.b16 %v2069
    %v2743 = vunpack.c.l.b16 %v2070
    %v2744 = vunpack.c.h.b16 %v2070
    %v2745 = vunpack.c.l.b16 %v2071
    %v2746 = vunpack.c.h.b16 %v2071
    %v2747 = vunpack.c.l.b16 %v2072
    %v2748 = vunpack.c.h.b16 %v2072
    %v2749 = vunpack.c.l.b16 %v2073
    %v2750 = vunpack.c.h.b16 %v2073
    %v2751 = vunpack.c.l.b16 %v2074
    %v2752 = vunpack.c.h.b16 %v2074
    %v2753 = vunpack.c.l.b16 %v2075
    %v2754 = vunpack.c.h.b16 %v2075
    %v2755 = vunpack.c.l.b16 %v2076
    %v2756 = vunpack.c.h.b16 %v2076
    %v2757 = vunpack.c.l.b16 %v2077
    %v2758 = vunpack.c.h.b16 %v2077
    %v2759 = vunpack.c.l.b16 %v2078
    %v2760 = vunpack.c.h.b16 %v2078
    %v2761 = vunpack.c.l.b16 %v2079
    %v2762 = vunpack.c.h.b16 %v2079
    %v2763 = vunpack.c.l.b16 %v2080
    %v2764 = vunpack.c.h.b16 %v2080
    %v2765 = vunpack.c.l.b16 %v2081
    %v2766 = vunpack.c.h.b16 %v2081
    %v2767 = vunpack.c.l.b16 %v2082
    %v2768 = vunpack.c.h.b16 %v2082
    %v2769 = vunpack.c.l.b16 %v2083
    %v2770 = vunpack.c.h.b16 %v2083
    %v2771 = vunpack.c.l.b16 %v2084
    %v2772 = vunpack.c.h.b16 %v2084
    %v2773 = vunpack.c.l.b16 %v2085
    %v2774 = vunpack.c.h.b16 %v2085
    %v2775 = vunpack.c.l.b16 %v2086
    %v2776 = vunpack.c.h.b16 %v2086
    %v2777 = vunpack.c.l.b16 %v2087
    %v2778 = vunpack.c.h.b16 %v2087
    %v2779 = vunpack.c.l.b16 %v2088
    %v2780 = vunpack.c.h.b16 %v2088
    %v2781 = vunpack.c.l.b16 %v2089
    %v2782 = vunpack.c.h.b16 %v2089
    %v2783 = vunpack.c.l.b16 %v2090
    %v2784 = vunpack.c.h.b16 %v2090
    %v2785 = vunpack.c.l.b16 %v2091
    %v2786 = vunpack.c.h.b16 %v2091
    %v2787 = vunpack.c.l.b16 %v2092
    %v2788 = vunpack.c.h.b16 %v2092
    %v2789 = vunpack.c.l.b16 %v2093
    %v2790 = vunpack.c.h.b16 %v2093
    %v2791 = vunpack.c.l.b16 %v2094
    %v2792 = vunpack.c.h.b16 %v2094
    %v2793 = vunpack.c.l.b16 %v2095
    %v2794 = vunpack.c.h.b16 %v2095
    %v2795 = vunpack.c.l.b16 %v2096
    %v2796 = vunpack.c.h.b16 %v2096
    %v2797 = vunpack.c.l.b16 %v2097
    %v2798 = vunpack.c.h.b16 %v2097
    %v2799 = vunpack.c.l.b16 %v2098
    %v2800 = vunpack.c.h.b16 %v2098
    %v2801 = vunpack.c.l.b16 %v2099
    %v2802 = vunpack.c.h.b16 %v2099
    %v2803 = vunpack.c.l.b16 %v2100
    %v2804 = vunpack.c.h.b16 %v2100
    %v2805 = vunpack.c.l.b16 %v2101
    %v2806 = vunpack.c.h.b16 %v2101
    %v2807 = vunpack.c.l.b16 %v2102
    %v2808 = vunpack.c.h.b16 %v2102
    %v2809 = vunpack.c.l.b16 %v2103
    %v2810 = vunpack.c.h.b16 %v2103
    %v2811 = vunpack.c.l.b16 %v2104
    %v2812 = vunpack.c.h.b16 %v2104
    %v2813 = vunpack.c.l.b16 %v2105
    %v2814 = vunpack.c.h.b16 %v2105
    %v2815 = vunpack.c.l.b16 %v2106
    %v2816 = vunpack.c.h.b16 %v2106
    %v2817 = vunpack.c.l.b16 %v2107
    %v2818 = vunpack.c.h.b16 %v2107
    %v2819 = vunpack.c.l.b16 %v2108
    %v2820 = vunpack.c.h.b16 %v2108
    %v2821 = vunpack.c.l.b16 %v2109
    %v2822 = vunpack.c.h.b16 %v2109
    %v2823 = vunpack.c.l.b16 %v2110
    %v2824 = vunpack.c.h.b16 %v2110
    %v2825 = vunpack.c.l.b16 %v2111
    %v2826 = vunpack.c.h.b16 %v2111
    %v2827 = vunpack.c.l.b16 %v2112
    %v2828 = vunpack.c.h.b16 %v2112
    %v2829 = vunpack.c.l.b16 %v2113
    %v2830 = vunpack.c.h.b16 %v2113
    %v2831 = vunpack.c.l.b16 %v2114
    %v2832 = vunpack.c.h.b16 %v2114
    %v2833 = vunpack.c.l.b16 %v2115
    %v2834 = vunpack.c.h.b16 %v2115
    %v2835 = vunpack.c.l.b16 %v2116
    %v2836 = vunpack.c.h.b16 %v2116
    %v2837 = vunpack.c.l.b16 %v2117
    %v2838 = vunpack.c.h.b16 %v2117
    %v2839 = vunpack.c.l.b16 %v2118
    %v2840 = vunpack.c.h.b16 %v2118
    %v2841 = vunpack.c.l.b16 %v2119
    %v2842 = vunpack.c.h.b16 %v2119
    %v2843 = vunpack.c.l.b16 %v2120
    %v2844 = vunpack.c.h.b16 %v2120
    %v2845 = vunpack.c.l.b16 %v2121
    %v2846 = vunpack.c.h.b16 %v2121
    %v2847 = vunpack.c.l.b16 %v2122
    %v2848 = vunpack.c.h.b16 %v2122
    %v2849 = vunpack.c.l.b16 %v2123
    %v2850 = vunpack.c.h.b16 %v2123
    %v2851 = vunpack.c.l.b16 %v2124
    %v2852 = vunpack.c.h.b16 %v2124
    %v2853 = vunpack.c.l.b16 %v2125
    %v2854 = vunpack.c.h.b16 %v2125
    %v2855 = vunpack.c.l.b16 %v2126
    %v2856 = vunpack.c.h.b16 %v2126
    %v2857 = vunpack.c.l.b16 %v2127
    %v2858 = vunpack.c.h.b16 %v2127
    %v2859 = vunpack.c.l.b16 %v2128
    %v2860 = vunpack.c.h.b16 %v2128
    %v2861 = vunpack.c.l.b16 %v2129
    %v2862 = vunpack.c.h.b16 %v2129
    %v2863 = vunpack.c.l.b16 %v2130
    %v2864 = vunpack.c.h.b16 %v2130
    %v2865 = vunpack.c.l.b16 %v2131
    %v2866 = vunpack.c.h.b16 %v2131
    %v2867 = vunpack.c.l.b16 %v2132
    %v2868 = vunpack.c.h.b16 %v2132
    %v2869 = vunpack.c.l.b16 %v2133
    %v2870 = vunpack.c.h.b16 %v2133
    %v2871 = vunpack.c.l.b16 %v2134
    %v2872 = vunpack.c.h.b16 %v2134
    %v2873 = vunpack.c.l.b16 %v2135
    %v2874 = vunpack.c.h.b16 %v2135
    %v2875 = vunpack.c.l.b16 %v2136
    %v2876 = vunpack.c.h.b16 %v2136
    %v2877 = vunpack.c.l.b16 %v2137
    %v2878 = vunpack.c.h.b16 %v2137
    %v2879 = vunpack.c.l.b16 %v2138
    %v2880 = vunpack.c.h.b16 %v2138
    %v2881 = vunpack.c.l.b16 %v2139
    %v2882 = vunpack.c.h.b16 %v2139
    %v2883 = vunpack.c.l.b16 %v2140
    %v2884 = vunpack.c.h.b16 %v2140
    %v2885 = vunpack.c.l.b16 %v2141
    %v2886 = vunpack.c.h.b16 %v2141
    %v2887 = vunpack.c.l.b16 %v2142
    %v2888 = vunpack.c.h.b16 %v2142
    %v2889 = vunpack.c.l.b16 %v2143
    %v2890 = vunpack.c.h.b16 %v2143
    %v2891 = vunpack.c.l.b16 %v2144
    %v2892 = vunpack.c.h.b16 %v2144
    %v2893 = vunpack.c.l.b16 %v2145
    %v2894 = vunpack.c.h.b16 %v2145
    %v2895 = vunpack.c.l.b16 %v2146
    %v2896 = vunpack.c.h.b16 %v2146
    %v2897 = vunpack.c.l.b16 %v2147
    %v2898 = vunpack.c.h.b16 %v2147
    %v2899 = vunpack.c.l.b16 %v2148
    %v2900 = vunpack.c.h.b16 %v2148
    %v2901 = vunpack.c.l.b16 %v2149
    %v2902 = vunpack.c.h.b16 %v2149
    %v2903 = vunpack.c.l.b16 %v2150
    %v2904 = vunpack.c.h.b16 %v2150
    %v2905 = vunpack.c.l.b16 %v2151
    %v2906 = vunpack.c.h.b16 %v2151
    %v2907 = vunpack.c.l.b16 %v2152
    %v2908 = vunpack.c.h.b16 %v2152
    %v2909 = vunpack.c.l.b16 %v2153
    %v2910 = vunpack.c.h.b16 %v2153
    %v2911 = vunpack.c.l.b16 %v2154
    %v2912 = vunpack.c.h.b16 %v2154
    %v2913 = vunpack.c.l.b16 %v2155
    %v2914 = vunpack.c.h.b16 %v2155
    %v2915 = vunpack.c.l.b16 %v2156
    %v2916 = vunpack.c.h.b16 %v2156
    %v2917 = vunpack.c.l.b16 %v2157
    %v2918 = vunpack.c.h.b16 %v2157
    %v2919 = vunpack.c.l.b16 %v2158
    %v2920 = vunpack.c.h.b16 %v2158
    %v2921 = vunpack.c.l.b16 %v2159
    %v2922 = vunpack.c.h.b16 %v2159
    %v2923 = vunpack.c.l.b16 %v2160
    %v2924 = vunpack.c.h.b16 %v2160
    %v2925 = vunpack.c.l.b16 %v2161
    %v2926 = vunpack.c.h.b16 %v2161
    %v2927 = vunpack.c.l.b16 %v2162
    %v2928 = vunpack.c.h.b16 %v2162
    %v2929 = vunpack.c.l.b16 %v2163
    %v2930 = vunpack.c.h.b16 %v2163
    %v2931 = vunpack.c.l.b16 %v2164
    %v2932 = vunpack.c.h.b16 %v2164
    %v2933 = vunpack.c.l.b16 %v2165
    %v2934 = vunpack.c.h.b16 %v2165
    %v2935 = vunpack.c.l.b16 %v2166
    %v2936 = vunpack.c.h.b16 %v2166
    %v2937 = vunpack.c.l.b16 %v2167
    %v2938 = vunpack.c.h.b16 %v2167
    %v2939 = vunpack.c.l.b16 %v2168
    %v2940 = vunpack.c.h.b16 %v2168
    %v2941 = vunpack.c.l.b16 %v2169
    %v2942 = vunpack.c.h.b16 %v2169
    %v2943 = vunpack.c.l.b16 %v2170
    %v2944 = vunpack.c.h.b16 %v2170
    %v2945 = vunpack.c.l.b16 %v2171
    %v2946 = vunpack.c.h.b16 %v2171
    %v2947 = vunpack.c.l.b16 %v2172
    %v2948 = vunpack.c.h.b16 %v2172
    %v2949 = vunpack.c.l.b16 %v2173
    %v2950 = vunpack.c.h.b16 %v2173
    %v2951 = vunpack.c.l.b16 %v2174
    %v2952 = vunpack.c.h.b16 %v2174
    %v2953 = vunpack.c.l.b16 %v2175
    %v2954 = vunpack.c.h.b16 %v2175
    %v2955 = vunpack.c.l.b16 %v2176
    %v2956 = vunpack.c.h.b16 %v2176
    %v2957 = vunpack.c.l.b16 %v2177
    %v2958 = vunpack.c.h.b16 %v2177
    %v2959 = vunpack.c.l.b16 %v2178
    %v2960 = vunpack.c.h.b16 %v2178
    %v2961 = vunpack.c.l.b16 %v2179
    %v2962 = vunpack.c.h.b16 %v2179
    %v2963 = vunpack.c.l.b16 %v2180
    %v2964 = vunpack.c.h.b16 %v2180
    %v2965 = vunpack.c.l.b16 %v2181
    %v2966 = vunpack.c.h.b16 %v2181
    %v2967 = vunpack.c.l.b16 %v2182
    %v2968 = vunpack.c.h.b16 %v2182
    %v2969 = vunpack.c.l.b16 %v2183
    %v2970 = vunpack.c.h.b16 %v2183
    %v2971 = vunpack.c.l.b16 %v2184
    %v2972 = vunpack.c.h.b16 %v2184
    %v2973 = vunpack.c.l.b16 %v2185
    %v2974 = vunpack.c.h.b16 %v2185
    %v2975 = vunpack.c.l.b16 %v2186
    %v2976 = vunpack.c.h.b16 %v2186
    %v2977 = vpack.c.b16 %v2473, %v2465
    %v2978 = vpack.c.b16 %v2474, %v2466
    %v2979 = vpack.c.b16 %v2475, %v2467
    %v2980 = vpack.c.b16 %v2476, %v2468
    %v2981 = vpack.c.b16 %v2477, %v2469
    %v2982 = vpack.c.b16 %v2478, %v2470
    %v2983 = vpack.c.b16 %v2479, %v2471
    %v2984 = vpack.c.b16 %v2480, %v2472
    %v2985 = vpack.c.b16 %v2489, %v2481
    %v2986 = vpack.c.b16 %v2490, %v2482
    %v2987 = vpack.c.b16 %v2491, %v2483
    %v2988 = vpack.c.b16 %v2492, %v2484
    %v2989 = vpack.c.b16 %v2493, %v2485
    %v2990 = vpack.c.b16 %v2494, %v2486
    %v2991 = vpack.c.b16 %v2495, %v2487
    %v2992 = vpack.c.b16 %v2496, %v2488
    %v2993 = vpack.c.b16 %v2505, %v2497
    %v2994 = vpack.c.b16 %v2506, %v2498
    %v2995 = vpack.c.b16 %v2507, %v2499
    %v2996 = vpack.c.b16 %v2508, %v2500
    %v2997 = vpack.c.b16 %v2509, %v2501
    %v2998 = vpack.c.b16 %v2510, %v2502
    %v2999 = vpack.c.b16 %v2511, %v2503
    %v3000 = vpack.c.b16 %v2512, %v2504
    %v3001 = vpack.c.b16 %v2521, %v2513
    %v3002 = vpack.c.b16 %v2522, %v2514
    %v3003 = vpack.c.b16 %v2523, %v2515
    %v3004 = vpack.c.b16 %v2524, %v2516
    %v3005 = vpack.c.b16 %v2525, %v2517
    %v3006 = vpack.c.b16 %v2526, %v2518
    %v3007 = vpack.c.b16 %v2527, %v2519
    %v3008 = vpack.c.b16 %v2528, %v2520
    %v3009 = vpack.c.b16 %v2537, %v2529
    %v3010 = vpack.c.b16 %v2538, %v2530
    %v3011 = vpack.c.b16 %v2539, %v2531
    %v3012 = vpack.c.b16 %v2540, %v2532
    %v3013 = vpack.c.b16 %v2541, %v2533
    %v3014 = vpack.c.b16 %v2542, %v2534
    %v3015 = vpack.c.b16 %v2543, %v2535
    %v3016 = vpack.c.b16 %v2544, %v2536
    %v3017 = vpack.c.b16 %v2553, %v2545
    %v3018 = vpack.c.b16 %v2554, %v2546
    %v3019 = vpack.c.b16 %v2555, %v2547
    %v3020 = vpack.c.b16 %v2556, %v2548
    %v3021 = vpack.c.b16 %v2557, %v2549
    %v3022 = vpack.c.b16 %v2558, %v2550
    %v3023 = vpack.c.b16 %v2559, %v2551
    %v3024 = vpack.c.b16 %v2560, %v2552
    %v3025 = vpack.c.b16 %v2569, %v2561
    %v3026 = vpack.c.b16 %v2570, %v2562
    %v3027 = vpack.c.b16 %v2571, %v2563
    %v3028 = vpack.c.b16 %v2572, %v2564
    %v3029 = vpack.c.b16 %v2573, %v2565
    %v3030 = vpack.c.b16 %v2574, %v2566
    %v3031 = vpack.c.b16 %v2575, %v2567
    %v3032 = vpack.c.b16 %v2576, %v2568
    %v3033 = vpack.c.b16 %v2585, %v2577
    %v3034 = vpack.c.b16 %v2586, %v2578
    %v3035 = vpack.c.b16 %v2587, %v2579
    %v3036 = vpack.c.b16 %v2588, %v2580
    %v3037 = vpack.c.b16 %v2589, %v2581
    %v3038 = vpack.c.b16 %v2590, %v2582
    %v3039 = vpack.c.b16 %v2591, %v2583
    %v3040 = vpack.c.b16 %v2592, %v2584
    %v3041 = vpack.c.b16 %v2601, %v2593
    %v3042 = vpack.c.b16 %v2602, %v2594
    %v3043 = vpack.c.b16 %v2603, %v2595
    %v3044 = vpack.c.b16 %v2604, %v2596
    %v3045 = vpack.c.b16 %v2605, %v2597
    %v3046 = vpack.c.b16 %v2606, %v2598
    %v3047 = vpack.c.b16 %v2607, %v2599
    %v3048 = vpack.c.b16 %v2608, %v2600
    %v3049 = vpack.c.b16 %v2617, %v2609
    %v3050 = vpack.c.b16 %v2618, %v2610
    %v3051 = vpack.c.b16 %v2619, %v2611
    %v3052 = vpack.c.b16 %v2620, %v2612
    %v3053 = vpack.c.b16 %v2621, %v2613
    %v3054 = vpack.c.b16 %v2622, %v2614
    %v3055 = vpack.c.b16 %v2623, %v2615
    %v3056 = vpack.c.b16 %v2624, %v2616
    %v3057 = vpack.c.b16 %v2633, %v2625
    %v3058 = vpack.c.b16 %v2634, %v2626
    %v3059 = vpack.c.b16 %v2635, %v2627
    %v3060 = vpack.c.b16 %v2636, %v2628
    %v3061 = vpack.c.b16 %v2637, %v2629
    %v3062 = vpack.c.b16 %v2638, %v2630
    %v3063 = vpack.c.b16 %v2639, %v2631
    %v3064 = vpack.c.b16 %v2640, %v2632
    %v3065 = vpack.c.b16 %v2649, %v2641
    %v3066 = vpack.c.b16 %v2650, %v2642
    %v3067 = vpack.c.b16 %v2651, %v2643
    %v3068 = vpack.c.b16 %v2652, %v2644
    %v3069 = vpack.c.b16 %v2653, %v2645
    %v3070 = vpack.c.b16 %v2654, %v2646
    %v3071 = vpack.c.b16 %v2655, %v2647
    %v3072 = vpack.c.b16 %v2656, %v2648
    %v3073 = vpack.c.b16 %v2665, %v2657
    %v3074 = vpack.c.b16 %v2666, %v2658
    %v3075 = vpack.c.b16 %v2667, %v2659
    %v3076 = vpack.c.b16 %v2668, %v2660
    %v3077 = vpack.c.b16 %v2669, %v2661
    %v3078 = vpack.c.b16 %v2670, %v2662
    %v3079 = vpack.c.b16 %v2671, %v2663
    %v3080 = vpack.c.b16 %v2672, %v2664
    %v3081 = vpack.c.b16 %v2681, %v2673
    %v3082 = vpack.c.b16 %v2682, %v2674
    %v3083 = vpack.c.b16 %v2683, %v2675
    %v3084 = vpack.c.b16 %v2684, %v2676
    %v3085 = vpack.c.b16 %v2685, %v2677
    %v3086 = vpack.c.b16 %v2686, %v2678
    %v3087 = vpack.c.b16 %v2687, %v2679
    %v3088 = vpack.c.b16 %v2688, %v2680
    %v3089 = vpack.c.b16 %v2697, %v2689
    %v3090 = vpack.c.b16 %v2698, %v2690
    %v3091 = vpack.c.b16 %v2699, %v2691
    %v3092 = vpack.c.b16 %v2700, %v2692
    %v3093 = vpack.c.b16 %v2701, %v2693
    %v3094 = vpack.c.b16 %v2702, %v2694
    %v3095 = vpack.c.b16 %v2703, %v2695
    %v3096 = vpack.c.b16 %v2704, %v2696
    %v3097 = vpack.c.b16 %v2713, %v2705
    %v3098 = vpack.c.b16 %v2714, %v2706
    %v3099 = vpack.c.b16 %v2715, %v2707
    %v3100 = vpack.c.b16 %v2716, %v2708
    %v3101 = vpack.c.b16 %v2717, %v2709
    %v3102 = vpack.c.b16 %v2718, %v2710
    %v3103 = vpack.c.b16 %v2719, %v2711
    %v3104 = vpack.c.b16 %v2720, %v2712
    %v3105 = vpack.c.b16 %v2729, %v2721
    %v3106 = vpack.c.b16 %v2730, %v2722
    %v3107 = vpack.c.b16 %v2731, %v2723
    %v3108 = vpack.c.b16 %v2732, %v2724
    %v3109 = vpack.c.b16 %v2733, %v2725
    %v3110 = vpack.c.b16 %v2734, %v2726
    %v3111 = vpack.c.b16 %v2735, %v2727
    %v3112 = vpack.c.b16 %v2736, %v2728
    %v3113 = vpack.c.b16 %v2745, %v2737
    %v3114 = vpack.c.b16 %v2746, %v2738
    %v3115 = vpack.c.b16 %v2747, %v2739
    %v3116 = vpack.c.b16 %v2748, %v2740
    %v3117 = vpack.c.b16 %v2749, %v2741
    %v3118 = vpack.c.b16 %v2750, %v2742
    %v3119 = vpack.c.b16 %v2751, %v2743
    %v3120 = vpack.c.b16 %v2752, %v2744
    %v3121 = vpack.c.b16 %v2761, %v2753
    %v3122 = vpack.c.b16 %v2762, %v2754
    %v3123 = vpack.c.b16 %v2763, %v2755
    %v3124 = vpack.c.b16 %v2764, %v2756
    %v3125 = vpack.c.b16 %v2765, %v2757
    %v3126 = vpack.c.b16 %v2766, %v2758
    %v3127 = vpack.c.b16 %v2767, %v2759
    %v3128 = vpack.c.b16 %v2768, %v2760
    %v3129 = vpack.c.b16 %v2777, %v2769
    %v3130 = vpack.c.b16 %v2778, %v2770
    %v3131 = vpack.c.b16 %v2779, %v2771
    %v3132 = vpack.c.b16 %v2780, %v2772
    %v3133 = vpack.c.b16 %v2781, %v2773
    %v3134 = vpack.c.b16 %v2782, %v2774
    %v3135 = vpack.c.b16 %v2783, %v2775
    %v3136 = vpack.c.b16 %v2784, %v2776
    %v3137 = vpack.c.b16 %v2793, %v2785
    %v3138 = vpack.c.b16 %v2794, %v2786
    %v3139 = vpack.c.b16 %v2795, %v2787
    %v3140 = vpack.c.b16 %v2796, %v2788
    %v3141 = vpack.c.b16 %v2797, %v2789
    %v3142 = vpack.c.b16 %v2798, %v2790
    %v3143 = vpack.c.b16 %v2799, %v2791
    %v3144 = vpack.c.b16 %v2800, %v2792
    %v3145 = vpack.c.b16 %v2809, %v2801
    %v3146 = vpack.c.b16 %v2810, %v2802
    %v3147 = vpack.c.b16 %v2811, %v2803
    %v3148 = vpack.c.b16 %v2812, %v2804
    %v3149 = vpack.c.b16 %v2813, %v2805
    %v3150 = vpack.c.b16 %v2814, %v2806
    %v3151 = vpack.c.b16 %v2815, %v2807
    %v3152 = vpack.c.b16 %v2816, %v2808
    %v3153 = vpack.c.b16 %v2825, %v2817
    %v3154 = vpack.c.b16 %v2826, %v2818
    %v3155 = vpack.c.b16 %v2827, %v2819
    %v3156 = vpack.c.b16 %v2828, %v2820
    %v3157 = vpack.c.b16 %v2829, %v2821
    %v3158 = vpack.c.b16 %v2830, %v2822
    %v3159 = vpack.c.b16 %v2831, %v2823
    %v3160 = vpack.c.b16 %v2832, %v2824
    %v3161 = vpack.c.b16 %v2841, %v2833
    %v3162 = vpack.c.b16 %v2842, %v2834
    %v3163 = vpack.c.b16 %v2843, %v2835
    %v3164 = vpack.c.b16 %v2844, %v2836
    %v3165 = vpack.c.b16 %v2845, %v2837
    %v3166 = vpack.c.b16 %v2846, %v2838
    %v3167 = vpack.c.b16 %v2847, %v2839
    %v3168 = vpack.c.b16 %v2848, %v2840
    %v3169 = vpack.c.b16 %v2857, %v2849
    %v3170 = vpack.c.b16 %v2858, %v2850
    %v3171 = vpack.c.b16 %v2859, %v2851
    %v3172 = vpack.c.b16 %v2860, %v2852
    %v3173 = vpack.c.b16 %v2861, %v2853
    %v3174 = vpack.c.b16 %v2862, %v2854
    %v3175 = vpack.c.b16 %v2863, %v2855
    %v3176 = vpack.c.b16 %v2864, %v2856
    %v3177 = vpack.c.b16 %v2873, %v2865
    %v3178 = vpack.c.b16 %v2874, %v2866
    %v3179 = vpack.c.b16 %v2875, %v2867
    %v3180 = vpack.c.b16 %v2876, %v2868
    %v3181 = vpack.c.b16 %v2877, %v2869
    %v3182 = vpack.c.b16 %v2878, %v2870
    %v3183 = vpack.c.b16 %v2879, %v2871
    %v3184 = vpack.c.b16 %v2880, %v2872
    %v3185 = vpack.c.b16 %v2889, %v2881
    %v3186 = vpack.c.b16 %v2890, %v2882
    %v3187 = vpack.c.b16 %v2891, %v2883
    %v3188 = vpack.c.b16 %v2892, %v2884
    %v3189 = vpack.c.b16 %v2893, %v2885
    %v3190 = vpack.c.b16 %v2894, %v2886
    %v3191 = vpack.c.b16 %v2895, %v2887
    %v3192 = vpack.c.b16 %v2896, %v2888
    %v3193 = vpack.c.b16 %v2905, %v2897
    %v3194 = vpack.c.b16 %v2906, %v2898
    %v3195 = vpack.c.b16 %v2907, %v2899
    %v3196 = vpack.c.b16 %v2908, %v2900
    %v3197 = vpack.c.b16 %v2909, %v2901
    %v3198 = vpack.c.b16 %v2910, %v2902
    %v3199 = vpack.c.b16 %v2911, %v2903
    %v3200 = vpack.c.b16 %v2912, %v2904
    %v3201 = vpack.c.b16 %v2921, %v2913
    %v3202 = vpack.c.b16 %v2922, %v2914
    %v3203 = vpack.c.b16 %v2923, %v2915
    %v3204 = vpack.c.b16 %v2924, %v2916
    %v3205 = vpack.c.b16 %v2925, %v2917
    %v3206 = vpack.c.b16 %v2926, %v2918
    %v3207 = vpack.c.b16 %v2927, %v2919
    %v3208 = vpack.c.b16 %v2928, %v2920
    %v3209 = vpack.c.b16 %v2937, %v2929
    %v3210 = vpack.c.b16 %v2938, %v2930
    %v3211 = vpack.c.b16 %v2939, %v2931
    %v3212 = vpack.c.b16 %v2940, %v2932
    %v3213 = vpack.c.b16 %v2941, %v2933
    %v3214 = vpack.c.b16 %v2942, %v2934
    %v3215 = vpack.c.b16 %v2943, %v2935
    %v3216 = vpack.c.b16 %v2944, %v2936
    %v3217 = vpack.c.b16 %v2953, %v2945
    %v3218 = vpack.c.b16 %v2954, %v2946
    %v3219 = vpack.c.b16 %v2955, %v2947
    %v3220 = vpack.c.b16 %v2956, %v2948
    %v3221 = vpack.c.b16 %v2957, %v2949
    %v3222 = vpack.c.b16 %v2958, %v2950
    %v3223 = vpack.c.b16 %v2959, %v2951
    %v3224 = vpack.c.b16 %v2960, %v2952
    %v3225 = vpack.c.b16 %v2969, %v2961
    %v3226 = vpack.c.b16 %v2970, %v2962
    %v3227 = vpack.c.b16 %v2971, %v2963
    %v3228 = vpack.c.b16 %v2972, %v2964
    %v3229 = vpack.c.b16 %v2973, %v2965
    %v3230 = vpack.c.b16 %v2974, %v2966
    %v3231 = vpack.c.b16 %v2975, %v2967
    %v3232 = vpack.c.b16 %v2976, %v2968
    %3489 = vmatpush.bf16.msra.mxu0 %v3033
    %3490 = vmatpush.bf16.msra.mxu0 %v3025
    %3491 = vmatpush.bf16.msra.mxu0 %v3017
    %3492 = vmatpush.bf16.msra.mxu0 %v3009
    %3493 = vmatpush.bf16.msra.mxu0 %v3001
    %3494 = vmatpush.bf16.msra.mxu0 %v2993
    %3495 = vmatpush.bf16.msra.mxu0 %v2985
    %3496 = vmatpush.bf16.msra.mxu0 %v2977
    %3497 = vmatmul.bf16.gmra.mxu0 %v2187
    %v3498 = vpop.f32.mrf.mxu0
    %v3499 = vadd.f32 %v2193, %v3498
    %v3500 = vpop.f32.mrf.mxu0
    %v3501 = vadd.f32 %v2193, %v3500
    %3502 = vdwg.mxu0
    %3503 = vmatpush.bf16.msra.mxu0 %v3097
    %3504 = vmatpush.bf16.msra.mxu0 %v3089
    %3505 = vmatpush.bf16.msra.mxu0 %v3081
    %3506 = vmatpush.bf16.msra.mxu0 %v3073
    %3507 = vmatpush.bf16.msra.mxu0 %v3065
    %3508 = vmatpush.bf16.msra.mxu0 %v3057
    %3509 = vmatpush.bf16.msra.mxu0 %v3049
    %3510 = vmatpush.bf16.msra.mxu0 %v3041
    %3511 = vmatmul.bf16.gmra.mxu0 %v2188
    %v3512 = vpop.f32.mrf.mxu0
    %v3513 = vadd.f32 %v3499, %v3512
    %v3514 = vpop.f32.mrf.mxu0
    %v3515 = vadd.f32 %v3501, %v3514
    %3516 = vdwg.mxu0
    %3517 = vmatpush.bf16.msra.mxu0 %v3161
    %3518 = vmatpush.bf16.msra.mxu0 %v3153
    %3519 = vmatpush.bf16.msra.mxu0 %v3145
    %3520 = vmatpush.bf16.msra.mxu0 %v3137
    %3521 = vmatpush.bf16.msra.mxu0 %v3129
    %3522 = vmatpush.bf16.msra.mxu0 %v3121
    %3523 = vmatpush.bf16.msra.mxu0 %v3113
    %3524 = vmatpush.bf16.msra.mxu0 %v3105
    %3525 = vmatmul.bf16.gmra.mxu0 %v2189
    %v3526 = vpop.f32.mrf.mxu0
    %v3527 = vadd.f32 %v3513, %v3526
    %v3528 = vpop.f32.mrf.mxu0
    %v3529 = vadd.f32 %v3515, %v3528
    %3530 = vdwg.mxu0
    %3531 = vmatpush.bf16.msra.mxu0 %v3225
    %3532 = vmatpush.bf16.msra.mxu0 %v3217
    %3533 = vmatpush.bf16.msra.mxu0 %v3209
    %3534 = vmatpush.bf16.msra.mxu0 %v3201
    %3535 = vmatpush.bf16.msra.mxu0 %v3193
    %3536 = vmatpush.bf16.msra.mxu0 %v3185
    %3537 = vmatpush.bf16.msra.mxu0 %v3177
    %3538 = vmatpush.bf16.msra.mxu0 %v3169
    %3539 = vmatmul.bf16.gmra.mxu0 %v2190
    %v3540 = vpop.f32.mrf.mxu0
    %v3541 = vadd.f32 %v3527, %v3540
    %v3542 = vpop.f32.mrf.mxu0
    %v3543 = vadd.f32 %v3529, %v3542
    %3544 = vdwg.mxu0
    %3545 = vmatpush.bf16.msra.mxu0 %v3034
    %3546 = vmatpush.bf16.msra.mxu0 %v3026
    %3547 = vmatpush.bf16.msra.mxu0 %v3018
    %3548 = vmatpush.bf16.msra.mxu0 %v3010
    %3549 = vmatpush.bf16.msra.mxu0 %v3002
    %3550 = vmatpush.bf16.msra.mxu0 %v2994
    %3551 = vmatpush.bf16.msra.mxu0 %v2986
    %3552 = vmatpush.bf16.msra.mxu0 %v2978
    %3553 = vmatmul.bf16.gmra.mxu0 %v2187
    %v3554 = vpop.f32.mrf.mxu0
    %v3555 = vadd.f32 %v2194, %v3554
    %v3556 = vpop.f32.mrf.mxu0
    %v3557 = vadd.f32 %v2194, %v3556
    %3558 = vdwg.mxu0
    %3559 = vmatpush.bf16.msra.mxu0 %v3098
    %3560 = vmatpush.bf16.msra.mxu0 %v3090
    %3561 = vmatpush.bf16.msra.mxu0 %v3082
    %3562 = vmatpush.bf16.msra.mxu0 %v3074
    %3563 = vmatpush.bf16.msra.mxu0 %v3066
    %3564 = vmatpush.bf16.msra.mxu0 %v3058
    %3565 = vmatpush.bf16.msra.mxu0 %v3050
    %3566 = vmatpush.bf16.msra.mxu0 %v3042
    %3567 = vmatmul.bf16.gmra.mxu0 %v2188
    %v3568 = vpop.f32.mrf.mxu0
    %v3569 = vadd.f32 %v3555, %v3568
    %v3570 = vpop.f32.mrf.mxu0
    %v3571 = vadd.f32 %v3557, %v3570
    %3572 = vdwg.mxu0
    %3573 = vmatpush.bf16.msra.mxu0 %v3162
    %3574 = vmatpush.bf16.msra.mxu0 %v3154
    %3575 = vmatpush.bf16.msra.mxu0 %v3146
    %3576 = vmatpush.bf16.msra.mxu0 %v3138
    %3577 = vmatpush.bf16.msra.mxu0 %v3130
    %3578 = vmatpush.bf16.msra.mxu0 %v3122
    %3579 = vmatpush.bf16.msra.mxu0 %v3114
    %3580 = vmatpush.bf16.msra.mxu0 %v3106
    %3581 = vmatmul.bf16.gmra.mxu0 %v2189
    %v3582 = vpop.f32.mrf.mxu0
    %v3583 = vadd.f32 %v3569, %v3582
    %v3584 = vpop.f32.mrf.mxu0
    %v3585 = vadd.f32 %v3571, %v3584
    %3586 = vdwg.mxu0
    %3587 = vmatpush.bf16.msra.mxu0 %v3226
    %3588 = vmatpush.bf16.msra.mxu0 %v3218
    %3589 = vmatpush.bf16.msra.mxu0 %v3210
    %3590 = vmatpush.bf16.msra.mxu0 %v3202
    %3591 = vmatpush.bf16.msra.mxu0 %v3194
    %3592 = vmatpush.bf16.msra.mxu0 %v3186
    %3593 = vmatpush.bf16.msra.mxu0 %v3178
    %3594 = vmatpush.bf16.msra.mxu0 %v3170
    %3595 = vmatmul.bf16.gmra.mxu0 %v2190
    %v3596 = vpop.f32.mrf.mxu0
    %v3597 = vadd.f32 %v3583, %v3596
    %v3598 = vpop.f32.mrf.mxu0
    %v3599 = vadd.f32 %v3585, %v3598
    %3600 = vdwg.mxu0
    %3601 = vmatpush.bf16.msra.mxu0 %v3035
    %3602 = vmatpush.bf16.msra.mxu0 %v3027
    %3603 = vmatpush.bf16.msra.mxu0 %v3019
    %3604 = vmatpush.bf16.msra.mxu0 %v3011
    %3605 = vmatpush.bf16.msra.mxu0 %v3003
    %3606 = vmatpush.bf16.msra.mxu0 %v2995
    %3607 = vmatpush.bf16.msra.mxu0 %v2987
    %3608 = vmatpush.bf16.msra.mxu0 %v2979
    %3609 = vmatmul.bf16.gmra.mxu0 %v2187
    %v3610 = vpop.f32.mrf.mxu0
    %v3611 = vadd.f32 %v2195, %v3610
    %v3612 = vpop.f32.mrf.mxu0
    %v3613 = vadd.f32 %v2195, %v3612
    %3614 = vdwg.mxu0
    %3615 = vmatpush.bf16.msra.mxu0 %v3099
    %3616 = vmatpush.bf16.msra.mxu0 %v3091
    %3617 = vmatpush.bf16.msra.mxu0 %v3083
    %3618 = vmatpush.bf16.msra.mxu0 %v3075
    %3619 = vmatpush.bf16.msra.mxu0 %v3067
    %3620 = vmatpush.bf16.msra.mxu0 %v3059
    %3621 = vmatpush.bf16.msra.mxu0 %v3051
    %3622 = vmatpush.bf16.msra.mxu0 %v3043
    %3623 = vmatmul.bf16.gmra.mxu0 %v2188
    %v3624 = vpop.f32.mrf.mxu0
    %v3625 = vadd.f32 %v3611, %v3624
    %v3626 = vpop.f32.mrf.mxu0
    %v3627 = vadd.f32 %v3613, %v3626
    %3628 = vdwg.mxu0
    %3629 = vmatpush.bf16.msra.mxu0 %v3163
    %3630 = vmatpush.bf16.msra.mxu0 %v3155
    %3631 = vmatpush.bf16.msra.mxu0 %v3147
    %3632 = vmatpush.bf16.msra.mxu0 %v3139
    %3633 = vmatpush.bf16.msra.mxu0 %v3131
    %3634 = vmatpush.bf16.msra.mxu0 %v3123
    %3635 = vmatpush.bf16.msra.mxu0 %v3115
    %3636 = vmatpush.bf16.msra.mxu0 %v3107
    %3637 = vmatmul.bf16.gmra.mxu0 %v2189
    %v3638 = vpop.f32.mrf.mxu0
    %v3639 = vadd.f32 %v3625, %v3638
    %v3640 = vpop.f32.mrf.mxu0
    %v3641 = vadd.f32 %v3627, %v3640
    %3642 = vdwg.mxu0
    %3643 = vmatpush.bf16.msra.mxu0 %v3227
    %3644 = vmatpush.bf16.msra.mxu0 %v3219
    %3645 = vmatpush.bf16.msra.mxu0 %v3211
    %3646 = vmatpush.bf16.msra.mxu0 %v3203
    %3647 = vmatpush.bf16.msra.mxu0 %v3195
    %3648 = vmatpush.bf16.msra.mxu0 %v3187
    %3649 = vmatpush.bf16.msra.mxu0 %v3179
    %3650 = vmatpush.bf16.msra.mxu0 %v3171
    %3651 = vmatmul.bf16.gmra.mxu0 %v2190
    %v3652 = vpop.f32.mrf.mxu0
    %v3653 = vadd.f32 %v3639, %v3652
    %v3654 = vpop.f32.mrf.mxu0
    %v3655 = vadd.f32 %v3641, %v3654
    %3656 = vdwg.mxu0
    %3657 = vmatpush.bf16.msra.mxu0 %v3036
    %3658 = vmatpush.bf16.msra.mxu0 %v3028
    %3659 = vmatpush.bf16.msra.mxu0 %v3020
    %3660 = vmatpush.bf16.msra.mxu0 %v3012
    %3661 = vmatpush.bf16.msra.mxu0 %v3004
    %3662 = vmatpush.bf16.msra.mxu0 %v2996
    %3663 = vmatpush.bf16.msra.mxu0 %v2988
    %3664 = vmatpush.bf16.msra.mxu0 %v2980
    %3665 = vmatmul.bf16.gmra.mxu0 %v2187
    %v3666 = vpop.f32.mrf.mxu0
    %v3667 = vadd.f32 %v2196, %v3666
    %v3668 = vpop.f32.mrf.mxu0
    %v3669 = vadd.f32 %v2196, %v3668
    %3670 = vdwg.mxu0
    %3671 = vmatpush.bf16.msra.mxu0 %v3100
    %3672 = vmatpush.bf16.msra.mxu0 %v3092
    %3673 = vmatpush.bf16.msra.mxu0 %v3084
    %3674 = vmatpush.bf16.msra.mxu0 %v3076
    %3675 = vmatpush.bf16.msra.mxu0 %v3068
    %3676 = vmatpush.bf16.msra.mxu0 %v3060
    %3677 = vmatpush.bf16.msra.mxu0 %v3052
    %3678 = vmatpush.bf16.msra.mxu0 %v3044
    %3679 = vmatmul.bf16.gmra.mxu0 %v2188
    %v3680 = vpop.f32.mrf.mxu0
    %v3681 = vadd.f32 %v3667, %v3680
    %v3682 = vpop.f32.mrf.mxu0
    %v3683 = vadd.f32 %v3669, %v3682
    %3684 = vdwg.mxu0
    %3685 = vmatpush.bf16.msra.mxu0 %v3164
    %3686 = vmatpush.bf16.msra.mxu0 %v3156
    %3687 = vmatpush.bf16.msra.mxu0 %v3148
    %3688 = vmatpush.bf16.msra.mxu0 %v3140
    %3689 = vmatpush.bf16.msra.mxu0 %v3132
    %3690 = vmatpush.bf16.msra.mxu0 %v3124
    %3691 = vmatpush.bf16.msra.mxu0 %v3116
    %3692 = vmatpush.bf16.msra.mxu0 %v3108
    %3693 = vmatmul.bf16.gmra.mxu0 %v2189
    %v3694 = vpop.f32.mrf.mxu0
    %v3695 = vadd.f32 %v3681, %v3694
    %v3696 = vpop.f32.mrf.mxu0
    %v3697 = vadd.f32 %v3683, %v3696
    %3698 = vdwg.mxu0
    %3699 = vmatpush.bf16.msra.mxu0 %v3228
    %3700 = vmatpush.bf16.msra.mxu0 %v3220
    %3701 = vmatpush.bf16.msra.mxu0 %v3212
    %3702 = vmatpush.bf16.msra.mxu0 %v3204
    %3703 = vmatpush.bf16.msra.mxu0 %v3196
    %3704 = vmatpush.bf16.msra.mxu0 %v3188
    %3705 = vmatpush.bf16.msra.mxu0 %v3180
    %3706 = vmatpush.bf16.msra.mxu0 %v3172
    %3707 = vmatmul.bf16.gmra.mxu0 %v2190
    %v3708 = vpop.f32.mrf.mxu0
    %v3709 = vadd.f32 %v3695, %v3708
    %v3710 = vpop.f32.mrf.mxu0
    %v3711 = vadd.f32 %v3697, %v3710
    %3712 = vdwg.mxu0
    %3713 = vmatpush.bf16.msra.mxu0 %v3037
    %3714 = vmatpush.bf16.msra.mxu0 %v3029
    %3715 = vmatpush.bf16.msra.mxu0 %v3021
    %3716 = vmatpush.bf16.msra.mxu0 %v3013
    %3717 = vmatpush.bf16.msra.mxu0 %v3005
    %3718 = vmatpush.bf16.msra.mxu0 %v2997
    %3719 = vmatpush.bf16.msra.mxu0 %v2989
    %3720 = vmatpush.bf16.msra.mxu0 %v2981
    %3721 = vmatmul.bf16.gmra.mxu0 %v2187
    %v3722 = vpop.f32.mrf.mxu0
    %v3723 = vadd.f32 %v2197, %v3722
    %v3724 = vpop.f32.mrf.mxu0
    %v3725 = vadd.f32 %v2197, %v3724
    %3726 = vdwg.mxu0
    %3727 = vmatpush.bf16.msra.mxu0 %v3101
    %3728 = vmatpush.bf16.msra.mxu0 %v3093
    %3729 = vmatpush.bf16.msra.mxu0 %v3085
    %3730 = vmatpush.bf16.msra.mxu0 %v3077
    %3731 = vmatpush.bf16.msra.mxu0 %v3069
    %3732 = vmatpush.bf16.msra.mxu0 %v3061
    %3733 = vmatpush.bf16.msra.mxu0 %v3053
    %3734 = vmatpush.bf16.msra.mxu0 %v3045
    %3735 = vmatmul.bf16.gmra.mxu0 %v2188
    %v3736 = vpop.f32.mrf.mxu0
    %v3737 = vadd.f32 %v3723, %v3736
    %v3738 = vpop.f32.mrf.mxu0
    %v3739 = vadd.f32 %v3725, %v3738
    %3740 = vdwg.mxu0
    %3741 = vmatpush.bf16.msra.mxu0 %v3165
    %3742 = vmatpush.bf16.msra.mxu0 %v3157
    %3743 = vmatpush.bf16.msra.mxu0 %v3149
    %3744 = vmatpush.bf16.msra.mxu0 %v3141
    %3745 = vmatpush.bf16.msra.mxu0 %v3133
    %3746 = vmatpush.bf16.msra.mxu0 %v3125
    %3747 = vmatpush.bf16.msra.mxu0 %v3117
    %3748 = vmatpush.bf16.msra.mxu0 %v3109
    %3749 = vmatmul.bf16.gmra.mxu0 %v2189
    %v3750 = vpop.f32.mrf.mxu0
    %v3751 = vadd.f32 %v3737, %v3750
    %v3752 = vpop.f32.mrf.mxu0
    %v3753 = vadd.f32 %v3739, %v3752
    %3754 = vdwg.mxu0
    %3755 = vmatpush.bf16.msra.mxu0 %v3229
    %3756 = vmatpush.bf16.msra.mxu0 %v3221
    %3757 = vmatpush.bf16.msra.mxu0 %v3213
    %3758 = vmatpush.bf16.msra.mxu0 %v3205
    %3759 = vmatpush.bf16.msra.mxu0 %v3197
    %3760 = vmatpush.bf16.msra.mxu0 %v3189
    %3761 = vmatpush.bf16.msra.mxu0 %v3181
    %3762 = vmatpush.bf16.msra.mxu0 %v3173
    %3763 = vmatmul.bf16.gmra.mxu0 %v2190
    %v3764 = vpop.f32.mrf.mxu0
    %v3765 = vadd.f32 %v3751, %v3764
    %v3766 = vpop.f32.mrf.mxu0
    %v3767 = vadd.f32 %v3753, %v3766
    %3768 = vdwg.mxu0
    %3769 = vmatpush.bf16.msra.mxu0 %v3038
    %3770 = vmatpush.bf16.msra.mxu0 %v3030
    %3771 = vmatpush.bf16.msra.mxu0 %v3022
    %3772 = vmatpush.bf16.msra.mxu0 %v3014
    %3773 = vmatpush.bf16.msra.mxu0 %v3006
    %3774 = vmatpush.bf16.msra.mxu0 %v2998
    %3775 = vmatpush.bf16.msra.mxu0 %v2990
    %3776 = vmatpush.bf16.msra.mxu0 %v2982
    %3777 = vmatmul.bf16.gmra.mxu0 %v2187
    %v3778 = vpop.f32.mrf.mxu0
    %v3779 = vadd.f32 %v2198, %v3778
    %v3780 = vpop.f32.mrf.mxu0
    %v3781 = vadd.f32 %v2198, %v3780
    %3782 = vdwg.mxu0
    %3783 = vmatpush.bf16.msra.mxu0 %v3102
    %3784 = vmatpush.bf16.msra.mxu0 %v3094
    %3785 = vmatpush.bf16.msra.mxu0 %v3086
    %3786 = vmatpush.bf16.msra.mxu0 %v3078
    %3787 = vmatpush.bf16.msra.mxu0 %v3070
    %3788 = vmatpush.bf16.msra.mxu0 %v3062
    %3789 = vmatpush.bf16.msra.mxu0 %v3054
    %3790 = vmatpush.bf16.msra.mxu0 %v3046
    %3791 = vmatmul.bf16.gmra.mxu0 %v2188
    %v3792 = vpop.f32.mrf.mxu0
    %v3793 = vadd.f32 %v3779, %v3792
    %v3794 = vpop.f32.mrf.mxu0
    %v3795 = vadd.f32 %v3781, %v3794
    %3796 = vdwg.mxu0
    %3797 = vmatpush.bf16.msra.mxu0 %v3166
    %3798 = vmatpush.bf16.msra.mxu0 %v3158
    %3799 = vmatpush.bf16.msra.mxu0 %v3150
    %3800 = vmatpush.bf16.msra.mxu0 %v3142
    %3801 = vmatpush.bf16.msra.mxu0 %v3134
    %3802 = vmatpush.bf16.msra.mxu0 %v3126
    %3803 = vmatpush.bf16.msra.mxu0 %v3118
    %3804 = vmatpush.bf16.msra.mxu0 %v3110
    %3805 = vmatmul.bf16.gmra.mxu0 %v2189
    %v3806 = vpop.f32.mrf.mxu0
    %v3807 = vadd.f32 %v3793, %v3806
    %v3808 = vpop.f32.mrf.mxu0
    %v3809 = vadd.f32 %v3795, %v3808
    %3810 = vdwg.mxu0
    %3811 = vmatpush.bf16.msra.mxu0 %v3230
    %3812 = vmatpush.bf16.msra.mxu0 %v3222
    %3813 = vmatpush.bf16.msra.mxu0 %v3214
    %3814 = vmatpush.bf16.msra.mxu0 %v3206
    %3815 = vmatpush.bf16.msra.mxu0 %v3198
    %3816 = vmatpush.bf16.msra.mxu0 %v3190
    %3817 = vmatpush.bf16.msra.mxu0 %v3182
    %3818 = vmatpush.bf16.msra.mxu0 %v3174
    %3819 = vmatmul.bf16.gmra.mxu0 %v2190
    %v3820 = vpop.f32.mrf.mxu0
    %v3821 = vadd.f32 %v3807, %v3820
    %v3822 = vpop.f32.mrf.mxu0
    %v3823 = vadd.f32 %v3809, %v3822
    %3824 = vdwg.mxu0
    %3825 = vmatpush.bf16.msra.mxu0 %v3039
    %3826 = vmatpush.bf16.msra.mxu0 %v3031
    %3827 = vmatpush.bf16.msra.mxu0 %v3023
    %3828 = vmatpush.bf16.msra.mxu0 %v3015
    %3829 = vmatpush.bf16.msra.mxu0 %v3007
    %3830 = vmatpush.bf16.msra.mxu0 %v2999
    %3831 = vmatpush.bf16.msra.mxu0 %v2991
    %3832 = vmatpush.bf16.msra.mxu0 %v2983
    %3833 = vmatmul.bf16.gmra.mxu0 %v2187
    %v3834 = vpop.f32.mrf.mxu0
    %v3835 = vadd.f32 %v2199, %v3834
    %v3836 = vpop.f32.mrf.mxu0
    %v3837 = vadd.f32 %v2199, %v3836
    %3838 = vdwg.mxu0
    %3839 = vmatpush.bf16.msra.mxu0 %v3103
    %3840 = vmatpush.bf16.msra.mxu0 %v3095
    %3841 = vmatpush.bf16.msra.mxu0 %v3087
    %3842 = vmatpush.bf16.msra.mxu0 %v3079
    %3843 = vmatpush.bf16.msra.mxu0 %v3071
    %3844 = vmatpush.bf16.msra.mxu0 %v3063
    %3845 = vmatpush.bf16.msra.mxu0 %v3055
    %3846 = vmatpush.bf16.msra.mxu0 %v3047
    %3847 = vmatmul.bf16.gmra.mxu0 %v2188
    %v3848 = vpop.f32.mrf.mxu0
    %v3849 = vadd.f32 %v3835, %v3848
    %v3850 = vpop.f32.mrf.mxu0
    %v3851 = vadd.f32 %v3837, %v3850
    %3852 = vdwg.mxu0
    %3853 = vmatpush.bf16.msra.mxu0 %v3167
    %3854 = vmatpush.bf16.msra.mxu0 %v3159
    %3855 = vmatpush.bf16.msra.mxu0 %v3151
    %3856 = vmatpush.bf16.msra.mxu0 %v3143
    %3857 = vmatpush.bf16.msra.mxu0 %v3135
    %3858 = vmatpush.bf16.msra.mxu0 %v3127
    %3859 = vmatpush.bf16.msra.mxu0 %v3119
    %3860 = vmatpush.bf16.msra.mxu0 %v3111
    %3861 = vmatmul.bf16.gmra.mxu0 %v2189
    %v3862 = vpop.f32.mrf.mxu0
    %v3863 = vadd.f32 %v3849, %v3862
    %v3864 = vpop.f32.mrf.mxu0
    %v3865 = vadd.f32 %v3851, %v3864
    %3866 = vdwg.mxu0
    %3867 = vmatpush.bf16.msra.mxu0 %v3231
    %3868 = vmatpush.bf16.msra.mxu0 %v3223
    %3869 = vmatpush.bf16.msra.mxu0 %v3215
    %3870 = vmatpush.bf16.msra.mxu0 %v3207
    %3871 = vmatpush.bf16.msra.mxu0 %v3199
    %3872 = vmatpush.bf16.msra.mxu0 %v3191
    %3873 = vmatpush.bf16.msra.mxu0 %v3183
    %3874 = vmatpush.bf16.msra.mxu0 %v3175
    %3875 = vmatmul.bf16.gmra.mxu0 %v2190
    %v3876 = vpop.f32.mrf.mxu0
    %v3877 = vadd.f32 %v3863, %v3876
    %v3878 = vpop.f32.mrf.mxu0
    %v3879 = vadd.f32 %v3865, %v3878
    %3880 = vdwg.mxu0
    %3881 = vmatpush.bf16.msra.mxu0 %v3040
    %3882 = vmatpush.bf16.msra.mxu0 %v3032
    %3883 = vmatpush.bf16.msra.mxu0 %v3024
    %3884 = vmatpush.bf16.msra.mxu0 %v3016
    %3885 = vmatpush.bf16.msra.mxu0 %v3008
    %3886 = vmatpush.bf16.msra.mxu0 %v3000
    %3887 = vmatpush.bf16.msra.mxu0 %v2992
    %3888 = vmatpush.bf16.msra.mxu0 %v2984
    %3889 = vmatmul.bf16.gmra.mxu0 %v2187
    %v3890 = vpop.f32.mrf.mxu0
    %v3891 = vadd.f32 %v2200, %v3890
    %v3892 = vpop.f32.mrf.mxu0
    %v3893 = vadd.f32 %v2200, %v3892
    %3894 = vdwg.mxu0
    %3895 = vmatpush.bf16.msra.mxu0 %v3104
    %3896 = vmatpush.bf16.msra.mxu0 %v3096
    %3897 = vmatpush.bf16.msra.mxu0 %v3088
    %3898 = vmatpush.bf16.msra.mxu0 %v3080
    %3899 = vmatpush.bf16.msra.mxu0 %v3072
    %3900 = vmatpush.bf16.msra.mxu0 %v3064
    %3901 = vmatpush.bf16.msra.mxu0 %v3056
    %3902 = vmatpush.bf16.msra.mxu0 %v3048
    %3903 = vmatmul.bf16.gmra.mxu0 %v2188
    %v3904 = vpop.f32.mrf.mxu0
    %v3905 = vadd.f32 %v3891, %v3904
    %v3906 = vpop.f32.mrf.mxu0
    %v3907 = vadd.f32 %v3893, %v3906
    %3908 = vdwg.mxu0
    %3909 = vmatpush.bf16.msra.mxu0 %v3168
    %3910 = vmatpush.bf16.msra.mxu0 %v3160
    %3911 = vmatpush.bf16.msra.mxu0 %v3152
    %3912 = vmatpush.bf16.msra.mxu0 %v3144
    %3913 = vmatpush.bf16.msra.mxu0 %v3136
    %3914 = vmatpush.bf16.msra.mxu0 %v3128
    %3915 = vmatpush.bf16.msra.mxu0 %v3120
    %3916 = vmatpush.bf16.msra.mxu0 %v3112
    %3917 = vmatmul.bf16.gmra.mxu0 %v2189
    %v3918 = vpop.f32.mrf.mxu0
    %v3919 = vadd.f32 %v3905, %v3918
    %v3920 = vpop.f32.mrf.mxu0
    %v3921 = vadd.f32 %v3907, %v3920
    %3922 = vdwg.mxu0
    %3923 = vmatpush.bf16.msra.mxu0 %v3232
    %3924 = vmatpush.bf16.msra.mxu0 %v3224
    %3925 = vmatpush.bf16.msra.mxu0 %v3216
    %3926 = vmatpush.bf16.msra.mxu0 %v3208
    %3927 = vmatpush.bf16.msra.mxu0 %v3200
    %3928 = vmatpush.bf16.msra.mxu0 %v3192
    %3929 = vmatpush.bf16.msra.mxu0 %v3184
    %3930 = vmatpush.bf16.msra.mxu0 %v3176
    %3931 = vmatmul.bf16.gmra.mxu0 %v2190
    %v3932 = vpop.f32.mrf.mxu0
    %v3933 = vadd.f32 %v3919, %v3932
    %v3934 = vpop.f32.mrf.mxu0
    %v3935 = vadd.f32 %v3921, %v3934
    %3936 = vdwg.mxu0
    %v3937 = vld [vmem:[%s14] sm:$0xff]
    %3939 = vst [vmem:[#allocation1] ss:$4 sm:$0xff] %v3937
    %v3940 = vld.sshfl [vmem:[#allocation1] sm:$0xff pattern:$0x73625140]
    %v3941 = vld.sshfl [vmem:[#allocation1 + $0x8] sm:$0xff pattern:$0x73625140]
    %v3942 = vld.sshfl [vmem:[#allocation1 + $0x10] sm:$0xff pattern:$0x73625140]
    %v3943 = vld.sshfl [vmem:[#allocation1 + $0x18] sm:$0xff pattern:$0x73625140]
    %v3944 = vsel %vm1227, %v3940, 0
    %v3946 = vsel %vm1227, %v3941, 0
    %v3948 = vsel %vm1227, %v3942, 0
    %v3950 = vsel %vm1227, %v3943, 0
    %3952 = vmatpush.bf16.msra.mxu0 0
    %3953 = vmatpush.bf16.msra.mxu0 0
    %3954 = vmatpush.bf16.msra.mxu0 0
    %3955 = vmatpush.bf16.msra.mxu0 0
    %3956 = vmatpush.bf16.msra.mxu0 0
    %3957 = vmatpush.bf16.msra.mxu0 0
    %3958 = vmatpush.bf16.msra.mxu0 0
    %3959 = vmatpush.bf16.msra.mxu0 %v3944
    %3960 = vmatmul.bf16.gmra.mxu0 %v1219
    %v3961 = vpop.f32.mrf.mxu0
    %v3962 = vadd.f32 0.0, %v3961
    %v3963 = vpop.f32.mrf.mxu0
    %v3964 = vadd.f32 0.0, %v3963
    %3965 = vmatmul.bf16.gmra.mxu0 %v1222
    %v3966 = vpop.f32.mrf.mxu0
    %v3967 = vadd.f32 0.0, %v3966
    %v3968 = vpop.f32.mrf.mxu0
    %v3969 = vadd.f32 0.0, %v3968
    %3970 = vmatmul.bf16.gmra.mxu0 %v1225
    %v3971 = vpop.f32.mrf.mxu0
    %v3972 = vadd.f32 0.0, %v3971
    %v3973 = vpop.f32.mrf.mxu0
    %v3974 = vadd.f32 0.0, %v3973
    %3975 = vdwg.mxu0
    %3976 = vmatpush.bf16.msra.mxu0 0
    %3977 = vmatpush.bf16.msra.mxu0 0
    %3978 = vmatpush.bf16.msra.mxu0 0
    %3979 = vmatpush.bf16.msra.mxu0 0
    %3980 = vmatpush.bf16.msra.mxu0 0
    %3981 = vmatpush.bf16.msra.mxu0 0
    %3982 = vmatpush.bf16.msra.mxu0 0
    %3983 = vmatpush.bf16.msra.mxu0 %v3946
    %3984 = vmatmul.bf16.gmra.mxu0 %v1219
    %v3985 = vpop.f32.mrf.mxu0
    %v3986 = vadd.f32 0.0, %v3985
    %v3987 = vpop.f32.mrf.mxu0
    %v3988 = vadd.f32 0.0, %v3987
    %3989 = vmatmul.bf16.gmra.mxu0 %v1222
    %v3990 = vpop.f32.mrf.mxu0
    %v3991 = vadd.f32 0.0, %v3990
    %v3992 = vpop.f32.mrf.mxu0
    %v3993 = vadd.f32 0.0, %v3992
    %3994 = vmatmul.bf16.gmra.mxu0 %v1225
    %v3995 = vpop.f32.mrf.mxu0
    %v3996 = vadd.f32 0.0, %v3995
    %v3997 = vpop.f32.mrf.mxu0
    %v3998 = vadd.f32 0.0, %v3997
    %3999 = vdwg.mxu0
    %4000 = vmatpush.bf16.msra.mxu0 0
    %4001 = vmatpush.bf16.msra.mxu0 0
    %4002 = vmatpush.bf16.msra.mxu0 0
    %4003 = vmatpush.bf16.msra.mxu0 0
    %4004 = vmatpush.bf16.msra.mxu0 0
    %4005 = vmatpush.bf16.msra.mxu0 0
    %4006 = vmatpush.bf16.msra.mxu0 0
    %4007 = vmatpush.bf16.msra.mxu0 %v3948
    %4008 = vmatmul.bf16.gmra.mxu0 %v1219
    %v4009 = vpop.f32.mrf.mxu0
    %v4010 = vadd.f32 0.0, %v4009
    %v4011 = vpop.f32.mrf.mxu0
    %v4012 = vadd.f32 0.0, %v4011
    %4013 = vmatmul.bf16.gmra.mxu0 %v1222
    %v4014 = vpop.f32.mrf.mxu0
    %v4015 = vadd.f32 0.0, %v4014
    %v4016 = vpop.f32.mrf.mxu0
    %v4017 = vadd.f32 0.0, %v4016
    %4018 = vmatmul.bf16.gmra.mxu0 %v1225
    %v4019 = vpop.f32.mrf.mxu0
    %v4020 = vadd.f32 0.0, %v4019
    %v4021 = vpop.f32.mrf.mxu0
    %v4022 = vadd.f32 0.0, %v4021
    %4023 = vdwg.mxu0
    %4024 = vmatpush.bf16.msra.mxu0 0
    %4025 = vmatpush.bf16.msra.mxu0 0
    %4026 = vmatpush.bf16.msra.mxu0 0
    %4027 = vmatpush.bf16.msra.mxu0 0
    %4028 = vmatpush.bf16.msra.mxu0 0
    %4029 = vmatpush.bf16.msra.mxu0 0
    %4030 = vmatpush.bf16.msra.mxu0 0
    %4031 = vmatpush.bf16.msra.mxu0 %v3950
    %4032 = vmatmul.bf16.gmra.mxu0 %v1219
    %v4033 = vpop.f32.mrf.mxu0
    %v4034 = vadd.f32 0.0, %v4033
    %v4035 = vpop.f32.mrf.mxu0
    %v4036 = vadd.f32 0.0, %v4035
    %4037 = vmatmul.bf16.gmra.mxu0 %v1222
    %v4038 = vpop.f32.mrf.mxu0
    %v4039 = vadd.f32 0.0, %v4038
    %v4040 = vpop.f32.mrf.mxu0
    %v4041 = vadd.f32 0.0, %v4040
    %4042 = vmatmul.bf16.gmra.mxu0 %v1225
    %v4043 = vpop.f32.mrf.mxu0
    %v4044 = vadd.f32 0.0, %v4043
    %v4045 = vpop.f32.mrf.mxu0
    %v4046 = vadd.f32 0.0, %v4045
    %4047 = vdwg.mxu0
    %v4048 = vpack.c.bf16 %v3543, %v3541
    %v4049 = vpack.c.bf16 %v3599, %v3597
    %v4050 = vpack.c.bf16 %v3655, %v3653
    %v4051 = vpack.c.bf16 %v3711, %v3709
    %4052 = vmatpush.bf16.msra.mxu0 0
    %4053 = vmatpush.bf16.msra.mxu0 0
    %4054 = vmatpush.bf16.msra.mxu0 0
    %4055 = vmatpush.bf16.msra.mxu0 0
    %4056 = vmatpush.bf16.msra.mxu0 0
    %4057 = vmatpush.bf16.msra.mxu0 0
    %4058 = vmatpush.bf16.msra.mxu0 0
    %4059 = vmatpush.bf16.msra.mxu0 %v4048
    %4060 = vmatmul.bf16.gmra.mxu0 %v1353
    %v4061 = vpop.f32.mrf.mxu0
    %v4062 = vadd.f32 0.0, %v4061
    %v4063 = vpop.f32.mrf.mxu0
    %v4064 = vadd.f32 0.0, %v4063
    %4065 = vmatmul.bf16.gmra.mxu0 %v1356
    %v4066 = vpop.f32.mrf.mxu0
    %v4067 = vadd.f32 0.0, %v4066
    %v4068 = vpop.f32.mrf.mxu0
    %v4069 = vadd.f32 0.0, %v4068
    %4070 = vmatmul.bf16.gmra.mxu0 %v1359
    %v4071 = vpop.f32.mrf.mxu0
    %v4072 = vadd.f32 0.0, %v4071
    %v4073 = vpop.f32.mrf.mxu0
    %v4074 = vadd.f32 0.0, %v4073
    %4075 = vdwg.mxu0
    %4076 = vmatpush.bf16.msra.mxu0 0
    %4077 = vmatpush.bf16.msra.mxu0 0
    %4078 = vmatpush.bf16.msra.mxu0 0
    %4079 = vmatpush.bf16.msra.mxu0 0
    %4080 = vmatpush.bf16.msra.mxu0 0
    %4081 = vmatpush.bf16.msra.mxu0 0
    %4082 = vmatpush.bf16.msra.mxu0 0
    %4083 = vmatpush.bf16.msra.mxu0 %v4049
    %4084 = vmatmul.bf16.gmra.mxu0 %v1353
    %v4085 = vpop.f32.mrf.mxu0
    %v4086 = vadd.f32 0.0, %v4085
    %v4087 = vpop.f32.mrf.mxu0
    %v4088 = vadd.f32 0.0, %v4087
    %4089 = vmatmul.bf16.gmra.mxu0 %v1356
    %v4090 = vpop.f32.mrf.mxu0
    %v4091 = vadd.f32 0.0, %v4090
    %v4092 = vpop.f32.mrf.mxu0
    %v4093 = vadd.f32 0.0, %v4092
    %4094 = vmatmul.bf16.gmra.mxu0 %v1359
    %v4095 = vpop.f32.mrf.mxu0
    %v4096 = vadd.f32 0.0, %v4095
    %v4097 = vpop.f32.mrf.mxu0
    %v4098 = vadd.f32 0.0, %v4097
    %4099 = vdwg.mxu0
    %4100 = vmatpush.bf16.msra.mxu0 0
    %4101 = vmatpush.bf16.msra.mxu0 0
    %4102 = vmatpush.bf16.msra.mxu0 0
    %4103 = vmatpush.bf16.msra.mxu0 0
    %4104 = vmatpush.bf16.msra.mxu0 0
    %4105 = vmatpush.bf16.msra.mxu0 0
    %4106 = vmatpush.bf16.msra.mxu0 0
    %4107 = vmatpush.bf16.msra.mxu0 %v4050
    %4108 = vmatmul.bf16.gmra.mxu0 %v1353
    %v4109 = vpop.f32.mrf.mxu0
    %v4110 = vadd.f32 0.0, %v4109
    %v4111 = vpop.f32.mrf.mxu0
    %v4112 = vadd.f32 0.0, %v4111
    %4113 = vmatmul.bf16.gmra.mxu0 %v1356
    %v4114 = vpop.f32.mrf.mxu0
    %v4115 = vadd.f32 0.0, %v4114
    %v4116 = vpop.f32.mrf.mxu0
    %v4117 = vadd.f32 0.0, %v4116
    %4118 = vmatmul.bf16.gmra.mxu0 %v1359
    %v4119 = vpop.f32.mrf.mxu0
    %v4120 = vadd.f32 0.0, %v4119
    %v4121 = vpop.f32.mrf.mxu0
    %v4122 = vadd.f32 0.0, %v4121
    %4123 = vdwg.mxu0
    %4124 = vmatpush.bf16.msra.mxu0 0
    %4125 = vmatpush.bf16.msra.mxu0 0
    %4126 = vmatpush.bf16.msra.mxu0 0
    %4127 = vmatpush.bf16.msra.mxu0 0
    %4128 = vmatpush.bf16.msra.mxu0 0
    %4129 = vmatpush.bf16.msra.mxu0 0
    %4130 = vmatpush.bf16.msra.mxu0 0
    %4131 = vmatpush.bf16.msra.mxu0 %v4051
    %4132 = vmatmul.bf16.gmra.mxu0 %v1353
    %v4133 = vpop.f32.mrf.mxu0
    %v4134 = vadd.f32 0.0, %v4133
    %v4135 = vpop.f32.mrf.mxu0
    %v4136 = vadd.f32 0.0, %v4135
    %4137 = vmatmul.bf16.gmra.mxu0 %v1356
    %v4138 = vpop.f32.mrf.mxu0
    %v4139 = vadd.f32 0.0, %v4138
    %v4140 = vpop.f32.mrf.mxu0
    %v4141 = vadd.f32 0.0, %v4140
    %4142 = vmatmul.bf16.gmra.mxu0 %v1359
    %v4143 = vpop.f32.mrf.mxu0
    %v4144 = vadd.f32 0.0, %v4143
    %v4145 = vpop.f32.mrf.mxu0
    %v4146 = vadd.f32 0.0, %v4145
    %4147 = vdwg.mxu0
    %v4148 = vpack.c.bf16 %v3767, %v3765
    %v4149 = vpack.c.bf16 %v3823, %v3821
    %v4150 = vpack.c.bf16 %v3879, %v3877
    %v4151 = vpack.c.bf16 %v3935, %v3933
    %4152 = vmatpush.bf16.msra.mxu0 0
    %4153 = vmatpush.bf16.msra.mxu0 0
    %4154 = vmatpush.bf16.msra.mxu0 0
    %4155 = vmatpush.bf16.msra.mxu0 0
    %4156 = vmatpush.bf16.msra.mxu0 0
    %4157 = vmatpush.bf16.msra.mxu0 0
    %4158 = vmatpush.bf16.msra.mxu0 0
    %4159 = vmatpush.bf16.msra.mxu0 %v4148
    %4160 = vmatmul.bf16.gmra.mxu0 %v1477
    %v4161 = vpop.f32.mrf.mxu0
    %v4162 = vadd.f32 0.0, %v4161
    %v4163 = vpop.f32.mrf.mxu0
    %v4164 = vadd.f32 0.0, %v4163
    %4165 = vmatmul.bf16.gmra.mxu0 %v1480
    %v4166 = vpop.f32.mrf.mxu0
    %v4167 = vadd.f32 0.0, %v4166
    %v4168 = vpop.f32.mrf.mxu0
    %v4169 = vadd.f32 0.0, %v4168
    %4170 = vmatmul.bf16.gmra.mxu0 %v1483
    %v4171 = vpop.f32.mrf.mxu0
    %v4172 = vadd.f32 0.0, %v4171
    %v4173 = vpop.f32.mrf.mxu0
    %v4174 = vadd.f32 0.0, %v4173
    %4175 = vdwg.mxu0
    %4176 = vmatpush.bf16.msra.mxu0 0
    %4177 = vmatpush.bf16.msra.mxu0 0
    %4178 = vmatpush.bf16.msra.mxu0 0
    %4179 = vmatpush.bf16.msra.mxu0 0
    %4180 = vmatpush.bf16.msra.mxu0 0
    %4181 = vmatpush.bf16.msra.mxu0 0
    %4182 = vmatpush.bf16.msra.mxu0 0
    %4183 = vmatpush.bf16.msra.mxu0 %v4149
    %4184 = vmatmul.bf16.gmra.mxu0 %v1477
    %v4185 = vpop.f32.mrf.mxu0
    %v4186 = vadd.f32 0.0, %v4185
    %v4187 = vpop.f32.mrf.mxu0
    %v4188 = vadd.f32 0.0, %v4187
    %4189 = vmatmul.bf16.gmra.mxu0 %v1480
    %v4190 = vpop.f32.mrf.mxu0
    %v4191 = vadd.f32 0.0, %v4190
    %v4192 = vpop.f32.mrf.mxu0
    %v4193 = vadd.f32 0.0, %v4192
    %4194 = vmatmul.bf16.gmra.mxu0 %v1483
    %v4195 = vpop.f32.mrf.mxu0
    %v4196 = vadd.f32 0.0, %v4195
    %v4197 = vpop.f32.mrf.mxu0
    %v4198 = vadd.f32 0.0, %v4197
    %4199 = vdwg.mxu0
    %4200 = vmatpush.bf16.msra.mxu0 0
    %4201 = vmatpush.bf16.msra.mxu0 0
    %4202 = vmatpush.bf16.msra.mxu0 0
    %4203 = vmatpush.bf16.msra.mxu0 0
    %4204 = vmatpush.bf16.msra.mxu0 0
    %4205 = vmatpush.bf16.msra.mxu0 0
    %4206 = vmatpush.bf16.msra.mxu0 0
    %4207 = vmatpush.bf16.msra.mxu0 %v4150
    %4208 = vmatmul.bf16.gmra.mxu0 %v1477
    %v4209 = vpop.f32.mrf.mxu0
    %v4210 = vadd.f32 0.0, %v4209
    %v4211 = vpop.f32.mrf.mxu0
    %v4212 = vadd.f32 0.0, %v4211
    %4213 = vmatmul.bf16.gmra.mxu0 %v1480
    %v4214 = vpop.f32.mrf.mxu0
    %v4215 = vadd.f32 0.0, %v4214
    %v4216 = vpop.f32.mrf.mxu0
    %v4217 = vadd.f32 0.0, %v4216
    %4218 = vmatmul.bf16.gmra.mxu0 %v1483
    %v4219 = vpop.f32.mrf.mxu0
    %v4220 = vadd.f32 0.0, %v4219
    %v4221 = vpop.f32.mrf.mxu0
    %v4222 = vadd.f32 0.0, %v4221
    %4223 = vdwg.mxu0
    %4224 = vmatpush.bf16.msra.mxu0 0
    %4225 = vmatpush.bf16.msra.mxu0 0
    %4226 = vmatpush.bf16.msra.mxu0 0
    %4227 = vmatpush.bf16.msra.mxu0 0
    %4228 = vmatpush.bf16.msra.mxu0 0
    %4229 = vmatpush.bf16.msra.mxu0 0
    %4230 = vmatpush.bf16.msra.mxu0 0
    %4231 = vmatpush.bf16.msra.mxu0 %v4151
    %4232 = vmatmul.bf16.gmra.mxu0 %v1477
    %v4233 = vpop.f32.mrf.mxu0
    %v4234 = vadd.f32 0.0, %v4233
    %v4235 = vpop.f32.mrf.mxu0
    %v4236 = vadd.f32 0.0, %v4235
    %4237 = vmatmul.bf16.gmra.mxu0 %v1480
    %v4238 = vpop.f32.mrf.mxu0
    %v4239 = vadd.f32 0.0, %v4238
    %v4240 = vpop.f32.mrf.mxu0
    %v4241 = vadd.f32 0.0, %v4240
    %4242 = vmatmul.bf16.gmra.mxu0 %v1483
    %v4243 = vpop.f32.mrf.mxu0
    %v4244 = vadd.f32 0.0, %v4243
    %v4245 = vpop.f32.mrf.mxu0
    %v4246 = vadd.f32 0.0, %v4245
    %4247 = vdwg.mxu0
    %v4248 = vadd.f32 %v4062, %v4162
    %v4249 = vadd.f32 %v4086, %v4186
    %v4250 = vadd.f32 %v4110, %v4210
    %v4251 = vadd.f32 %v4134, %v4234
    %v4252 = vadd.f32 %v4064, %v4164
    %v4253 = vadd.f32 %v4088, %v4188
    %v4254 = vadd.f32 %v4112, %v4212
    %v4255 = vadd.f32 %v4136, %v4236
    %v4256 = vadd.f32 %v4067, %v4167
    %v4257 = vadd.f32 %v4091, %v4191
    %v4258 = vadd.f32 %v4115, %v4215
    %v4259 = vadd.f32 %v4139, %v4239
    %v4260 = vadd.f32 %v4069, %v4169
    %v4261 = vadd.f32 %v4093, %v4193
    %v4262 = vadd.f32 %v4117, %v4217
    %v4263 = vadd.f32 %v4141, %v4241
    %v4264 = vadd.f32 %v4072, %v4172
    %v4265 = vadd.f32 %v4096, %v4196
    %v4266 = vadd.f32 %v4120, %v4220
    %v4267 = vadd.f32 %v4144, %v4244
    %v4268 = vadd.f32 %v4074, %v4174
    %v4269 = vadd.f32 %v4098, %v4198
    %v4270 = vadd.f32 %v4122, %v4222
    %v4271 = vadd.f32 %v4146, %v4246
    %v4272 = vadd.f32 %v4248, %v3962
    %v4273 = vadd.f32 %v4249, %v3986
    %v4274 = vadd.f32 %v4250, %v4010
    %v4275 = vadd.f32 %v4251, %v4034
    %v4276 = vadd.f32 %v4252, %v3964
    %v4277 = vadd.f32 %v4253, %v3988
    %v4278 = vadd.f32 %v4254, %v4012
    %v4279 = vadd.f32 %v4255, %v4036
    %v4280 = vadd.f32 %v4256, %v3967
    %v4281 = vadd.f32 %v4257, %v3991
    %v4282 = vadd.f32 %v4258, %v4015
    %v4283 = vadd.f32 %v4259, %v4039
    %v4284 = vadd.f32 %v4260, %v3969
    %v4285 = vadd.f32 %v4261, %v3993
    %v4286 = vadd.f32 %v4262, %v4017
    %v4287 = vadd.f32 %v4263, %v4041
    %v4288 = vadd.f32 %v4264, %v3972
    %v4289 = vadd.f32 %v4265, %v3996
    %v4290 = vadd.f32 %v4266, %v4020
    %v4291 = vadd.f32 %v4267, %v4044
    %v4292 = vadd.f32 %v4268, %v3974
    %v4293 = vadd.f32 %v4269, %v3998
    %v4294 = vadd.f32 %v4270, %v4022
    %v4295 = vadd.f32 %v4271, %v4046
    %vm4296 = vcmp.gt.f32.partialorder %v4272, 0.0
    %vm4297 = vcmp.gt.f32.partialorder %v4273, 0.0
    %vm4298 = vcmp.gt.f32.partialorder %v4274, 0.0
    %vm4299 = vcmp.gt.f32.partialorder %v4275, 0.0
    %vm4300 = vcmp.gt.f32.partialorder %v4276, 0.0
    %vm4301 = vcmp.gt.f32.partialorder %v4277, 0.0
    %vm4302 = vcmp.gt.f32.partialorder %v4278, 0.0
    %vm4303 = vcmp.gt.f32.partialorder %v4279, 0.0
    %vm4304 = vcmp.gt.f32.partialorder %v4280, 0.0
    %vm4305 = vcmp.gt.f32.partialorder %v4281, 0.0
    %vm4306 = vcmp.gt.f32.partialorder %v4282, 0.0
    %vm4307 = vcmp.gt.f32.partialorder %v4283, 0.0
    %vm4308 = vcmp.gt.f32.partialorder %v4284, 0.0
    %vm4309 = vcmp.gt.f32.partialorder %v4285, 0.0
    %vm4310 = vcmp.gt.f32.partialorder %v4286, 0.0
    %vm4311 = vcmp.gt.f32.partialorder %v4287, 0.0
    %vm4312 = vcmp.gt.f32.partialorder %v4288, 0.0
    %vm4313 = vcmp.gt.f32.partialorder %v4289, 0.0
    %vm4314 = vcmp.gt.f32.partialorder %v4290, 0.0
    %vm4315 = vcmp.gt.f32.partialorder %v4291, 0.0
    %vm4316 = vcmp.gt.f32.partialorder %v4292, 0.0
    %vm4317 = vcmp.gt.f32.partialorder %v4293, 0.0
    %vm4318 = vcmp.gt.f32.partialorder %v4294, 0.0
    %vm4319 = vcmp.gt.f32.partialorder %v4295, 0.0
    %v4320 = vmul.f32 %v4272, 0.2
    %v4321 = vmul.f32 %v4273, 0.2
    %v4322 = vmul.f32 %v4274, 0.2
    %v4323 = vmul.f32 %v4275, 0.2
    %v4324 = vmul.f32 %v4276, 0.2
    %v4325 = vmul.f32 %v4277, 0.2
    %v4326 = vmul.f32 %v4278, 0.2
    %v4327 = vmul.f32 %v4279, 0.2
    %v4328 = vmul.f32 %v4280, 0.2
    %v4329 = vmul.f32 %v4281, 0.2
    %v4330 = vmul.f32 %v4282, 0.2
    %v4331 = vmul.f32 %v4283, 0.2
    %v4332 = vmul.f32 %v4284, 0.2
    %v4333 = vmul.f32 %v4285, 0.2
    %v4334 = vmul.f32 %v4286, 0.2
    %v4335 = vmul.f32 %v4287, 0.2
    %v4336 = vmul.f32 %v4288, 0.2
    %v4337 = vmul.f32 %v4289, 0.2
    %v4338 = vmul.f32 %v4290, 0.2
    %v4339 = vmul.f32 %v4291, 0.2
    %v4340 = vmul.f32 %v4292, 0.2
    %v4341 = vmul.f32 %v4293, 0.2
    %v4342 = vmul.f32 %v4294, 0.2
    %v4343 = vmul.f32 %v4295, 0.2
    %v4344 = vsel %vm4296, %v4272, %v4320
    %v4345 = vsel %vm4297, %v4273, %v4321
    %v4346 = vsel %vm4298, %v4274, %v4322
    %v4347 = vsel %vm4299, %v4275, %v4323
    %v4348 = vsel %vm4300, %v4276, %v4324
    %v4349 = vsel %vm4301, %v4277, %v4325
    %v4350 = vsel %vm4302, %v4278, %v4326
    %v4351 = vsel %vm4303, %v4279, %v4327
    %v4352 = vsel %vm4304, %v4280, %v4328
    %v4353 = vsel %vm4305, %v4281, %v4329
    %v4354 = vsel %vm4306, %v4282, %v4330
    %v4355 = vsel %vm4307, %v4283, %v4331
    %v4356 = vsel %vm4308, %v4284, %v4332
    %v4357 = vsel %vm4309, %v4285, %v4333
    %v4358 = vsel %vm4310, %v4286, %v4334
    %v4359 = vsel %vm4311, %v4287, %v4335
    %v4360 = vsel %vm4312, %v4288, %v4336
    %v4361 = vsel %vm4313, %v4289, %v4337
    %v4362 = vsel %vm4314, %v4290, %v4338
    %v4363 = vsel %vm4315, %v4291, %v4339
    %v4364 = vsel %vm4316, %v4292, %v4340
    %v4365 = vsel %vm4317, %v4293, %v4341
    %v4366 = vsel %vm4318, %v4294, %v4342
    %v4367 = vsel %vm4319, %v4295, %v4343
    %v4368 = vld [vmem:[%s15] sm:$0xf]
    %v4370 = vperm.slane %v4368, 0
    %v4371 = vperm.slane %v4368, 1
    %v4372 = vperm.slane %v4368, 2
    %v4373 = vperm.slane %v4368, 3
    %4378 = vmatpush.xpose.msra.mxu0 0.0
    %4379 = vmatpush.xpose.msra.mxu0 0.0
    %4380 = vmatpush.xpose.msra.mxu0 0.0
    %4381 = vmatpush.xpose.msra.mxu0 0.0
    %4382 = vmatpush.xpose.msra.mxu0 0.0
    %4383 = vmatpush.xpose.msra.mxu0 0.0
    %4384 = vmatpush.xpose.msra.mxu0 0.0
    %4385 = vmatpush.xpose.msra.mxu0 0.0
    %4386 = vmatpush.xpose.msra.mxu0 0.0
    %4387 = vmatpush.xpose.msra.mxu0 0.0
    %4388 = vmatpush.xpose.msra.mxu0 %v4364
    %4389 = vmatpush.xpose.msra.mxu0 %v4360
    %4390 = vmatpush.xpose.msra.mxu0 %v4356
    %4391 = vmatpush.xpose.msra.mxu0 %v4352
    %4392 = vmatpush.xpose.msra.mxu0 %v4348
    %4393 = vmatpush.xpose.msra.mxu0 %v4344
    %4394 = vmatmul.f32.gmra.mxu0 %v4370
    %v4395 = vpop.f32.mrf.mxu0
    %v4396 = vadd.f32 0.0, %v4395
    %4397 = vdwg.mxu0
    %4398 = vmatpush.xpose.msra.mxu0 0.0
    %4399 = vmatpush.xpose.msra.mxu0 0.0
    %4400 = vmatpush.xpose.msra.mxu0 0.0
    %4401 = vmatpush.xpose.msra.mxu0 0.0
    %4402 = vmatpush.xpose.msra.mxu0 0.0
    %4403 = vmatpush.xpose.msra.mxu0 0.0
    %4404 = vmatpush.xpose.msra.mxu0 0.0
    %4405 = vmatpush.xpose.msra.mxu0 0.0
    %4406 = vmatpush.xpose.msra.mxu0 0.0
    %4407 = vmatpush.xpose.msra.mxu0 0.0
    %4408 = vmatpush.xpose.msra.mxu0 %v4365
    %4409 = vmatpush.xpose.msra.mxu0 %v4361
    %4410 = vmatpush.xpose.msra.mxu0 %v4357
    %4411 = vmatpush.xpose.msra.mxu0 %v4353
    %4412 = vmatpush.xpose.msra.mxu0 %v4349
    %4413 = vmatpush.xpose.msra.mxu0 %v4345
    %4414 = vmatmul.f32.gmra.mxu0 %v4371
    %v4415 = vpop.f32.mrf.mxu0
    %v4416 = vadd.f32 %v4396, %v4415
    %4417 = vdwg.mxu0
    %4418 = vmatpush.xpose.msra.mxu0 0.0
    %4419 = vmatpush.xpose.msra.mxu0 0.0
    %4420 = vmatpush.xpose.msra.mxu0 0.0
    %4421 = vmatpush.xpose.msra.mxu0 0.0
    %4422 = vmatpush.xpose.msra.mxu0 0.0
    %4423 = vmatpush.xpose.msra.mxu0 0.0
    %4424 = vmatpush.xpose.msra.mxu0 0.0
    %4425 = vmatpush.xpose.msra.mxu0 0.0
    %4426 = vmatpush.xpose.msra.mxu0 0.0
    %4427 = vmatpush.xpose.msra.mxu0 0.0
    %4428 = vmatpush.xpose.msra.mxu0 %v4366
    %4429 = vmatpush.xpose.msra.mxu0 %v4362
    %4430 = vmatpush.xpose.msra.mxu0 %v4358
    %4431 = vmatpush.xpose.msra.mxu0 %v4354
    %4432 = vmatpush.xpose.msra.mxu0 %v4350
    %4433 = vmatpush.xpose.msra.mxu0 %v4346
    %4434 = vmatmul.f32.gmra.mxu0 %v4372
    %v4435 = vpop.f32.mrf.mxu0
    %v4436 = vadd.f32 %v4416, %v4435
    %4437 = vdwg.mxu0
    %4438 = vmatpush.xpose.msra.mxu0 0.0
    %4439 = vmatpush.xpose.msra.mxu0 0.0
    %4440 = vmatpush.xpose.msra.mxu0 0.0
    %4441 = vmatpush.xpose.msra.mxu0 0.0
    %4442 = vmatpush.xpose.msra.mxu0 0.0
    %4443 = vmatpush.xpose.msra.mxu0 0.0
    %4444 = vmatpush.xpose.msra.mxu0 0.0
    %4445 = vmatpush.xpose.msra.mxu0 0.0
    %4446 = vmatpush.xpose.msra.mxu0 0.0
    %4447 = vmatpush.xpose.msra.mxu0 0.0
    %4448 = vmatpush.xpose.msra.mxu0 %v4367
    %4449 = vmatpush.xpose.msra.mxu0 %v4363
    %4450 = vmatpush.xpose.msra.mxu0 %v4359
    %4451 = vmatpush.xpose.msra.mxu0 %v4355
    %4452 = vmatpush.xpose.msra.mxu0 %v4351
    %4453 = vmatpush.xpose.msra.mxu0 %v4347
    %4454 = vmatmul.f32.gmra.mxu0 %v4373
    %v4455 = vpop.f32.mrf.mxu0
    %v4456 = vadd.f32 %v4436, %v4455
    %4457 = vdwg.mxu0
    %v4458 = vperm.slane %v4456, 0
    %v4459 = vsel %vm997, %v4458, -1e+30
    %v4460 = vsel %vm998, %v4458, -1e+30
    %v4461 = vsel %vm1794, %v4459, -inf
    %4462 = vmax.xlane.f32.xlu0 %v4461
    %v4463 = vpop.xlane.xlu0 %4462
    %v4464 = vsel %vm1794, %v4460, -inf
    %4465 = vmax.xlane.f32.xlu0 %v4464
    %v4466 = vpop.xlane.xlu0 %4465
    %v4467 = vsub.f32 %v4459, %v4463
    %v4468 = vsub.f32 %v4460, %v4466
    %v4469 = vmul.f32 %v4467, 1.442695
    %v4470 = vpow.pop %v4469
    %v4471 = vmul.f32 %v4468, 1.442695
    %v4472 = vpow.pop %v4471
    %v4473 = vsel %vm997, %v4470, 0.0
    %v4474 = vsel %vm998, %v4472, 0.0
    %v4475 = vsel %vm1794, %v4473, 0.0
    %4476 = vadd.xlane.f32.xlu0 %v4475
    %v4477 = vpop.xlane.xlu0 %4476
    %v4478 = vsel %vm1794, %v4474, 0.0
    %4479 = vadd.xlane.f32.xlu0 %v4478
    %v4480 = vpop.xlane.xlu0 %4479
    %v4481 = vrcp.pop %v4477
    %v4482 = vrcp.pop %v4480
    %v4483 = vmul.f32 %v4473, %v4481
    %v4484 = vmul.f32 %v4474, %v4482
    %v4485 = vld [vmem:[%s16] sm:$0xf]
    %v4487 = vperm.slane %v4485, 0
    %v4488 = vperm.slane %v4485, 1
    %v4489 = vperm.slane %v4485, 2
    %v4490 = vperm.slane %v4485, 3
    %v4496 = vsel %vm1794, %v4483, 0
    %v4499 = vsel %vm1794, %v4484, 0
    %4501 = vmatpush.msra.mxu0 0.0
    %4502 = vmatpush.msra.mxu0 0.0
    %4503 = vmatpush.msra.mxu0 0.0
    %4504 = vmatpush.msra.mxu0 0.0
    %4505 = vmatpush.msra.mxu0 0.0
    %4506 = vmatpush.msra.mxu0 0.0
    %4507 = vmatpush.msra.mxu0 0.0
    %4508 = vmatpush.msra.mxu0 0.0
    %4509 = vmatpush.msra.mxu0 0.0
    %4510 = vmatpush.msra.mxu0 0.0
    %4511 = vmatpush.msra.mxu0 %v4074
    %4512 = vmatpush.msra.mxu0 %v4072
    %4513 = vmatpush.msra.mxu0 %v4069
    %4514 = vmatpush.msra.mxu0 %v4067
    %4515 = vmatpush.msra.mxu0 %v4064
    %4516 = vmatpush.msra.mxu0 %v4062
    %4517 = vmatmul.f32.gmra.mxu0 %v4496
    %v4518 = vpop.f32.mrf.mxu0
    %v4519 = vadd.f32 %v4487, %v4518
    %4520 = vmatmul.f32.gmra.mxu0 %v4499
    %v4521 = vpop.f32.mrf.mxu0
    %v4522 = vadd.f32 %v4487, %v4521
    %4523 = vdwg.mxu0
    %4524 = vmatpush.msra.mxu0 0.0
    %4525 = vmatpush.msra.mxu0 0.0
    %4526 = vmatpush.msra.mxu0 0.0
    %4527 = vmatpush.msra.mxu0 0.0
    %4528 = vmatpush.msra.mxu0 0.0
    %4529 = vmatpush.msra.mxu0 0.0
    %4530 = vmatpush.msra.mxu0 0.0
    %4531 = vmatpush.msra.mxu0 0.0
    %4532 = vmatpush.msra.mxu0 0.0
    %4533 = vmatpush.msra.mxu0 0.0
    %4534 = vmatpush.msra.mxu0 %v4098
    %4535 = vmatpush.msra.mxu0 %v4096
    %4536 = vmatpush.msra.mxu0 %v4093
    %4537 = vmatpush.msra.mxu0 %v4091
    %4538 = vmatpush.msra.mxu0 %v4088
    %4539 = vmatpush.msra.mxu0 %v4086
    %4540 = vmatmul.f32.gmra.mxu0 %v4496
    %v4541 = vpop.f32.mrf.mxu0
    %v4542 = vadd.f32 %v4488, %v4541
    %4543 = vmatmul.f32.gmra.mxu0 %v4499
    %v4544 = vpop.f32.mrf.mxu0
    %v4545 = vadd.f32 %v4488, %v4544
    %4546 = vdwg.mxu0
    %4547 = vmatpush.msra.mxu0 0.0
    %4548 = vmatpush.msra.mxu0 0.0
    %4549 = vmatpush.msra.mxu0 0.0
    %4550 = vmatpush.msra.mxu0 0.0
    %4551 = vmatpush.msra.mxu0 0.0
    %4552 = vmatpush.msra.mxu0 0.0
    %4553 = vmatpush.msra.mxu0 0.0
    %4554 = vmatpush.msra.mxu0 0.0
    %4555 = vmatpush.msra.mxu0 0.0
    %4556 = vmatpush.msra.mxu0 0.0
    %4557 = vmatpush.msra.mxu0 %v4122
    %4558 = vmatpush.msra.mxu0 %v4120
    %4559 = vmatpush.msra.mxu0 %v4117
    %4560 = vmatpush.msra.mxu0 %v4115
    %4561 = vmatpush.msra.mxu0 %v4112
    %4562 = vmatpush.msra.mxu0 %v4110
    %4563 = vmatmul.f32.gmra.mxu0 %v4496
    %v4564 = vpop.f32.mrf.mxu0
    %v4565 = vadd.f32 %v4489, %v4564
    %4566 = vmatmul.f32.gmra.mxu0 %v4499
    %v4567 = vpop.f32.mrf.mxu0
    %v4568 = vadd.f32 %v4489, %v4567
    %4569 = vdwg.mxu0
    %4570 = vmatpush.msra.mxu0 0.0
    %4571 = vmatpush.msra.mxu0 0.0
    %4572 = vmatpush.msra.mxu0 0.0
    %4573 = vmatpush.msra.mxu0 0.0
    %4574 = vmatpush.msra.mxu0 0.0
    %4575 = vmatpush.msra.mxu0 0.0
    %4576 = vmatpush.msra.mxu0 0.0
    %4577 = vmatpush.msra.mxu0 0.0
    %4578 = vmatpush.msra.mxu0 0.0
    %4579 = vmatpush.msra.mxu0 0.0
    %4580 = vmatpush.msra.mxu0 %v4146
    %4581 = vmatpush.msra.mxu0 %v4144
    %4582 = vmatpush.msra.mxu0 %v4141
    %4583 = vmatpush.msra.mxu0 %v4139
    %4584 = vmatpush.msra.mxu0 %v4136
    %4585 = vmatpush.msra.mxu0 %v4134
    %4586 = vmatmul.f32.gmra.mxu0 %v4496
    %v4587 = vpop.f32.mrf.mxu0
    %v4588 = vadd.f32 %v4490, %v4587
    %4589 = vmatmul.f32.gmra.mxu0 %v4499
    %v4590 = vpop.f32.mrf.mxu0
    %v4591 = vadd.f32 %v4490, %v4590
    %4592 = vdwg.mxu0
    %s4593 = smul.u32 %s1927, 4
    %s4594 = sshll.u32 %s4593, 4
    %4595 = dma.done %s627, %s4594
    %v4596 = vld [vmem:[#allocation4] sm:$0xff]
    %v4597 = vld [vmem:[#allocation4 + $0x8] sm:$0xff]
    %v4598 = vld [vmem:[#allocation4 + $0x10] sm:$0xff]
    %v4599 = vld [vmem:[#allocation4 + $0x18] sm:$0xff]
    %v4600 = vld [vmem:[#allocation4 + $0x20] sm:$0xff]
    %v4601 = vld [vmem:[#allocation4 + $0x28] sm:$0xff]
    %v4602 = vld [vmem:[#allocation4 + $0x30] sm:$0xff]
    %v4603 = vld [vmem:[#allocation4 + $0x38] sm:$0xff]
    %v4604 = vld [vmem:[#allocation4 + $0x40] sm:$0xff]
    %v4605 = vld [vmem:[#allocation4 + $0x48] sm:$0xff]
    %v4606 = vld [vmem:[#allocation4 + $0x50] sm:$0xff]
    %v4607 = vld [vmem:[#allocation4 + $0x58] sm:$0xff]
    %v4608 = vld [vmem:[#allocation4 + $0x60] sm:$0xff]
    %v4609 = vld [vmem:[#allocation4 + $0x68] sm:$0xff]
    %v4610 = vld [vmem:[#allocation4 + $0x70] sm:$0xff]
    %v4611 = vld [vmem:[#allocation4 + $0x78] sm:$0xff]
    %v4612 = vld [vmem:[#allocation4 + $0x80] sm:$0xff]
    %v4613 = vld [vmem:[#allocation4 + $0x88] sm:$0xff]
    %v4614 = vld [vmem:[#allocation4 + $0x90] sm:$0xff]
    %v4615 = vld [vmem:[#allocation4 + $0x98] sm:$0xff]
    %v4616 = vld [vmem:[#allocation4 + $0xa0] sm:$0xff]
    %v4617 = vld [vmem:[#allocation4 + $0xa8] sm:$0xff]
    %v4618 = vld [vmem:[#allocation4 + $0xb0] sm:$0xff]
    %v4619 = vld [vmem:[#allocation4 + $0xb8] sm:$0xff]
    %v4620 = vld [vmem:[#allocation4 + $0xc0] sm:$0xff]
    %v4621 = vld [vmem:[#allocation4 + $0xc8] sm:$0xff]
    %v4622 = vld [vmem:[#allocation4 + $0xd0] sm:$0xff]
    %v4623 = vld [vmem:[#allocation4 + $0xd8] sm:$0xff]
    %v4624 = vld [vmem:[#allocation4 + $0xe0] sm:$0xff]
    %v4625 = vld [vmem:[#allocation4 + $0xe8] sm:$0xff]
    %v4626 = vld [vmem:[#allocation4 + $0xf0] sm:$0xff]
    %v4627 = vld [vmem:[#allocation4 + $0xf8] sm:$0xff]
    %v4628 = vld [vmem:[#allocation4 + $0x100] sm:$0xff]
    %v4629 = vld [vmem:[#allocation4 + $0x108] sm:$0xff]
    %v4630 = vld [vmem:[#allocation4 + $0x110] sm:$0xff]
    %v4631 = vld [vmem:[#allocation4 + $0x118] sm:$0xff]
    %v4632 = vld [vmem:[#allocation4 + $0x120] sm:$0xff]
    %v4633 = vld [vmem:[#allocation4 + $0x128] sm:$0xff]
    %v4634 = vld [vmem:[#allocation4 + $0x130] sm:$0xff]
    %v4635 = vld [vmem:[#allocation4 + $0x138] sm:$0xff]
    %v4636 = vld [vmem:[#allocation4 + $0x140] sm:$0xff]
    %v4637 = vld [vmem:[#allocation4 + $0x148] sm:$0xff]
    %v4638 = vld [vmem:[#allocation4 + $0x150] sm:$0xff]
    %v4639 = vld [vmem:[#allocation4 + $0x158] sm:$0xff]
    %v4640 = vld [vmem:[#allocation4 + $0x160] sm:$0xff]
    %v4641 = vld [vmem:[#allocation4 + $0x168] sm:$0xff]
    %v4642 = vld [vmem:[#allocation4 + $0x170] sm:$0xff]
    %v4643 = vld [vmem:[#allocation4 + $0x178] sm:$0xff]
    %v4644 = vld [vmem:[#allocation4 + $0x180] sm:$0xff]
    %v4645 = vld [vmem:[#allocation4 + $0x188] sm:$0xff]
    %v4646 = vld [vmem:[#allocation4 + $0x190] sm:$0xff]
    %v4647 = vld [vmem:[#allocation4 + $0x198] sm:$0xff]
    %v4648 = vld [vmem:[#allocation4 + $0x1a0] sm:$0xff]
    %v4649 = vld [vmem:[#allocation4 + $0x1a8] sm:$0xff]
    %v4650 = vld [vmem:[#allocation4 + $0x1b0] sm:$0xff]
    %v4651 = vld [vmem:[#allocation4 + $0x1b8] sm:$0xff]
    %v4652 = vld [vmem:[#allocation4 + $0x1c0] sm:$0xff]
    %v4653 = vld [vmem:[#allocation4 + $0x1c8] sm:$0xff]
    %v4654 = vld [vmem:[#allocation4 + $0x1d0] sm:$0xff]
    %v4655 = vld [vmem:[#allocation4 + $0x1d8] sm:$0xff]
    %v4656 = vld [vmem:[#allocation4 + $0x1e0] sm:$0xff]
    %v4657 = vld [vmem:[#allocation4 + $0x1e8] sm:$0xff]
    %v4658 = vld [vmem:[#allocation4 + $0x1f0] sm:$0xff]
    %v4659 = vld [vmem:[#allocation4 + $0x1f8] sm:$0xff]
    %v4660 = vld [vmem:[#allocation4 + $0x200] sm:$0xff]
    %v4661 = vld [vmem:[#allocation4 + $0x208] sm:$0xff]
    %v4662 = vld [vmem:[#allocation4 + $0x210] sm:$0xff]
    %v4663 = vld [vmem:[#allocation4 + $0x218] sm:$0xff]
    %v4664 = vld [vmem:[#allocation4 + $0x220] sm:$0xff]
    %v4665 = vld [vmem:[#allocation4 + $0x228] sm:$0xff]
    %v4666 = vld [vmem:[#allocation4 + $0x230] sm:$0xff]
    %v4667 = vld [vmem:[#allocation4 + $0x238] sm:$0xff]
    %v4668 = vld [vmem:[#allocation4 + $0x240] sm:$0xff]
    %v4669 = vld [vmem:[#allocation4 + $0x248] sm:$0xff]
    %v4670 = vld [vmem:[#allocation4 + $0x250] sm:$0xff]
    %v4671 = vld [vmem:[#allocation4 + $0x258] sm:$0xff]
    %v4672 = vld [vmem:[#allocation4 + $0x260] sm:$0xff]
    %v4673 = vld [vmem:[#allocation4 + $0x268] sm:$0xff]
    %v4674 = vld [vmem:[#allocation4 + $0x270] sm:$0xff]
    %v4675 = vld [vmem:[#allocation4 + $0x278] sm:$0xff]
    %v4676 = vld [vmem:[#allocation4 + $0x280] sm:$0xff]
    %v4677 = vld [vmem:[#allocation4 + $0x288] sm:$0xff]
    %v4678 = vld [vmem:[#allocation4 + $0x290] sm:$0xff]
    %v4679 = vld [vmem:[#allocation4 + $0x298] sm:$0xff]
    %v4680 = vld [vmem:[#allocation4 + $0x2a0] sm:$0xff]
    %v4681 = vld [vmem:[#allocation4 + $0x2a8] sm:$0xff]
    %v4682 = vld [vmem:[#allocation4 + $0x2b0] sm:$0xff]
    %v4683 = vld [vmem:[#allocation4 + $0x2b8] sm:$0xff]
    %v4684 = vld [vmem:[#allocation4 + $0x2c0] sm:$0xff]
    %v4685 = vld [vmem:[#allocation4 + $0x2c8] sm:$0xff]
    %v4686 = vld [vmem:[#allocation4 + $0x2d0] sm:$0xff]
    %v4687 = vld [vmem:[#allocation4 + $0x2d8] sm:$0xff]
    %v4688 = vld [vmem:[#allocation4 + $0x2e0] sm:$0xff]
    %v4689 = vld [vmem:[#allocation4 + $0x2e8] sm:$0xff]
    %v4690 = vld [vmem:[#allocation4 + $0x2f0] sm:$0xff]
    %v4691 = vld [vmem:[#allocation4 + $0x2f8] sm:$0xff]
    %v4692 = vld [vmem:[#allocation4 + $0x300] sm:$0xff]
    %v4693 = vld [vmem:[#allocation4 + $0x308] sm:$0xff]
    %v4694 = vld [vmem:[#allocation4 + $0x310] sm:$0xff]
    %v4695 = vld [vmem:[#allocation4 + $0x318] sm:$0xff]
    %v4696 = vld [vmem:[#allocation4 + $0x320] sm:$0xff]
    %v4697 = vld [vmem:[#allocation4 + $0x328] sm:$0xff]
    %v4698 = vld [vmem:[#allocation4 + $0x330] sm:$0xff]
    %v4699 = vld [vmem:[#allocation4 + $0x338] sm:$0xff]
    %v4700 = vld [vmem:[#allocation4 + $0x340] sm:$0xff]
    %v4701 = vld [vmem:[#allocation4 + $0x348] sm:$0xff]
    %v4702 = vld [vmem:[#allocation4 + $0x350] sm:$0xff]
    %v4703 = vld [vmem:[#allocation4 + $0x358] sm:$0xff]
    %v4704 = vld [vmem:[#allocation4 + $0x360] sm:$0xff]
    %v4705 = vld [vmem:[#allocation4 + $0x368] sm:$0xff]
    %v4706 = vld [vmem:[#allocation4 + $0x370] sm:$0xff]
    %v4707 = vld [vmem:[#allocation4 + $0x378] sm:$0xff]
    %v4708 = vld [vmem:[#allocation4 + $0x380] sm:$0xff]
    %v4709 = vld [vmem:[#allocation4 + $0x388] sm:$0xff]
    %v4710 = vld [vmem:[#allocation4 + $0x390] sm:$0xff]
    %v4711 = vld [vmem:[#allocation4 + $0x398] sm:$0xff]
    %v4712 = vld [vmem:[#allocation4 + $0x3a0] sm:$0xff]
    %v4713 = vld [vmem:[#allocation4 + $0x3a8] sm:$0xff]
    %v4714 = vld [vmem:[#allocation4 + $0x3b0] sm:$0xff]
    %v4715 = vld [vmem:[#allocation4 + $0x3b8] sm:$0xff]
    %v4716 = vld [vmem:[#allocation4 + $0x3c0] sm:$0xff]
    %v4717 = vld [vmem:[#allocation4 + $0x3c8] sm:$0xff]
    %v4718 = vld [vmem:[#allocation4 + $0x3d0] sm:$0xff]
    %v4719 = vld [vmem:[#allocation4 + $0x3d8] sm:$0xff]
    %v4720 = vld [vmem:[#allocation4 + $0x3e0] sm:$0xff]
    %v4721 = vld [vmem:[#allocation4 + $0x3e8] sm:$0xff]
    %v4722 = vld [vmem:[#allocation4 + $0x3f0] sm:$0xff]
    %v4723 = vld [vmem:[#allocation4 + $0x3f8] sm:$0xff]
    %v4724 = vpack.c.bf16 %v4522, %v4519
    %v4725 = vpack.c.bf16 %v4545, %v4542
    %v4726 = vpack.c.bf16 %v4568, %v4565
    %v4727 = vpack.c.bf16 %v4591, %v4588
    %v4728 = vld [vmem:[%s17] sm:$0xf]
    %v4730 = vperm.slane %v4728, 0
    %v4731 = vperm.slane %v4728, 1
    %v4732 = vperm.slane %v4728, 2
    %v4733 = vperm.slane %v4728, 3
    %v4866 = vunpack.c.l.b16 %v4596
    %v4867 = vunpack.c.h.b16 %v4596
    %v4868 = vunpack.c.l.b16 %v4597
    %v4869 = vunpack.c.h.b16 %v4597
    %v4870 = vunpack.c.l.b16 %v4598
    %v4871 = vunpack.c.h.b16 %v4598
    %v4872 = vunpack.c.l.b16 %v4599
    %v4873 = vunpack.c.h.b16 %v4599
    %v4874 = vunpack.c.l.b16 %v4600
    %v4875 = vunpack.c.h.b16 %v4600
    %v4876 = vunpack.c.l.b16 %v4601
    %v4877 = vunpack.c.h.b16 %v4601
    %v4878 = vunpack.c.l.b16 %v4602
    %v4879 = vunpack.c.h.b16 %v4602
    %v4880 = vunpack.c.l.b16 %v4603
    %v4881 = vunpack.c.h.b16 %v4603
    %v4882 = vunpack.c.l.b16 %v4604
    %v4883 = vunpack.c.h.b16 %v4604
    %v4884 = vunpack.c.l.b16 %v4605
    %v4885 = vunpack.c.h.b16 %v4605
    %v4886 = vunpack.c.l.b16 %v4606
    %v4887 = vunpack.c.h.b16 %v4606
    %v4888 = vunpack.c.l.b16 %v4607
    %v4889 = vunpack.c.h.b16 %v4607
    %v4890 = vunpack.c.l.b16 %v4608
    %v4891 = vunpack.c.h.b16 %v4608
    %v4892 = vunpack.c.l.b16 %v4609
    %v4893 = vunpack.c.h.b16 %v4609
    %v4894 = vunpack.c.l.b16 %v4610
    %v4895 = vunpack.c.h.b16 %v4610
    %v4896 = vunpack.c.l.b16 %v4611
    %v4897 = vunpack.c.h.b16 %v4611
    %v4898 = vunpack.c.l.b16 %v4612
    %v4899 = vunpack.c.h.b16 %v4612
    %v4900 = vunpack.c.l.b16 %v4613
    %v4901 = vunpack.c.h.b16 %v4613
    %v4902 = vunpack.c.l.b16 %v4614
    %v4903 = vunpack.c.h.b16 %v4614
    %v4904 = vunpack.c.l.b16 %v4615
    %v4905 = vunpack.c.h.b16 %v4615
    %v4906 = vunpack.c.l.b16 %v4616
    %v4907 = vunpack.c.h.b16 %v4616
    %v4908 = vunpack.c.l.b16 %v4617
    %v4909 = vunpack.c.h.b16 %v4617
    %v4910 = vunpack.c.l.b16 %v4618
    %v4911 = vunpack.c.h.b16 %v4618
    %v4912 = vunpack.c.l.b16 %v4619
    %v4913 = vunpack.c.h.b16 %v4619
    %v4914 = vunpack.c.l.b16 %v4620
    %v4915 = vunpack.c.h.b16 %v4620
    %v4916 = vunpack.c.l.b16 %v4621
    %v4917 = vunpack.c.h.b16 %v4621
    %v4918 = vunpack.c.l.b16 %v4622
    %v4919 = vunpack.c.h.b16 %v4622
    %v4920 = vunpack.c.l.b16 %v4623
    %v4921 = vunpack.c.h.b16 %v4623
    %v4922 = vunpack.c.l.b16 %v4624
    %v4923 = vunpack.c.h.b16 %v4624
    %v4924 = vunpack.c.l.b16 %v4625
    %v4925 = vunpack.c.h.b16 %v4625
    %v4926 = vunpack.c.l.b16 %v4626
    %v4927 = vunpack.c.h.b16 %v4626
    %v4928 = vunpack.c.l.b16 %v4627
    %v4929 = vunpack.c.h.b16 %v4627
    %v4930 = vunpack.c.l.b16 %v4628
    %v4931 = vunpack.c.h.b16 %v4628
    %v4932 = vunpack.c.l.b16 %v4629
    %v4933 = vunpack.c.h.b16 %v4629
    %v4934 = vunpack.c.l.b16 %v4630
    %v4935 = vunpack.c.h.b16 %v4630
    %v4936 = vunpack.c.l.b16 %v4631
    %v4937 = vunpack.c.h.b16 %v4631
    %v4938 = vunpack.c.l.b16 %v4632
    %v4939 = vunpack.c.h.b16 %v4632
    %v4940 = vunpack.c.l.b16 %v4633
    %v4941 = vunpack.c.h.b16 %v4633
    %v4942 = vunpack.c.l.b16 %v4634
    %v4943 = vunpack.c.h.b16 %v4634
    %v4944 = vunpack.c.l.b16 %v4635
    %v4945 = vunpack.c.h.b16 %v4635
    %v4946 = vunpack.c.l.b16 %v4636
    %v4947 = vunpack.c.h.b16 %v4636
    %v4948 = vunpack.c.l.b16 %v4637
    %v4949 = vunpack.c.h.b16 %v4637
    %v4950 = vunpack.c.l.b16 %v4638
    %v4951 = vunpack.c.h.b16 %v4638
    %v4952 = vunpack.c.l.b16 %v4639
    %v4953 = vunpack.c.h.b16 %v4639
    %v4954 = vunpack.c.l.b16 %v4640
    %v4955 = vunpack.c.h.b16 %v4640
    %v4956 = vunpack.c.l.b16 %v4641
    %v4957 = vunpack.c.h.b16 %v4641
    %v4958 = vunpack.c.l.b16 %v4642
    %v4959 = vunpack.c.h.b16 %v4642
    %v4960 = vunpack.c.l.b16 %v4643
    %v4961 = vunpack.c.h.b16 %v4643
    %v4962 = vunpack.c.l.b16 %v4644
    %v4963 = vunpack.c.h.b16 %v4644
    %v4964 = vunpack.c.l.b16 %v4645
    %v4965 = vunpack.c.h.b16 %v4645
    %v4966 = vunpack.c.l.b16 %v4646
    %v4967 = vunpack.c.h.b16 %v4646
    %v4968 = vunpack.c.l.b16 %v4647
    %v4969 = vunpack.c.h.b16 %v4647
    %v4970 = vunpack.c.l.b16 %v4648
    %v4971 = vunpack.c.h.b16 %v4648
    %v4972 = vunpack.c.l.b16 %v4649
    %v4973 = vunpack.c.h.b16 %v4649
    %v4974 = vunpack.c.l.b16 %v4650
    %v4975 = vunpack.c.h.b16 %v4650
    %v4976 = vunpack.c.l.b16 %v4651
    %v4977 = vunpack.c.h.b16 %v4651
    %v4978 = vunpack.c.l.b16 %v4652
    %v4979 = vunpack.c.h.b16 %v4652
    %v4980 = vunpack.c.l.b16 %v4653
    %v4981 = vunpack.c.h.b16 %v4653
    %v4982 = vunpack.c.l.b16 %v4654
    %v4983 = vunpack.c.h.b16 %v4654
    %v4984 = vunpack.c.l.b16 %v4655
    %v4985 = vunpack.c.h.b16 %v4655
    %v4986 = vunpack.c.l.b16 %v4656
    %v4987 = vunpack.c.h.b16 %v4656
    %v4988 = vunpack.c.l.b16 %v4657
    %v4989 = vunpack.c.h.b16 %v4657
    %v4990 = vunpack.c.l.b16 %v4658
    %v4991 = vunpack.c.h.b16 %v4658
    %v4992 = vunpack.c.l.b16 %v4659
    %v4993 = vunpack.c.h.b16 %v4659
    %v4994 = vunpack.c.l.b16 %v4660
    %v4995 = vunpack.c.h.b16 %v4660
    %v4996 = vunpack.c.l.b16 %v4661
    %v4997 = vunpack.c.h.b16 %v4661
    %v4998 = vunpack.c.l.b16 %v4662
    %v4999 = vunpack.c.h.b16 %v4662
    %v5000 = vunpack.c.l.b16 %v4663
    %v5001 = vunpack.c.h.b16 %v4663
    %v5002 = vunpack.c.l.b16 %v4664
    %v5003 = vunpack.c.h.b16 %v4664
    %v5004 = vunpack.c.l.b16 %v4665
    %v5005 = vunpack.c.h.b16 %v4665
    %v5006 = vunpack.c.l.b16 %v4666
    %v5007 = vunpack.c.h.b16 %v4666
    %v5008 = vunpack.c.l.b16 %v4667
    %v5009 = vunpack.c.h.b16 %v4667
    %v5010 = vunpack.c.l.b16 %v4668
    %v5011 = vunpack.c.h.b16 %v4668
    %v5012 = vunpack.c.l.b16 %v4669
    %v5013 = vunpack.c.h.b16 %v4669
    %v5014 = vunpack.c.l.b16 %v4670
    %v5015 = vunpack.c.h.b16 %v4670
    %v5016 = vunpack.c.l.b16 %v4671
    %v5017 = vunpack.c.h.b16 %v4671
    %v5018 = vunpack.c.l.b16 %v4672
    %v5019 = vunpack.c.h.b16 %v4672
    %v5020 = vunpack.c.l.b16 %v4673
    %v5021 = vunpack.c.h.b16 %v4673
    %v5022 = vunpack.c.l.b16 %v4674
    %v5023 = vunpack.c.h.b16 %v4674
    %v5024 = vunpack.c.l.b16 %v4675
    %v5025 = vunpack.c.h.b16 %v4675
    %v5026 = vunpack.c.l.b16 %v4676
    %v5027 = vunpack.c.h.b16 %v4676
    %v5028 = vunpack.c.l.b16 %v4677
    %v5029 = vunpack.c.h.b16 %v4677
    %v5030 = vunpack.c.l.b16 %v4678
    %v5031 = vunpack.c.h.b16 %v4678
    %v5032 = vunpack.c.l.b16 %v4679
    %v5033 = vunpack.c.h.b16 %v4679
    %v5034 = vunpack.c.l.b16 %v4680
    %v5035 = vunpack.c.h.b16 %v4680
    %v5036 = vunpack.c.l.b16 %v4681
    %v5037 = vunpack.c.h.b16 %v4681
    %v5038 = vunpack.c.l.b16 %v4682
    %v5039 = vunpack.c.h.b16 %v4682
    %v5040 = vunpack.c.l.b16 %v4683
    %v5041 = vunpack.c.h.b16 %v4683
    %v5042 = vunpack.c.l.b16 %v4684
    %v5043 = vunpack.c.h.b16 %v4684
    %v5044 = vunpack.c.l.b16 %v4685
    %v5045 = vunpack.c.h.b16 %v4685
    %v5046 = vunpack.c.l.b16 %v4686
    %v5047 = vunpack.c.h.b16 %v4686
    %v5048 = vunpack.c.l.b16 %v4687
    %v5049 = vunpack.c.h.b16 %v4687
    %v5050 = vunpack.c.l.b16 %v4688
    %v5051 = vunpack.c.h.b16 %v4688
    %v5052 = vunpack.c.l.b16 %v4689
    %v5053 = vunpack.c.h.b16 %v4689
    %v5054 = vunpack.c.l.b16 %v4690
    %v5055 = vunpack.c.h.b16 %v4690
    %v5056 = vunpack.c.l.b16 %v4691
    %v5057 = vunpack.c.h.b16 %v4691
    %v5058 = vunpack.c.l.b16 %v4692
    %v5059 = vunpack.c.h.b16 %v4692
    %v5060 = vunpack.c.l.b16 %v4693
    %v5061 = vunpack.c.h.b16 %v4693
    %v5062 = vunpack.c.l.b16 %v4694
    %v5063 = vunpack.c.h.b16 %v4694
    %v5064 = vunpack.c.l.b16 %v4695
    %v5065 = vunpack.c.h.b16 %v4695
    %v5066 = vunpack.c.l.b16 %v4696
    %v5067 = vunpack.c.h.b16 %v4696
    %v5068 = vunpack.c.l.b16 %v4697
    %v5069 = vunpack.c.h.b16 %v4697
    %v5070 = vunpack.c.l.b16 %v4698
    %v5071 = vunpack.c.h.b16 %v4698
    %v5072 = vunpack.c.l.b16 %v4699
    %v5073 = vunpack.c.h.b16 %v4699
    %v5074 = vunpack.c.l.b16 %v4700
    %v5075 = vunpack.c.h.b16 %v4700
    %v5076 = vunpack.c.l.b16 %v4701
    %v5077 = vunpack.c.h.b16 %v4701
    %v5078 = vunpack.c.l.b16 %v4702
    %v5079 = vunpack.c.h.b16 %v4702
    %v5080 = vunpack.c.l.b16 %v4703
    %v5081 = vunpack.c.h.b16 %v4703
    %v5082 = vunpack.c.l.b16 %v4704
    %v5083 = vunpack.c.h.b16 %v4704
    %v5084 = vunpack.c.l.b16 %v4705
    %v5085 = vunpack.c.h.b16 %v4705
    %v5086 = vunpack.c.l.b16 %v4706
    %v5087 = vunpack.c.h.b16 %v4706
    %v5088 = vunpack.c.l.b16 %v4707
    %v5089 = vunpack.c.h.b16 %v4707
    %v5090 = vunpack.c.l.b16 %v4708
    %v5091 = vunpack.c.h.b16 %v4708
    %v5092 = vunpack.c.l.b16 %v4709
    %v5093 = vunpack.c.h.b16 %v4709
    %v5094 = vunpack.c.l.b16 %v4710
    %v5095 = vunpack.c.h.b16 %v4710
    %v5096 = vunpack.c.l.b16 %v4711
    %v5097 = vunpack.c.h.b16 %v4711
    %v5098 = vunpack.c.l.b16 %v4712
    %v5099 = vunpack.c.h.b16 %v4712
    %v5100 = vunpack.c.l.b16 %v4713
    %v5101 = vunpack.c.h.b16 %v4713
    %v5102 = vunpack.c.l.b16 %v4714
    %v5103 = vunpack.c.h.b16 %v4714
    %v5104 = vunpack.c.l.b16 %v4715
    %v5105 = vunpack.c.h.b16 %v4715
    %v5106 = vunpack.c.l.b16 %v4716
    %v5107 = vunpack.c.h.b16 %v4716
    %v5108 = vunpack.c.l.b16 %v4717
    %v5109 = vunpack.c.h.b16 %v4717
    %v5110 = vunpack.c.l.b16 %v4718
    %v5111 = vunpack.c.h.b16 %v4718
    %v5112 = vunpack.c.l.b16 %v4719
    %v5113 = vunpack.c.h.b16 %v4719
    %v5114 = vunpack.c.l.b16 %v4720
    %v5115 = vunpack.c.h.b16 %v4720
    %v5116 = vunpack.c.l.b16 %v4721
    %v5117 = vunpack.c.h.b16 %v4721
    %v5118 = vunpack.c.l.b16 %v4722
    %v5119 = vunpack.c.h.b16 %v4722
    %v5120 = vunpack.c.l.b16 %v4723
    %v5121 = vunpack.c.h.b16 %v4723
    %v5122 = vpack.c.b16 %v4870, %v4866
    %v5123 = vpack.c.b16 %v4871, %v4867
    %v5124 = vpack.c.b16 %v4872, %v4868
    %v5125 = vpack.c.b16 %v4873, %v4869
    %v5126 = vpack.c.b16 %v4878, %v4874
    %v5127 = vpack.c.b16 %v4879, %v4875
    %v5128 = vpack.c.b16 %v4880, %v4876
    %v5129 = vpack.c.b16 %v4881, %v4877
    %v5130 = vpack.c.b16 %v4886, %v4882
    %v5131 = vpack.c.b16 %v4887, %v4883
    %v5132 = vpack.c.b16 %v4888, %v4884
    %v5133 = vpack.c.b16 %v4889, %v4885
    %v5134 = vpack.c.b16 %v4894, %v4890
    %v5135 = vpack.c.b16 %v4895, %v4891
    %v5136 = vpack.c.b16 %v4896, %v4892
    %v5137 = vpack.c.b16 %v4897, %v4893
    %v5138 = vpack.c.b16 %v4902, %v4898
    %v5139 = vpack.c.b16 %v4903, %v4899
    %v5140 = vpack.c.b16 %v4904, %v4900
    %v5141 = vpack.c.b16 %v4905, %v4901
    %v5142 = vpack.c.b16 %v4910, %v4906
    %v5143 = vpack.c.b16 %v4911, %v4907
    %v5144 = vpack.c.b16 %v4912, %v4908
    %v5145 = vpack.c.b16 %v4913, %v4909
    %v5146 = vpack.c.b16 %v4918, %v4914
    %v5147 = vpack.c.b16 %v4919, %v4915
    %v5148 = vpack.c.b16 %v4920, %v4916
    %v5149 = vpack.c.b16 %v4921, %v4917
    %v5150 = vpack.c.b16 %v4926, %v4922
    %v5151 = vpack.c.b16 %v4927, %v4923
    %v5152 = vpack.c.b16 %v4928, %v4924
    %v5153 = vpack.c.b16 %v4929, %v4925
    %v5154 = vpack.c.b16 %v4934, %v4930
    %v5155 = vpack.c.b16 %v4935, %v4931
    %v5156 = vpack.c.b16 %v4936, %v4932
    %v5157 = vpack.c.b16 %v4937, %v4933
    %v5158 = vpack.c.b16 %v4942, %v4938
    %v5159 = vpack.c.b16 %v4943, %v4939
    %v5160 = vpack.c.b16 %v4944, %v4940
    %v5161 = vpack.c.b16 %v4945, %v4941
    %v5162 = vpack.c.b16 %v4950, %v4946
    %v5163 = vpack.c.b16 %v4951, %v4947
    %v5164 = vpack.c.b16 %v4952, %v4948
    %v5165 = vpack.c.b16 %v4953, %v4949
    %v5166 = vpack.c.b16 %v4958, %v4954
    %v5167 = vpack.c.b16 %v4959, %v4955
    %v5168 = vpack.c.b16 %v4960, %v4956
    %v5169 = vpack.c.b16 %v4961, %v4957
    %v5170 = vpack.c.b16 %v4966, %v4962
    %v5171 = vpack.c.b16 %v4967, %v4963
    %v5172 = vpack.c.b16 %v4968, %v4964
    %v5173 = vpack.c.b16 %v4969, %v4965
    %v5174 = vpack.c.b16 %v4974, %v4970
    %v5175 = vpack.c.b16 %v4975, %v4971
    %v5176 = vpack.c.b16 %v4976, %v4972
    %v5177 = vpack.c.b16 %v4977, %v4973
    %v5178 = vpack.c.b16 %v4982, %v4978
    %v5179 = vpack.c.b16 %v4983, %v4979
    %v5180 = vpack.c.b16 %v4984, %v4980
    %v5181 = vpack.c.b16 %v4985, %v4981
    %v5182 = vpack.c.b16 %v4990, %v4986
    %v5183 = vpack.c.b16 %v4991, %v4987
    %v5184 = vpack.c.b16 %v4992, %v4988
    %v5185 = vpack.c.b16 %v4993, %v4989
    %v5186 = vpack.c.b16 %v4998, %v4994
    %v5187 = vpack.c.b16 %v4999, %v4995
    %v5188 = vpack.c.b16 %v5000, %v4996
    %v5189 = vpack.c.b16 %v5001, %v4997
    %v5190 = vpack.c.b16 %v5006, %v5002
    %v5191 = vpack.c.b16 %v5007, %v5003
    %v5192 = vpack.c.b16 %v5008, %v5004
    %v5193 = vpack.c.b16 %v5009, %v5005
    %v5194 = vpack.c.b16 %v5014, %v5010
    %v5195 = vpack.c.b16 %v5015, %v5011
    %v5196 = vpack.c.b16 %v5016, %v5012
    %v5197 = vpack.c.b16 %v5017, %v5013
    %v5198 = vpack.c.b16 %v5022, %v5018
    %v5199 = vpack.c.b16 %v5023, %v5019
    %v5200 = vpack.c.b16 %v5024, %v5020
    %v5201 = vpack.c.b16 %v5025, %v5021
    %v5202 = vpack.c.b16 %v5030, %v5026
    %v5203 = vpack.c.b16 %v5031, %v5027
    %v5204 = vpack.c.b16 %v5032, %v5028
    %v5205 = vpack.c.b16 %v5033, %v5029
    %v5206 = vpack.c.b16 %v5038, %v5034
    %v5207 = vpack.c.b16 %v5039, %v5035
    %v5208 = vpack.c.b16 %v5040, %v5036
    %v5209 = vpack.c.b16 %v5041, %v5037
    %v5210 = vpack.c.b16 %v5046, %v5042
    %v5211 = vpack.c.b16 %v5047, %v5043
    %v5212 = vpack.c.b16 %v5048, %v5044
    %v5213 = vpack.c.b16 %v5049, %v5045
    %v5214 = vpack.c.b16 %v5054, %v5050
    %v5215 = vpack.c.b16 %v5055, %v5051
    %v5216 = vpack.c.b16 %v5056, %v5052
    %v5217 = vpack.c.b16 %v5057, %v5053
    %v5218 = vpack.c.b16 %v5062, %v5058
    %v5219 = vpack.c.b16 %v5063, %v5059
    %v5220 = vpack.c.b16 %v5064, %v5060
    %v5221 = vpack.c.b16 %v5065, %v5061
    %v5222 = vpack.c.b16 %v5070, %v5066
    %v5223 = vpack.c.b16 %v5071, %v5067
    %v5224 = vpack.c.b16 %v5072, %v5068
    %v5225 = vpack.c.b16 %v5073, %v5069
    %v5226 = vpack.c.b16 %v5078, %v5074
    %v5227 = vpack.c.b16 %v5079, %v5075
    %v5228 = vpack.c.b16 %v5080, %v5076
    %v5229 = vpack.c.b16 %v5081, %v5077
    %v5230 = vpack.c.b16 %v5086, %v5082
    %v5231 = vpack.c.b16 %v5087, %v5083
    %v5232 = vpack.c.b16 %v5088, %v5084
    %v5233 = vpack.c.b16 %v5089, %v5085
    %v5234 = vpack.c.b16 %v5094, %v5090
    %v5235 = vpack.c.b16 %v5095, %v5091
    %v5236 = vpack.c.b16 %v5096, %v5092
    %v5237 = vpack.c.b16 %v5097, %v5093
    %v5238 = vpack.c.b16 %v5102, %v5098
    %v5239 = vpack.c.b16 %v5103, %v5099
    %v5240 = vpack.c.b16 %v5104, %v5100
    %v5241 = vpack.c.b16 %v5105, %v5101
    %v5242 = vpack.c.b16 %v5110, %v5106
    %v5243 = vpack.c.b16 %v5111, %v5107
    %v5244 = vpack.c.b16 %v5112, %v5108
    %v5245 = vpack.c.b16 %v5113, %v5109
    %v5246 = vpack.c.b16 %v5118, %v5114
    %v5247 = vpack.c.b16 %v5119, %v5115
    %v5248 = vpack.c.b16 %v5120, %v5116
    %v5249 = vpack.c.b16 %v5121, %v5117
    %5378 = vmatpush.bf16.msra.mxu0 %v5150
    %5379 = vmatpush.bf16.msra.mxu0 %v5146
    %5380 = vmatpush.bf16.msra.mxu0 %v5142
    %5381 = vmatpush.bf16.msra.mxu0 %v5138
    %5382 = vmatpush.bf16.msra.mxu0 %v5134
    %5383 = vmatpush.bf16.msra.mxu0 %v5130
    %5384 = vmatpush.bf16.msra.mxu0 %v5126
    %5385 = vmatpush.bf16.msra.mxu0 %v5122
    %5386 = vmatmul.bf16.gmra.mxu0 %v4724
    %v5387 = vpop.f32.mrf.mxu0
    %v5388 = vadd.f32 %v4730, %v5387
    %v5389 = vpop.f32.mrf.mxu0
    %v5390 = vadd.f32 %v4730, %v5389
    %5391 = vdwg.mxu0
    %5392 = vmatpush.bf16.msra.mxu0 %v5182
    %5393 = vmatpush.bf16.msra.mxu0 %v5178
    %5394 = vmatpush.bf16.msra.mxu0 %v5174
    %5395 = vmatpush.bf16.msra.mxu0 %v5170
    %5396 = vmatpush.bf16.msra.mxu0 %v5166
    %5397 = vmatpush.bf16.msra.mxu0 %v5162
    %5398 = vmatpush.bf16.msra.mxu0 %v5158
    %5399 = vmatpush.bf16.msra.mxu0 %v5154
    %5400 = vmatmul.bf16.gmra.mxu0 %v4725
    %v5401 = vpop.f32.mrf.mxu0
    %v5402 = vadd.f32 %v5388, %v5401
    %v5403 = vpop.f32.mrf.mxu0
    %v5404 = vadd.f32 %v5390, %v5403
    %5405 = vdwg.mxu0
    %5406 = vmatpush.bf16.msra.mxu0 %v5214
    %5407 = vmatpush.bf16.msra.mxu0 %v5210
    %5408 = vmatpush.bf16.msra.mxu0 %v5206
    %5409 = vmatpush.bf16.msra.mxu0 %v5202
    %5410 = vmatpush.bf16.msra.mxu0 %v5198
    %5411 = vmatpush.bf16.msra.mxu0 %v5194
    %5412 = vmatpush.bf16.msra.mxu0 %v5190
    %5413 = vmatpush.bf16.msra.mxu0 %v5186
    %5414 = vmatmul.bf16.gmra.mxu0 %v4726
    %v5415 = vpop.f32.mrf.mxu0
    %v5416 = vadd.f32 %v5402, %v5415
    %v5417 = vpop.f32.mrf.mxu0
    %v5418 = vadd.f32 %v5404, %v5417
    %5419 = vdwg.mxu0
    %5420 = vmatpush.bf16.msra.mxu0 %v5246
    %5421 = vmatpush.bf16.msra.mxu0 %v5242
    %5422 = vmatpush.bf16.msra.mxu0 %v5238
    %5423 = vmatpush.bf16.msra.mxu0 %v5234
    %5424 = vmatpush.bf16.msra.mxu0 %v5230
    %5425 = vmatpush.bf16.msra.mxu0 %v5226
    %5426 = vmatpush.bf16.msra.mxu0 %v5222
    %5427 = vmatpush.bf16.msra.mxu0 %v5218
    %5428 = vmatmul.bf16.gmra.mxu0 %v4727
    %v5429 = vpop.f32.mrf.mxu0
    %v5430 = vadd.f32 %v5416, %v5429
    %v5431 = vpop.f32.mrf.mxu0
    %v5432 = vadd.f32 %v5418, %v5431
    %5433 = vdwg.mxu0
    %5434 = vmatpush.bf16.msra.mxu0 %v5151
    %5435 = vmatpush.bf16.msra.mxu0 %v5147
    %5436 = vmatpush.bf16.msra.mxu0 %v5143
    %5437 = vmatpush.bf16.msra.mxu0 %v5139
    %5438 = vmatpush.bf16.msra.mxu0 %v5135
    %5439 = vmatpush.bf16.msra.mxu0 %v5131
    %5440 = vmatpush.bf16.msra.mxu0 %v5127
    %5441 = vmatpush.bf16.msra.mxu0 %v5123
    %5442 = vmatmul.bf16.gmra.mxu0 %v4724
    %v5443 = vpop.f32.mrf.mxu0
    %v5444 = vadd.f32 %v4731, %v5443
    %v5445 = vpop.f32.mrf.mxu0
    %v5446 = vadd.f32 %v4731, %v5445
    %5447 = vdwg.mxu0
    %5448 = vmatpush.bf16.msra.mxu0 %v5183
    %5449 = vmatpush.bf16.msra.mxu0 %v5179
    %5450 = vmatpush.bf16.msra.mxu0 %v5175
    %5451 = vmatpush.bf16.msra.mxu0 %v5171
    %5452 = vmatpush.bf16.msra.mxu0 %v5167
    %5453 = vmatpush.bf16.msra.mxu0 %v5163
    %5454 = vmatpush.bf16.msra.mxu0 %v5159
    %5455 = vmatpush.bf16.msra.mxu0 %v5155
    %5456 = vmatmul.bf16.gmra.mxu0 %v4725
    %v5457 = vpop.f32.mrf.mxu0
    %v5458 = vadd.f32 %v5444, %v5457
    %v5459 = vpop.f32.mrf.mxu0
    %v5460 = vadd.f32 %v5446, %v5459
    %5461 = vdwg.mxu0
    %5462 = vmatpush.bf16.msra.mxu0 %v5215
    %5463 = vmatpush.bf16.msra.mxu0 %v5211
    %5464 = vmatpush.bf16.msra.mxu0 %v5207
    %5465 = vmatpush.bf16.msra.mxu0 %v5203
    %5466 = vmatpush.bf16.msra.mxu0 %v5199
    %5467 = vmatpush.bf16.msra.mxu0 %v5195
    %5468 = vmatpush.bf16.msra.mxu0 %v5191
    %5469 = vmatpush.bf16.msra.mxu0 %v5187
    %5470 = vmatmul.bf16.gmra.mxu0 %v4726
    %v5471 = vpop.f32.mrf.mxu0
    %v5472 = vadd.f32 %v5458, %v5471
    %v5473 = vpop.f32.mrf.mxu0
    %v5474 = vadd.f32 %v5460, %v5473
    %5475 = vdwg.mxu0
    %5476 = vmatpush.bf16.msra.mxu0 %v5247
    %5477 = vmatpush.bf16.msra.mxu0 %v5243
    %5478 = vmatpush.bf16.msra.mxu0 %v5239
    %5479 = vmatpush.bf16.msra.mxu0 %v5235
    %5480 = vmatpush.bf16.msra.mxu0 %v5231
    %5481 = vmatpush.bf16.msra.mxu0 %v5227
    %5482 = vmatpush.bf16.msra.mxu0 %v5223
    %5483 = vmatpush.bf16.msra.mxu0 %v5219
    %5484 = vmatmul.bf16.gmra.mxu0 %v4727
    %v5485 = vpop.f32.mrf.mxu0
    %v5486 = vadd.f32 %v5472, %v5485
    %v5487 = vpop.f32.mrf.mxu0
    %v5488 = vadd.f32 %v5474, %v5487
    %5489 = vdwg.mxu0
    %5490 = vmatpush.bf16.msra.mxu0 %v5152
    %5491 = vmatpush.bf16.msra.mxu0 %v5148
    %5492 = vmatpush.bf16.msra.mxu0 %v5144
    %5493 = vmatpush.bf16.msra.mxu0 %v5140
    %5494 = vmatpush.bf16.msra.mxu0 %v5136
    %5495 = vmatpush.bf16.msra.mxu0 %v5132
    %5496 = vmatpush.bf16.msra.mxu0 %v5128
    %5497 = vmatpush.bf16.msra.mxu0 %v5124
    %5498 = vmatmul.bf16.gmra.mxu0 %v4724
    %v5499 = vpop.f32.mrf.mxu0
    %v5500 = vadd.f32 %v4732, %v5499
    %v5501 = vpop.f32.mrf.mxu0
    %v5502 = vadd.f32 %v4732, %v5501
    %5503 = vdwg.mxu0
    %5504 = vmatpush.bf16.msra.mxu0 %v5184
    %5505 = vmatpush.bf16.msra.mxu0 %v5180
    %5506 = vmatpush.bf16.msra.mxu0 %v5176
    %5507 = vmatpush.bf16.msra.mxu0 %v5172
    %5508 = vmatpush.bf16.msra.mxu0 %v5168
    %5509 = vmatpush.bf16.msra.mxu0 %v5164
    %5510 = vmatpush.bf16.msra.mxu0 %v5160
    %5511 = vmatpush.bf16.msra.mxu0 %v5156
    %5512 = vmatmul.bf16.gmra.mxu0 %v4725
    %v5513 = vpop.f32.mrf.mxu0
    %v5514 = vadd.f32 %v5500, %v5513
    %v5515 = vpop.f32.mrf.mxu0
    %v5516 = vadd.f32 %v5502, %v5515
    %5517 = vdwg.mxu0
    %5518 = vmatpush.bf16.msra.mxu0 %v5216
    %5519 = vmatpush.bf16.msra.mxu0 %v5212
    %5520 = vmatpush.bf16.msra.mxu0 %v5208
    %5521 = vmatpush.bf16.msra.mxu0 %v5204
    %5522 = vmatpush.bf16.msra.mxu0 %v5200
    %5523 = vmatpush.bf16.msra.mxu0 %v5196
    %5524 = vmatpush.bf16.msra.mxu0 %v5192
    %5525 = vmatpush.bf16.msra.mxu0 %v5188
    %5526 = vmatmul.bf16.gmra.mxu0 %v4726
    %v5527 = vpop.f32.mrf.mxu0
    %v5528 = vadd.f32 %v5514, %v5527
    %v5529 = vpop.f32.mrf.mxu0
    %v5530 = vadd.f32 %v5516, %v5529
    %5531 = vdwg.mxu0
    %5532 = vmatpush.bf16.msra.mxu0 %v5248
    %5533 = vmatpush.bf16.msra.mxu0 %v5244
    %5534 = vmatpush.bf16.msra.mxu0 %v5240
    %5535 = vmatpush.bf16.msra.mxu0 %v5236
    %5536 = vmatpush.bf16.msra.mxu0 %v5232
    %5537 = vmatpush.bf16.msra.mxu0 %v5228
    %5538 = vmatpush.bf16.msra.mxu0 %v5224
    %5539 = vmatpush.bf16.msra.mxu0 %v5220
    %5540 = vmatmul.bf16.gmra.mxu0 %v4727
    %v5541 = vpop.f32.mrf.mxu0
    %v5542 = vadd.f32 %v5528, %v5541
    %v5543 = vpop.f32.mrf.mxu0
    %v5544 = vadd.f32 %v5530, %v5543
    %5545 = vdwg.mxu0
    %5546 = vmatpush.bf16.msra.mxu0 %v5153
    %5547 = vmatpush.bf16.msra.mxu0 %v5149
    %5548 = vmatpush.bf16.msra.mxu0 %v5145
    %5549 = vmatpush.bf16.msra.mxu0 %v5141
    %5550 = vmatpush.bf16.msra.mxu0 %v5137
    %5551 = vmatpush.bf16.msra.mxu0 %v5133
    %5552 = vmatpush.bf16.msra.mxu0 %v5129
    %5553 = vmatpush.bf16.msra.mxu0 %v5125
    %5554 = vmatmul.bf16.gmra.mxu0 %v4724
    %v5555 = vpop.f32.mrf.mxu0
    %v5556 = vadd.f32 %v4733, %v5555
    %v5557 = vpop.f32.mrf.mxu0
    %v5558 = vadd.f32 %v4733, %v5557
    %5559 = vdwg.mxu0
    %5560 = vmatpush.bf16.msra.mxu0 %v5185
    %5561 = vmatpush.bf16.msra.mxu0 %v5181
    %5562 = vmatpush.bf16.msra.mxu0 %v5177
    %5563 = vmatpush.bf16.msra.mxu0 %v5173
    %5564 = vmatpush.bf16.msra.mxu0 %v5169
    %5565 = vmatpush.bf16.msra.mxu0 %v5165
    %5566 = vmatpush.bf16.msra.mxu0 %v5161
    %5567 = vmatpush.bf16.msra.mxu0 %v5157
    %5568 = vmatmul.bf16.gmra.mxu0 %v4725
    %v5569 = vpop.f32.mrf.mxu0
    %v5570 = vadd.f32 %v5556, %v5569
    %v5571 = vpop.f32.mrf.mxu0
    %v5572 = vadd.f32 %v5558, %v5571
    %5573 = vdwg.mxu0
    %5574 = vmatpush.bf16.msra.mxu0 %v5217
    %5575 = vmatpush.bf16.msra.mxu0 %v5213
    %5576 = vmatpush.bf16.msra.mxu0 %v5209
    %5577 = vmatpush.bf16.msra.mxu0 %v5205
    %5578 = vmatpush.bf16.msra.mxu0 %v5201
    %5579 = vmatpush.bf16.msra.mxu0 %v5197
    %5580 = vmatpush.bf16.msra.mxu0 %v5193
    %5581 = vmatpush.bf16.msra.mxu0 %v5189
    %5582 = vmatmul.bf16.gmra.mxu0 %v4726
    %v5583 = vpop.f32.mrf.mxu0
    %v5584 = vadd.f32 %v5570, %v5583
    %v5585 = vpop.f32.mrf.mxu0
    %v5586 = vadd.f32 %v5572, %v5585
    %5587 = vdwg.mxu0
    %5588 = vmatpush.bf16.msra.mxu0 %v5249
    %5589 = vmatpush.bf16.msra.mxu0 %v5245
    %5590 = vmatpush.bf16.msra.mxu0 %v5241
    %5591 = vmatpush.bf16.msra.mxu0 %v5237
    %5592 = vmatpush.bf16.msra.mxu0 %v5233
    %5593 = vmatpush.bf16.msra.mxu0 %v5229
    %5594 = vmatpush.bf16.msra.mxu0 %v5225
    %5595 = vmatpush.bf16.msra.mxu0 %v5221
    %5596 = vmatmul.bf16.gmra.mxu0 %v4727
    %v5597 = vpop.f32.mrf.mxu0
    %v5598 = vadd.f32 %v5584, %v5597
    %v5599 = vpop.f32.mrf.mxu0
    %v5600 = vadd.f32 %v5586, %v5599
    %5601 = vdwg.mxu0
    %v5602 = vld [vmem:[%s18] sm:$0xf]
    %5604 = vst [vmem:[#allocation1] ss:$4 sm:$0xff] %v5602
    %v5605 = vld.sshfl [vmem:[#allocation1] sm:$0xff pattern:$0x73625140]
    %v5606 = vld.sshfl [vmem:[#allocation1 + $0x8] sm:$0xff pattern:$0x73625140]
    %v5607 = vsel %vm1227, %v5605, 0
    %v5609 = vsel %vm1227, %v5606, 0
    %5611 = vmatpush.bf16.msra.mxu0 0
    %5612 = vmatpush.bf16.msra.mxu0 0
    %5613 = vmatpush.bf16.msra.mxu0 0
    %5614 = vmatpush.bf16.msra.mxu0 0
    %5615 = vmatpush.bf16.msra.mxu0 0
    %5616 = vmatpush.bf16.msra.mxu0 0
    %5617 = vmatpush.bf16.msra.mxu0 0
    %5618 = vmatpush.bf16.msra.mxu0 %v5607
    %5619 = vmatmul.bf16.gmra.mxu0 %v1219
    %v5620 = vpop.f32.mrf.mxu0
    %v5621 = vadd.f32 0.0, %v5620
    %v5622 = vpop.f32.mrf.mxu0
    %v5623 = vadd.f32 0.0, %v5622
    %5624 = vmatmul.bf16.gmra.mxu0 %v1222
    %v5625 = vpop.f32.mrf.mxu0
    %v5626 = vadd.f32 0.0, %v5625
    %v5627 = vpop.f32.mrf.mxu0
    %v5628 = vadd.f32 0.0, %v5627
    %5629 = vmatmul.bf16.gmra.mxu0 %v1225
    %v5630 = vpop.f32.mrf.mxu0
    %v5631 = vadd.f32 0.0, %v5630
    %v5632 = vpop.f32.mrf.mxu0
    %v5633 = vadd.f32 0.0, %v5632
    %5634 = vdwg.mxu0
    %5635 = vmatpush.bf16.msra.mxu0 0
    %5636 = vmatpush.bf16.msra.mxu0 0
    %5637 = vmatpush.bf16.msra.mxu0 0
    %5638 = vmatpush.bf16.msra.mxu0 0
    %5639 = vmatpush.bf16.msra.mxu0 0
    %5640 = vmatpush.bf16.msra.mxu0 0
    %5641 = vmatpush.bf16.msra.mxu0 0
    %5642 = vmatpush.bf16.msra.mxu0 %v5609
    %5643 = vmatmul.bf16.gmra.mxu0 %v1219
    %v5644 = vpop.f32.mrf.mxu0
    %v5645 = vadd.f32 0.0, %v5644
    %v5646 = vpop.f32.mrf.mxu0
    %v5647 = vadd.f32 0.0, %v5646
    %5648 = vmatmul.bf16.gmra.mxu0 %v1222
    %v5649 = vpop.f32.mrf.mxu0
    %v5650 = vadd.f32 0.0, %v5649
    %v5651 = vpop.f32.mrf.mxu0
    %v5652 = vadd.f32 0.0, %v5651
    %5653 = vmatmul.bf16.gmra.mxu0 %v1225
    %v5654 = vpop.f32.mrf.mxu0
    %v5655 = vadd.f32 0.0, %v5654
    %v5656 = vpop.f32.mrf.mxu0
    %v5657 = vadd.f32 0.0, %v5656
    %5658 = vdwg.mxu0
    %v5659 = vpack.c.bf16 %v5432, %v5430
    %v5660 = vpack.c.bf16 %v5488, %v5486
    %5661 = vmatpush.bf16.msra.mxu0 0
    %5662 = vmatpush.bf16.msra.mxu0 0
    %5663 = vmatpush.bf16.msra.mxu0 0
    %5664 = vmatpush.bf16.msra.mxu0 0
    %5665 = vmatpush.bf16.msra.mxu0 0
    %5666 = vmatpush.bf16.msra.mxu0 0
    %5667 = vmatpush.bf16.msra.mxu0 0
    %5668 = vmatpush.bf16.msra.mxu0 %v5659
    %5669 = vmatmul.bf16.gmra.mxu0 %v1353
    %v5670 = vpop.f32.mrf.mxu0
    %v5671 = vadd.f32 0.0, %v5670
    %v5672 = vpop.f32.mrf.mxu0
    %v5673 = vadd.f32 0.0, %v5672
    %5674 = vmatmul.bf16.gmra.mxu0 %v1356
    %v5675 = vpop.f32.mrf.mxu0
    %v5676 = vadd.f32 0.0, %v5675
    %v5677 = vpop.f32.mrf.mxu0
    %v5678 = vadd.f32 0.0, %v5677
    %5679 = vmatmul.bf16.gmra.mxu0 %v1359
    %v5680 = vpop.f32.mrf.mxu0
    %v5681 = vadd.f32 0.0, %v5680
    %v5682 = vpop.f32.mrf.mxu0
    %v5683 = vadd.f32 0.0, %v5682
    %5684 = vdwg.mxu0
    %5685 = vmatpush.bf16.msra.mxu0 0
    %5686 = vmatpush.bf16.msra.mxu0 0
    %5687 = vmatpush.bf16.msra.mxu0 0
    %5688 = vmatpush.bf16.msra.mxu0 0
    %5689 = vmatpush.bf16.msra.mxu0 0
    %5690 = vmatpush.bf16.msra.mxu0 0
    %5691 = vmatpush.bf16.msra.mxu0 0
    %5692 = vmatpush.bf16.msra.mxu0 %v5660
    %5693 = vmatmul.bf16.gmra.mxu0 %v1353
    %v5694 = vpop.f32.mrf.mxu0
    %v5695 = vadd.f32 0.0, %v5694
    %v5696 = vpop.f32.mrf.mxu0
    %v5697 = vadd.f32 0.0, %v5696
    %5698 = vmatmul.bf16.gmra.mxu0 %v1356
    %v5699 = vpop.f32.mrf.mxu0
    %v5700 = vadd.f32 0.0, %v5699
    %v5701 = vpop.f32.mrf.mxu0
    %v5702 = vadd.f32 0.0, %v5701
    %5703 = vmatmul.bf16.gmra.mxu0 %v1359
    %v5704 = vpop.f32.mrf.mxu0
    %v5705 = vadd.f32 0.0, %v5704
    %v5706 = vpop.f32.mrf.mxu0
    %v5707 = vadd.f32 0.0, %v5706
    %5708 = vdwg.mxu0
    %v5709 = vpack.c.bf16 %v5544, %v5542
    %v5710 = vpack.c.bf16 %v5600, %v5598
    %5711 = vmatpush.bf16.msra.mxu0 0
    %5712 = vmatpush.bf16.msra.mxu0 0
    %5713 = vmatpush.bf16.msra.mxu0 0
    %5714 = vmatpush.bf16.msra.mxu0 0
    %5715 = vmatpush.bf16.msra.mxu0 0
    %5716 = vmatpush.bf16.msra.mxu0 0
    %5717 = vmatpush.bf16.msra.mxu0 0
    %5718 = vmatpush.bf16.msra.mxu0 %v5709
    %5719 = vmatmul.bf16.gmra.mxu0 %v1477
    %v5720 = vpop.f32.mrf.mxu0
    %v5721 = vadd.f32 0.0, %v5720
    %v5722 = vpop.f32.mrf.mxu0
    %v5723 = vadd.f32 0.0, %v5722
    %5724 = vmatmul.bf16.gmra.mxu0 %v1480
    %v5725 = vpop.f32.mrf.mxu0
    %v5726 = vadd.f32 0.0, %v5725
    %v5727 = vpop.f32.mrf.mxu0
    %v5728 = vadd.f32 0.0, %v5727
    %5729 = vmatmul.bf16.gmra.mxu0 %v1483
    %v5730 = vpop.f32.mrf.mxu0
    %v5731 = vadd.f32 0.0, %v5730
    %v5732 = vpop.f32.mrf.mxu0
    %v5733 = vadd.f32 0.0, %v5732
    %5734 = vdwg.mxu0
    %5735 = vmatpush.bf16.msra.mxu0 0
    %5736 = vmatpush.bf16.msra.mxu0 0
    %5737 = vmatpush.bf16.msra.mxu0 0
    %5738 = vmatpush.bf16.msra.mxu0 0
    %5739 = vmatpush.bf16.msra.mxu0 0
    %5740 = vmatpush.bf16.msra.mxu0 0
    %5741 = vmatpush.bf16.msra.mxu0 0
    %5742 = vmatpush.bf16.msra.mxu0 %v5710
    %5743 = vmatmul.bf16.gmra.mxu0 %v1477
    %v5744 = vpop.f32.mrf.mxu0
    %v5745 = vadd.f32 0.0, %v5744
    %v5746 = vpop.f32.mrf.mxu0
    %v5747 = vadd.f32 0.0, %v5746
    %5748 = vmatmul.bf16.gmra.mxu0 %v1480
    %v5749 = vpop.f32.mrf.mxu0
    %v5750 = vadd.f32 0.0, %v5749
    %v5751 = vpop.f32.mrf.mxu0
    %v5752 = vadd.f32 0.0, %v5751
    %5753 = vmatmul.bf16.gmra.mxu0 %v1483
    %v5754 = vpop.f32.mrf.mxu0
    %v5755 = vadd.f32 0.0, %v5754
    %v5756 = vpop.f32.mrf.mxu0
    %v5757 = vadd.f32 0.0, %v5756
    %5758 = vdwg.mxu0
    %v5759 = vadd.f32 %v5671, %v5721
    %v5760 = vadd.f32 %v5695, %v5745
    %v5761 = vadd.f32 %v5673, %v5723
    %v5762 = vadd.f32 %v5697, %v5747
    %v5763 = vadd.f32 %v5676, %v5726
    %v5764 = vadd.f32 %v5700, %v5750
    %v5765 = vadd.f32 %v5678, %v5728
    %v5766 = vadd.f32 %v5702, %v5752
    %v5767 = vadd.f32 %v5681, %v5731
    %v5768 = vadd.f32 %v5705, %v5755
    %v5769 = vadd.f32 %v5683, %v5733
    %v5770 = vadd.f32 %v5707, %v5757
    %v5771 = vadd.f32 %v5759, %v5621
    %v5772 = vadd.f32 %v5760, %v5645
    %v5773 = vadd.f32 %v5761, %v5623
    %v5774 = vadd.f32 %v5762, %v5647
    %v5775 = vadd.f32 %v5763, %v5626
    %v5776 = vadd.f32 %v5764, %v5650
    %v5777 = vadd.f32 %v5765, %v5628
    %v5778 = vadd.f32 %v5766, %v5652
    %v5779 = vadd.f32 %v5767, %v5631
    %v5780 = vadd.f32 %v5768, %v5655
    %v5781 = vadd.f32 %v5769, %v5633
    %v5782 = vadd.f32 %v5770, %v5657
    %vm5783 = vcmp.gt.f32.partialorder %v5771, 0.0
    %vm5784 = vcmp.gt.f32.partialorder %v5772, 0.0
    %vm5785 = vcmp.gt.f32.partialorder %v5773, 0.0
    %vm5786 = vcmp.gt.f32.partialorder %v5774, 0.0
    %vm5787 = vcmp.gt.f32.partialorder %v5775, 0.0
    %vm5788 = vcmp.gt.f32.partialorder %v5776, 0.0
    %vm5789 = vcmp.gt.f32.partialorder %v5777, 0.0
    %vm5790 = vcmp.gt.f32.partialorder %v5778, 0.0
    %vm5791 = vcmp.gt.f32.partialorder %v5779, 0.0
    %vm5792 = vcmp.gt.f32.partialorder %v5780, 0.0
    %vm5793 = vcmp.gt.f32.partialorder %v5781, 0.0
    %vm5794 = vcmp.gt.f32.partialorder %v5782, 0.0
    %v5795 = vmul.f32 %v5771, 0.2
    %v5796 = vmul.f32 %v5772, 0.2
    %v5797 = vmul.f32 %v5773, 0.2
    %v5798 = vmul.f32 %v5774, 0.2
    %v5799 = vmul.f32 %v5775, 0.2
    %v5800 = vmul.f32 %v5776, 0.2
    %v5801 = vmul.f32 %v5777, 0.2
    %v5802 = vmul.f32 %v5778, 0.2
    %v5803 = vmul.f32 %v5779, 0.2
    %v5804 = vmul.f32 %v5780, 0.2
    %v5805 = vmul.f32 %v5781, 0.2
    %v5806 = vmul.f32 %v5782, 0.2
    %v5807 = vsel %vm5783, %v5771, %v5795
    %v5808 = vsel %vm5784, %v5772, %v5796
    %v5809 = vsel %vm5785, %v5773, %v5797
    %v5810 = vsel %vm5786, %v5774, %v5798
    %v5811 = vsel %vm5787, %v5775, %v5799
    %v5812 = vsel %vm5788, %v5776, %v5800
    %v5813 = vsel %vm5789, %v5777, %v5801
    %v5814 = vsel %vm5790, %v5778, %v5802
    %v5815 = vsel %vm5791, %v5779, %v5803
    %v5816 = vsel %vm5792, %v5780, %v5804
    %v5817 = vsel %vm5793, %v5781, %v5805
    %v5818 = vsel %vm5794, %v5782, %v5806
    %v5819 = vld [vmem:[%s19] sm:$0x3]
    %v5821 = vperm.slane %v5819, 0
    %v5822 = vperm.slane %v5819, 1
    %5825 = vmatpush.xpose.msra.mxu0 0.0
    %5826 = vmatpush.xpose.msra.mxu0 0.0
    %5827 = vmatpush.xpose.msra.mxu0 0.0
    %5828 = vmatpush.xpose.msra.mxu0 0.0
    %5829 = vmatpush.xpose.msra.mxu0 0.0
    %5830 = vmatpush.xpose.msra.mxu0 0.0
    %5831 = vmatpush.xpose.msra.mxu0 0.0
    %5832 = vmatpush.xpose.msra.mxu0 0.0
    %5833 = vmatpush.xpose.msra.mxu0 0.0
    %5834 = vmatpush.xpose.msra.mxu0 0.0
    %5835 = vmatpush.xpose.msra.mxu0 %v5817
    %5836 = vmatpush.xpose.msra.mxu0 %v5815
    %5837 = vmatpush.xpose.msra.mxu0 %v5813
    %5838 = vmatpush.xpose.msra.mxu0 %v5811
    %5839 = vmatpush.xpose.msra.mxu0 %v5809
    %5840 = vmatpush.xpose.msra.mxu0 %v5807
    %5841 = vmatmul.f32.gmra.mxu0 %v5821
    %v5842 = vpop.f32.mrf.mxu0
    %v5843 = vadd.f32 0.0, %v5842
    %5844 = vdwg.mxu0
    %5845 = vmatpush.xpose.msra.mxu0 0.0
    %5846 = vmatpush.xpose.msra.mxu0 0.0
    %5847 = vmatpush.xpose.msra.mxu0 0.0
    %5848 = vmatpush.xpose.msra.mxu0 0.0
    %5849 = vmatpush.xpose.msra.mxu0 0.0
    %5850 = vmatpush.xpose.msra.mxu0 0.0
    %5851 = vmatpush.xpose.msra.mxu0 0.0
    %5852 = vmatpush.xpose.msra.mxu0 0.0
    %5853 = vmatpush.xpose.msra.mxu0 0.0
    %5854 = vmatpush.xpose.msra.mxu0 0.0
    %5855 = vmatpush.xpose.msra.mxu0 %v5818
    %5856 = vmatpush.xpose.msra.mxu0 %v5816
    %5857 = vmatpush.xpose.msra.mxu0 %v5814
    %5858 = vmatpush.xpose.msra.mxu0 %v5812
    %5859 = vmatpush.xpose.msra.mxu0 %v5810
    %5860 = vmatpush.xpose.msra.mxu0 %v5808
    %5861 = vmatmul.f32.gmra.mxu0 %v5822
    %v5862 = vpop.f32.mrf.mxu0
    %v5863 = vadd.f32 %v5843, %v5862
    %5864 = vdwg.mxu0
    %v5865 = vperm.slane %v5863, 0
    %v5866 = vsel %vm997, %v5865, -1e+30
    %v5867 = vsel %vm998, %v5865, -1e+30
    %v5868 = vsel %vm1794, %v5866, -inf
    %5869 = vmax.xlane.f32.xlu0 %v5868
    %v5870 = vpop.xlane.xlu0 %5869
    %v5871 = vsel %vm1794, %v5867, -inf
    %5872 = vmax.xlane.f32.xlu0 %v5871
    %v5873 = vpop.xlane.xlu0 %5872
    %v5874 = vsub.f32 %v5866, %v5870
    %v5875 = vsub.f32 %v5867, %v5873
    %v5876 = vmul.f32 %v5874, 1.442695
    %v5877 = vpow.pop %v5876
    %v5878 = vmul.f32 %v5875, 1.442695
    %v5879 = vpow.pop %v5878
    %v5880 = vsel %vm997, %v5877, 0.0
    %v5881 = vsel %vm998, %v5879, 0.0
    %v5882 = vsel %vm1794, %v5880, 0.0
    %5883 = vadd.xlane.f32.xlu0 %v5882
    %v5884 = vpop.xlane.xlu0 %5883
    %v5885 = vsel %vm1794, %v5881, 0.0
    %5886 = vadd.xlane.f32.xlu0 %v5885
    %v5887 = vpop.xlane.xlu0 %5886
    %v5888 = vrcp.pop %v5884
    %v5889 = vrcp.pop %v5887
    %v5890 = vmul.f32 %v5880, %v5888
    %v5891 = vmul.f32 %v5881, %v5889
    %v5892 = vld [vmem:[%s20] sm:$0x3]
    %v5894 = vperm.slane %v5892, 0
    %v5895 = vperm.slane %v5892, 1
    %v5899 = vsel %vm1794, %v5890, 0
    %v5902 = vsel %vm1794, %v5891, 0
    %5904 = vmatpush.msra.mxu0 0.0
    %5905 = vmatpush.msra.mxu0 0.0
    %5906 = vmatpush.msra.mxu0 0.0
    %5907 = vmatpush.msra.mxu0 0.0
    %5908 = vmatpush.msra.mxu0 0.0
    %5909 = vmatpush.msra.mxu0 0.0
    %5910 = vmatpush.msra.mxu0 0.0
    %5911 = vmatpush.msra.mxu0 0.0
    %5912 = vmatpush.msra.mxu0 0.0
    %5913 = vmatpush.msra.mxu0 0.0
    %5914 = vmatpush.msra.mxu0 %v5683
    %5915 = vmatpush.msra.mxu0 %v5681
    %5916 = vmatpush.msra.mxu0 %v5678
    %5917 = vmatpush.msra.mxu0 %v5676
    %5918 = vmatpush.msra.mxu0 %v5673
    %5919 = vmatpush.msra.mxu0 %v5671
    %5920 = vmatmul.f32.gmra.mxu0 %v5899
    %v5921 = vpop.f32.mrf.mxu0
    %v5922 = vadd.f32 %v5894, %v5921
    %5923 = vmatmul.f32.gmra.mxu0 %v5902
    %v5924 = vpop.f32.mrf.mxu0
    %v5925 = vadd.f32 %v5894, %v5924
    %5926 = vdwg.mxu0
    %5927 = vmatpush.msra.mxu0 0.0
    %5928 = vmatpush.msra.mxu0 0.0
    %5929 = vmatpush.msra.mxu0 0.0
    %5930 = vmatpush.msra.mxu0 0.0
    %5931 = vmatpush.msra.mxu0 0.0
    %5932 = vmatpush.msra.mxu0 0.0
    %5933 = vmatpush.msra.mxu0 0.0
    %5934 = vmatpush.msra.mxu0 0.0
    %5935 = vmatpush.msra.mxu0 0.0
    %5936 = vmatpush.msra.mxu0 0.0
    %5937 = vmatpush.msra.mxu0 %v5707
    %5938 = vmatpush.msra.mxu0 %v5705
    %5939 = vmatpush.msra.mxu0 %v5702
    %5940 = vmatpush.msra.mxu0 %v5700
    %5941 = vmatpush.msra.mxu0 %v5697
    %5942 = vmatpush.msra.mxu0 %v5695
    %5943 = vmatmul.f32.gmra.mxu0 %v5899
    %v5944 = vpop.f32.mrf.mxu0
    %v5945 = vadd.f32 %v5895, %v5944
    %5946 = vmatmul.f32.gmra.mxu0 %v5902
    %v5947 = vpop.f32.mrf.mxu0
    %v5948 = vadd.f32 %v5895, %v5947
    %5949 = vdwg.mxu0
    %s5950 = smul.u32 4, 32
    %s5951 = smul.u32 %s5950, 2
    %s5952 = sshll.u32 %s5951, 4
    %5953 = dma.done %s900, %s5952
    %v5954 = vld [vmem:[#allocation5] sm:$0xff]
    %v5955 = vld [vmem:[#allocation5 + $0x8] sm:$0xff]
    %v5956 = vld [vmem:[#allocation5 + $0x10] sm:$0xff]
    %v5957 = vld [vmem:[#allocation5 + $0x18] sm:$0xff]
    %v5958 = vld [vmem:[#allocation5 + $0x20] sm:$0xff]
    %v5959 = vld [vmem:[#allocation5 + $0x28] sm:$0xff]
    %v5960 = vld [vmem:[#allocation5 + $0x30] sm:$0xff]
    %v5961 = vld [vmem:[#allocation5 + $0x38] sm:$0xff]
    %v5962 = vld [vmem:[#allocation5 + $0x40] sm:$0xff]
    %v5963 = vld [vmem:[#allocation5 + $0x48] sm:$0xff]
    %v5964 = vld [vmem:[#allocation5 + $0x50] sm:$0xff]
    %v5965 = vld [vmem:[#allocation5 + $0x58] sm:$0xff]
    %v5966 = vld [vmem:[#allocation5 + $0x60] sm:$0xff]
    %v5967 = vld [vmem:[#allocation5 + $0x68] sm:$0xff]
    %v5968 = vld [vmem:[#allocation5 + $0x70] sm:$0xff]
    %v5969 = vld [vmem:[#allocation5 + $0x78] sm:$0xff]
    %v5970 = vld [vmem:[#allocation5 + $0x80] sm:$0xff]
    %v5971 = vld [vmem:[#allocation5 + $0x88] sm:$0xff]
    %v5972 = vld [vmem:[#allocation5 + $0x90] sm:$0xff]
    %v5973 = vld [vmem:[#allocation5 + $0x98] sm:$0xff]
    %v5974 = vld [vmem:[#allocation5 + $0xa0] sm:$0xff]
    %v5975 = vld [vmem:[#allocation5 + $0xa8] sm:$0xff]
    %v5976 = vld [vmem:[#allocation5 + $0xb0] sm:$0xff]
    %v5977 = vld [vmem:[#allocation5 + $0xb8] sm:$0xff]
    %v5978 = vld [vmem:[#allocation5 + $0xc0] sm:$0xff]
    %v5979 = vld [vmem:[#allocation5 + $0xc8] sm:$0xff]
    %v5980 = vld [vmem:[#allocation5 + $0xd0] sm:$0xff]
    %v5981 = vld [vmem:[#allocation5 + $0xd8] sm:$0xff]
    %v5982 = vld [vmem:[#allocation5 + $0xe0] sm:$0xff]
    %v5983 = vld [vmem:[#allocation5 + $0xe8] sm:$0xff]
    %v5984 = vld [vmem:[#allocation5 + $0xf0] sm:$0xff]
    %v5985 = vld [vmem:[#allocation5 + $0xf8] sm:$0xff]
    %v5986 = vpack.c.bf16 %v5925, %v5922
    %v5987 = vpack.c.bf16 %v5948, %v5945
    %v5988 = vld [vmem:[%s21] sm:$0x3]
    %v5990 = vperm.slane %v5988, 0
    %v5991 = vperm.slane %v5988, 1
    %v6026 = vunpack.c.l.b16 %v5954
    %v6027 = vunpack.c.h.b16 %v5954
    %v6028 = vunpack.c.l.b16 %v5955
    %v6029 = vunpack.c.h.b16 %v5955
    %v6030 = vunpack.c.l.b16 %v5956
    %v6031 = vunpack.c.h.b16 %v5956
    %v6032 = vunpack.c.l.b16 %v5957
    %v6033 = vunpack.c.h.b16 %v5957
    %v6034 = vunpack.c.l.b16 %v5958
    %v6035 = vunpack.c.h.b16 %v5958
    %v6036 = vunpack.c.l.b16 %v5959
    %v6037 = vunpack.c.h.b16 %v5959
    %v6038 = vunpack.c.l.b16 %v5960
    %v6039 = vunpack.c.h.b16 %v5960
    %v6040 = vunpack.c.l.b16 %v5961
    %v6041 = vunpack.c.h.b16 %v5961
    %v6042 = vunpack.c.l.b16 %v5962
    %v6043 = vunpack.c.h.b16 %v5962
    %v6044 = vunpack.c.l.b16 %v5963
    %v6045 = vunpack.c.h.b16 %v5963
    %v6046 = vunpack.c.l.b16 %v5964
    %v6047 = vunpack.c.h.b16 %v5964
    %v6048 = vunpack.c.l.b16 %v5965
    %v6049 = vunpack.c.h.b16 %v5965
    %v6050 = vunpack.c.l.b16 %v5966
    %v6051 = vunpack.c.h.b16 %v5966
    %v6052 = vunpack.c.l.b16 %v5967
    %v6053 = vunpack.c.h.b16 %v5967
    %v6054 = vunpack.c.l.b16 %v5968
    %v6055 = vunpack.c.h.b16 %v5968
    %v6056 = vunpack.c.l.b16 %v5969
    %v6057 = vunpack.c.h.b16 %v5969
    %v6058 = vunpack.c.l.b16 %v5970
    %v6059 = vunpack.c.h.b16 %v5970
    %v6060 = vunpack.c.l.b16 %v5971
    %v6061 = vunpack.c.h.b16 %v5971
    %v6062 = vunpack.c.l.b16 %v5972
    %v6063 = vunpack.c.h.b16 %v5972
    %v6064 = vunpack.c.l.b16 %v5973
    %v6065 = vunpack.c.h.b16 %v5973
    %v6066 = vunpack.c.l.b16 %v5974
    %v6067 = vunpack.c.h.b16 %v5974
    %v6068 = vunpack.c.l.b16 %v5975
    %v6069 = vunpack.c.h.b16 %v5975
    %v6070 = vunpack.c.l.b16 %v5976
    %v6071 = vunpack.c.h.b16 %v5976
    %v6072 = vunpack.c.l.b16 %v5977
    %v6073 = vunpack.c.h.b16 %v5977
    %v6074 = vunpack.c.l.b16 %v5978
    %v6075 = vunpack.c.h.b16 %v5978
    %v6076 = vunpack.c.l.b16 %v5979
    %v6077 = vunpack.c.h.b16 %v5979
    %v6078 = vunpack.c.l.b16 %v5980
    %v6079 = vunpack.c.h.b16 %v5980
    %v6080 = vunpack.c.l.b16 %v5981
    %v6081 = vunpack.c.h.b16 %v5981
    %v6082 = vunpack.c.l.b16 %v5982
    %v6083 = vunpack.c.h.b16 %v5982
    %v6084 = vunpack.c.l.b16 %v5983
    %v6085 = vunpack.c.h.b16 %v5983
    %v6086 = vunpack.c.l.b16 %v5984
    %v6087 = vunpack.c.h.b16 %v5984
    %v6088 = vunpack.c.l.b16 %v5985
    %v6089 = vunpack.c.h.b16 %v5985
    %v6090 = vpack.c.b16 %v6028, %v6026
    %v6091 = vpack.c.b16 %v6029, %v6027
    %v6092 = vpack.c.b16 %v6032, %v6030
    %v6093 = vpack.c.b16 %v6033, %v6031
    %v6094 = vpack.c.b16 %v6036, %v6034
    %v6095 = vpack.c.b16 %v6037, %v6035
    %v6096 = vpack.c.b16 %v6040, %v6038
    %v6097 = vpack.c.b16 %v6041, %v6039
    %v6098 = vpack.c.b16 %v6044, %v6042
    %v6099 = vpack.c.b16 %v6045, %v6043
    %v6100 = vpack.c.b16 %v6048, %v6046
    %v6101 = vpack.c.b16 %v6049, %v6047
    %v6102 = vpack.c.b16 %v6052, %v6050
    %v6103 = vpack.c.b16 %v6053, %v6051
    %v6104 = vpack.c.b16 %v6056, %v6054
    %v6105 = vpack.c.b16 %v6057, %v6055
    %v6106 = vpack.c.b16 %v6060, %v6058
    %v6107 = vpack.c.b16 %v6061, %v6059
    %v6108 = vpack.c.b16 %v6064, %v6062
    %v6109 = vpack.c.b16 %v6065, %v6063
    %v6110 = vpack.c.b16 %v6068, %v6066
    %v6111 = vpack.c.b16 %v6069, %v6067
    %v6112 = vpack.c.b16 %v6072, %v6070
    %v6113 = vpack.c.b16 %v6073, %v6071
    %v6114 = vpack.c.b16 %v6076, %v6074
    %v6115 = vpack.c.b16 %v6077, %v6075
    %v6116 = vpack.c.b16 %v6080, %v6078
    %v6117 = vpack.c.b16 %v6081, %v6079
    %v6118 = vpack.c.b16 %v6084, %v6082
    %v6119 = vpack.c.b16 %v6085, %v6083
    %v6120 = vpack.c.b16 %v6088, %v6086
    %v6121 = vpack.c.b16 %v6089, %v6087
    %6154 = vmatpush.bf16.msra.mxu0 %v6104
    %6155 = vmatpush.bf16.msra.mxu0 %v6102
    %6156 = vmatpush.bf16.msra.mxu0 %v6100
    %6157 = vmatpush.bf16.msra.mxu0 %v6098
    %6158 = vmatpush.bf16.msra.mxu0 %v6096
    %6159 = vmatpush.bf16.msra.mxu0 %v6094
    %6160 = vmatpush.bf16.msra.mxu0 %v6092
    %6161 = vmatpush.bf16.msra.mxu0 %v6090
    %6162 = vmatmul.bf16.gmra.mxu0 %v5986
    %v6163 = vpop.f32.mrf.mxu0
    %v6164 = vadd.f32 %v5990, %v6163
    %v6165 = vpop.f32.mrf.mxu0
    %v6166 = vadd.f32 %v5990, %v6165
    %6167 = vdwg.mxu0
    %6168 = vmatpush.bf16.msra.mxu0 %v6120
    %6169 = vmatpush.bf16.msra.mxu0 %v6118
    %6170 = vmatpush.bf16.msra.mxu0 %v6116
    %6171 = vmatpush.bf16.msra.mxu0 %v6114
    %6172 = vmatpush.bf16.msra.mxu0 %v6112
    %6173 = vmatpush.bf16.msra.mxu0 %v6110
    %6174 = vmatpush.bf16.msra.mxu0 %v6108
    %6175 = vmatpush.bf16.msra.mxu0 %v6106
    %6176 = vmatmul.bf16.gmra.mxu0 %v5987
    %v6177 = vpop.f32.mrf.mxu0
    %v6178 = vadd.f32 %v6164, %v6177
    %v6179 = vpop.f32.mrf.mxu0
    %v6180 = vadd.f32 %v6166, %v6179
    %6181 = vdwg.mxu0
    %6182 = vmatpush.bf16.msra.mxu0 %v6105
    %6183 = vmatpush.bf16.msra.mxu0 %v6103
    %6184 = vmatpush.bf16.msra.mxu0 %v6101
    %6185 = vmatpush.bf16.msra.mxu0 %v6099
    %6186 = vmatpush.bf16.msra.mxu0 %v6097
    %6187 = vmatpush.bf16.msra.mxu0 %v6095
    %6188 = vmatpush.bf16.msra.mxu0 %v6093
    %6189 = vmatpush.bf16.msra.mxu0 %v6091
    %6190 = vmatmul.bf16.gmra.mxu0 %v5986
    %v6191 = vpop.f32.mrf.mxu0
    %v6192 = vadd.f32 %v5991, %v6191
    %v6193 = vpop.f32.mrf.mxu0
    %v6194 = vadd.f32 %v5991, %v6193
    %6195 = vdwg.mxu0
    %6196 = vmatpush.bf16.msra.mxu0 %v6121
    %6197 = vmatpush.bf16.msra.mxu0 %v6119
    %6198 = vmatpush.bf16.msra.mxu0 %v6117
    %6199 = vmatpush.bf16.msra.mxu0 %v6115
    %6200 = vmatpush.bf16.msra.mxu0 %v6113
    %6201 = vmatpush.bf16.msra.mxu0 %v6111
    %6202 = vmatpush.bf16.msra.mxu0 %v6109
    %6203 = vmatpush.bf16.msra.mxu0 %v6107
    %6204 = vmatmul.bf16.gmra.mxu0 %v5987
    %v6205 = vpop.f32.mrf.mxu0
    %v6206 = vadd.f32 %v6192, %v6205
    %v6207 = vpop.f32.mrf.mxu0
    %v6208 = vadd.f32 %v6194, %v6207
    %6209 = vdwg.mxu0
    %v6210 = vld [vmem:[%s22] sm:$0x3]
    %v6212 = vsel %vm1227, %v6210, 0
    %6214 = vmatpush.bf16.msra.mxu0 0
    %6215 = vmatpush.bf16.msra.mxu0 0
    %6216 = vmatpush.bf16.msra.mxu0 0
    %6217 = vmatpush.bf16.msra.mxu0 0
    %6218 = vmatpush.bf16.msra.mxu0 0
    %6219 = vmatpush.bf16.msra.mxu0 0
    %6220 = vmatpush.bf16.msra.mxu0 0
    %6221 = vmatpush.bf16.msra.mxu0 %v6212
    %6222 = vmatmul.bf16.gmra.mxu0 %v1219
    %v6223 = vpop.f32.mrf.mxu0
    %v6224 = vadd.f32 0.0, %v6223
    %v6225 = vpop.f32.mrf.mxu0
    %v6226 = vadd.f32 0.0, %v6225
    %6227 = vmatmul.bf16.gmra.mxu0 %v1222
    %v6228 = vpop.f32.mrf.mxu0
    %v6229 = vadd.f32 0.0, %v6228
    %v6230 = vpop.f32.mrf.mxu0
    %v6231 = vadd.f32 0.0, %v6230
    %6232 = vmatmul.bf16.gmra.mxu0 %v1225
    %v6233 = vpop.f32.mrf.mxu0
    %v6234 = vadd.f32 0.0, %v6233
    %v6235 = vpop.f32.mrf.mxu0
    %v6236 = vadd.f32 0.0, %v6235
    %6237 = vdwg.mxu0
    %v6238 = vpack.c.bf16 %v6180, %v6178
    %6239 = vmatpush.bf16.msra.mxu0 0
    %6240 = vmatpush.bf16.msra.mxu0 0
    %6241 = vmatpush.bf16.msra.mxu0 0
    %6242 = vmatpush.bf16.msra.mxu0 0
    %6243 = vmatpush.bf16.msra.mxu0 0
    %6244 = vmatpush.bf16.msra.mxu0 0
    %6245 = vmatpush.bf16.msra.mxu0 0
    %6246 = vmatpush.bf16.msra.mxu0 %v6238
    %6247 = vmatmul.bf16.gmra.mxu0 %v1353
    %v6248 = vpop.f32.mrf.mxu0
    %v6249 = vadd.f32 0.0, %v6248
    %v6250 = vpop.f32.mrf.mxu0
    %v6251 = vadd.f32 0.0, %v6250
    %6252 = vmatmul.bf16.gmra.mxu0 %v1356
    %v6253 = vpop.f32.mrf.mxu0
    %v6254 = vadd.f32 0.0, %v6253
    %v6255 = vpop.f32.mrf.mxu0
    %v6256 = vadd.f32 0.0, %v6255
    %6257 = vmatmul.bf16.gmra.mxu0 %v1359
    %v6258 = vpop.f32.mrf.mxu0
    %v6259 = vadd.f32 0.0, %v6258
    %v6260 = vpop.f32.mrf.mxu0
    %v6261 = vadd.f32 0.0, %v6260
    %6262 = vdwg.mxu0
    %v6263 = vpack.c.bf16 %v6208, %v6206
    %6264 = vmatpush.bf16.msra.mxu0 0
    %6265 = vmatpush.bf16.msra.mxu0 0
    %6266 = vmatpush.bf16.msra.mxu0 0
    %6267 = vmatpush.bf16.msra.mxu0 0
    %6268 = vmatpush.bf16.msra.mxu0 0
    %6269 = vmatpush.bf16.msra.mxu0 0
    %6270 = vmatpush.bf16.msra.mxu0 0
    %6271 = vmatpush.bf16.msra.mxu0 %v6263
    %6272 = vmatmul.bf16.gmra.mxu0 %v1477
    %v6273 = vpop.f32.mrf.mxu0
    %v6274 = vadd.f32 0.0, %v6273
    %v6275 = vpop.f32.mrf.mxu0
    %v6276 = vadd.f32 0.0, %v6275
    %6277 = vmatmul.bf16.gmra.mxu0 %v1480
    %v6278 = vpop.f32.mrf.mxu0
    %v6279 = vadd.f32 0.0, %v6278
    %v6280 = vpop.f32.mrf.mxu0
    %v6281 = vadd.f32 0.0, %v6280
    %6282 = vmatmul.bf16.gmra.mxu0 %v1483
    %v6283 = vpop.f32.mrf.mxu0
    %v6284 = vadd.f32 0.0, %v6283
    %v6285 = vpop.f32.mrf.mxu0
    %v6286 = vadd.f32 0.0, %v6285
    %6287 = vdwg.mxu0
    %v6288 = vadd.f32 %v6249, %v6274
    %v6289 = vadd.f32 %v6251, %v6276
    %v6290 = vadd.f32 %v6254, %v6279
    %v6291 = vadd.f32 %v6256, %v6281
    %v6292 = vadd.f32 %v6259, %v6284
    %v6293 = vadd.f32 %v6261, %v6286
    %v6294 = vadd.f32 %v6288, %v6224
    %v6295 = vadd.f32 %v6289, %v6226
    %v6296 = vadd.f32 %v6290, %v6229
    %v6297 = vadd.f32 %v6291, %v6231
    %v6298 = vadd.f32 %v6292, %v6234
    %v6299 = vadd.f32 %v6293, %v6236
    %vm6300 = vcmp.gt.f32.partialorder %v6294, 0.0
    %vm6301 = vcmp.gt.f32.partialorder %v6295, 0.0
    %vm6302 = vcmp.gt.f32.partialorder %v6296, 0.0
    %vm6303 = vcmp.gt.f32.partialorder %v6297, 0.0
    %vm6304 = vcmp.gt.f32.partialorder %v6298, 0.0
    %vm6305 = vcmp.gt.f32.partialorder %v6299, 0.0
    %v6306 = vmul.f32 %v6294, 0.2
    %v6307 = vmul.f32 %v6295, 0.2
    %v6308 = vmul.f32 %v6296, 0.2
    %v6309 = vmul.f32 %v6297, 0.2
    %v6310 = vmul.f32 %v6298, 0.2
    %v6311 = vmul.f32 %v6299, 0.2
    %v6312 = vsel %vm6300, %v6294, %v6306
    %v6313 = vsel %vm6301, %v6295, %v6307
    %v6314 = vsel %vm6302, %v6296, %v6308
    %v6315 = vsel %vm6303, %v6297, %v6309
    %v6316 = vsel %vm6304, %v6298, %v6310
    %v6317 = vsel %vm6305, %v6299, %v6311
    %v6318 = vld [vmem:[%s23] sm:$0x1]
    %vm6319 = vcmask 261120
    %v6321 = vsel %vm6319, %v6318, 0
    %v6324 = vsel %vm6319, %v6312, 0
    %v6327 = vsel %vm6319, %v6313, 0
    %v6330 = vsel %vm6319, %v6314, 0
    %v6333 = vsel %vm6319, %v6315, 0
    %v6336 = vsel %vm6319, %v6316, 0
    %v6339 = vsel %vm6319, %v6317, 0
    %6341 = vmatpush.xpose.msra.mxu0 0.0
    %6342 = vmatpush.xpose.msra.mxu0 0.0
    %6343 = vmatpush.xpose.msra.mxu0 0.0
    %6344 = vmatpush.xpose.msra.mxu0 0.0
    %6345 = vmatpush.xpose.msra.mxu0 0.0
    %6346 = vmatpush.xpose.msra.mxu0 0.0
    %6347 = vmatpush.xpose.msra.mxu0 0.0
    %6348 = vmatpush.xpose.msra.mxu0 0.0
    %6349 = vmatpush.xpose.msra.mxu0 0.0
    %6350 = vmatpush.xpose.msra.mxu0 0.0
    %6351 = vmatpush.xpose.msra.mxu0 %v6339
    %6352 = vmatpush.xpose.msra.mxu0 %v6336
    %6353 = vmatpush.xpose.msra.mxu0 %v6333
    %6354 = vmatpush.xpose.msra.mxu0 %v6330
    %6355 = vmatpush.xpose.msra.mxu0 %v6327
    %6356 = vmatpush.xpose.msra.mxu0 %v6324
    %6357 = vmatmul.f32.gmra.mxu0 %v6321
    %v6358 = vpop.f32.mrf.mxu0
    %v6359 = vadd.f32 0.0, %v6358
    %6360 = vdwg.mxu0
    %v6361 = vperm.slane %v6359, 0
    %v6362 = vsel %vm997, %v6361, -1e+30
    %v6363 = vsel %vm998, %v6361, -1e+30
    %v6364 = vsel %vm1794, %v6362, -inf
    %6365 = vmax.xlane.f32.xlu0 %v6364
    %v6366 = vpop.xlane.xlu0 %6365
    %v6367 = vsel %vm1794, %v6363, -inf
    %6368 = vmax.xlane.f32.xlu0 %v6367
    %v6369 = vpop.xlane.xlu0 %6368
    %v6370 = vsub.f32 %v6362, %v6366
    %v6371 = vsub.f32 %v6363, %v6369
    %v6372 = vmul.f32 %v6370, 1.442695
    %v6373 = vpow.pop %v6372
    %v6374 = vmul.f32 %v6371, 1.442695
    %v6375 = vpow.pop %v6374
    %v6376 = vsel %vm997, %v6373, 0.0
    %v6377 = vsel %vm998, %v6375, 0.0
    %v6378 = vsel %vm1794, %v6376, 0.0
    %6379 = vadd.xlane.f32.xlu0 %v6378
    %v6380 = vpop.xlane.xlu0 %6379
    %v6381 = vsel %vm1794, %v6377, 0.0
    %6382 = vadd.xlane.f32.xlu0 %v6381
    %v6383 = vpop.xlane.xlu0 %6382
    %v6384 = vrcp.pop %v6380
    %v6385 = vrcp.pop %v6383
    %v6386 = vmul.f32 %v6376, %v6384
    %v6387 = vmul.f32 %v6377, %v6385
    %v6388 = vld [vmem:[%s24] sm:$0x1]
    %v6390 = vperm.slane %v6388, 0
    %v6393 = vsel %vm1794, %v6386, 0
    %v6396 = vsel %vm1794, %v6387, 0
    %6398 = vmatpush.msra.mxu0 0.0
    %6399 = vmatpush.msra.mxu0 0.0
    %6400 = vmatpush.msra.mxu0 0.0
    %6401 = vmatpush.msra.mxu0 0.0
    %6402 = vmatpush.msra.mxu0 0.0
    %6403 = vmatpush.msra.mxu0 0.0
    %6404 = vmatpush.msra.mxu0 0.0
    %6405 = vmatpush.msra.mxu0 0.0
    %6406 = vmatpush.msra.mxu0 0.0
    %6407 = vmatpush.msra.mxu0 0.0
    %6408 = vmatpush.msra.mxu0 %v6261
    %6409 = vmatpush.msra.mxu0 %v6259
    %6410 = vmatpush.msra.mxu0 %v6256
    %6411 = vmatpush.msra.mxu0 %v6254
    %6412 = vmatpush.msra.mxu0 %v6251
    %6413 = vmatpush.msra.mxu0 %v6249
    %6414 = vmatmul.f32.gmra.mxu0 %v6393
    %v6415 = vpop.f32.mrf.mxu0
    %v6416 = vadd.f32 %v6390, %v6415
    %6417 = vmatmul.f32.gmra.mxu0 %v6396
    %v6418 = vpop.f32.mrf.mxu0
    %v6419 = vadd.f32 %v6390, %v6418
    %6420 = vdwg.mxu0
    %v6421 = vsel %vm6319, %v6416, 0.0
    %v6422 = vsel %vm6319, %v6419, 0.0
    %v6423 = vadd.f32 %v6421, %v6422
    %v6424 = vrot.slane %v6423, 4
    %v6425 = vadd.f32 %v6423, %v6424
    %v6426 = vrot.slane %v6425, 2
    %v6427 = vadd.f32 %v6425, %v6426
    %v6428 = vrot.slane %v6427, 1
    %v6429 = vadd.f32 %v6427, %v6428
    %v6430 = vrcp.pop 16.0
    %v6431 = vmul.f32 16.0, %v6430
    %v6432 = vsub.f32 1.0, %v6431
    %v6433 = vmul.f32 %v6430, %v6432
    %v6434 = vadd.f32 %v6430, %v6433
    %vm6435 = vweird.f32 %v6430
    %v6436 = vsel %vm6435, %v6430, %v6434
    %v6437 = vmul.f32 %v6429, %v6436
    %vm6438 = vcmask 253952
    %6439 = vst.msk [vmem:[#allocation7] sm:$0x1] %vm6438, %v6437
    // Predicated region
    $region162: #{gnn_forward.1} parent=1 // pred_check
      _
    $region163: #{gnn_forward.1} parent=1 // pred_check_branch
      %6441 = sbr.rel (0) target = $region165
    $region164: #{gnn_forward.1} parent=1 // pred_region
      %6443 = vsyncadd [#allocation8], 0
      %s6445 = sshll.u32 [#allocation7], 4
      %s6446 = int_to_ptr.vmem [resolvable:$true] %s6445
      %s6447 = sshll.u32 %s25, 4
      %s6448 = int_to_ptr.hbm [resolvable:$true] %s6447
      %6450 = dma.vmem_to_hbm [thread:$0]  %s6446, 16, %s6448, [#allocation8]
    $region165: #{gnn_forward.1} parent=1 // pred_fallthru
      _
    // Predicated region
    $region166: #{gnn_forward.1} parent=1 // pred_check
      _
    $region167: #{gnn_forward.1} parent=1 // pred_check_branch
      %6452 = sbr.rel (0) target = $region169
    $region168: #{gnn_forward.1} parent=1 // pred_region
      %6454 = dma.done [#allocation8], 16
    $region169: #{gnn_forward.1} parent=1 // pred_fallthru
      _
    %6455 = vsyncpa [#allocation8], 1
  %6456 = vsyncmov [#allocation6]
  %s6457 = vpop.sfrf %6456
  %p6458 = scmp.eq.s32.totalorder %s6457, 0
  %p6459 = pneg %p6458
  %6461 = shalt.err (%p6459)
  %s6462 = scalar_lea.sflag [#allocation6], 1
  %6463 = vsyncmov %s6462
  %s6464 = vpop.sfrf %6463
  %p6465 = scmp.eq.s32.totalorder %s6464, 0
  %p6466 = pneg %p6465
  %6468 = shalt.err (%p6466)
  %s6469 = scalar_lea.sflag [#allocation6], 2
  %6470 = vsyncmov %s6469
  %s6471 = vpop.sfrf %6470
  %p6472 = scmp.eq.s32.totalorder %s6471, 0
  %p6473 = pneg %p6472
  %6475 = shalt.err (%p6473)
  %s6476 = scalar_lea.sflag [#allocation6], 3
  %6477 = vsyncmov %s6476
  %s6478 = vpop.sfrf %6477
  %p6479 = scmp.eq.s32.totalorder %s6478, 0
  %p6480 = pneg %p6479
  %6482 = shalt.err (%p6480)

</llo_original>
